<compile_context>
chip_gen: v7x
topology: tpu7x:2x2x1
jax: 0.10.0
libtpu: 0.0.40
codegen_flags: <defaults>
</compile_context>

<pallas_src>
import functools

import jax
import jax.numpy as jnp
from jax import lax
from jax.experimental import pallas as pl
from jax.experimental.pallas import tpu as pltpu


# ---------------------------------------------------------------------------
# In-kernel building block: K-split im2col conv accumulated in fp32 VMEM.
# ---------------------------------------------------------------------------
def _conv_accumulate(xpad_ref, w_ref, col_ref, acc_ref, *, hw):
    """'same' conv of a padded bf16 scratch against w_ref (KH, KW*Cin, Cout).

    K is split per kernel row: for each kh a (H*W, KW*Cin) bf16 col row-group
    is built in VMEM (taps sliced straight from the bf16 padded scratch, no
    f32 round trip) and one MXU matmul is accumulated into the fp32 acc_ref.
    """
    h, w = hw
    kdim = w_ref.shape[0]
    cin = xpad_ref.shape[-1]

    acc_ref[...] = jnp.zeros_like(acc_ref)

    @pl.loop(0, kdim)
    def _(kh):
        for kw in range(kdim):                                # static tap loop
            tap = xpad_ref[pl.ds(kh, h), pl.ds(kw, w), :]     # (h, w, cin) bf16
            col_ref[:, kw * cin:(kw + 1) * cin] = tap.reshape(h * w, cin)
        acc_ref[...] += jnp.dot(col_ref[...], w_ref[kh],
                                preferred_element_type=jnp.float32)


def _pad_into(xpad_ref, x, pad):
    """Zero the padded VMEM scratch and copy the block interior ('same' pad).

    The scratch is zeroed every step (not via a program_id==0 one-shot) so the
    halo is valid even when the batch grid axis is megacore-split across
    TensorCores, where each core owns a private, uninitialized scratch copy.
    """
    h, w = x.shape[0], x.shape[1]
    xpad_ref[...] = jnp.zeros_like(xpad_ref)
    xpad_ref[pad:pad + h, pad:pad + w, :] = x


# ---------------------------------------------------------------------------
# Kernels.
# ---------------------------------------------------------------------------
def _conv_relu_pool_kernel(x_ref, w_ref, b_ref, o_ref,
                           xpad_ref, col_ref, acc_ref, *, hw):
    """Merged-branch conv + bias + ReLU + fused 2x2 max-pool (floor behaviour,
    like nn.MaxPool2d(2))."""
    h, w = hw
    kdim = w_ref.shape[0]
    cout = acc_ref.shape[-1]

    _pad_into(xpad_ref, x_ref[0], kdim // 2)
    _conv_accumulate(xpad_ref, w_ref, col_ref, acc_ref, hw=hw)

    # Bias + ReLU; cast to the bf16 output dtype *before* pooling (max commutes
    # with the monotone cast), then pool on values -- no f32 scratch round trip.
    act = jnp.maximum(acc_ref[...] + b_ref[...], 0.0).astype(o_ref.dtype)
    act = act.reshape(h, w, cout)
    h2, w2 = h // 2, w // 2
    act = act[:2 * h2, :2 * w2].reshape(h2, 2, 2 * w2, cout)
    rows = jnp.maximum(act[:, 0], act[:, 1])                  # (h2, 2*w2, cout)
    o_ref[0] = jnp.max(rows.reshape(h2, w2, 2, cout), axis=2)


def _conv_conv_fuse_kernel(x_ref, w3_ref, b3_ref, w4_ref, b4_ref,
                           fw_ref, fb_ref, o_ref,
                           xpad3_ref, col3_ref, acc3_ref,
                           xpad4_ref, col4_ref, acc4_ref, *, hw):
    """Fused stage-3 conv + stage-4 conv + Conv2d(30->1, 1x1) fuse + final ReLU
    (MCNN.forward applies self.relu after self.fuse).  The 60-channel
    intermediate never leaves VMEM."""
    h, w = hw
    k3, k4 = w3_ref.shape[0], w4_ref.shape[0]
    c3, c4 = acc3_ref.shape[-1], acc4_ref.shape[-1]

    # Stage-3 conv (Cin is 128-lane aligned thanks to the stage-2 Cout pad).
    _pad_into(xpad3_ref, x_ref[0], k3 // 2)
    _conv_accumulate(xpad3_ref, w3_ref, col3_ref, acc3_ref, hw=hw)
    mid = jnp.maximum(acc3_ref[...] + b3_ref[...], 0.0)       # (h*w, c3) f32

    # Stage-4 conv: the activation is re-padded in VMEM only.
    _pad_into(xpad4_ref, mid.astype(xpad4_ref.dtype).reshape(h, w, c3), k4 // 2)
    _conv_accumulate(xpad4_ref, w4_ref, col4_ref, acc4_ref, hw=hw)
    branch = jnp.maximum(acc4_ref[...] + b4_ref[...], 0.0)    # (h*w, 30) f32

    # Fused 1x1 fuse conv as a VPU weighted channel sum (MXU with N=1 is waste).
    dens = jnp.sum(branch.reshape(h, w, c4) * fw_ref[...], axis=-1)   # (h, w)
    dens = dens + fb_ref[...]
    o_ref[0] = jnp.maximum(dens, 0.0).astype(o_ref.dtype)


# ---------------------------------------------------------------------------
# Wrappers: one pallas_call per fused stage, grid over batch.
# ---------------------------------------------------------------------------
def _compiler_params(block_bytes, scratch_bytes):
    # BlockSpec-pipelined operands are double-buffered; scratch is resident.
    need = 2 * block_bytes + scratch_bytes
    limit = int(min(64 << 20, max(16 << 20, need + (2 << 20))))
    return pltpu.CompilerParams(dimension_semantics=("parallel",),
                                vmem_limit_bytes=limit)


def _conv_pool_stage(x, stage, *, out_dtype=jnp.bfloat16):
    """One merged conv stage + ReLU + 2x2 max-pool.  x: (N, H, W, Cin) bf16."""
    n, h, w, cin = x.shape
    kdim, cout = stage["kdim"], stage["cout"]
    w3d, b = stage["w3d"], stage["b"]
    assert w3d.shape == (kdim, kdim * cin, cout), (w3d.shape, kdim, cin, cout)
    pad = kdim // 2
    hp, wp = h + 2 * pad, w + 2 * pad
    h2, w2 = h // 2, w // 2

    block_bytes = (h * w * cin * 2 + w3d.size * 2 + cout * 4
                   + h2 * w2 * cout * 2)
    scratch_bytes = (hp * wp * cin * 2 + h * w * kdim * cin * 2
                     + h * w * cout * 4)
    flops = 2 * n * h * w * kdim * kdim * cin * cout
    bytes_accessed = (n * (h * w * cin + h2 * w2 * cout) * 2
                      + w3d.size * 2 + cout * 4)

    return pl.pallas_call(
        functools.partial(_conv_relu_pool_kernel, hw=(h, w)),
        out_shape=jax.ShapeDtypeStruct((n, h2, w2, cout), out_dtype),
        grid=(n,),
        in_specs=[pl.BlockSpec((1, h, w, cin), lambda i: (i, 0, 0, 0)),
                  pl.BlockSpec((kdim, kdim * cin, cout), lambda i: (0, 0, 0)),
                  pl.BlockSpec((1, cout), lambda i: (0, 0))],
        out_specs=pl.BlockSpec((1, h2, w2, cout), lambda i: (i, 0, 0, 0)),
        scratch_shapes=[pltpu.VMEM((hp, wp, cin), jnp.bfloat16),     # padded in
                        pltpu.VMEM((h * w, kdim * cin), jnp.bfloat16),  # col
                        pltpu.VMEM((h * w, cout), jnp.float32)],        # acc
        compiler_params=_compiler_params(block_bytes, scratch_bytes),
        cost_estimate=pl.CostEstimate(flops=flops, transcendentals=0,
                                      bytes_accessed=bytes_accessed),
    )(x, w3d, b)


def _final_stage(x, st3, st4, fuse_wb):
    """Fused stage-3 conv + stage-4 conv + 1x1 fuse + ReLU -> (N, H, W) f32."""
    n, h, w, cin3 = x.shape
    k3, c3 = st3["kdim"], st3["cout"]
    k4, c4 = st4["kdim"], st4["cout"]
    w3, b3 = st3["w3d"], st3["b"]
    w4, b4 = st4["w3d"], st4["b"]
    fw, fb = fuse_wb
    assert w3.shape == (k3, k3 * cin3, c3) and w4.shape == (k4, k4 * c3, c4)
    p3, p4 = k3 // 2, k4 // 2

    block_bytes = (h * w * cin3 * 2 + (w3.size + w4.size) * 2
                   + (c3 + 2 * c4 + 1) * 4 + h * w * 4)
    scratch_bytes = ((h + 2 * p3) * (w + 2 * p3) * cin3 * 2
                     + h * w * k3 * cin3 * 2 + h * w * c3 * 4
                     + (h + 2 * p4) * (w + 2 * p4) * c3 * 2
                     + h * w * k4 * c3 * 2 + h * w * c4 * 4)
    flops = 2 * n * h * w * (k3 * k3 * cin3 * c3 + k4 * k4 * c3 * c4 + c4)
    bytes_accessed = (n * (h * w * cin3 * 2 + h * w * 4)
                      + (w3.size + w4.size) * 2 + (c3 + 2 * c4 + 1) * 4)

    return pl.pallas_call(
        functools.partial(_conv_conv_fuse_kernel, hw=(h, w)),
        out_shape=jax.ShapeDtypeStruct((n, h, w), jnp.float32),
        grid=(n,),
        in_specs=[pl.BlockSpec((1, h, w, cin3), lambda i: (i, 0, 0, 0)),
                  pl.BlockSpec((k3, k3 * cin3, c3), lambda i: (0, 0, 0)),
                  pl.BlockSpec((1, c3), lambda i: (0, 0)),
                  pl.BlockSpec((k4, k4 * c3, c4), lambda i: (0, 0, 0)),
                  pl.BlockSpec((1, c4), lambda i: (0, 0)),
                  pl.BlockSpec((1, 1, c4), lambda i: (0, 0, 0)),
                  pl.BlockSpec((1, 1), lambda i: (0, 0))],
        out_specs=pl.BlockSpec((1, h, w), lambda i: (i, 0, 0)),
        scratch_shapes=[
            pltpu.VMEM((h + 2 * p3, w + 2 * p3, cin3), jnp.bfloat16),
            pltpu.VMEM((h * w, k3 * cin3), jnp.bfloat16),
            pltpu.VMEM((h * w, c3), jnp.float32),
            pltpu.VMEM((h + 2 * p4, w + 2 * p4, c3), jnp.bfloat16),
            pltpu.VMEM((h * w, k4 * c3), jnp.bfloat16),
            pltpu.VMEM((h * w, c4), jnp.float32)],
        compiler_params=_compiler_params(block_bytes, scratch_bytes),
        cost_estimate=pl.CostEstimate(flops=flops, transcendentals=0,
                                      bytes_accessed=bytes_accessed),
    )(x, w3, b3, w4, b4, fw, fb)


# ---------------------------------------------------------------------------
# MCNN parameters (synthetic init matching PyTorch _initialize_weights:
# conv weights ~ N(0, 0.01), biases = 0) and branch merging.
# ---------------------------------------------------------------------------
_BRANCH_CFGS = [
    # (kernel_size, out_channels) for each branch's 4 convs; Cin = 3 at stage 1.
    [(9, 16), (7, 32), (7, 16), (7, 8)],    # branch1
    [(7, 20), (5, 40), (5, 20), (5, 10)],   # branch2
    [(5, 24), (3, 48), (3, 24), (3, 12)],   # branch3
]
_STAGE_KDIM = (9, 7, 7, 7)                  # max kernel size per stage
# Merged Cout per stage; stage 2 (32+40+48=120) is zero-padded to 128 so its
# HBM activation and the stage-3 tap stores are 128-lane dense.
_STAGE_COUT = (60, 128, 60, 30)


def init_mcnn_params(key):
    branches = []
    for cfg in _BRANCH_CFGS:
        layers, cin = [], 3
        for (k, cout) in cfg:
            key, sub = jax.random.split(key)
            wgt = 0.01 * jax.random.normal(sub, (k, k, cin, cout), jnp.float32)
            layers.append((wgt, jnp.zeros((cout,), jnp.float32)))
            cin = cout
        branches.append(layers)
    key, sub = jax.random.split(key)
    fuse_w = 0.01 * jax.random.normal(sub, (1, 1, 30, 1), jnp.float32)
    fuse_b = jnp.zeros((1,), jnp.float32)
    return {"branches": branches, "fuse": (fuse_w, fuse_b)}


def merge_mcnn_params(params):
    """Merge the three branches into a single conv per stage.

    Each branch kernel is zero-padded (spatially centred) to the stage's max
    size and placed block-diagonally over (Cin, Cout) (stage 1 shares the 3
    RGB input channels); stage-2 Cout is zero-padded 120 -> 128.  Weights are
    pre-reshaped to (KH, KW*Cin, Cout) bf16 for the K-split im2col kernels.
    """
    stages = []
    cin_alloc, prev_couts = 3, None
    for s, kdim in enumerate(_STAGE_KDIM):
        couts = [cfg[s][1] for cfg in _BRANCH_CFGS]
        cins = [3, 3, 3] if s == 0 else prev_couts
        cout_alloc = _STAGE_COUT[s]
        wm = jnp.zeros((kdim, kdim, cin_alloc, cout_alloc), jnp.float32)
        bm = jnp.zeros((cout_alloc,), jnp.float32)
        ci_off = co_off = 0
        for br, cfg in enumerate(_BRANCH_CFGS):
            wb, bb = params["branches"][br][s]
            kb = cfg[s][0]
            off = (kdim - kb) // 2
            ci0 = 0 if s == 0 else ci_off
            wm = wm.at[off:off + kb, off:off + kb,
                       ci0:ci0 + cins[br], co_off:co_off + couts[br]].set(wb)
            bm = bm.at[co_off:co_off + couts[br]].set(bb)
            ci_off += cins[br]
            co_off += couts[br]
        stages.append({
            "w3d": wm.reshape(kdim, kdim * cin_alloc,
                              cout_alloc).astype(jnp.bfloat16),
            "b": bm.reshape(1, cout_alloc),
            "kdim": kdim, "cout": cout_alloc})
        cin_alloc, prev_couts = cout_alloc, couts
    fuse_w, fuse_b = params["fuse"]
    return {"stages": stages,
            "fuse": (fuse_w.reshape(1, 1, 30).astype(jnp.float32),
                     fuse_b.reshape(1, 1).astype(jnp.float32))}


def mcnn_forward(img_nchw, mparams):
    """img_nchw: (N, 3, H, W) float32 -> (N, 1, H//4, W//4) float32."""
    x = jnp.transpose(img_nchw, (0, 2, 3, 1)).astype(jnp.bfloat16)   # NHWC bf16
    st = mparams["stages"]
    x = _conv_pool_stage(x, st[0])                       # conv9 + ReLU + pool
    x = _conv_pool_stage(x, st[1])                       # conv7 + ReLU + pool
    y = _final_stage(x, st[2], st[3], mparams["fuse"])   # conv7 + conv7 + fuse
    return y[:, None, :, :]                              # back to NCHW


def mcnn_reference(img_nchw, params):
    """Pure-JAX fp32 reference of the original per-branch MCNN forward."""
    dn = ("NHWC", "HWIO", "NHWC")
    x0 = jnp.transpose(img_nchw, (0, 2, 3, 1)).astype(jnp.float32)
    cols = []
    for layers in params["branches"]:
        x = x0
        for li, (wgt, b) in enumerate(layers):
            x = lax.conv_general_dilated(x, wgt, (1, 1), "SAME",
                                         dimension_numbers=dn,
                                         precision=lax.Precision.HIGHEST)
            x = jnp.maximum(x + b, 0.0)
            if li < 2:                                   # MaxPool2d(2) x2
                x = lax.reduce_window(x, -jnp.inf, lax.max,
                                      (1, 2, 2, 1), (1, 2, 2, 1), "VALID")
        cols.append(x)
    x = jnp.concatenate(cols, axis=-1)                   # channel concat
    fw, fb = params["fuse"]
    x = lax.conv_general_dilated(x, fw, (1, 1), "SAME", dimension_numbers=dn,
                                 precision=lax.Precision.HIGHEST) + fb
    return jnp.transpose(jnp.maximum(x, 0.0), (0, 3, 1, 2))


if __name__ == "__main__":
    key = jax.random.PRNGKey(0)
    pkey, xkey = jax.random.split(key)

    params = init_mcnn_params(pkey)
    mparams = merge_mcnn_params(params)
    img = jax.random.normal(xkey, (2, 3, 16, 16), jnp.float32)  # NCHW like torch

    fwd = jax.jit(lambda t: mcnn_forward(t, mparams))
    out = jax.block_until_ready(fwd(img))

    assert out.shape == (2, 1, 4, 4), out.shape
    assert out.dtype == jnp.float32
    assert bool(jnp.all(out >= 0.0))            # ReLU after fuse, as in MCNN
    assert bool(jnp.all(jnp.isfinite(out)))

    # Accuracy vs. a pure-JAX fp32 reference of the unmerged network (also
    # validates the block-diagonal merge / centred kernel padding / pooling).
    ref = jax.jit(lambda t: mcnn_reference(t, params))(img)
    err = float(jnp.max(jnp.abs(out - ref)))
    scale = float(jnp.max(jnp.abs(ref)))
    assert err <= 0.15 * scale + 1e-6, ("accuracy check failed", err, scale)

    print("KERNEL_OK")
</pallas_src>

<mosaic_0001>
module attributes {stable_mosaic.version = 11 : i64} {
  func.func @_conv_relu_pool_kernel(%arg0: i32, %arg1: memref<1x16x16x3xbf16, #tpu.memory_space<vmem>>, %arg2: memref<9x27x60xbf16, #tpu.memory_space<vmem>>, %arg3: memref<1x60xf32, #tpu.memory_space<vmem>>, %arg4: memref<1x8x8x60xbf16, #tpu.memory_space<vmem>>, %arg5: memref<24x24x3xbf16, #tpu.memory_space<vmem>>, %arg6: memref<256x27xbf16, #tpu.memory_space<vmem>>, %arg7: memref<256x60xf32, #tpu.memory_space<vmem>>) attributes {dimension_semantics = [#tpu.dimension_semantics<parallel>], iteration_bounds = array<i64: 2>, scalar_prefetch = 0 : i64, scratch_operands = 3 : i64, tpu.core_type = #tpu.core_type<tc>, window_params = [{transform_indices = @transform_0, window_bounds = array<i64: 1, 16, 16, 3>}, {pipeline_mode = #tpu.pipeline_mode<synchronous>, transform_indices = @transform_1, window_bounds = array<i64: 9, 27, 60>}, {pipeline_mode = #tpu.pipeline_mode<synchronous>, transform_indices = @transform_2, window_bounds = array<i64: 1, 60>}, {transform_indices = @transform_3, window_bounds = array<i64: 1, 8, 8, 60>}]} {
    %c0 = arith.constant 0 : index
    %c0_0 = arith.constant 0 : index
    %c0_1 = arith.constant 0 : index
    %c0_2 = arith.constant 0 : index
    %0 = vector.load %arg1[%c0, %c0_0, %c0_1, %c0_2] : memref<1x16x16x3xbf16, #tpu.memory_space<vmem>>, vector<1x16x16x3xbf16>
    %1 = vector.shape_cast %0 : vector<1x16x16x3xbf16> to vector<16x16x3xbf16>
    %cst = arith.constant 0.000000e+00 : bf16
    %2 = vector.broadcast %cst : bf16 to vector<24x24x3xbf16>
    %c0_3 = arith.constant 0 : index
    %c0_4 = arith.constant 0 : index
    %c0_5 = arith.constant 0 : index
    %3 = vector.load %arg5[%c0_3, %c0_4, %c0_5] : memref<24x24x3xbf16, #tpu.memory_space<vmem>>, vector<24x24x3xbf16>
    tpu.vector_store %arg5[%c0_3, %c0_4, %c0_5], %2 {strides = array<i32>} : memref<24x24x3xbf16, #tpu.memory_space<vmem>>, vector<24x24x3xbf16>,
    %c4 = arith.constant 4 : index
    %c4_6 = arith.constant 4 : index
    %c0_7 = arith.constant 0 : index
    %4 = vector.load %arg5[%c4, %c4_6, %c0_7] : memref<24x24x3xbf16, #tpu.memory_space<vmem>>, vector<16x16x3xbf16>
    tpu.vector_store %arg5[%c4, %c4_6, %c0_7], %1 {strides = array<i32>} : memref<24x24x3xbf16, #tpu.memory_space<vmem>>, vector<16x16x3xbf16>,
    %cst_8 = arith.constant 0.000000e+00 : f32
    %5 = vector.broadcast %cst_8 : f32 to vector<256x60xf32>
    %c0_9 = arith.constant 0 : index
    %c0_10 = arith.constant 0 : index
    %6 = vector.load %arg7[%c0_9, %c0_10] : memref<256x60xf32, #tpu.memory_space<vmem>>, vector<256x60xf32>
    tpu.vector_store %arg7[%c0_9, %c0_10], %5 {strides = array<i32>} : memref<256x60xf32, #tpu.memory_space<vmem>>, vector<256x60xf32>,
    %c0_i32 = arith.constant 0 : i32
    %c9_i32 = arith.constant 9 : i32
    %7 = arith.addi %c0_i32, %c9_i32 : i32
    %c1_i32 = arith.constant 1 : i32
    scf.for %arg8 = %c0_i32 to %7 step %c1_i32  : i32 {
      %c1_i32_22 = arith.constant 1 : i32
      %27 = arith.muli %arg8, %c1_i32_22 : i32
      %c0_i32_23 = arith.constant 0 : i32
      %28 = arith.addi %c0_i32_23, %27 : i32
      %29 = arith.index_cast %28 : i32 to index
      %c0_24 = arith.constant 0 : index
      %c0_25 = arith.constant 0 : index
      %30 = vector.load %arg5[%29, %c0_24, %c0_25] : memref<24x24x3xbf16, #tpu.memory_space<vmem>>, vector<16x16x3xbf16>
      %31 = vector.shape_cast %30 : vector<16x16x3xbf16> to vector<256x3xbf16>
      %c0_26 = arith.constant 0 : index
      %c0_27 = arith.constant 0 : index
      %32 = vector.load %arg6[%c0_26, %c0_27] : memref<256x27xbf16, #tpu.memory_space<vmem>>, vector<256x3xbf16>
      tpu.vector_store %arg6[%c0_26, %c0_27], %31 {strides = array<i32>} : memref<256x27xbf16, #tpu.memory_space<vmem>>, vector<256x3xbf16>,
      %33 = arith.index_cast %28 : i32 to index
      %c1 = arith.constant 1 : index
      %c0_28 = arith.constant 0 : index
      %34 = vector.load %arg5[%33, %c1, %c0_28] : memref<24x24x3xbf16, #tpu.memory_space<vmem>>, vector<16x16x3xbf16>
      %35 = vector.shape_cast %34 : vector<16x16x3xbf16> to vector<256x3xbf16>
      %c0_29 = arith.constant 0 : index
      %c3 = arith.constant 3 : index
      %36 = vector.load %arg6[%c0_29, %c3] : memref<256x27xbf16, #tpu.memory_space<vmem>>, vector<256x3xbf16>
      tpu.vector_store %arg6[%c0_29, %c3], %35 {strides = array<i32>} : memref<256x27xbf16, #tpu.memory_space<vmem>>, vector<256x3xbf16>,
      %37 = arith.index_cast %28 : i32 to index
      %c2 = arith.constant 2 : index
      %c0_30 = arith.constant 0 : index
      %38 = vector.load %arg5[%37, %c2, %c0_30] : memref<24x24x3xbf16, #tpu.memory_space<vmem>>, vector<16x16x3xbf16>
      %39 = vector.shape_cast %38 : vector<16x16x3xbf16> to vector<256x3xbf16>
      %c0_31 = arith.constant 0 : index
      %c6 = arith.constant 6 : index
      %40 = vector.load %arg6[%c0_31, %c6] : memref<256x27xbf16, #tpu.memory_space<vmem>>, vector<256x3xbf16>
      tpu.vector_store %arg6[%c0_31, %c6], %39 {strides = array<i32>} : memref<256x27xbf16, #tpu.memory_space<vmem>>, vector<256x3xbf16>,
      %41 = arith.index_cast %28 : i32 to index
      %c3_32 = arith.constant 3 : index
      %c0_33 = arith.constant 0 : index
      %42 = vector.load %arg5[%41, %c3_32, %c0_33] : memref<24x24x3xbf16, #tpu.memory_space<vmem>>, vector<16x16x3xbf16>
      %43 = vector.shape_cast %42 : vector<16x16x3xbf16> to vector<256x3xbf16>
      %c0_34 = arith.constant 0 : index
      %c9 = arith.constant 9 : index
      %44 = vector.load %arg6[%c0_34, %c9] : memref<256x27xbf16, #tpu.memory_space<vmem>>, vector<256x3xbf16>
      tpu.vector_store %arg6[%c0_34, %c9], %43 {strides = array<i32>} : memref<256x27xbf16, #tpu.memory_space<vmem>>, vector<256x3xbf16>,
      %45 = arith.index_cast %28 : i32 to index
      %c4_35 = arith.constant 4 : index
      %c0_36 = arith.constant 0 : index
      %46 = vector.load %arg5[%45, %c4_35, %c0_36] : memref<24x24x3xbf16, #tpu.memory_space<vmem>>, vector<16x16x3xbf16>
      %47 = vector.shape_cast %46 : vector<16x16x3xbf16> to vector<256x3xbf16>
      %c0_37 = arith.constant 0 : index
      %c12 = arith.constant 12 : index
      %48 = vector.load %arg6[%c0_37, %c12] : memref<256x27xbf16, #tpu.memory_space<vmem>>, vector<256x3xbf16>
      tpu.vector_store %arg6[%c0_37, %c12], %47 {strides = array<i32>} : memref<256x27xbf16, #tpu.memory_space<vmem>>, vector<256x3xbf16>,
      %49 = arith.index_cast %28 : i32 to index
      %c5 = arith.constant 5 : index
      %c0_38 = arith.constant 0 : index
      %50 = vector.load %arg5[%49, %c5, %c0_38] : memref<24x24x3xbf16, #tpu.memory_space<vmem>>, vector<16x16x3xbf16>
      %51 = vector.shape_cast %50 : vector<16x16x3xbf16> to vector<256x3xbf16>
      %c0_39 = arith.constant 0 : index
      %c15 = arith.constant 15 : index
      %52 = vector.load %arg6[%c0_39, %c15] : memref<256x27xbf16, #tpu.memory_space<vmem>>, vector<256x3xbf16>
      tpu.vector_store %arg6[%c0_39, %c15], %51 {strides = array<i32>} : memref<256x27xbf16, #tpu.memory_space<vmem>>, vector<256x3xbf16>,
      %53 = arith.index_cast %28 : i32 to index
      %c6_40 = arith.constant 6 : index
      %c0_41 = arith.constant 0 : index
      %54 = vector.load %arg5[%53, %c6_40, %c0_41] : memref<24x24x3xbf16, #tpu.memory_space<vmem>>, vector<16x16x3xbf16>
      %55 = vector.shape_cast %54 : vector<16x16x3xbf16> to vector<256x3xbf16>
      %c0_42 = arith.constant 0 : index
      %c18 = arith.constant 18 : index
      %56 = vector.load %arg6[%c0_42, %c18] : memref<256x27xbf16, #tpu.memory_space<vmem>>, vector<256x3xbf16>
      tpu.vector_store %arg6[%c0_42, %c18], %55 {strides = array<i32>} : memref<256x27xbf16, #tpu.memory_space<vmem>>, vector<256x3xbf16>,
      %57 = arith.index_cast %28 : i32 to index
      %c7 = arith.constant 7 : index
      %c0_43 = arith.constant 0 : index
      %58 = vector.load %arg5[%57, %c7, %c0_43] : memref<24x24x3xbf16, #tpu.memory_space<vmem>>, vector<16x16x3xbf16>
      %59 = vector.shape_cast %58 : vector<16x16x3xbf16> to vector<256x3xbf16>
      %c0_44 = arith.constant 0 : index
      %c21 = arith.constant 21 : index
      %60 = vector.load %arg6[%c0_44, %c21] : memref<256x27xbf16, #tpu.memory_space<vmem>>, vector<256x3xbf16>
      tpu.vector_store %arg6[%c0_44, %c21], %59 {strides = array<i32>} : memref<256x27xbf16, #tpu.memory_space<vmem>>, vector<256x3xbf16>,
      %61 = arith.index_cast %28 : i32 to index
      %c8 = arith.constant 8 : index
      %c0_45 = arith.constant 0 : index
      %62 = vector.load %arg5[%61, %c8, %c0_45] : memref<24x24x3xbf16, #tpu.memory_space<vmem>>, vector<16x16x3xbf16>
      %63 = vector.shape_cast %62 : vector<16x16x3xbf16> to vector<256x3xbf16>
      %c0_46 = arith.constant 0 : index
      %c24 = arith.constant 24 : index
      %64 = vector.load %arg6[%c0_46, %c24] : memref<256x27xbf16, #tpu.memory_space<vmem>>, vector<256x3xbf16>
      tpu.vector_store %arg6[%c0_46, %c24], %63 {strides = array<i32>} : memref<256x27xbf16, #tpu.memory_space<vmem>>, vector<256x3xbf16>,
      %c0_47 = arith.constant 0 : index
      %c0_48 = arith.constant 0 : index
      %65 = vector.load %arg7[%c0_47, %c0_48] : memref<256x60xf32, #tpu.memory_space<vmem>>, vector<256x60xf32>
      %c0_49 = arith.constant 0 : index
      %c0_50 = arith.constant 0 : index
      %66 = vector.load %arg6[%c0_49, %c0_50] : memref<256x27xbf16, #tpu.memory_space<vmem>>, vector<256x27xbf16>
      %67 = arith.index_cast %28 : i32 to index
      %c0_51 = arith.constant 0 : index
      %c0_52 = arith.constant 0 : index
      %68 = vector.load %arg2[%67, %c0_51, %c0_52] : memref<9x27x60xbf16, #tpu.memory_space<vmem>>, vector<1x27x60xbf16>
      %69 = vector.shape_cast %68 : vector<1x27x60xbf16> to vector<27x60xbf16>
      %cst_53 = arith.constant dense<0.000000e+00> : vector<256x60xf32>
      %70 = tpu.matmul %66, %69, %cst_53 {dimension_numbers = #tpu.dot_dimension_numbers<[1], [0], [0], [1], [0, 0, 1, 1], [], []>} : vector<256x27xbf16>, vector<27x60xbf16>, vector<256x60xf32> -> vector<256x60xf32>
      %71 = arith.addf %65, %70 : vector<256x60xf32>
      %c0_54 = arith.constant 0 : index
      %c0_55 = arith.constant 0 : index
      %72 = vector.load %arg7[%c0_54, %c0_55] : memref<256x60xf32, #tpu.memory_space<vmem>>, vector<256x60xf32>
      tpu.vector_store %arg7[%c0_54, %c0_55], %71 {strides = array<i32>} : memref<256x60xf32, #tpu.memory_space<vmem>>, vector<256x60xf32>,
    }
    %c9_i32_11 = arith.constant 9 : i32
    %c0_12 = arith.constant 0 : index
    %c0_13 = arith.constant 0 : index
    %8 = vector.load %arg7[%c0_12, %c0_13] : memref<256x60xf32, #tpu.memory_space<vmem>>, vector<256x60xf32>
    %c0_14 = arith.constant 0 : index
    %c0_15 = arith.constant 0 : index
    %9 = vector.load %arg3[%c0_14, %c0_15] : memref<1x60xf32, #tpu.memory_space<vmem>>, vector<1x60xf32>
    %10 = vector.broadcast %9 : vector<1x60xf32> to vector<256x60xf32>
    %11 = arith.addf %8, %10 : vector<256x60xf32>
    %cst_16 = arith.constant 0.000000e+00 : f32
    %12 = vector.broadcast %cst_16 : f32 to vector<256x60xf32>
    %13 = arith.maximumf %11, %12 : vector<256x60xf32>
    %14 = arith.truncf %13 : vector<256x60xf32> to vector<256x60xbf16>
    %15 = vector.shape_cast %14 : vector<256x60xbf16> to vector<16x16x60xbf16>
    %16 = vector.shape_cast %15 : vector<16x16x60xbf16> to vector<8x2x16x60xbf16>
    %17 = vector.extract_strided_slice %16 {offsets = [0, 0, 0, 0], sizes = [8, 1, 16, 60], strides = [1, 1, 1, 1]} : vector<8x2x16x60xbf16> to vector<8x1x16x60xbf16>
    %18 = vector.shape_cast %17 : vector<8x1x16x60xbf16> to vector<8x16x60xbf16>
    %19 = vector.extract_strided_slice %16 {offsets = [0, 1, 0, 0], sizes = [8, 1, 16, 60], strides = [1, 1, 1, 1]} : vector<8x2x16x60xbf16> to vector<8x1x16x60xbf16>
    %20 = vector.shape_cast %19 : vector<8x1x16x60xbf16> to vector<8x16x60xbf16>
    %21 = arith.maximumf %18, %20 : vector<8x16x60xbf16>
    %22 = vector.shape_cast %21 : vector<8x16x60xbf16> to vector<8x8x2x60xbf16>
    %cst_17 = arith.constant dense<0xFF80> : vector<8x8x60xbf16>
    %23 = vector.multi_reduction <maximumf>, %22, %cst_17 [2] : vector<8x8x2x60xbf16> to vector<8x8x60xbf16>
    %c0_18 = arith.constant 0 : index
    %c0_19 = arith.constant 0 : index
    %c0_20 = arith.constant 0 : index
    %c0_21 = arith.constant 0 : index
    %24 = vector.load %arg4[%c0_18, %c0_19, %c0_20, %c0_21] : memref<1x8x8x60xbf16, #tpu.memory_space<vmem>>, vector<1x8x8x60xbf16>
    %25 = vector.shape_cast %24 : vector<1x8x8x60xbf16> to vector<8x8x60xbf16>
    %26 = vector.shape_cast %23 : vector<8x8x60xbf16> to vector<1x8x8x60xbf16>
    tpu.vector_store %arg4[%c0_18, %c0_19, %c0_20, %c0_21], %26 {strides = array<i32>} : memref<1x8x8x60xbf16, #tpu.memory_space<vmem>>, vector<1x8x8x60xbf16>,
    return
  }
  func.func @transform_0(%arg0: i32) -> (i32, i32, i32, i32) {
    %c0_i32 = arith.constant 0 : i32
    %c0_i32_0 = arith.constant 0 : i32
    %c0_i32_1 = arith.constant 0 : i32
    %c0_i32_2 = arith.constant 0 : i32
    return %arg0, %c0_i32, %c0_i32_0, %c0_i32_1 : i32, i32, i32, i32
  }
  func.func @transform_1(%arg0: i32) -> (i32, i32, i32) {
    %c0_i32 = arith.constant 0 : i32
    %c0_i32_0 = arith.constant 0 : i32
    %c0_i32_1 = arith.constant 0 : i32
    %c0_i32_2 = arith.constant 0 : i32
    return %c0_i32, %c0_i32_0, %c0_i32_1 : i32, i32, i32
  }
  func.func @transform_2(%arg0: i32) -> (i32, i32) {
    %c0_i32 = arith.constant 0 : i32
    %c0_i32_0 = arith.constant 0 : i32
    %c0_i32_1 = arith.constant 0 : i32
    return %c0_i32, %c0_i32_0 : i32, i32
  }
  func.func @transform_3(%arg0: i32) -> (i32, i32, i32, i32) {
    %c0_i32 = arith.constant 0 : i32
    %c0_i32_0 = arith.constant 0 : i32
    %c0_i32_1 = arith.constant 0 : i32
    %c0_i32_2 = arith.constant 0 : i32
    return %arg0, %c0_i32, %c0_i32_0, %c0_i32_1 : i32, i32, i32, i32
  }
}

module attributes {stable_mosaic.version = 11 : i64} {
  func.func @_conv_conv_fuse_kernel(%arg0: i32, %arg1: memref<1x4x4x128xbf16, #tpu.memory_space<vmem>>, %arg2: memref<7x896x60xbf16, #tpu.memory_space<vmem>>, %arg3: memref<1x60xf32, #tpu.memory_space<vmem>>, %arg4: memref<7x420x30xbf16, #tpu.memory_space<vmem>>, %arg5: memref<1x30xf32, #tpu.memory_space<vmem>>, %arg6: memref<1x1x30xf32, #tpu.memory_space<vmem>>, %arg7: memref<1x1xf32, #tpu.memory_space<vmem>>, %arg8: memref<1x4x4xf32, #tpu.memory_space<vmem>>, %arg9: memref<10x10x128xbf16, #tpu.memory_space<vmem>>, %arg10: memref<16x896xbf16, #tpu.memory_space<vmem>>, %arg11: memref<16x60xf32, #tpu.memory_space<vmem>>, %arg12: memref<10x10x60xbf16, #tpu.memory_space<vmem>>, %arg13: memref<16x420xbf16, #tpu.memory_space<vmem>>, %arg14: memref<16x30xf32, #tpu.memory_space<vmem>>) attributes {dimension_semantics = [#tpu.dimension_semantics<parallel>], iteration_bounds = array<i64: 2>, scalar_prefetch = 0 : i64, scratch_operands = 6 : i64, tpu.core_type = #tpu.core_type<tc>, window_params = [{transform_indices = @transform_0, window_bounds = array<i64: 1, 4, 4, 128>}, {pipeline_mode = #tpu.pipeline_mode<synchronous>, transform_indices = @transform_1, window_bounds = array<i64: 7, 896, 60>}, {pipeline_mode = #tpu.pipeline_mode<synchronous>, transform_indices = @transform_2, window_bounds = array<i64: 1, 60>}, {pipeline_mode = #tpu.pipeline_mode<synchronous>, transform_indices = @transform_3, window_bounds = array<i64: 7, 420, 30>}, {pipeline_mode = #tpu.pipeline_mode<synchronous>, transform_indices = @transform_4, window_bounds = array<i64: 1, 30>}, {pipeline_mode = #tpu.pipeline_mode<synchronous>, transform_indices = @transform_5, window_bounds = array<i64: 1, 1, 30>}, {pipeline_mode = #tpu.pipeline_mode<synchronous>, transform_indices = @transform_6, window_bounds = array<i64: 1, 1>}, {transform_indices = @transform_7, window_bounds = array<i64: 1, 4, 4>}]} {
    %c0 = arith.constant 0 : index
    %c0_0 = arith.constant 0 : index
    %c0_1 = arith.constant 0 : index
    %c0_2 = arith.constant 0 : index
    %0 = vector.load %arg1[%c0, %c0_0, %c0_1, %c0_2] : memref<1x4x4x128xbf16, #tpu.memory_space<vmem>>, vector<1x4x4x128xbf16>
    %1 = vector.shape_cast %0 : vector<1x4x4x128xbf16> to vector<4x4x128xbf16>
    %cst = arith.constant 0.000000e+00 : bf16
    %2 = vector.broadcast %cst : bf16 to vector<10x10x128xbf16>
    %c0_3 = arith.constant 0 : index
    %c0_4 = arith.constant 0 : index
    %c0_5 = arith.constant 0 : index
    %3 = vector.load %arg9[%c0_3, %c0_4, %c0_5] : memref<10x10x128xbf16, #tpu.memory_space<vmem>>, vector<10x10x128xbf16>
    tpu.vector_store %arg9[%c0_3, %c0_4, %c0_5], %2 {strides = array<i32>} : memref<10x10x128xbf16, #tpu.memory_space<vmem>>, vector<10x10x128xbf16>,
    %c3 = arith.constant 3 : index
    %c3_6 = arith.constant 3 : index
    %c0_7 = arith.constant 0 : index
    %4 = vector.load %arg9[%c3, %c3_6, %c0_7] : memref<10x10x128xbf16, #tpu.memory_space<vmem>>, vector<4x4x128xbf16>
    tpu.vector_store %arg9[%c3, %c3_6, %c0_7], %1 {strides = array<i32>} : memref<10x10x128xbf16, #tpu.memory_space<vmem>>, vector<4x4x128xbf16>,
    %cst_8 = arith.constant 0.000000e+00 : f32
    %5 = vector.broadcast %cst_8 : f32 to vector<16x60xf32>
    %c0_9 = arith.constant 0 : index
    %c0_10 = arith.constant 0 : index
    %6 = vector.load %arg11[%c0_9, %c0_10] : memref<16x60xf32, #tpu.memory_space<vmem>>, vector<16x60xf32>
    tpu.vector_store %arg11[%c0_9, %c0_10], %5 {strides = array<i32>} : memref<16x60xf32, #tpu.memory_space<vmem>>, vector<16x60xf32>,
    %c0_i32 = arith.constant 0 : i32
    %c7_i32 = arith.constant 7 : i32
    %7 = arith.addi %c0_i32, %c7_i32 : i32
    %c1_i32 = arith.constant 1 : i32
    scf.for %arg15 = %c0_i32 to %7 step %c1_i32  : i32 {
      %c1_i32_46 = arith.constant 1 : i32
      %41 = arith.muli %arg15, %c1_i32_46 : i32
      %c0_i32_47 = arith.constant 0 : i32
      %42 = arith.addi %c0_i32_47, %41 : i32
      %43 = arith.index_cast %42 : i32 to index
      %c0_48 = arith.constant 0 : index
      %c0_49 = arith.constant 0 : index
      %44 = vector.load %arg9[%43, %c0_48, %c0_49] : memref<10x10x128xbf16, #tpu.memory_space<vmem>>, vector<4x4x128xbf16>
      %45 = vector.shape_cast %44 : vector<4x4x128xbf16> to vector<16x128xbf16>
      %c0_50 = arith.constant 0 : index
      %c0_51 = arith.constant 0 : index
      %46 = vector.load %arg10[%c0_50, %c0_51] : memref<16x896xbf16, #tpu.memory_space<vmem>>, vector<16x128xbf16>
      tpu.vector_store %arg10[%c0_50, %c0_51], %45 {strides = array<i32>} : memref<16x896xbf16, #tpu.memory_space<vmem>>, vector<16x128xbf16>,
      %47 = arith.index_cast %42 : i32 to index
      %c1 = arith.constant 1 : index
      %c0_52 = arith.constant 0 : index
      %48 = vector.load %arg9[%47, %c1, %c0_52] : memref<10x10x128xbf16, #tpu.memory_space<vmem>>, vector<4x4x128xbf16>
      %49 = vector.shape_cast %48 : vector<4x4x128xbf16> to vector<16x128xbf16>
      %c0_53 = arith.constant 0 : index
      %c128 = arith.constant 128 : index
      %50 = vector.load %arg10[%c0_53, %c128] : memref<16x896xbf16, #tpu.memory_space<vmem>>, vector<16x128xbf16>
      tpu.vector_store %arg10[%c0_53, %c128], %49 {strides = array<i32>} : memref<16x896xbf16, #tpu.memory_space<vmem>>, vector<16x128xbf16>,
      %51 = arith.index_cast %42 : i32 to index
      %c2 = arith.constant 2 : index
      %c0_54 = arith.constant 0 : index
      %52 = vector.load %arg9[%51, %c2, %c0_54] : memref<10x10x128xbf16, #tpu.memory_space<vmem>>, vector<4x4x128xbf16>
      %53 = vector.shape_cast %52 : vector<4x4x128xbf16> to vector<16x128xbf16>
      %c0_55 = arith.constant 0 : index
      %c256 = arith.constant 256 : index
      %54 = vector.load %arg10[%c0_55, %c256] : memref<16x896xbf16, #tpu.memory_space<vmem>>, vector<16x128xbf16>
      tpu.vector_store %arg10[%c0_55, %c256], %53 {strides = array<i32>} : memref<16x896xbf16, #tpu.memory_space<vmem>>, vector<16x128xbf16>,
      %55 = arith.index_cast %42 : i32 to index
      %c3_56 = arith.constant 3 : index
      %c0_57 = arith.constant 0 : index
      %56 = vector.load %arg9[%55, %c3_56, %c0_57] : memref<10x10x128xbf16, #tpu.memory_space<vmem>>, vector<4x4x128xbf16>
      %57 = vector.shape_cast %56 : vector<4x4x128xbf16> to vector<16x128xbf16>
      %c0_58 = arith.constant 0 : index
      %c384 = arith.constant 384 : index
      %58 = vector.load %arg10[%c0_58, %c384] : memref<16x896xbf16, #tpu.memory_space<vmem>>, vector<16x128xbf16>
      tpu.vector_store %arg10[%c0_58, %c384], %57 {strides = array<i32>} : memref<16x896xbf16, #tpu.memory_space<vmem>>, vector<16x128xbf16>,
      %59 = arith.index_cast %42 : i32 to index
      %c4 = arith.constant 4 : index
      %c0_59 = arith.constant 0 : index
      %60 = vector.load %arg9[%59, %c4, %c0_59] : memref<10x10x128xbf16, #tpu.memory_space<vmem>>, vector<4x4x128xbf16>
      %61 = vector.shape_cast %60 : vector<4x4x128xbf16> to vector<16x128xbf16>
      %c0_60 = arith.constant 0 : index
      %c512 = arith.constant 512 : index
      %62 = vector.load %arg10[%c0_60, %c512] : memref<16x896xbf16, #tpu.memory_space<vmem>>, vector<16x128xbf16>
      tpu.vector_store %arg10[%c0_60, %c512], %61 {strides = array<i32>} : memref<16x896xbf16, #tpu.memory_space<vmem>>, vector<16x128xbf16>,
      %63 = arith.index_cast %42 : i32 to index
      %c5 = arith.constant 5 : index
      %c0_61 = arith.constant 0 : index
      %64 = vector.load %arg9[%63, %c5, %c0_61] : memref<10x10x128xbf16, #tpu.memory_space<vmem>>, vector<4x4x128xbf16>
      %65 = vector.shape_cast %64 : vector<4x4x128xbf16> to vector<16x128xbf16>
      %c0_62 = arith.constant 0 : index
      %c640 = arith.constant 640 : index
      %66 = vector.load %arg10[%c0_62, %c640] : memref<16x896xbf16, #tpu.memory_space<vmem>>, vector<16x128xbf16>
      tpu.vector_store %arg10[%c0_62, %c640], %65 {strides = array<i32>} : memref<16x896xbf16, #tpu.memory_space<vmem>>, vector<16x128xbf16>,
      %67 = arith.index_cast %42 : i32 to index
      %c6 = arith.constant 6 : index
      %c0_63 = arith.constant 0 : index
      %68 = vector.load %arg9[%67, %c6, %c0_63] : memref<10x10x128xbf16, #tpu.memory_space<vmem>>, vector<4x4x128xbf16>
      %69 = vector.shape_cast %68 : vector<4x4x128xbf16> to vector<16x128xbf16>
      %c0_64 = arith.constant 0 : index
      %c768 = arith.constant 768 : index
      %70 = vector.load %arg10[%c0_64, %c768] : memref<16x896xbf16, #tpu.memory_space<vmem>>, vector<16x128xbf16>
      tpu.vector_store %arg10[%c0_64, %c768], %69 {strides = array<i32>} : memref<16x896xbf16, #tpu.memory_space<vmem>>, vector<16x128xbf16>,
      %c0_65 = arith.constant 0 : index
      %c0_66 = arith.constant 0 : index
      %71 = vector.load %arg11[%c0_65, %c0_66] : memref<16x60xf32, #tpu.memory_space<vmem>>, vector<16x60xf32>
      %c0_67 = arith.constant 0 : index
      %c0_68 = arith.constant 0 : index
      %72 = vector.load %arg10[%c0_67, %c0_68] : memref<16x896xbf16, #tpu.memory_space<vmem>>, vector<16x896xbf16>
      %73 = arith.index_cast %42 : i32 to index
      %c0_69 = arith.constant 0 : index
      %c0_70 = arith.constant 0 : index
      %74 = vector.load %arg2[%73, %c0_69, %c0_70] : memref<7x896x60xbf16, #tpu.memory_space<vmem>>, vector<1x896x60xbf16>
      %75 = vector.shape_cast %74 : vector<1x896x60xbf16> to vector<896x60xbf16>
      %cst_71 = arith.constant dense<0.000000e+00> : vector<16x60xf32>
      %76 = tpu.matmul %72, %75, %cst_71 {dimension_numbers = #tpu.dot_dimension_numbers<[1], [0], [0], [1], [0, 0, 1, 1], [], []>} : vector<16x896xbf16>, vector<896x60xbf16>, vector<16x60xf32> -> vector<16x60xf32>
      %77 = arith.addf %71, %76 : vector<16x60xf32>
      %c0_72 = arith.constant 0 : index
      %c0_73 = arith.constant 0 : index
      %78 = vector.load %arg11[%c0_72, %c0_73] : memref<16x60xf32, #tpu.memory_space<vmem>>, vector<16x60xf32>
      tpu.vector_store %arg11[%c0_72, %c0_73], %77 {strides = array<i32>} : memref<16x60xf32, #tpu.memory_space<vmem>>, vector<16x60xf32>,
    }
    %c7_i32_11 = arith.constant 7 : i32
    %c0_12 = arith.constant 0 : index
    %c0_13 = arith.constant 0 : index
    %8 = vector.load %arg11[%c0_12, %c0_13] : memref<16x60xf32, #tpu.memory_space<vmem>>, vector<16x60xf32>
    %c0_14 = arith.constant 0 : index
    %c0_15 = arith.constant 0 : index
    %9 = vector.load %arg3[%c0_14, %c0_15] : memref<1x60xf32, #tpu.memory_space<vmem>>, vector<1x60xf32>
    %10 = vector.broadcast %9 : vector<1x60xf32> to vector<16x60xf32>
    %11 = arith.addf %8, %10 : vector<16x60xf32>
    %cst_16 = arith.constant 0.000000e+00 : f32
    %12 = vector.broadcast %cst_16 : f32 to vector<16x60xf32>
    %13 = arith.maximumf %11, %12 : vector<16x60xf32>
    %14 = arith.truncf %13 : vector<16x60xf32> to vector<16x60xbf16>
    %15 = vector.shape_cast %14 : vector<16x60xbf16> to vector<4x4x60xbf16>
    %cst_17 = arith.constant 0.000000e+00 : bf16
    %16 = vector.broadcast %cst_17 : bf16 to vector<10x10x60xbf16>
    %c0_18 = arith.constant 0 : index
    %c0_19 = arith.constant 0 : index
    %c0_20 = arith.constant 0 : index
    %17 = vector.load %arg12[%c0_18, %c0_19, %c0_20] : memref<10x10x60xbf16, #tpu.memory_space<vmem>>, vector<10x10x60xbf16>
    tpu.vector_store %arg12[%c0_18, %c0_19, %c0_20], %16 {strides = array<i32>} : memref<10x10x60xbf16, #tpu.memory_space<vmem>>, vector<10x10x60xbf16>,
    %c3_21 = arith.constant 3 : index
    %c3_22 = arith.constant 3 : index
    %c0_23 = arith.constant 0 : index
    %18 = vector.load %arg12[%c3_21, %c3_22, %c0_23] : memref<10x10x60xbf16, #tpu.memory_space<vmem>>, vector<4x4x60xbf16>
    tpu.vector_store %arg12[%c3_21, %c3_22, %c0_23], %15 {strides = array<i32>} : memref<10x10x60xbf16, #tpu.memory_space<vmem>>, vector<4x4x60xbf16>,
    %cst_24 = arith.constant 0.000000e+00 : f32
    %19 = vector.broadcast %cst_24 : f32 to vector<16x30xf32>
    %c0_25 = arith.constant 0 : index
    %c0_26 = arith.constant 0 : index
    %20 = vector.load %arg14[%c0_25, %c0_26] : memref<16x30xf32, #tpu.memory_space<vmem>>, vector<16x30xf32>
    tpu.vector_store %arg14[%c0_25, %c0_26], %19 {strides = array<i32>} : memref<16x30xf32, #tpu.memory_space<vmem>>, vector<16x30xf32>,
    %c0_i32_27 = arith.constant 0 : i32
    %c7_i32_28 = arith.constant 7 : i32
    %21 = arith.addi %c0_i32_27, %c7_i32_28 : i32
    %c1_i32_29 = arith.constant 1 : i32
    scf.for %arg15 = %c0_i32_27 to %21 step %c1_i32_29  : i32 {
      %c1_i32_46 = arith.constant 1 : i32
      %41 = arith.muli %arg15, %c1_i32_46 : i32
      %c0_i32_47 = arith.constant 0 : i32
      %42 = arith.addi %c0_i32_47, %41 : i32
      %43 = arith.index_cast %42 : i32 to index
      %c0_48 = arith.constant 0 : index
      %c0_49 = arith.constant 0 : index
      %44 = vector.load %arg12[%43, %c0_48, %c0_49] : memref<10x10x60xbf16, #tpu.memory_space<vmem>>, vector<4x4x60xbf16>
      %45 = vector.shape_cast %44 : vector<4x4x60xbf16> to vector<16x60xbf16>
      %c0_50 = arith.constant 0 : index
      %c0_51 = arith.constant 0 : index
      %46 = vector.load %arg13[%c0_50, %c0_51] : memref<16x420xbf16, #tpu.memory_space<vmem>>, vector<16x60xbf16>
      tpu.vector_store %arg13[%c0_50, %c0_51], %45 {strides = array<i32>} : memref<16x420xbf16, #tpu.memory_space<vmem>>, vector<16x60xbf16>,
      %47 = arith.index_cast %42 : i32 to index
      %c1 = arith.constant 1 : index
      %c0_52 = arith.constant 0 : index
      %48 = vector.load %arg12[%47, %c1, %c0_52] : memref<10x10x60xbf16, #tpu.memory_space<vmem>>, vector<4x4x60xbf16>
      %49 = vector.shape_cast %48 : vector<4x4x60xbf16> to vector<16x60xbf16>
      %c0_53 = arith.constant 0 : index
      %c60 = arith.constant 60 : index
      %50 = vector.load %arg13[%c0_53, %c60] : memref<16x420xbf16, #tpu.memory_space<vmem>>, vector<16x60xbf16>
      tpu.vector_store %arg13[%c0_53, %c60], %49 {strides = array<i32>} : memref<16x420xbf16, #tpu.memory_space<vmem>>, vector<16x60xbf16>,
      %51 = arith.index_cast %42 : i32 to index
      %c2 = arith.constant 2 : index
      %c0_54 = arith.constant 0 : index
      %52 = vector.load %arg12[%51, %c2, %c0_54] : memref<10x10x60xbf16, #tpu.memory_space<vmem>>, vector<4x4x60xbf16>
      %53 = vector.shape_cast %52 : vector<4x4x60xbf16> to vector<16x60xbf16>
      %c0_55 = arith.constant 0 : index
      %c120 = arith.constant 120 : index
      %54 = vector.load %arg13[%c0_55, %c120] : memref<16x420xbf16, #tpu.memory_space<vmem>>, vector<16x60xbf16>
      tpu.vector_store %arg13[%c0_55, %c120], %53 {strides = array<i32>} : memref<16x420xbf16, #tpu.memory_space<vmem>>, vector<16x60xbf16>,
      %55 = arith.index_cast %42 : i32 to index
      %c3_56 = arith.constant 3 : index
      %c0_57 = arith.constant 0 : index
      %56 = vector.load %arg12[%55, %c3_56, %c0_57] : memref<10x10x60xbf16, #tpu.memory_space<vmem>>, vector<4x4x60xbf16>
      %57 = vector.shape_cast %56 : vector<4x4x60xbf16> to vector<16x60xbf16>
      %c0_58 = arith.constant 0 : index
      %c180 = arith.constant 180 : index
      %58 = vector.load %arg13[%c0_58, %c180] : memref<16x420xbf16, #tpu.memory_space<vmem>>, vector<16x60xbf16>
      tpu.vector_store %arg13[%c0_58, %c180], %57 {strides = array<i32>} : memref<16x420xbf16, #tpu.memory_space<vmem>>, vector<16x60xbf16>,
      %59 = arith.index_cast %42 : i32 to index
      %c4 = arith.constant 4 : index
      %c0_59 = arith.constant 0 : index
      %60 = vector.load %arg12[%59, %c4, %c0_59] : memref<10x10x60xbf16, #tpu.memory_space<vmem>>, vector<4x4x60xbf16>
      %61 = vector.shape_cast %60 : vector<4x4x60xbf16> to vector<16x60xbf16>
      %c0_60 = arith.constant 0 : index
      %c240 = arith.constant 240 : index
      %62 = vector.load %arg13[%c0_60, %c240] : memref<16x420xbf16, #tpu.memory_space<vmem>>, vector<16x60xbf16>
      tpu.vector_store %arg13[%c0_60, %c240], %61 {strides = array<i32>} : memref<16x420xbf16, #tpu.memory_space<vmem>>, vector<16x60xbf16>,
      %63 = arith.index_cast %42 : i32 to index
      %c5 = arith.constant 5 : index
      %c0_61 = arith.constant 0 : index
      %64 = vector.load %arg12[%63, %c5, %c0_61] : memref<10x10x60xbf16, #tpu.memory_space<vmem>>, vector<4x4x60xbf16>
      %65 = vector.shape_cast %64 : vector<4x4x60xbf16> to vector<16x60xbf16>
      %c0_62 = arith.constant 0 : index
      %c300 = arith.constant 300 : index
      %66 = vector.load %arg13[%c0_62, %c300] : memref<16x420xbf16, #tpu.memory_space<vmem>>, vector<16x60xbf16>
      tpu.vector_store %arg13[%c0_62, %c300], %65 {strides = array<i32>} : memref<16x420xbf16, #tpu.memory_space<vmem>>, vector<16x60xbf16>,
      %67 = arith.index_cast %42 : i32 to index
      %c6 = arith.constant 6 : index
      %c0_63 = arith.constant 0 : index
      %68 = vector.load %arg12[%67, %c6, %c0_63] : memref<10x10x60xbf16, #tpu.memory_space<vmem>>, vector<4x4x60xbf16>
      %69 = vector.shape_cast %68 : vector<4x4x60xbf16> to vector<16x60xbf16>
      %c0_64 = arith.constant 0 : index
      %c360 = arith.constant 360 : index
      %70 = vector.load %arg13[%c0_64, %c360] : memref<16x420xbf16, #tpu.memory_space<vmem>>, vector<16x60xbf16>
      tpu.vector_store %arg13[%c0_64, %c360], %69 {strides = array<i32>} : memref<16x420xbf16, #tpu.memory_space<vmem>>, vector<16x60xbf16>,
      %c0_65 = arith.constant 0 : index
      %c0_66 = arith.constant 0 : index
      %71 = vector.load %arg14[%c0_65, %c0_66] : memref<16x30xf32, #tpu.memory_space<vmem>>, vector<16x30xf32>
      %c0_67 = arith.constant 0 : index
      %c0_68 = arith.constant 0 : index
      %72 = vector.load %arg13[%c0_67, %c0_68] : memref<16x420xbf16, #tpu.memory_space<vmem>>, vector<16x420xbf16>
      %73 = arith.index_cast %42 : i32 to index
      %c0_69 = arith.constant 0 : index
      %c0_70 = arith.constant 0 : index
      %74 = vector.load %arg4[%73, %c0_69, %c0_70] : memref<7x420x30xbf16, #tpu.memory_space<vmem>>, vector<1x420x30xbf16>
      %75 = vector.shape_cast %74 : vector<1x420x30xbf16> to vector<420x30xbf16>
      %cst_71 = arith.constant dense<0.000000e+00> : vector<16x30xf32>
      %76 = tpu.matmul %72, %75, %cst_71 {dimension_numbers = #tpu.dot_dimension_numbers<[1], [0], [0], [1], [0, 0, 1, 1], [], []>} : vector<16x420xbf16>, vector<420x30xbf16>, vector<16x30xf32> -> vector<16x30xf32>
      %77 = arith.addf %71, %76 : vector<16x30xf32>
      %c0_72 = arith.constant 0 : index
      %c0_73 = arith.constant 0 : index
      %78 = vector.load %arg14[%c0_72, %c0_73] : memref<16x30xf32, #tpu.memory_space<vmem>>, vector<16x30xf32>
      tpu.vector_store %arg14[%c0_72, %c0_73], %77 {strides = array<i32>} : memref<16x30xf32, #tpu.memory_space<vmem>>, vector<16x30xf32>,
    }
    %c7_i32_30 = arith.constant 7 : i32
    %c0_31 = arith.constant 0 : index
    %c0_32 = arith.constant 0 : index
    %22 = vector.load %arg14[%c0_31, %c0_32] : memref<16x30xf32, #tpu.memory_space<vmem>>, vector<16x30xf32>
    %c0_33 = arith.constant 0 : index
    %c0_34 = arith.constant 0 : index
    %23 = vector.load %arg5[%c0_33, %c0_34] : memref<1x30xf32, #tpu.memory_space<vmem>>, vector<1x30xf32>
    %24 = vector.broadcast %23 : vector<1x30xf32> to vector<16x30xf32>
    %25 = arith.addf %22, %24 : vector<16x30xf32>
    %cst_35 = arith.constant 0.000000e+00 : f32
    %26 = vector.broadcast %cst_35 : f32 to vector<16x30xf32>
    %27 = arith.maximumf %25, %26 : vector<16x30xf32>
    %28 = vector.shape_cast %27 : vector<16x30xf32> to vector<4x4x30xf32>
    %c0_36 = arith.constant 0 : index
    %c0_37 = arith.constant 0 : index
    %c0_38 = arith.constant 0 : index
    %29 = vector.load %arg6[%c0_36, %c0_37, %c0_38] : memref<1x1x30xf32, #tpu.memory_space<vmem>>, vector<1x1x30xf32>
    %30 = vector.broadcast %29 : vector<1x1x30xf32> to vector<4x4x30xf32>
    %31 = arith.mulf %28, %30 : vector<4x4x30xf32>
    %cst_39 = arith.constant dense<0.000000e+00> : vector<4x4xf32>
    %32 = vector.multi_reduction <add>, %31, %cst_39 [2] : vector<4x4x30xf32> to vector<4x4xf32>
    %c0_40 = arith.constant 0 : index
    %c0_41 = arith.constant 0 : index
    %33 = vector.load %arg7[%c0_40, %c0_41] : memref<1x1xf32, #tpu.memory_space<vmem>>, vector<1x1xf32>
    %34 = vector.broadcast %33 : vector<1x1xf32> to vector<4x4xf32>
    %35 = arith.addf %32, %34 : vector<4x4xf32>
    %cst_42 = arith.constant 0.000000e+00 : f32
    %36 = vector.broadcast %cst_42 : f32 to vector<4x4xf32>
    %37 = arith.maximumf %35, %36 : vector<4x4xf32>
    %c0_43 = arith.constant 0 : index
    %c0_44 = arith.constant 0 : index
    %c0_45 = arith.constant 0 : index
    %38 = vector.load %arg8[%c0_43, %c0_44, %c0_45] : memref<1x4x4xf32, #tpu.memory_space<vmem>>, vector<1x4x4xf32>
    %39 = vector.shape_cast %38 : vector<1x4x4xf32> to vector<4x4xf32>
    %40 = vector.shape_cast %37 : vector<4x4xf32> to vector<1x4x4xf32>
    tpu.vector_store %arg8[%c0_43, %c0_44, %c0_45], %40 {strides = array<i32>} : memref<1x4x4xf32, #tpu.memory_space<vmem>>, vector<1x4x4xf32>,
    return
  }
  func.func @transform_0(%arg0: i32) -> (i32, i32, i32, i32) {
    %c0_i32 = arith.constant 0 : i32
    %c0_i32_0 = arith.constant 0 : i32
    %c0_i32_1 = arith.constant 0 : i32
    %c0_i32_2 = arith.constant 0 : i32
    return %arg0, %c0_i32, %c0_i32_0, %c0_i32_1 : i32, i32, i32, i32
  }
  func.func @transform_1(%arg0: i32) -> (i32, i32, i32) {
    %c0_i32 = arith.constant 0 : i32
    %c0_i32_0 = arith.constant 0 : i32
    %c0_i32_1 = arith.constant 0 : i32
    %c0_i32_2 = arith.constant 0 : i32
    return %c0_i32, %c0_i32_0, %c0_i32_1 : i32, i32, i32
  }
  func.func @transform_2(%arg0: i32) -> (i32, i32) {
    %c0_i32 = arith.constant 0 : i32
    %c0_i32_0 = arith.constant 0 : i32
    %c0_i32_1 = arith.constant 0 : i32
    return %c0_i32, %c0_i32_0 : i32, i32
  }
  func.func @transform_3(%arg0: i32) -> (i32, i32, i32) {
    %c0_i32 = arith.constant 0 : i32
    %c0_i32_0 = arith.constant 0 : i32
    %c0_i32_1 = arith.constant 0 : i32
    %c0_i32_2 = arith.constant 0 : i32
    return %c0_i32, %c0_i32_0, %c0_i32_1 : i32, i32, i32
  }
  func.func @transform_4(%arg0: i32) -> (i32, i32) {
    %c0_i32 = arith.constant 0 : i32
    %c0_i32_0 = arith.constant 0 : i32
    %c0_i32_1 = arith.constant 0 : i32
    return %c0_i32, %c0_i32_0 : i32, i32
  }
  func.func @transform_5(%arg0: i32) -> (i32, i32, i32) {
    %c0_i32 = arith.constant 0 : i32
    %c0_i32_0 = arith.constant 0 : i32
    %c0_i32_1 = arith.constant 0 : i32
    %c0_i32_2 = arith.constant 0 : i32
    return %c0_i32, %c0_i32_0, %c0_i32_1 : i32, i32, i32
  }
  func.func @transform_6(%arg0: i32) -> (i32, i32) {
    %c0_i32 = arith.constant 0 : i32
    %c0_i32_0 = arith.constant 0 : i32
    %c0_i32_1 = arith.constant 0 : i32
    return %c0_i32, %c0_i32_0 : i32, i32
  }
  func.func @transform_7(%arg0: i32) -> (i32, i32, i32) {
    %c0_i32 = arith.constant 0 : i32
    %c0_i32_0 = arith.constant 0 : i32
    %c0_i32_1 = arith.constant 0 : i32
    return %arg0, %c0_i32, %c0_i32_0 : i32, i32, i32
  }
}

module attributes {stable_mosaic.version = 11 : i64} {
  func.func @_conv_relu_pool_kernel(%arg0: i32, %arg1: memref<1x8x8x60xbf16, #tpu.memory_space<vmem>>, %arg2: memref<7x420x128xbf16, #tpu.memory_space<vmem>>, %arg3: memref<1x128xf32, #tpu.memory_space<vmem>>, %arg4: memref<1x4x4x128xbf16, #tpu.memory_space<vmem>>, %arg5: memref<14x14x60xbf16, #tpu.memory_space<vmem>>, %arg6: memref<64x420xbf16, #tpu.memory_space<vmem>>, %arg7: memref<64x128xf32, #tpu.memory_space<vmem>>) attributes {dimension_semantics = [#tpu.dimension_semantics<parallel>], iteration_bounds = array<i64: 2>, scalar_prefetch = 0 : i64, scratch_operands = 3 : i64, tpu.core_type = #tpu.core_type<tc>, window_params = [{transform_indices = @transform_0, window_bounds = array<i64: 1, 8, 8, 60>}, {pipeline_mode = #tpu.pipeline_mode<synchronous>, transform_indices = @transform_1, window_bounds = array<i64: 7, 420, 128>}, {pipeline_mode = #tpu.pipeline_mode<synchronous>, transform_indices = @transform_2, window_bounds = array<i64: 1, 128>}, {transform_indices = @transform_3, window_bounds = array<i64: 1, 4, 4, 128>}]} {
    %c0 = arith.constant 0 : index
    %c0_0 = arith.constant 0 : index
    %c0_1 = arith.constant 0 : index
    %c0_2 = arith.constant 0 : index
    %0 = vector.load %arg1[%c0, %c0_0, %c0_1, %c0_2] : memref<1x8x8x60xbf16, #tpu.memory_space<vmem>>, vector<1x8x8x60xbf16>
    %1 = vector.shape_cast %0 : vector<1x8x8x60xbf16> to vector<8x8x60xbf16>
    %cst = arith.constant 0.000000e+00 : bf16
    %2 = vector.broadcast %cst : bf16 to vector<14x14x60xbf16>
    %c0_3 = arith.constant 0 : index
    %c0_4 = arith.constant 0 : index
    %c0_5 = arith.constant 0 : index
    %3 = vector.load %arg5[%c0_3, %c0_4, %c0_5] : memref<14x14x60xbf16, #tpu.memory_space<vmem>>, vector<14x14x60xbf16>
    tpu.vector_store %arg5[%c0_3, %c0_4, %c0_5], %2 {strides = array<i32>} : memref<14x14x60xbf16, #tpu.memory_space<vmem>>, vector<14x14x60xbf16>,
    %c3 = arith.constant 3 : index
    %c3_6 = arith.constant 3 : index
    %c0_7 = arith.constant 0 : index
    %4 = vector.load %arg5[%c3, %c3_6, %c0_7] : memref<14x14x60xbf16, #tpu.memory_space<vmem>>, vector<8x8x60xbf16>
    tpu.vector_store %arg5[%c3, %c3_6, %c0_7], %1 {strides = array<i32>} : memref<14x14x60xbf16, #tpu.memory_space<vmem>>, vector<8x8x60xbf16>,
    %cst_8 = arith.constant 0.000000e+00 : f32
    %5 = vector.broadcast %cst_8 : f32 to vector<64x128xf32>
    %c0_9 = arith.constant 0 : index
    %c0_10 = arith.constant 0 : index
    %6 = vector.load %arg7[%c0_9, %c0_10] : memref<64x128xf32, #tpu.memory_space<vmem>>, vector<64x128xf32>
    tpu.vector_store %arg7[%c0_9, %c0_10], %5 {strides = array<i32>} : memref<64x128xf32, #tpu.memory_space<vmem>>, vector<64x128xf32>,
    %c0_i32 = arith.constant 0 : i32
    %c7_i32 = arith.constant 7 : i32
    %7 = arith.addi %c0_i32, %c7_i32 : i32
    %c1_i32 = arith.constant 1 : i32
    scf.for %arg8 = %c0_i32 to %7 step %c1_i32  : i32 {
      %c1_i32_22 = arith.constant 1 : i32
      %27 = arith.muli %arg8, %c1_i32_22 : i32
      %c0_i32_23 = arith.constant 0 : i32
      %28 = arith.addi %c0_i32_23, %27 : i32
      %29 = arith.index_cast %28 : i32 to index
      %c0_24 = arith.constant 0 : index
      %c0_25 = arith.constant 0 : index
      %30 = vector.load %arg5[%29, %c0_24, %c0_25] : memref<14x14x60xbf16, #tpu.memory_space<vmem>>, vector<8x8x60xbf16>
      %31 = vector.shape_cast %30 : vector<8x8x60xbf16> to vector<64x60xbf16>
      %c0_26 = arith.constant 0 : index
      %c0_27 = arith.constant 0 : index
      %32 = vector.load %arg6[%c0_26, %c0_27] : memref<64x420xbf16, #tpu.memory_space<vmem>>, vector<64x60xbf16>
      tpu.vector_store %arg6[%c0_26, %c0_27], %31 {strides = array<i32>} : memref<64x420xbf16, #tpu.memory_space<vmem>>, vector<64x60xbf16>,
      %33 = arith.index_cast %28 : i32 to index
      %c1 = arith.constant 1 : index
      %c0_28 = arith.constant 0 : index
      %34 = vector.load %arg5[%33, %c1, %c0_28] : memref<14x14x60xbf16, #tpu.memory_space<vmem>>, vector<8x8x60xbf16>
      %35 = vector.shape_cast %34 : vector<8x8x60xbf16> to vector<64x60xbf16>
      %c0_29 = arith.constant 0 : index
      %c60 = arith.constant 60 : index
      %36 = vector.load %arg6[%c0_29, %c60] : memref<64x420xbf16, #tpu.memory_space<vmem>>, vector<64x60xbf16>
      tpu.vector_store %arg6[%c0_29, %c60], %35 {strides = array<i32>} : memref<64x420xbf16, #tpu.memory_space<vmem>>, vector<64x60xbf16>,
      %37 = arith.index_cast %28 : i32 to index
      %c2 = arith.constant 2 : index
      %c0_30 = arith.constant 0 : index
      %38 = vector.load %arg5[%37, %c2, %c0_30] : memref<14x14x60xbf16, #tpu.memory_space<vmem>>, vector<8x8x60xbf16>
      %39 = vector.shape_cast %38 : vector<8x8x60xbf16> to vector<64x60xbf16>
      %c0_31 = arith.constant 0 : index
      %c120 = arith.constant 120 : index
      %40 = vector.load %arg6[%c0_31, %c120] : memref<64x420xbf16, #tpu.memory_space<vmem>>, vector<64x60xbf16>
      tpu.vector_store %arg6[%c0_31, %c120], %39 {strides = array<i32>} : memref<64x420xbf16, #tpu.memory_space<vmem>>, vector<64x60xbf16>,
      %41 = arith.index_cast %28 : i32 to index
      %c3_32 = arith.constant 3 : index
      %c0_33 = arith.constant 0 : index
      %42 = vector.load %arg5[%41, %c3_32, %c0_33] : memref<14x14x60xbf16, #tpu.memory_space<vmem>>, vector<8x8x60xbf16>
      %43 = vector.shape_cast %42 : vector<8x8x60xbf16> to vector<64x60xbf16>
      %c0_34 = arith.constant 0 : index
      %c180 = arith.constant 180 : index
      %44 = vector.load %arg6[%c0_34, %c180] : memref<64x420xbf16, #tpu.memory_space<vmem>>, vector<64x60xbf16>
      tpu.vector_store %arg6[%c0_34, %c180], %43 {strides = array<i32>} : memref<64x420xbf16, #tpu.memory_space<vmem>>, vector<64x60xbf16>,
      %45 = arith.index_cast %28 : i32 to index
      %c4 = arith.constant 4 : index
      %c0_35 = arith.constant 0 : index
      %46 = vector.load %arg5[%45, %c4, %c0_35] : memref<14x14x60xbf16, #tpu.memory_space<vmem>>, vector<8x8x60xbf16>
      %47 = vector.shape_cast %46 : vector<8x8x60xbf16> to vector<64x60xbf16>
      %c0_36 = arith.constant 0 : index
      %c240 = arith.constant 240 : index
      %48 = vector.load %arg6[%c0_36, %c240] : memref<64x420xbf16, #tpu.memory_space<vmem>>, vector<64x60xbf16>
      tpu.vector_store %arg6[%c0_36, %c240], %47 {strides = array<i32>} : memref<64x420xbf16, #tpu.memory_space<vmem>>, vector<64x60xbf16>,
      %49 = arith.index_cast %28 : i32 to index
      %c5 = arith.constant 5 : index
      %c0_37 = arith.constant 0 : index
      %50 = vector.load %arg5[%49, %c5, %c0_37] : memref<14x14x60xbf16, #tpu.memory_space<vmem>>, vector<8x8x60xbf16>
      %51 = vector.shape_cast %50 : vector<8x8x60xbf16> to vector<64x60xbf16>
      %c0_38 = arith.constant 0 : index
      %c300 = arith.constant 300 : index
      %52 = vector.load %arg6[%c0_38, %c300] : memref<64x420xbf16, #tpu.memory_space<vmem>>, vector<64x60xbf16>
      tpu.vector_store %arg6[%c0_38, %c300], %51 {strides = array<i32>} : memref<64x420xbf16, #tpu.memory_space<vmem>>, vector<64x60xbf16>,
      %53 = arith.index_cast %28 : i32 to index
      %c6 = arith.constant 6 : index
      %c0_39 = arith.constant 0 : index
      %54 = vector.load %arg5[%53, %c6, %c0_39] : memref<14x14x60xbf16, #tpu.memory_space<vmem>>, vector<8x8x60xbf16>
      %55 = vector.shape_cast %54 : vector<8x8x60xbf16> to vector<64x60xbf16>
      %c0_40 = arith.constant 0 : index
      %c360 = arith.constant 360 : index
      %56 = vector.load %arg6[%c0_40, %c360] : memref<64x420xbf16, #tpu.memory_space<vmem>>, vector<64x60xbf16>
      tpu.vector_store %arg6[%c0_40, %c360], %55 {strides = array<i32>} : memref<64x420xbf16, #tpu.memory_space<vmem>>, vector<64x60xbf16>,
      %c0_41 = arith.constant 0 : index
      %c0_42 = arith.constant 0 : index
      %57 = vector.load %arg7[%c0_41, %c0_42] : memref<64x128xf32, #tpu.memory_space<vmem>>, vector<64x128xf32>
      %c0_43 = arith.constant 0 : index
      %c0_44 = arith.constant 0 : index
      %58 = vector.load %arg6[%c0_43, %c0_44] : memref<64x420xbf16, #tpu.memory_space<vmem>>, vector<64x420xbf16>
      %59 = arith.index_cast %28 : i32 to index
      %c0_45 = arith.constant 0 : index
      %c0_46 = arith.constant 0 : index
      %60 = vector.load %arg2[%59, %c0_45, %c0_46] : memref<7x420x128xbf16, #tpu.memory_space<vmem>>, vector<1x420x128xbf16>
      %61 = vector.shape_cast %60 : vector<1x420x128xbf16> to vector<420x128xbf16>
      %cst_47 = arith.constant dense<0.000000e+00> : vector<64x128xf32>
      %62 = tpu.matmul %58, %61, %cst_47 {dimension_numbers = #tpu.dot_dimension_numbers<[1], [0], [0], [1], [0, 0, 1, 1], [], []>} : vector<64x420xbf16>, vector<420x128xbf16>, vector<64x128xf32> -> vector<64x128xf32>
      %63 = arith.addf %57, %62 : vector<64x128xf32>
      %c0_48 = arith.constant 0 : index
      %c0_49 = arith.constant 0 : index
      %64 = vector.load %arg7[%c0_48, %c0_49] : memref<64x128xf32, #tpu.memory_space<vmem>>, vector<64x128xf32>
      tpu.vector_store %arg7[%c0_48, %c0_49], %63 {strides = array<i32>} : memref<64x128xf32, #tpu.memory_space<vmem>>, vector<64x128xf32>,
    }
    %c7_i32_11 = arith.constant 7 : i32
    %c0_12 = arith.constant 0 : index
    %c0_13 = arith.constant 0 : index
    %8 = vector.load %arg7[%c0_12, %c0_13] : memref<64x128xf32, #tpu.memory_space<vmem>>, vector<64x128xf32>
    %c0_14 = arith.constant 0 : index
    %c0_15 = arith.constant 0 : index
    %9 = vector.load %arg3[%c0_14, %c0_15] : memref<1x128xf32, #tpu.memory_space<vmem>>, vector<1x128xf32>
    %10 = vector.broadcast %9 : vector<1x128xf32> to vector<64x128xf32>
    %11 = arith.addf %8, %10 : vector<64x128xf32>
    %cst_16 = arith.constant 0.000000e+00 : f32
    %12 = vector.broadcast %cst_16 : f32 to vector<64x128xf32>
    %13 = arith.maximumf %11, %12 : vector<64x128xf32>
    %14 = arith.truncf %13 : vector<64x128xf32> to vector<64x128xbf16>
    %15 = vector.shape_cast %14 : vector<64x128xbf16> to vector<8x8x128xbf16>
    %16 = vector.shape_cast %15 : vector<8x8x128xbf16> to vector<4x2x8x128xbf16>
    %17 = vector.extract_strided_slice %16 {offsets = [0, 0, 0, 0], sizes = [4, 1, 8, 128], strides = [1, 1, 1, 1]} : vector<4x2x8x128xbf16> to vector<4x1x8x128xbf16>
    %18 = vector.shape_cast %17 : vector<4x1x8x128xbf16> to vector<4x8x128xbf16>
    %19 = vector.extract_strided_slice %16 {offsets = [0, 1, 0, 0], sizes = [4, 1, 8, 128], strides = [1, 1, 1, 1]} : vector<4x2x8x128xbf16> to vector<4x1x8x128xbf16>
    %20 = vector.shape_cast %19 : vector<4x1x8x128xbf16> to vector<4x8x128xbf16>
    %21 = arith.maximumf %18, %20 : vector<4x8x128xbf16>
    %22 = vector.shape_cast %21 : vector<4x8x128xbf16> to vector<4x4x2x128xbf16>
    %cst_17 = arith.constant dense<0xFF80> : vector<4x4x128xbf16>
    %23 = vector.multi_reduction <maximumf>, %22, %cst_17 [2] : vector<4x4x2x128xbf16> to vector<4x4x128xbf16>
    %c0_18 = arith.constant 0 : index
    %c0_19 = arith.constant 0 : index
    %c0_20 = arith.constant 0 : index
    %c0_21 = arith.constant 0 : index
    %24 = vector.load %arg4[%c0_18, %c0_19, %c0_20, %c0_21] : memref<1x4x4x128xbf16, #tpu.memory_space<vmem>>, vector<1x4x4x128xbf16>
    %25 = vector.shape_cast %24 : vector<1x4x4x128xbf16> to vector<4x4x128xbf16>
    %26 = vector.shape_cast %23 : vector<4x4x128xbf16> to vector<1x4x4x128xbf16>
    tpu.vector_store %arg4[%c0_18, %c0_19, %c0_20, %c0_21], %26 {strides = array<i32>} : memref<1x4x4x128xbf16, #tpu.memory_space<vmem>>, vector<1x4x4x128xbf16>,
    return
  }
  func.func @transform_0(%arg0: i32) -> (i32, i32, i32, i32) {
    %c0_i32 = arith.constant 0 : i32
    %c0_i32_0 = arith.constant 0 : i32
    %c0_i32_1 = arith.constant 0 : i32
    %c0_i32_2 = arith.constant 0 : i32
    return %arg0, %c0_i32, %c0_i32_0, %c0_i32_1 : i32, i32, i32, i32
  }
  func.func @transform_1(%arg0: i32) -> (i32, i32, i32) {
    %c0_i32 = arith.constant 0 : i32
    %c0_i32_0 = arith.constant 0 : i32
    %c0_i32_1 = arith.constant 0 : i32
    %c0_i32_2 = arith.constant 0 : i32
    return %c0_i32, %c0_i32_0, %c0_i32_1 : i32, i32, i32
  }
  func.func @transform_2(%arg0: i32) -> (i32, i32) {
    %c0_i32 = arith.constant 0 : i32
    %c0_i32_0 = arith.constant 0 : i32
    %c0_i32_1 = arith.constant 0 : i32
    return %c0_i32, %c0_i32_0 : i32, i32
  }
  func.func @transform_3(%arg0: i32) -> (i32, i32, i32, i32) {
    %c0_i32 = arith.constant 0 : i32
    %c0_i32_0 = arith.constant 0 : i32
    %c0_i32_1 = arith.constant 0 : i32
    %c0_i32_2 = arith.constant 0 : i32
    return %arg0, %c0_i32, %c0_i32_0, %c0_i32_1 : i32, i32, i32, i32
  }
}

</mosaic_0001>

<llo_original>
// kernel: _lambda_.4
$region0: #{_lambda_.4}
  #allocation0 [shape = 'u32[]', space=smem, size = 0x4, offset = 0x4, fixed_abs, tag = 'smem constant byte address 0x4 - core index']
  #allocation1 [shape = 'u32[144,128]{1,0:T(1,128)}', space=vmem, size = 0x12000, scoped, tag = 'internal scratch']
  #allocation2 [shape = 'bf16[14,14,60]{2,1,0:T(8,128)(2,1)}', space=vmem, size = 0xe000, scoped, tag = 'scratch operand']
  #allocation3 [shape = 'bf16[64,420]{1,0:T(16,128)(2,1)}', space=vmem, size = 0x10000, scoped, tag = 'scratch operand']
  #allocation4 [shape = 'f32[64,128]{1,0:T(8,128)}', space=vmem, size = 0x8000, scoped, tag = 'scratch operand']
  %s0 = inlined_call_operand.vmem [shape: bf16[2,8,8,60], index: 0, kind: input, shape index: {}]
  %s1 = inlined_call_operand.hbm [shape: bf16[7,420,128], index: 1, kind: input, shape index: {}]
  %s2 = inlined_call_operand.vmem [shape: f32[1,128], index: 2, kind: input, shape index: {}]
  %s3 = inlined_call_operand.vmem [shape: bf16[2,4,4,128], index: 3, kind: output, shape index: {}]
  %s4 = sld [smem:[#allocation0]]
  $region56: #{_lambda_.4} parent=0
    _
  %s6 = ssub.s32 1, %s4
  %s7 = scalar_select 0, %s6, %s4
  $region1: #{_lambda_.4} parent=0
    #allocation5 [shape = 'u8[759808]{0}', space=vmem, size = 0xb9800, scoped, tag = 'input window, operand 1, single buffered']
    #allocation6 [shape = 's32[2]{0}', space=sflag, size = 0x8, scoped, tag = 'scoped memory for _lambda_.4']
    %8 = vsyncpa [#allocation6], 0
    loop: start=0, step=1, limit=4
    $region2: #{_lambda_.4} parent=1 // loop_pre_header
      _
    $region3: #{_lambda_.4} parent=1 // loop_header
      %s10 = sphi 0, %s14
      %p11 = scmp.ge.s32.totalorder %s10, 4
      %s20 = sphi 0, %s22
      %s23 = sphi 0, %s20
      %s24 = sphi 0, %s23
      %s40 = sphi 0, %s24
      %s44 = sphi 0, %s44
      %s46 = sphi 0, %s44
      %s47 = sphi 0, %s46
      %s61 = sphi 0, %s47
      %s65 = sphi 0, %s65
      %s67 = sphi 0, %s65
      %s68 = sphi 0, %s67
      %s82 = sphi 0, %s68
      %s88 = sphi 0, %s90
      %s91 = sphi 0, %s88
      %s92 = sphi 0, %s91
      %s108 = sphi 0, %s92
    $region4: #{_lambda_.4} parent=1 // loop_header_branch
      %13 = sbr.rel (%p11) target = $region8
    $region5: #{_lambda_.4} parent=1 // loop_body
      %s15 = ssub.s32 %s10, 1
      %s16 = ssub.s32 %s10, 2
      %s17 = sadd.s32 %s10, 1
      %s18 = ssub.s32 %s10, %s17
      %p19 = scmp.eq.s32.totalorder %s18, 0
      %s21 = sadd.s32 %s20, 1
      %s22 = scalar_select %p19, %s20, %s21
      %p25 = pneg %p19
      %p26 = scmp.eq.s32.totalorder %s10, 1
      %p27 = por %p25, %p26
      %p28 = scmp.ne.s32.totalorder %s20, %s23
      %p29 = scmp.eq.s32.totalorder %s10, 0
      %p30 = por %p28, %p29
      %p31 = scmp.ne.s32.totalorder %s20, %s23
      %p32 = scmp.eq.s32.totalorder %s15, 1
      %p33 = por %p31, %p32
      %p34 = scmp.ne.s32.totalorder %s23, %s24
      %p35 = scmp.eq.s32.totalorder %s15, 0
      %p36 = por %p34, %p35
      %p37 = scmp.ne.s32.totalorder %s23, %s24
      %p38 = scmp.eq.s32.totalorder %s16, 1
      %p39 = por %p37, %p38
      %p41 = scmp.ne.s32.totalorder %s24, %s40
      %p42 = scmp.eq.s32.totalorder %s16, 0
      %p43 = por %p41, %p42
      %s45 = sadd.s32 %s44, 1
      %p48 = scmp.eq.s32.totalorder %s10, 1
      %p49 = scmp.ne.s32.totalorder %s44, %s46
      %p50 = scmp.eq.s32.totalorder %s10, 0
      %p51 = por %p49, %p50
      %p52 = scmp.ne.s32.totalorder %s44, %s46
      %p53 = scmp.eq.s32.totalorder %s15, 1
      %p54 = por %p52, %p53
      %p55 = scmp.ne.s32.totalorder %s46, %s47
      %p56 = scmp.eq.s32.totalorder %s15, 0
      %p57 = por %p55, %p56
      %p58 = scmp.ne.s32.totalorder %s46, %s47
      %p59 = scmp.eq.s32.totalorder %s16, 1
      %p60 = por %p58, %p59
      %p62 = scmp.ne.s32.totalorder %s47, %s61
      %p63 = scmp.eq.s32.totalorder %s16, 0
      %p64 = por %p62, %p63
      %s66 = sadd.s32 %s65, 1
      %p69 = scmp.eq.s32.totalorder %s10, 1
      %p70 = scmp.ne.s32.totalorder %s65, %s67
      %p71 = scmp.eq.s32.totalorder %s10, 0
      %p72 = por %p70, %p71
      %p73 = scmp.ne.s32.totalorder %s65, %s67
      %p74 = scmp.eq.s32.totalorder %s15, 1
      %p75 = por %p73, %p74
      %p76 = scmp.ne.s32.totalorder %s67, %s68
      %p77 = scmp.eq.s32.totalorder %s15, 0
      %p78 = por %p76, %p77
      %p79 = scmp.ne.s32.totalorder %s67, %s68
      %p80 = scmp.eq.s32.totalorder %s16, 1
      %p81 = por %p79, %p80
      %p83 = scmp.ne.s32.totalorder %s68, %s82
      %p84 = scmp.eq.s32.totalorder %s16, 0
      %p85 = por %p83, %p84
      %s86 = ssub.s32 %s10, %s17
      %p87 = scmp.eq.s32.totalorder %s86, 0
      %s89 = sadd.s32 %s88, 1
      %s90 = scalar_select %p87, %s88, %s89
      %p93 = pneg %p87
      %p94 = scmp.eq.s32.totalorder %s10, 1
      %p95 = por %p93, %p94
      %p96 = scmp.ne.s32.totalorder %s88, %s91
      %p97 = scmp.eq.s32.totalorder %s10, 0
      %p98 = por %p96, %p97
      %p99 = scmp.ne.s32.totalorder %s88, %s91
      %p100 = scmp.eq.s32.totalorder %s15, 1
      %p101 = por %p99, %p100
      %p102 = scmp.ne.s32.totalorder %s91, %s92
      %p103 = scmp.eq.s32.totalorder %s15, 0
      %p104 = por %p102, %p103
      %p105 = scmp.ne.s32.totalorder %s91, %s92
      %p106 = scmp.eq.s32.totalorder %s16, 1
      %p107 = por %p105, %p106
      %p109 = scmp.ne.s32.totalorder %s92, %s108
      %p110 = scmp.eq.s32.totalorder %s16, 0
      %p111 = por %p109, %p110
      %p112 = scmp.le.s32.totalorder 1, %s10
      %p113 = scmp.lt.s32.totalorder %s10, 3
      %p114 = pnand %p112, %p113
      %p115 = pneg %p114
      // Predicated region
      $region9: #{_lambda_.4} parent=5 // pred_check
        _
      $region10: #{_lambda_.4} parent=5 // pred_check_branch
        %117 = sbr.rel (%p114) target = $region12
      $region11: #{_lambda_.4} parent=5 // pred_region
        %s118 = ssub.s32 %s10, 1
        // Predicated region
        $region13: #{_lambda_.4} parent=11 // pred_check
          %p119 = pneg %p57
        $region14: #{_lambda_.4} parent=11 // pred_check_branch
          %121 = sbr.rel (%p119) target = $region16
        $region15: #{_lambda_.4} parent=11 // pred_region
          %s123 = ssub.s32 23744, 23744
          %124 = vsyncadd [#allocation6], %s123
          %s125 = sshll.u32 [#allocation5], 4
          %s126 = int_to_ptr.vmem [resolvable:$true] %s125
          %131 = dma.hbm_to_vmem [thread:$0]  %s1, 23744, %s126, [#allocation6], 64, 64, 4
        $region16: #{_lambda_.4} parent=11 // pred_fallthru
          _
        // Predicated region
        $region17: #{_lambda_.4} parent=11 // pred_check
          %p132 = pneg %p78
        $region18: #{_lambda_.4} parent=11 // pred_check_branch
          %134 = sbr.rel (%p132) target = $region20
        $region19: #{_lambda_.4} parent=11 // pred_region
          _
        $region20: #{_lambda_.4} parent=11 // pred_fallthru
          _
      $region12: #{_lambda_.4} parent=5 // pred_fallthru
        _
      %p135 = scmp.lt.s32.totalorder %s10, 2
      // Predicated region
      $region21: #{_lambda_.4} parent=5 // pred_check
        %p136 = pneg %p135
      $region22: #{_lambda_.4} parent=5 // pred_check_branch
        %138 = sbr.rel (%p136) target = $region24
      $region23: #{_lambda_.4} parent=5 // pred_region
        // Predicated region
        $region25: #{_lambda_.4} parent=23 // pred_check
          %p139 = pneg %p30
        $region26: #{_lambda_.4} parent=23 // pred_check_branch
          %141 = sbr.rel (%p139) target = $region28
        $region27: #{_lambda_.4} parent=23 // pred_region
          %p142 = scmp.lt.s32.totalorder %s10, 1
          %s143 = scalar_select %p142, %s10, 1
          %s144 = smul.addr %s143, 8
          %s145 = smul.addr %s144, 4
          %s146 = scalar_lea.vmem %s0, %s145
        $region28: #{_lambda_.4} parent=23 // pred_fallthru
          _
      $region24: #{_lambda_.4} parent=5 // pred_fallthru
        _
      %p147 = scmp.le.s32.totalorder 1, %s10
      %p148 = scmp.lt.s32.totalorder %s10, 3
      %p149 = pnand %p147, %p148
      %p150 = pneg %p149
      // Predicated region
      $region29: #{_lambda_.4} parent=5 // pred_check
        _
      $region30: #{_lambda_.4} parent=5 // pred_check_branch
        %152 = sbr.rel (%p149) target = $region32
      $region31: #{_lambda_.4} parent=5 // pred_region
        %s153 = ssub.s32 %s10, 1
        // Predicated region
        $region33: #{_lambda_.4} parent=31 // pred_check
          %p154 = pneg %p57
        $region34: #{_lambda_.4} parent=31 // pred_check_branch
          %156 = sbr.rel (%p154) target = $region36
        $region35: #{_lambda_.4} parent=31 // pred_region
          %157 = dma.done [#allocation6], 23744
        $region36: #{_lambda_.4} parent=31 // pred_fallthru
          _
        %p158 = scmp.lt.s32.totalorder %s15, 1
        %s159 = scalar_select %p158, %s15, 1
        %s160 = smul.addr %s159, 8
        %s161 = smul.addr %s160, 4
        %s162 = scalar_lea.vmem %s0, %s161
        %p163 = pneg %p36
        %p164 = pneg %p33
        %p165 = pneg %p57
        %p166 = pneg %p54
        %p167 = pneg %p78
        %p168 = pneg %p75
        %p169 = pneg %p104
        %p170 = pneg %p101
        %p171 = scmp.lt.s32.totalorder %s15, 1
        %s172 = scalar_select %p171, %s15, 1
        %s173 = smul.addr %s172, 4
        %s174 = smul.addr %s173, 2
        %s175 = scalar_lea.vmem %s3, %s174
        %p176 = scmp.lt.s32.totalorder %s15, 1
        %s177 = scalar_select %p176, %s15, 1
        %s178 = smul.addr %s177, 8
        %s179 = smul.addr %s178, 4
        %s180 = scalar_lea.vmem %s0, %s179
        %p181 = scmp.lt.s32.totalorder %s15, 1
        %s182 = scalar_select %p181, %s15, 1
        %s183 = smul.addr %s182, 4
        %s184 = smul.addr %s183, 2
        %s185 = scalar_lea.vmem %s3, %s184
        %v188 = vld [vmem:[%s180] sm:$0xf]
        %v189 = vld [vmem:[%s180 + $0x4] sm:$0xf]
        %v190 = vld [vmem:[%s180 + $0x8] sm:$0xf]
        %v191 = vld [vmem:[%s180 + $0xc] sm:$0xf]
        %v192 = vld [vmem:[%s180 + $0x10] sm:$0xf]
        %v193 = vld [vmem:[%s180 + $0x14] sm:$0xf]
        %v194 = vld [vmem:[%s180 + $0x18] sm:$0xf]
        %v195 = vld [vmem:[%s180 + $0x1c] sm:$0xf]
        %vm196 = vcmask 486400
        %197 = vst.msk [vmem:[#allocation2] sm:$0xf] %vm196, 0
        %vm198 = vcmask 485376
        %199 = vst.msk [vmem:[#allocation2 + $0x4] sm:$0x7] %vm198, 0
        %200 = vst.msk [vmem:[#allocation2 + $0x8] sm:$0xf] %vm196, 0
        %201 = vst.msk [vmem:[#allocation2 + $0xc] sm:$0x7] %vm198, 0
        %202 = vst.msk [vmem:[#allocation2 + $0x10] sm:$0xf] %vm196, 0
        %203 = vst.msk [vmem:[#allocation2 + $0x14] sm:$0x7] %vm198, 0
        %204 = vst.msk [vmem:[#allocation2 + $0x18] sm:$0xf] %vm196, 0
        %205 = vst.msk [vmem:[#allocation2 + $0x1c] sm:$0x7] %vm198, 0
        %206 = vst.msk [vmem:[#allocation2 + $0x20] sm:$0xf] %vm196, 0
        %207 = vst.msk [vmem:[#allocation2 + $0x24] sm:$0x7] %vm198, 0
        %208 = vst.msk [vmem:[#allocation2 + $0x28] sm:$0xf] %vm196, 0
        %209 = vst.msk [vmem:[#allocation2 + $0x2c] sm:$0x7] %vm198, 0
        %210 = vst.msk [vmem:[#allocation2 + $0x30] sm:$0xf] %vm196, 0
        %211 = vst.msk [vmem:[#allocation2 + $0x34] sm:$0x7] %vm198, 0
        %212 = vst.msk [vmem:[#allocation2 + $0x38] sm:$0xf] %vm196, 0
        %213 = vst.msk [vmem:[#allocation2 + $0x3c] sm:$0x7] %vm198, 0
        %214 = vst.msk [vmem:[#allocation2 + $0x40] sm:$0xf] %vm196, 0
        %215 = vst.msk [vmem:[#allocation2 + $0x44] sm:$0x7] %vm198, 0
        %216 = vst.msk [vmem:[#allocation2 + $0x48] sm:$0xf] %vm196, 0
        %217 = vst.msk [vmem:[#allocation2 + $0x4c] sm:$0x7] %vm198, 0
        %218 = vst.msk [vmem:[#allocation2 + $0x50] sm:$0xf] %vm196, 0
        %219 = vst.msk [vmem:[#allocation2 + $0x54] sm:$0x7] %vm198, 0
        %220 = vst.msk [vmem:[#allocation2 + $0x58] sm:$0xf] %vm196, 0
        %221 = vst.msk [vmem:[#allocation2 + $0x5c] sm:$0x7] %vm198, 0
        %222 = vst.msk [vmem:[#allocation2 + $0x60] sm:$0xf] %vm196, 0
        %223 = vst.msk [vmem:[#allocation2 + $0x64] sm:$0x7] %vm198, 0
        %224 = vst.msk [vmem:[#allocation2 + $0x68] sm:$0xf] %vm196, 0
        %225 = vst.msk [vmem:[#allocation2 + $0x6c] sm:$0x7] %vm198, 0
        %v227 = vshrl.u32 %v188, 16
        %v229 = vrot.slane %v227, 6
        %v230 = vshll.u32 %v188, 16
        %v232 = vrot.slane %v230, 7
        %v233 = vor.u32 %v229, %v232
        %v234 = vrot.slane %v233, 4
        %v236 = vshrl.u32 %v189, 16
        %v238 = vrot.slane %v236, 6
        %v239 = vshll.u32 %v189, 16
        %v241 = vrot.slane %v239, 7
        %v242 = vor.u32 %v238, %v241
        %v243 = vrot.slane %v242, 4
        %v245 = vshrl.u32 %v190, 16
        %v247 = vrot.slane %v245, 6
        %v248 = vshll.u32 %v190, 16
        %v250 = vrot.slane %v248, 7
        %v251 = vor.u32 %v247, %v250
        %v252 = vrot.slane %v251, 4
        %v254 = vshrl.u32 %v191, 16
        %v256 = vrot.slane %v254, 6
        %v257 = vshll.u32 %v191, 16
        %v259 = vrot.slane %v257, 7
        %v260 = vor.u32 %v256, %v259
        %v261 = vrot.slane %v260, 4
        %v263 = vshrl.u32 %v192, 16
        %v265 = vrot.slane %v263, 6
        %v266 = vshll.u32 %v192, 16
        %v268 = vrot.slane %v266, 7
        %v269 = vor.u32 %v265, %v268
        %v270 = vrot.slane %v269, 4
        %v272 = vshrl.u32 %v193, 16
        %v274 = vrot.slane %v272, 6
        %v275 = vshll.u32 %v193, 16
        %v277 = vrot.slane %v275, 7
        %v278 = vor.u32 %v274, %v277
        %v279 = vrot.slane %v278, 4
        %v281 = vshrl.u32 %v194, 16
        %v283 = vrot.slane %v281, 6
        %v284 = vshll.u32 %v194, 16
        %v286 = vrot.slane %v284, 7
        %v287 = vor.u32 %v283, %v286
        %v288 = vrot.slane %v287, 4
        %v290 = vshrl.u32 %v195, 16
        %v292 = vrot.slane %v290, 6
        %v293 = vshll.u32 %v195, 16
        %v295 = vrot.slane %v293, 7
        %v296 = vor.u32 %v292, %v295
        %v297 = vrot.slane %v296, 4
        %s314 = scalar_lea.vmem [#allocation2], 24
        %vm315 = vcmask 486401
        %vm316 = vsmask.f32 7942
        %vm317 = vmand %vm315, %vm316
        %v318 = vld [vmem:[%s314] sm:$0xe]
        %v319 = vsel %vm317, %v233, %v318
        %320 = vst [vmem:[%s314] sm:$0xe] %v319
        %vm321 = vcmask 484352
        %vm322 = vsmask.f32 1280
        %vm323 = vmand %vm321, %vm322
        %v324 = vld [vmem:[%s314 + $0x4] sm:$0x3]
        %v325 = vsel %vm323, %v234, %v324
        %326 = vst [vmem:[%s314 + $0x4] sm:$0x3] %v325
        %v327 = vld [vmem:[%s314 + $0x8] sm:$0xe]
        %v328 = vsel %vm317, %v242, %v327
        %329 = vst [vmem:[%s314 + $0x8] sm:$0xe] %v328
        %v330 = vld [vmem:[%s314 + $0xc] sm:$0x3]
        %v331 = vsel %vm323, %v243, %v330
        %332 = vst [vmem:[%s314 + $0xc] sm:$0x3] %v331
        %v333 = vld [vmem:[%s314 + $0x10] sm:$0xe]
        %v334 = vsel %vm317, %v251, %v333
        %335 = vst [vmem:[%s314 + $0x10] sm:$0xe] %v334
        %v336 = vld [vmem:[%s314 + $0x14] sm:$0x3]
        %v337 = vsel %vm323, %v252, %v336
        %338 = vst [vmem:[%s314 + $0x14] sm:$0x3] %v337
        %v339 = vld [vmem:[%s314 + $0x18] sm:$0xe]
        %v340 = vsel %vm317, %v260, %v339
        %341 = vst [vmem:[%s314 + $0x18] sm:$0xe] %v340
        %v342 = vld [vmem:[%s314 + $0x1c] sm:$0x3]
        %v343 = vsel %vm323, %v261, %v342
        %344 = vst [vmem:[%s314 + $0x1c] sm:$0x3] %v343
        %v345 = vld [vmem:[%s314 + $0x20] sm:$0xe]
        %v346 = vsel %vm317, %v269, %v345
        %347 = vst [vmem:[%s314 + $0x20] sm:$0xe] %v346
        %v348 = vld [vmem:[%s314 + $0x24] sm:$0x3]
        %v349 = vsel %vm323, %v270, %v348
        %350 = vst [vmem:[%s314 + $0x24] sm:$0x3] %v349
        %v351 = vld [vmem:[%s314 + $0x28] sm:$0xe]
        %v352 = vsel %vm317, %v278, %v351
        %353 = vst [vmem:[%s314 + $0x28] sm:$0xe] %v352
        %v354 = vld [vmem:[%s314 + $0x2c] sm:$0x3]
        %v355 = vsel %vm323, %v279, %v354
        %356 = vst [vmem:[%s314 + $0x2c] sm:$0x3] %v355
        %v357 = vld [vmem:[%s314 + $0x30] sm:$0xe]
        %v358 = vsel %vm317, %v287, %v357
        %359 = vst [vmem:[%s314 + $0x30] sm:$0xe] %v358
        %v360 = vld [vmem:[%s314 + $0x34] sm:$0x3]
        %v361 = vsel %vm323, %v288, %v360
        %362 = vst [vmem:[%s314 + $0x34] sm:$0x3] %v361
        %v363 = vld [vmem:[%s314 + $0x38] sm:$0xe]
        %v364 = vsel %vm317, %v296, %v363
        %365 = vst [vmem:[%s314 + $0x38] sm:$0xe] %v364
        %v366 = vld [vmem:[%s314 + $0x3c] sm:$0x3]
        %v367 = vsel %vm323, %v297, %v366
        %368 = vst [vmem:[%s314 + $0x3c] sm:$0x3] %v367
        %369 = vst [vmem:[#allocation4] sm:$0xff] 0.0
        %370 = vst [vmem:[#allocation4 + $0x8] sm:$0xff] 0.0
        %371 = vst [vmem:[#allocation4 + $0x10] sm:$0xff] 0.0
        %372 = vst [vmem:[#allocation4 + $0x18] sm:$0xff] 0.0
        %373 = vst [vmem:[#allocation4 + $0x20] sm:$0xff] 0.0
        %374 = vst [vmem:[#allocation4 + $0x28] sm:$0xff] 0.0
        %375 = vst [vmem:[#allocation4 + $0x30] sm:$0xff] 0.0
        %376 = vst [vmem:[#allocation4 + $0x38] sm:$0xff] 0.0
        loop: start=0, step=1, limit=7
        $region37: #{_lambda_.4} parent=31 // loop_pre_header
          _
        $region38: #{_lambda_.4} parent=31 // loop_header
          %s378 = sphi 0, %s382
          %p379 = scmp.ge.s32.totalorder %s378, 7
        $region39: #{_lambda_.4} parent=31 // loop_header_branch
          %381 = sbr.rel (%p379) target = $region43
        $region40: #{_lambda_.4} parent=31 // loop_body
          %s383 = smul.u32 %s378, 2
          %s384 = smul.addr %s383, 4
          %s385 = scalar_lea.vmem [#allocation2], %s384
          %v386 = vld [vmem:[%s385] sm:$0xf]
          %v387 = vld [vmem:[%s385 + $0x8] sm:$0xf]
          %v388 = vld [vmem:[%s385 + $0x10] sm:$0xf]
          %v389 = vld [vmem:[%s385 + $0x18] sm:$0xf]
          %v390 = vld [vmem:[%s385 + $0x20] sm:$0xf]
          %v391 = vld [vmem:[%s385 + $0x28] sm:$0xf]
          %v392 = vld [vmem:[%s385 + $0x30] sm:$0xf]
          %v393 = vld [vmem:[%s385 + $0x38] sm:$0xf]
          %v402 = vunpack.c.l.b16 %v386
          %v403 = vunpack.c.l.b16 %v387
          %v404 = vunpack.c.l.b16 %v388
          %v405 = vunpack.c.l.b16 %v389
          %v406 = vunpack.c.l.b16 %v390
          %v407 = vunpack.c.l.b16 %v391
          %v408 = vunpack.c.l.b16 %v392
          %v409 = vunpack.c.l.b16 %v393
          %v410 = vpack.c.b16 %v403, %v402
          %v411 = vpack.c.b16 %v405, %v404
          %v412 = vpack.c.b16 %v407, %v406
          %v413 = vpack.c.b16 %v409, %v408
          %vm418 = vcmask 490496
          %419 = vst.msk [vmem:[#allocation3] sm:$0xff] %vm418, %v410
          %420 = vst.msk [vmem:[#allocation3 + $0x20] sm:$0xff] %vm418, %v411
          %421 = vst.msk [vmem:[#allocation3 + $0x40] sm:$0xff] %vm418, %v412
          %422 = vst.msk [vmem:[#allocation3 + $0x60] sm:$0xff] %vm418, %v413
          %v423 = vld [vmem:[%s385] sm:$0xf]
          %v424 = vld [vmem:[%s385 + $0x4] sm:$0x1]
          %v425 = vld [vmem:[%s385 + $0x8] sm:$0xf]
          %v426 = vld [vmem:[%s385 + $0xc] sm:$0x1]
          %v427 = vld [vmem:[%s385 + $0x10] sm:$0xf]
          %v428 = vld [vmem:[%s385 + $0x14] sm:$0x1]
          %v429 = vld [vmem:[%s385 + $0x18] sm:$0xf]
          %v430 = vld [vmem:[%s385 + $0x1c] sm:$0x1]
          %v431 = vld [vmem:[%s385 + $0x20] sm:$0xf]
          %v432 = vld [vmem:[%s385 + $0x24] sm:$0x1]
          %v433 = vld [vmem:[%s385 + $0x28] sm:$0xf]
          %v434 = vld [vmem:[%s385 + $0x2c] sm:$0x1]
          %v435 = vld [vmem:[%s385 + $0x30] sm:$0xf]
          %v436 = vld [vmem:[%s385 + $0x34] sm:$0x1]
          %v437 = vld [vmem:[%s385 + $0x38] sm:$0xf]
          %v438 = vld [vmem:[%s385 + $0x3c] sm:$0x1]
          %vm439 = vsmask.f32 3328
          %vm440 = vsmask.f32 7440
          %vm441 = vmor %vm439, %vm440
          %v443 = vshrl.u32 %v423, 16
          %v445 = vrot.slane %v443, 4
          %v446 = vshll.u32 %v423, 16
          %v448 = vrot.slane %v446, 5
          %v449 = vor.u32 %v445, %v448
          %v450 = vrot.slane %v449, 4
          %v452 = vshll.u32 %v424, 16
          %v454 = vrot.slane %v452, 5
          %v455 = vsel %vm441, %v450, %v454
          %v457 = vshrl.u32 %v425, 16
          %v459 = vrot.slane %v457, 4
          %v460 = vshll.u32 %v425, 16
          %v462 = vrot.slane %v460, 5
          %v463 = vor.u32 %v459, %v462
          %v464 = vrot.slane %v463, 4
          %v466 = vshll.u32 %v426, 16
          %v468 = vrot.slane %v466, 5
          %v469 = vsel %vm441, %v464, %v468
          %v471 = vshrl.u32 %v427, 16
          %v473 = vrot.slane %v471, 4
          %v474 = vshll.u32 %v427, 16
          %v476 = vrot.slane %v474, 5
          %v477 = vor.u32 %v473, %v476
          %v478 = vrot.slane %v477, 4
          %v480 = vshll.u32 %v428, 16
          %v482 = vrot.slane %v480, 5
          %v483 = vsel %vm441, %v478, %v482
          %v485 = vshrl.u32 %v429, 16
          %v487 = vrot.slane %v485, 4
          %v488 = vshll.u32 %v429, 16
          %v490 = vrot.slane %v488, 5
          %v491 = vor.u32 %v487, %v490
          %v492 = vrot.slane %v491, 4
          %v494 = vshll.u32 %v430, 16
          %v496 = vrot.slane %v494, 5
          %v497 = vsel %vm441, %v492, %v496
          %v499 = vshrl.u32 %v431, 16
          %v501 = vrot.slane %v499, 4
          %v502 = vshll.u32 %v431, 16
          %v504 = vrot.slane %v502, 5
          %v505 = vor.u32 %v501, %v504
          %v506 = vrot.slane %v505, 4
          %v508 = vshll.u32 %v432, 16
          %v510 = vrot.slane %v508, 5
          %v511 = vsel %vm441, %v506, %v510
          %v513 = vshrl.u32 %v433, 16
          %v515 = vrot.slane %v513, 4
          %v516 = vshll.u32 %v433, 16
          %v518 = vrot.slane %v516, 5
          %v519 = vor.u32 %v515, %v518
          %v520 = vrot.slane %v519, 4
          %v522 = vshll.u32 %v434, 16
          %v524 = vrot.slane %v522, 5
          %v525 = vsel %vm441, %v520, %v524
          %v527 = vshrl.u32 %v435, 16
          %v529 = vrot.slane %v527, 4
          %v530 = vshll.u32 %v435, 16
          %v532 = vrot.slane %v530, 5
          %v533 = vor.u32 %v529, %v532
          %v534 = vrot.slane %v533, 4
          %v536 = vshll.u32 %v436, 16
          %v538 = vrot.slane %v536, 5
          %v539 = vsel %vm441, %v534, %v538
          %v541 = vshrl.u32 %v437, 16
          %v543 = vrot.slane %v541, 4
          %v544 = vshll.u32 %v437, 16
          %v546 = vrot.slane %v544, 5
          %v547 = vor.u32 %v543, %v546
          %v548 = vrot.slane %v547, 4
          %v550 = vshll.u32 %v438, 16
          %v552 = vrot.slane %v550, 5
          %v553 = vsel %vm441, %v548, %v552
          %v554 = vunpack.c.l.b16 %v455
          %v555 = vunpack.c.l.b16 %v469
          %v556 = vunpack.c.l.b16 %v483
          %v557 = vunpack.c.l.b16 %v497
          %v558 = vunpack.c.l.b16 %v511
          %v559 = vunpack.c.l.b16 %v525
          %v560 = vunpack.c.l.b16 %v539
          %v561 = vunpack.c.l.b16 %v553
          %v562 = vpack.c.b16 %v555, %v554
          %v563 = vpack.c.b16 %v557, %v556
          %v564 = vpack.c.b16 %v559, %v558
          %v565 = vpack.c.b16 %v561, %v560
          %566 = vrot.lane.b32.xlu0 %v562, 60
          %v567 = vpop.permute.xlu0 %566
          %568 = vrot.lane.b32.xlu0 %v563, 60
          %v569 = vpop.permute.xlu0 %568
          %570 = vrot.lane.b32.xlu0 %v564, 60
          %v571 = vpop.permute.xlu0 %570
          %572 = vrot.lane.b32.xlu0 %v565, 60
          %v573 = vpop.permute.xlu0 %572
          %vm578 = vcmask 982496
          %579 = vst.msk [vmem:[#allocation3] sm:$0xff] %vm578, %v567
          %580 = vst.msk [vmem:[#allocation3 + $0x20] sm:$0xff] %vm578, %v569
          %581 = vst.msk [vmem:[#allocation3 + $0x40] sm:$0xff] %vm578, %v571
          %582 = vst.msk [vmem:[#allocation3 + $0x60] sm:$0xff] %vm578, %v573
          %v583 = vld [vmem:[%s385] sm:$0xe]
          %v584 = vld [vmem:[%s385 + $0x4] sm:$0x1]
          %v585 = vld [vmem:[%s385 + $0x8] sm:$0xe]
          %v586 = vld [vmem:[%s385 + $0xc] sm:$0x1]
          %v587 = vld [vmem:[%s385 + $0x10] sm:$0xe]
          %v588 = vld [vmem:[%s385 + $0x14] sm:$0x1]
          %v589 = vld [vmem:[%s385 + $0x18] sm:$0xe]
          %v590 = vld [vmem:[%s385 + $0x1c] sm:$0x1]
          %v591 = vld [vmem:[%s385 + $0x20] sm:$0xe]
          %v592 = vld [vmem:[%s385 + $0x24] sm:$0x1]
          %v593 = vld [vmem:[%s385 + $0x28] sm:$0xe]
          %v594 = vld [vmem:[%s385 + $0x2c] sm:$0x1]
          %v595 = vld [vmem:[%s385 + $0x30] sm:$0xe]
          %v596 = vld [vmem:[%s385 + $0x34] sm:$0x1]
          %v597 = vld [vmem:[%s385 + $0x38] sm:$0xe]
          %v598 = vld [vmem:[%s385 + $0x3c] sm:$0x1]
          %vm615 = vcmask 1042432
          %vm616 = vcmask 1046532
          %vm617 = vmor %vm615, %vm616
          %v618 = vrot.slane %v583, 5
          %v619 = vrot.slane %v618, 4
          %v620 = vrot.slane %v584, 5
          %v621 = vsel %vm617, %v619, %v620
          %v622 = vrot.slane %v585, 5
          %v623 = vrot.slane %v622, 4
          %v624 = vrot.slane %v586, 5
          %v625 = vsel %vm617, %v623, %v624
          %v626 = vrot.slane %v587, 5
          %v627 = vrot.slane %v626, 4
          %v628 = vrot.slane %v588, 5
          %v629 = vsel %vm617, %v627, %v628
          %v630 = vrot.slane %v589, 5
          %v631 = vrot.slane %v630, 4
          %v632 = vrot.slane %v590, 5
          %v633 = vsel %vm617, %v631, %v632
          %v634 = vrot.slane %v591, 5
          %v635 = vrot.slane %v634, 4
          %v636 = vrot.slane %v592, 5
          %v637 = vsel %vm617, %v635, %v636
          %v638 = vrot.slane %v593, 5
          %v639 = vrot.slane %v638, 4
          %v640 = vrot.slane %v594, 5
          %v641 = vsel %vm617, %v639, %v640
          %v642 = vrot.slane %v595, 5
          %v643 = vrot.slane %v642, 4
          %v644 = vrot.slane %v596, 5
          %v645 = vsel %vm617, %v643, %v644
          %v646 = vrot.slane %v597, 5
          %v647 = vrot.slane %v646, 4
          %v648 = vrot.slane %v598, 5
          %v649 = vsel %vm617, %v647, %v648
          %v650 = vunpack.c.l.b16 %v621
          %v651 = vunpack.c.l.b16 %v625
          %v652 = vunpack.c.l.b16 %v629
          %v653 = vunpack.c.l.b16 %v633
          %v654 = vunpack.c.l.b16 %v637
          %v655 = vunpack.c.l.b16 %v641
          %v656 = vunpack.c.l.b16 %v645
          %v657 = vunpack.c.l.b16 %v649
          %v658 = vpack.c.b16 %v651, %v650
          %v659 = vpack.c.b16 %v653, %v652
          %v660 = vpack.c.b16 %v655, %v654
          %v661 = vpack.c.b16 %v657, %v656
          %662 = vrot.lane.b32.xlu0 %v658, 120
          %v663 = vpop.permute.xlu0 %662
          %664 = vrot.lane.b32.xlu0 %v659, 120
          %v665 = vpop.permute.xlu0 %664
          %666 = vrot.lane.b32.xlu0 %v660, 120
          %v667 = vpop.permute.xlu0 %666
          %668 = vrot.lane.b32.xlu0 %v661, 120
          %v669 = vpop.permute.xlu0 %668
          %vm674 = vcmask 1048512
          %675 = vst.msk [vmem:[#allocation3] sm:$0xff] %vm674, %v663
          %vm676 = vcmask 424960
          %677 = vst.msk [vmem:[#allocation3 + $0x8] sm:$0xff] %vm676, %v663
          %678 = vst.msk [vmem:[#allocation3 + $0x20] sm:$0xff] %vm674, %v665
          %679 = vst.msk [vmem:[#allocation3 + $0x28] sm:$0xff] %vm676, %v665
          %680 = vst.msk [vmem:[#allocation3 + $0x40] sm:$0xff] %vm674, %v667
          %681 = vst.msk [vmem:[#allocation3 + $0x48] sm:$0xff] %vm676, %v667
          %682 = vst.msk [vmem:[#allocation3 + $0x60] sm:$0xff] %vm674, %v669
          %683 = vst.msk [vmem:[#allocation3 + $0x68] sm:$0xff] %vm676, %v669
          %v684 = vld [vmem:[%s385] sm:$0xe]
          %v685 = vld [vmem:[%s385 + $0x4] sm:$0x3]
          %v686 = vld [vmem:[%s385 + $0x8] sm:$0xe]
          %v687 = vld [vmem:[%s385 + $0xc] sm:$0x3]
          %v688 = vld [vmem:[%s385 + $0x10] sm:$0xe]
          %v689 = vld [vmem:[%s385 + $0x14] sm:$0x3]
          %v690 = vld [vmem:[%s385 + $0x18] sm:$0xe]
          %v691 = vld [vmem:[%s385 + $0x1c] sm:$0x3]
          %v692 = vld [vmem:[%s385 + $0x20] sm:$0xe]
          %v693 = vld [vmem:[%s385 + $0x24] sm:$0x3]
          %v694 = vld [vmem:[%s385 + $0x28] sm:$0xe]
          %v695 = vld [vmem:[%s385 + $0x2c] sm:$0x3]
          %v696 = vld [vmem:[%s385 + $0x30] sm:$0xe]
          %v697 = vld [vmem:[%s385 + $0x34] sm:$0x3]
          %v698 = vld [vmem:[%s385 + $0x38] sm:$0xe]
          %v699 = vld [vmem:[%s385 + $0x3c] sm:$0x3]
          %vm700 = vsmask.f32 2304
          %vm701 = vsmask.f32 6416
          %vm702 = vmor %vm700, %vm701
          %v704 = vshrl.u32 %v684, 16
          %v706 = vrot.slane %v704, 5
          %v707 = vshll.u32 %v684, 16
          %v709 = vrot.slane %v707, 6
          %v710 = vor.u32 %v706, %v709
          %v711 = vrot.slane %v710, 4
          %v713 = vshrl.u32 %v685, 16
          %v715 = vrot.slane %v713, 5
          %v716 = vshll.u32 %v685, 16
          %v718 = vrot.slane %v716, 6
          %v719 = vor.u32 %v715, %v718
          %v720 = vsel %vm702, %v711, %v719
          %v722 = vshrl.u32 %v686, 16
          %v724 = vrot.slane %v722, 5
          %v725 = vshll.u32 %v686, 16
          %v727 = vrot.slane %v725, 6
          %v728 = vor.u32 %v724, %v727
          %v729 = vrot.slane %v728, 4
          %v731 = vshrl.u32 %v687, 16
          %v733 = vrot.slane %v731, 5
          %v734 = vshll.u32 %v687, 16
          %v736 = vrot.slane %v734, 6
          %v737 = vor.u32 %v733, %v736
          %v738 = vsel %vm702, %v729, %v737
          %v740 = vshrl.u32 %v688, 16
          %v742 = vrot.slane %v740, 5
          %v743 = vshll.u32 %v688, 16
          %v745 = vrot.slane %v743, 6
          %v746 = vor.u32 %v742, %v745
          %v747 = vrot.slane %v746, 4
          %v749 = vshrl.u32 %v689, 16
          %v751 = vrot.slane %v749, 5
          %v752 = vshll.u32 %v689, 16
          %v754 = vrot.slane %v752, 6
          %v755 = vor.u32 %v751, %v754
          %v756 = vsel %vm702, %v747, %v755
          %v758 = vshrl.u32 %v690, 16
          %v760 = vrot.slane %v758, 5
          %v761 = vshll.u32 %v690, 16
          %v763 = vrot.slane %v761, 6
          %v764 = vor.u32 %v760, %v763
          %v765 = vrot.slane %v764, 4
          %v767 = vshrl.u32 %v691, 16
          %v769 = vrot.slane %v767, 5
          %v770 = vshll.u32 %v691, 16
          %v772 = vrot.slane %v770, 6
          %v773 = vor.u32 %v769, %v772
          %v774 = vsel %vm702, %v765, %v773
          %v776 = vshrl.u32 %v692, 16
          %v778 = vrot.slane %v776, 5
          %v779 = vshll.u32 %v692, 16
          %v781 = vrot.slane %v779, 6
          %v782 = vor.u32 %v778, %v781
          %v783 = vrot.slane %v782, 4
          %v785 = vshrl.u32 %v693, 16
          %v787 = vrot.slane %v785, 5
          %v788 = vshll.u32 %v693, 16
          %v790 = vrot.slane %v788, 6
          %v791 = vor.u32 %v787, %v790
          %v792 = vsel %vm702, %v783, %v791
          %v794 = vshrl.u32 %v694, 16
          %v796 = vrot.slane %v794, 5
          %v797 = vshll.u32 %v694, 16
          %v799 = vrot.slane %v797, 6
          %v800 = vor.u32 %v796, %v799
          %v801 = vrot.slane %v800, 4
          %v803 = vshrl.u32 %v695, 16
          %v805 = vrot.slane %v803, 5
          %v806 = vshll.u32 %v695, 16
          %v808 = vrot.slane %v806, 6
          %v809 = vor.u32 %v805, %v808
          %v810 = vsel %vm702, %v801, %v809
          %v812 = vshrl.u32 %v696, 16
          %v814 = vrot.slane %v812, 5
          %v815 = vshll.u32 %v696, 16
          %v817 = vrot.slane %v815, 6
          %v818 = vor.u32 %v814, %v817
          %v819 = vrot.slane %v818, 4
          %v821 = vshrl.u32 %v697, 16
          %v823 = vrot.slane %v821, 5
          %v824 = vshll.u32 %v697, 16
          %v826 = vrot.slane %v824, 6
          %v827 = vor.u32 %v823, %v826
          %v828 = vsel %vm702, %v819, %v827
          %v830 = vshrl.u32 %v698, 16
          %v832 = vrot.slane %v830, 5
          %v833 = vshll.u32 %v698, 16
          %v835 = vrot.slane %v833, 6
          %v836 = vor.u32 %v832, %v835
          %v837 = vrot.slane %v836, 4
          %v839 = vshrl.u32 %v699, 16
          %v841 = vrot.slane %v839, 5
          %v842 = vshll.u32 %v699, 16
          %v844 = vrot.slane %v842, 6
          %v845 = vor.u32 %v841, %v844
          %v846 = vsel %vm702, %v837, %v845
          %v847 = vunpack.c.l.b16 %v720
          %v848 = vunpack.c.l.b16 %v738
          %v849 = vunpack.c.l.b16 %v756
          %v850 = vunpack.c.l.b16 %v774
          %v851 = vunpack.c.l.b16 %v792
          %v852 = vunpack.c.l.b16 %v810
          %v853 = vunpack.c.l.b16 %v828
          %v854 = vunpack.c.l.b16 %v846
          %v855 = vpack.c.b16 %v848, %v847
          %v856 = vpack.c.b16 %v850, %v849
          %v857 = vpack.c.b16 %v852, %v851
          %v858 = vpack.c.b16 %v854, %v853
          %859 = vrot.lane.b32.xlu0 %v855, 52
          %v860 = vpop.permute.xlu0 %859
          %861 = vrot.lane.b32.xlu0 %v856, 52
          %v862 = vpop.permute.xlu0 %861
          %863 = vrot.lane.b32.xlu0 %v857, 52
          %v864 = vpop.permute.xlu0 %863
          %865 = vrot.lane.b32.xlu0 %v858, 52
          %v866 = vpop.permute.xlu0 %865
          %vm871 = vcmask 916896
          %872 = vst.msk [vmem:[#allocation3 + $0x8] sm:$0xff] %vm871, %v860
          %873 = vst.msk [vmem:[#allocation3 + $0x28] sm:$0xff] %vm871, %v862
          %874 = vst.msk [vmem:[#allocation3 + $0x48] sm:$0xff] %vm871, %v864
          %875 = vst.msk [vmem:[#allocation3 + $0x68] sm:$0xff] %vm871, %v866
          %v876 = vld [vmem:[%s385] sm:$0xc]
          %v877 = vld [vmem:[%s385 + $0x4] sm:$0x3]
          %v878 = vld [vmem:[%s385 + $0x8] sm:$0xc]
          %v879 = vld [vmem:[%s385 + $0xc] sm:$0x3]
          %v880 = vld [vmem:[%s385 + $0x10] sm:$0xc]
          %v881 = vld [vmem:[%s385 + $0x14] sm:$0x3]
          %v882 = vld [vmem:[%s385 + $0x18] sm:$0xc]
          %v883 = vld [vmem:[%s385 + $0x1c] sm:$0x3]
          %v884 = vld [vmem:[%s385 + $0x20] sm:$0xc]
          %v885 = vld [vmem:[%s385 + $0x24] sm:$0x3]
          %v886 = vld [vmem:[%s385 + $0x28] sm:$0xc]
          %v887 = vld [vmem:[%s385 + $0x2c] sm:$0x3]
          %v888 = vld [vmem:[%s385 + $0x30] sm:$0xc]
          %v889 = vld [vmem:[%s385 + $0x34] sm:$0x3]
          %v890 = vld [vmem:[%s385 + $0x38] sm:$0xc]
          %v891 = vld [vmem:[%s385 + $0x3c] sm:$0x3]
          %vm908 = vcmask 1041408
          %vm909 = vcmask 1045508
          %vm910 = vmor %vm908, %vm909
          %v911 = vrot.slane %v876, 6
          %v912 = vrot.slane %v911, 4
          %v913 = vrot.slane %v877, 6
          %v914 = vsel %vm910, %v912, %v913
          %v915 = vrot.slane %v878, 6
          %v916 = vrot.slane %v915, 4
          %v917 = vrot.slane %v879, 6
          %v918 = vsel %vm910, %v916, %v917
          %v919 = vrot.slane %v880, 6
          %v920 = vrot.slane %v919, 4
          %v921 = vrot.slane %v881, 6
          %v922 = vsel %vm910, %v920, %v921
          %v923 = vrot.slane %v882, 6
          %v924 = vrot.slane %v923, 4
          %v925 = vrot.slane %v883, 6
          %v926 = vsel %vm910, %v924, %v925
          %v927 = vrot.slane %v884, 6
          %v928 = vrot.slane %v927, 4
          %v929 = vrot.slane %v885, 6
          %v930 = vsel %vm910, %v928, %v929
          %v931 = vrot.slane %v886, 6
          %v932 = vrot.slane %v931, 4
          %v933 = vrot.slane %v887, 6
          %v934 = vsel %vm910, %v932, %v933
          %v935 = vrot.slane %v888, 6
          %v936 = vrot.slane %v935, 4
          %v937 = vrot.slane %v889, 6
          %v938 = vsel %vm910, %v936, %v937
          %v939 = vrot.slane %v890, 6
          %v940 = vrot.slane %v939, 4
          %v941 = vrot.slane %v891, 6
          %v942 = vsel %vm910, %v940, %v941
          %v943 = vunpack.c.l.b16 %v914
          %v944 = vunpack.c.l.b16 %v918
          %v945 = vunpack.c.l.b16 %v922
          %v946 = vunpack.c.l.b16 %v926
          %v947 = vunpack.c.l.b16 %v930
          %v948 = vunpack.c.l.b16 %v934
          %v949 = vunpack.c.l.b16 %v938
          %v950 = vunpack.c.l.b16 %v942
          %v951 = vpack.c.b16 %v944, %v943
          %v952 = vpack.c.b16 %v946, %v945
          %v953 = vpack.c.b16 %v948, %v947
          %v954 = vpack.c.b16 %v950, %v949
          %955 = vrot.lane.b32.xlu0 %v951, 112
          %v956 = vpop.permute.xlu0 %955
          %957 = vrot.lane.b32.xlu0 %v952, 112
          %v958 = vpop.permute.xlu0 %957
          %959 = vrot.lane.b32.xlu0 %v953, 112
          %v960 = vpop.permute.xlu0 %959
          %961 = vrot.lane.b32.xlu0 %v954, 112
          %v962 = vpop.permute.xlu0 %961
          %vm967 = vcmask 1048448
          %968 = vst.msk [vmem:[#allocation3 + $0x8] sm:$0xff] %vm967, %v956
          %vm969 = vcmask 359424
          %970 = vst.msk [vmem:[#allocation3 + $0x10] sm:$0xff] %vm969, %v956
          %971 = vst.msk [vmem:[#allocation3 + $0x28] sm:$0xff] %vm967, %v958
          %972 = vst.msk [vmem:[#allocation3 + $0x30] sm:$0xff] %vm969, %v958
          %973 = vst.msk [vmem:[#allocation3 + $0x48] sm:$0xff] %vm967, %v960
          %974 = vst.msk [vmem:[#allocation3 + $0x50] sm:$0xff] %vm969, %v960
          %975 = vst.msk [vmem:[#allocation3 + $0x68] sm:$0xff] %vm967, %v962
          %976 = vst.msk [vmem:[#allocation3 + $0x70] sm:$0xff] %vm969, %v962
          %v977 = vld [vmem:[%s385] sm:$0xc]
          %v978 = vld [vmem:[%s385 + $0x4] sm:$0x7]
          %v979 = vld [vmem:[%s385 + $0x8] sm:$0xc]
          %v980 = vld [vmem:[%s385 + $0xc] sm:$0x7]
          %v981 = vld [vmem:[%s385 + $0x10] sm:$0xc]
          %v982 = vld [vmem:[%s385 + $0x14] sm:$0x7]
          %v983 = vld [vmem:[%s385 + $0x18] sm:$0xc]
          %v984 = vld [vmem:[%s385 + $0x1c] sm:$0x7]
          %v985 = vld [vmem:[%s385 + $0x20] sm:$0xc]
          %v986 = vld [vmem:[%s385 + $0x24] sm:$0x7]
          %v987 = vld [vmem:[%s385 + $0x28] sm:$0xc]
          %v988 = vld [vmem:[%s385 + $0x2c] sm:$0x7]
          %v989 = vld [vmem:[%s385 + $0x30] sm:$0xc]
          %v990 = vld [vmem:[%s385 + $0x34] sm:$0x7]
          %v991 = vld [vmem:[%s385 + $0x38] sm:$0xc]
          %v992 = vld [vmem:[%s385 + $0x3c] sm:$0x7]
          %vm993 = vsmask.f32 5392
          %vm994 = vmor %vm322, %vm993
          %v996 = vshrl.u32 %v977, 16
          %v998 = vrot.slane %v996, 6
          %v999 = vshll.u32 %v977, 16
          %v1001 = vrot.slane %v999, 7
          %v1002 = vor.u32 %v998, %v1001
          %v1003 = vrot.slane %v1002, 4
          %v1005 = vshrl.u32 %v978, 16
          %v1007 = vrot.slane %v1005, 6
          %v1008 = vshll.u32 %v978, 16
          %v1010 = vrot.slane %v1008, 7
          %v1011 = vor.u32 %v1007, %v1010
          %v1012 = vsel %vm994, %v1003, %v1011
          %v1014 = vshrl.u32 %v979, 16
          %v1016 = vrot.slane %v1014, 6
          %v1017 = vshll.u32 %v979, 16
          %v1019 = vrot.slane %v1017, 7
          %v1020 = vor.u32 %v1016, %v1019
          %v1021 = vrot.slane %v1020, 4
          %v1023 = vshrl.u32 %v980, 16
          %v1025 = vrot.slane %v1023, 6
          %v1026 = vshll.u32 %v980, 16
          %v1028 = vrot.slane %v1026, 7
          %v1029 = vor.u32 %v1025, %v1028
          %v1030 = vsel %vm994, %v1021, %v1029
          %v1032 = vshrl.u32 %v981, 16
          %v1034 = vrot.slane %v1032, 6
          %v1035 = vshll.u32 %v981, 16
          %v1037 = vrot.slane %v1035, 7
          %v1038 = vor.u32 %v1034, %v1037
          %v1039 = vrot.slane %v1038, 4
          %v1041 = vshrl.u32 %v982, 16
          %v1043 = vrot.slane %v1041, 6
          %v1044 = vshll.u32 %v982, 16
          %v1046 = vrot.slane %v1044, 7
          %v1047 = vor.u32 %v1043, %v1046
          %v1048 = vsel %vm994, %v1039, %v1047
          %v1050 = vshrl.u32 %v983, 16
          %v1052 = vrot.slane %v1050, 6
          %v1053 = vshll.u32 %v983, 16
          %v1055 = vrot.slane %v1053, 7
          %v1056 = vor.u32 %v1052, %v1055
          %v1057 = vrot.slane %v1056, 4
          %v1059 = vshrl.u32 %v984, 16
          %v1061 = vrot.slane %v1059, 6
          %v1062 = vshll.u32 %v984, 16
          %v1064 = vrot.slane %v1062, 7
          %v1065 = vor.u32 %v1061, %v1064
          %v1066 = vsel %vm994, %v1057, %v1065
          %v1068 = vshrl.u32 %v985, 16
          %v1070 = vrot.slane %v1068, 6
          %v1071 = vshll.u32 %v985, 16
          %v1073 = vrot.slane %v1071, 7
          %v1074 = vor.u32 %v1070, %v1073
          %v1075 = vrot.slane %v1074, 4
          %v1077 = vshrl.u32 %v986, 16
          %v1079 = vrot.slane %v1077, 6
          %v1080 = vshll.u32 %v986, 16
          %v1082 = vrot.slane %v1080, 7
          %v1083 = vor.u32 %v1079, %v1082
          %v1084 = vsel %vm994, %v1075, %v1083
          %v1086 = vshrl.u32 %v987, 16
          %v1088 = vrot.slane %v1086, 6
          %v1089 = vshll.u32 %v987, 16
          %v1091 = vrot.slane %v1089, 7
          %v1092 = vor.u32 %v1088, %v1091
          %v1093 = vrot.slane %v1092, 4
          %v1095 = vshrl.u32 %v988, 16
          %v1097 = vrot.slane %v1095, 6
          %v1098 = vshll.u32 %v988, 16
          %v1100 = vrot.slane %v1098, 7
          %v1101 = vor.u32 %v1097, %v1100
          %v1102 = vsel %vm994, %v1093, %v1101
          %v1104 = vshrl.u32 %v989, 16
          %v1106 = vrot.slane %v1104, 6
          %v1107 = vshll.u32 %v989, 16
          %v1109 = vrot.slane %v1107, 7
          %v1110 = vor.u32 %v1106, %v1109
          %v1111 = vrot.slane %v1110, 4
          %v1113 = vshrl.u32 %v990, 16
          %v1115 = vrot.slane %v1113, 6
          %v1116 = vshll.u32 %v990, 16
          %v1118 = vrot.slane %v1116, 7
          %v1119 = vor.u32 %v1115, %v1118
          %v1120 = vsel %vm994, %v1111, %v1119
          %v1122 = vshrl.u32 %v991, 16
          %v1124 = vrot.slane %v1122, 6
          %v1125 = vshll.u32 %v991, 16
          %v1127 = vrot.slane %v1125, 7
          %v1128 = vor.u32 %v1124, %v1127
          %v1129 = vrot.slane %v1128, 4
          %v1131 = vshrl.u32 %v992, 16
          %v1133 = vrot.slane %v1131, 6
          %v1134 = vshll.u32 %v992, 16
          %v1136 = vrot.slane %v1134, 7
          %v1137 = vor.u32 %v1133, %v1136
          %v1138 = vsel %vm994, %v1129, %v1137
          %v1139 = vunpack.c.l.b16 %v1012
          %v1140 = vunpack.c.l.b16 %v1030
          %v1141 = vunpack.c.l.b16 %v1048
          %v1142 = vunpack.c.l.b16 %v1066
          %v1143 = vunpack.c.l.b16 %v1084
          %v1144 = vunpack.c.l.b16 %v1102
          %v1145 = vunpack.c.l.b16 %v1120
          %v1146 = vunpack.c.l.b16 %v1138
          %v1147 = vpack.c.b16 %v1140, %v1139
          %v1148 = vpack.c.b16 %v1142, %v1141
          %v1149 = vpack.c.b16 %v1144, %v1143
          %v1150 = vpack.c.b16 %v1146, %v1145
          %1151 = vrot.lane.b32.xlu0 %v1147, 44
          %v1152 = vpop.permute.xlu0 %1151
          %1153 = vrot.lane.b32.xlu0 %v1148, 44
          %v1154 = vpop.permute.xlu0 %1153
          %1155 = vrot.lane.b32.xlu0 %v1149, 44
          %v1156 = vpop.permute.xlu0 %1155
          %1157 = vrot.lane.b32.xlu0 %v1150, 44
          %v1158 = vpop.permute.xlu0 %1157
          %vm1163 = vcmask 851296
          %1164 = vst.msk [vmem:[#allocation3 + $0x10] sm:$0xff] %vm1163, %v1152
          %1165 = vst.msk [vmem:[#allocation3 + $0x30] sm:$0xff] %vm1163, %v1154
          %1166 = vst.msk [vmem:[#allocation3 + $0x50] sm:$0xff] %vm1163, %v1156
          %1167 = vst.msk [vmem:[#allocation3 + $0x70] sm:$0xff] %vm1163, %v1158
          %v1168 = vld [vmem:[%s385] sm:$0x8]
          %v1169 = vld [vmem:[%s385 + $0x4] sm:$0x7]
          %v1170 = vld [vmem:[%s385 + $0x8] sm:$0x8]
          %v1171 = vld [vmem:[%s385 + $0xc] sm:$0x7]
          %v1172 = vld [vmem:[%s385 + $0x10] sm:$0x8]
          %v1173 = vld [vmem:[%s385 + $0x14] sm:$0x7]
          %v1174 = vld [vmem:[%s385 + $0x18] sm:$0x8]
          %v1175 = vld [vmem:[%s385 + $0x1c] sm:$0x7]
          %v1176 = vld [vmem:[%s385 + $0x20] sm:$0x8]
          %v1177 = vld [vmem:[%s385 + $0x24] sm:$0x7]
          %v1178 = vld [vmem:[%s385 + $0x28] sm:$0x8]
          %v1179 = vld [vmem:[%s385 + $0x2c] sm:$0x7]
          %v1180 = vld [vmem:[%s385 + $0x30] sm:$0x8]
          %v1181 = vld [vmem:[%s385 + $0x34] sm:$0x7]
          %v1182 = vld [vmem:[%s385 + $0x38] sm:$0x8]
          %v1183 = vld [vmem:[%s385 + $0x3c] sm:$0x7]
          %vm1200 = vcmask 1040384
          %vm1201 = vcmask 1044484
          %vm1202 = vmor %vm1200, %vm1201
          %v1203 = vrot.slane %v1168, 7
          %v1204 = vrot.slane %v1203, 4
          %v1205 = vrot.slane %v1169, 7
          %v1206 = vsel %vm1202, %v1204, %v1205
          %v1207 = vrot.slane %v1170, 7
          %v1208 = vrot.slane %v1207, 4
          %v1209 = vrot.slane %v1171, 7
          %v1210 = vsel %vm1202, %v1208, %v1209
          %v1211 = vrot.slane %v1172, 7
          %v1212 = vrot.slane %v1211, 4
          %v1213 = vrot.slane %v1173, 7
          %v1214 = vsel %vm1202, %v1212, %v1213
          %v1215 = vrot.slane %v1174, 7
          %v1216 = vrot.slane %v1215, 4
          %v1217 = vrot.slane %v1175, 7
          %v1218 = vsel %vm1202, %v1216, %v1217
          %v1219 = vrot.slane %v1176, 7
          %v1220 = vrot.slane %v1219, 4
          %v1221 = vrot.slane %v1177, 7
          %v1222 = vsel %vm1202, %v1220, %v1221
          %v1223 = vrot.slane %v1178, 7
          %v1224 = vrot.slane %v1223, 4
          %v1225 = vrot.slane %v1179, 7
          %v1226 = vsel %vm1202, %v1224, %v1225
          %v1227 = vrot.slane %v1180, 7
          %v1228 = vrot.slane %v1227, 4
          %v1229 = vrot.slane %v1181, 7
          %v1230 = vsel %vm1202, %v1228, %v1229
          %v1231 = vrot.slane %v1182, 7
          %v1232 = vrot.slane %v1231, 4
          %v1233 = vrot.slane %v1183, 7
          %v1234 = vsel %vm1202, %v1232, %v1233
          %v1235 = vunpack.c.l.b16 %v1206
          %v1236 = vunpack.c.l.b16 %v1210
          %v1237 = vunpack.c.l.b16 %v1214
          %v1238 = vunpack.c.l.b16 %v1218
          %v1239 = vunpack.c.l.b16 %v1222
          %v1240 = vunpack.c.l.b16 %v1226
          %v1241 = vunpack.c.l.b16 %v1230
          %v1242 = vunpack.c.l.b16 %v1234
          %v1243 = vpack.c.b16 %v1236, %v1235
          %v1244 = vpack.c.b16 %v1238, %v1237
          %v1245 = vpack.c.b16 %v1240, %v1239
          %v1246 = vpack.c.b16 %v1242, %v1241
          %1247 = vrot.lane.b32.xlu0 %v1243, 104
          %v1248 = vpop.permute.xlu0 %1247
          %1249 = vrot.lane.b32.xlu0 %v1244, 104
          %v1250 = vpop.permute.xlu0 %1249
          %1251 = vrot.lane.b32.xlu0 %v1245, 104
          %v1252 = vpop.permute.xlu0 %1251
          %1253 = vrot.lane.b32.xlu0 %v1246, 104
          %v1254 = vpop.permute.xlu0 %1253
          %vm1259 = vcmask 1048384
          %1260 = vst.msk [vmem:[#allocation3 + $0x10] sm:$0xff] %vm1259, %v1248
          %vm1261 = vcmask 293888
          %1262 = vst.msk [vmem:[#allocation3 + $0x18] sm:$0xff] %vm1261, %v1248
          %1263 = vst.msk [vmem:[#allocation3 + $0x30] sm:$0xff] %vm1259, %v1250
          %1264 = vst.msk [vmem:[#allocation3 + $0x38] sm:$0xff] %vm1261, %v1250
          %1265 = vst.msk [vmem:[#allocation3 + $0x50] sm:$0xff] %vm1259, %v1252
          %1266 = vst.msk [vmem:[#allocation3 + $0x58] sm:$0xff] %vm1261, %v1252
          %1267 = vst.msk [vmem:[#allocation3 + $0x70] sm:$0xff] %vm1259, %v1254
          %1268 = vst.msk [vmem:[#allocation3 + $0x78] sm:$0xff] %vm1261, %v1254
          %v1269 = vld [vmem:[#allocation4] sm:$0xff]
          %v1270 = vld [vmem:[#allocation4 + $0x8] sm:$0xff]
          %v1271 = vld [vmem:[#allocation4 + $0x10] sm:$0xff]
          %v1272 = vld [vmem:[#allocation4 + $0x18] sm:$0xff]
          %v1273 = vld [vmem:[#allocation4 + $0x20] sm:$0xff]
          %v1274 = vld [vmem:[#allocation4 + $0x28] sm:$0xff]
          %v1275 = vld [vmem:[#allocation4 + $0x30] sm:$0xff]
          %v1276 = vld [vmem:[#allocation4 + $0x38] sm:$0xff]
          %v1277 = vld [vmem:[#allocation3] sm:$0xff]
          %v1278 = vld [vmem:[#allocation3 + $0x8] sm:$0xff]
          %v1279 = vld [vmem:[#allocation3 + $0x10] sm:$0xff]
          %v1280 = vld [vmem:[#allocation3 + $0x18] sm:$0xff]
          %v1281 = vld [vmem:[#allocation3 + $0x20] sm:$0xff]
          %v1282 = vld [vmem:[#allocation3 + $0x28] sm:$0xff]
          %v1283 = vld [vmem:[#allocation3 + $0x30] sm:$0xff]
          %v1284 = vld [vmem:[#allocation3 + $0x38] sm:$0xff]
          %v1285 = vld [vmem:[#allocation3 + $0x40] sm:$0xff]
          %v1286 = vld [vmem:[#allocation3 + $0x48] sm:$0xff]
          %v1287 = vld [vmem:[#allocation3 + $0x50] sm:$0xff]
          %v1288 = vld [vmem:[#allocation3 + $0x58] sm:$0xff]
          %v1289 = vld [vmem:[#allocation3 + $0x60] sm:$0xff]
          %v1290 = vld [vmem:[#allocation3 + $0x68] sm:$0xff]
          %v1291 = vld [vmem:[#allocation3 + $0x70] sm:$0xff]
          %v1292 = vld [vmem:[#allocation3 + $0x78] sm:$0xff]
          %s1293 = smul.u32 %s378, 53
          %s1294 = smul.addr %s1293, 4
          %s1295 = scalar_lea.vmem [#allocation5], %s1294
          %v1296 = vld [vmem:[%s1295] sm:$0xf]
          %v1297 = vld [vmem:[%s1295 + $0x4] sm:$0xf]
          %v1298 = vld [vmem:[%s1295 + $0x8] sm:$0xf]
          %v1299 = vld [vmem:[%s1295 + $0xc] sm:$0xf]
          %v1300 = vld [vmem:[%s1295 + $0x10] sm:$0xf]
          %v1301 = vld [vmem:[%s1295 + $0x14] sm:$0xf]
          %v1302 = vld [vmem:[%s1295 + $0x18] sm:$0xf]
          %v1303 = vld [vmem:[%s1295 + $0x1c] sm:$0xf]
          %v1304 = vld [vmem:[%s1295 + $0x20] sm:$0xf]
          %v1305 = vld [vmem:[%s1295 + $0x24] sm:$0xf]
          %v1306 = vld [vmem:[%s1295 + $0x28] sm:$0xf]
          %v1307 = vld [vmem:[%s1295 + $0x2c] sm:$0xf]
          %v1308 = vld [vmem:[%s1295 + $0x30] sm:$0xf]
          %v1309 = vld [vmem:[%s1295 + $0x34] sm:$0xf]
          %v1310 = vld [vmem:[%s1295 + $0x38] sm:$0xf]
          %v1311 = vld [vmem:[%s1295 + $0x3c] sm:$0xf]
          %v1312 = vld [vmem:[%s1295 + $0x40] sm:$0xf]
          %v1313 = vld [vmem:[%s1295 + $0x44] sm:$0xf]
          %v1314 = vld [vmem:[%s1295 + $0x48] sm:$0xf]
          %v1315 = vld [vmem:[%s1295 + $0x4c] sm:$0xf]
          %v1316 = vld [vmem:[%s1295 + $0x50] sm:$0xf]
          %v1317 = vld [vmem:[%s1295 + $0x54] sm:$0xf]
          %v1318 = vld [vmem:[%s1295 + $0x58] sm:$0xf]
          %v1319 = vld [vmem:[%s1295 + $0x5c] sm:$0xf]
          %v1320 = vld [vmem:[%s1295 + $0x60] sm:$0xf]
          %v1321 = vld [vmem:[%s1295 + $0x64] sm:$0xf]
          %v1322 = vld [vmem:[%s1295 + $0x68] sm:$0xf]
          %v1323 = vld [vmem:[%s1295 + $0x6c] sm:$0xf]
          %v1324 = vld [vmem:[%s1295 + $0x70] sm:$0xf]
          %v1325 = vld [vmem:[%s1295 + $0x74] sm:$0xf]
          %v1326 = vld [vmem:[%s1295 + $0x78] sm:$0xf]
          %v1327 = vld [vmem:[%s1295 + $0x7c] sm:$0xf]
          %v1328 = vld [vmem:[%s1295 + $0x80] sm:$0xf]
          %v1329 = vld [vmem:[%s1295 + $0x84] sm:$0xf]
          %v1330 = vld [vmem:[%s1295 + $0x88] sm:$0xf]
          %v1331 = vld [vmem:[%s1295 + $0x8c] sm:$0xf]
          %v1332 = vld [vmem:[%s1295 + $0x90] sm:$0xf]
          %v1333 = vld [vmem:[%s1295 + $0x94] sm:$0xf]
          %v1334 = vld [vmem:[%s1295 + $0x98] sm:$0xf]
          %v1335 = vld [vmem:[%s1295 + $0x9c] sm:$0xf]
          %v1336 = vld [vmem:[%s1295 + $0xa0] sm:$0xf]
          %v1337 = vld [vmem:[%s1295 + $0xa4] sm:$0xf]
          %v1338 = vld [vmem:[%s1295 + $0xa8] sm:$0xf]
          %v1339 = vld [vmem:[%s1295 + $0xac] sm:$0xf]
          %v1340 = vld [vmem:[%s1295 + $0xb0] sm:$0xf]
          %v1341 = vld [vmem:[%s1295 + $0xb4] sm:$0xf]
          %v1342 = vld [vmem:[%s1295 + $0xb8] sm:$0xf]
          %v1343 = vld [vmem:[%s1295 + $0xbc] sm:$0xf]
          %v1344 = vld [vmem:[%s1295 + $0xc0] sm:$0xf]
          %v1345 = vld [vmem:[%s1295 + $0xc4] sm:$0xf]
          %v1346 = vld [vmem:[%s1295 + $0xc8] sm:$0xf]
          %v1347 = vld [vmem:[%s1295 + $0xcc] sm:$0xf]
          %v1348 = vld [vmem:[%s1295 + $0xd0] sm:$0x3]
          %v1402 = vunpack.c.l.b16 %v1296
          %v1403 = vunpack.c.l.b16 %v1297
          %v1404 = vunpack.c.l.b16 %v1298
          %v1405 = vunpack.c.l.b16 %v1299
          %v1406 = vunpack.c.l.b16 %v1300
          %v1407 = vunpack.c.l.b16 %v1301
          %v1408 = vunpack.c.l.b16 %v1302
          %v1409 = vunpack.c.l.b16 %v1303
          %v1410 = vunpack.c.l.b16 %v1304
          %v1411 = vunpack.c.l.b16 %v1305
          %v1412 = vunpack.c.l.b16 %v1306
          %v1413 = vunpack.c.l.b16 %v1307
          %v1414 = vunpack.c.l.b16 %v1308
          %v1415 = vunpack.c.l.b16 %v1309
          %v1416 = vunpack.c.l.b16 %v1310
          %v1417 = vunpack.c.l.b16 %v1311
          %v1418 = vunpack.c.l.b16 %v1312
          %v1419 = vunpack.c.l.b16 %v1313
          %v1420 = vunpack.c.l.b16 %v1314
          %v1421 = vunpack.c.l.b16 %v1315
          %v1422 = vunpack.c.l.b16 %v1316
          %v1423 = vunpack.c.l.b16 %v1317
          %v1424 = vunpack.c.l.b16 %v1318
          %v1425 = vunpack.c.l.b16 %v1319
          %v1426 = vunpack.c.l.b16 %v1320
          %v1427 = vunpack.c.l.b16 %v1321
          %v1428 = vunpack.c.l.b16 %v1322
          %v1429 = vunpack.c.l.b16 %v1323
          %v1430 = vunpack.c.l.b16 %v1324
          %v1431 = vunpack.c.l.b16 %v1325
          %v1432 = vunpack.c.l.b16 %v1326
          %v1433 = vunpack.c.l.b16 %v1327
          %v1434 = vunpack.c.l.b16 %v1328
          %v1435 = vunpack.c.l.b16 %v1329
          %v1436 = vunpack.c.l.b16 %v1330
          %v1437 = vunpack.c.l.b16 %v1331
          %v1438 = vunpack.c.l.b16 %v1332
          %v1439 = vunpack.c.l.b16 %v1333
          %v1440 = vunpack.c.l.b16 %v1334
          %v1441 = vunpack.c.l.b16 %v1335
          %v1442 = vunpack.c.l.b16 %v1336
          %v1443 = vunpack.c.l.b16 %v1337
          %v1444 = vunpack.c.l.b16 %v1338
          %v1445 = vunpack.c.l.b16 %v1339
          %v1446 = vunpack.c.l.b16 %v1340
          %v1447 = vunpack.c.l.b16 %v1341
          %v1448 = vunpack.c.l.b16 %v1342
          %v1449 = vunpack.c.l.b16 %v1343
          %v1450 = vunpack.c.l.b16 %v1344
          %v1451 = vunpack.c.l.b16 %v1345
          %v1452 = vunpack.c.l.b16 %v1346
          %v1453 = vunpack.c.l.b16 %v1347
          %v1454 = vunpack.c.l.b16 %v1348
          %v1455 = vpack.c.b16 %v1403, %v1402
          %v1456 = vpack.c.b16 %v1405, %v1404
          %v1457 = vpack.c.b16 %v1407, %v1406
          %v1458 = vpack.c.b16 %v1409, %v1408
          %v1459 = vpack.c.b16 %v1411, %v1410
          %v1460 = vpack.c.b16 %v1413, %v1412
          %v1461 = vpack.c.b16 %v1415, %v1414
          %v1462 = vpack.c.b16 %v1417, %v1416
          %v1463 = vpack.c.b16 %v1419, %v1418
          %v1464 = vpack.c.b16 %v1421, %v1420
          %v1465 = vpack.c.b16 %v1423, %v1422
          %v1466 = vpack.c.b16 %v1425, %v1424
          %v1467 = vpack.c.b16 %v1427, %v1426
          %v1468 = vpack.c.b16 %v1429, %v1428
          %v1469 = vpack.c.b16 %v1431, %v1430
          %v1470 = vpack.c.b16 %v1433, %v1432
          %v1471 = vpack.c.b16 %v1435, %v1434
          %v1472 = vpack.c.b16 %v1437, %v1436
          %v1473 = vpack.c.b16 %v1439, %v1438
          %v1474 = vpack.c.b16 %v1441, %v1440
          %v1475 = vpack.c.b16 %v1443, %v1442
          %v1476 = vpack.c.b16 %v1445, %v1444
          %v1477 = vpack.c.b16 %v1447, %v1446
          %v1478 = vpack.c.b16 %v1449, %v1448
          %v1479 = vpack.c.b16 %v1451, %v1450
          %v1480 = vpack.c.b16 %v1453, %v1452
          %v1481 = vpack.c.b16 %v1454, %v1454
          %v1509 = vsel %vm1261, %v1280, 0
          %v1512 = vsel %vm1261, %v1284, 0
          %v1515 = vsel %vm1261, %v1288, 0
          %v1518 = vsel %vm1261, %v1292, 0
          %vm1520 = vcmask 1041408
          %v1522 = vsel %vm1520, %v1481, 0
          %1524 = vmatprep.subr.bf16.mxu0 0
          %1525 = vmatpush1.bf16.msra.mxu0 %v1455
          %1526 = vmatprep.subr.bf16.mxu0 0
          %1527 = vmatpush1.bf16.msra.mxu0 %v1456
          %1528 = vmatprep.subr.bf16.mxu0 0
          %1529 = vmatpush1.bf16.msra.mxu0 %v1457
          %1530 = vmatprep.subr.bf16.mxu0 0
          %1531 = vmatpush1.bf16.msra.mxu0 %v1458
          %1532 = vmatprep.subr.bf16.mxu0 0
          %1533 = vmatpush1.bf16.msra.mxu0 %v1459
          %1534 = vmatprep.subr.bf16.mxu0 0
          %1535 = vmatpush1.bf16.msra.mxu0 %v1460
          %1536 = vmatprep.subr.bf16.mxu0 0
          %1537 = vmatpush1.bf16.msra.mxu0 %v1461
          %1538 = vmatprep.subr.bf16.mxu0 0
          %1539 = vmatpush1.bf16.msra.mxu0 %v1462
          %1540 = vmatprep.subr.bf16.mxu0 0
          %1541 = vmatpush1.bf16.msra.mxu0 %v1463
          %1542 = vmatprep.subr.bf16.mxu0 0
          %1543 = vmatpush1.bf16.msra.mxu0 %v1464
          %1544 = vmatprep.subr.bf16.mxu0 0
          %1545 = vmatpush1.bf16.msra.mxu0 %v1465
          %1546 = vmatprep.subr.bf16.mxu0 0
          %1547 = vmatpush1.bf16.msra.mxu0 %v1466
          %1548 = vmatprep.subr.bf16.mxu0 0
          %1549 = vmatpush1.bf16.msra.mxu0 %v1467
          %1550 = vmatprep.subr.bf16.mxu0 0
          %1551 = vmatpush1.bf16.msra.mxu0 %v1468
          %1552 = vmatprep.subr.bf16.mxu0 0
          %1553 = vmatpush1.bf16.msra.mxu0 %v1469
          %1554 = vmatprep.subr.bf16.mxu0 0
          %1555 = vmatpush1.bf16.msra.mxu0 %v1470
          %1556 = vmatprep.mubr.bf16.mxu0 %v1278
          %1557 = vmatmul.mubr.bf16.gmra.mrb[0].mxu0 %v1277
          %v1558 = vpop.f32.mrb[0].mxu0
          %v1559 = vadd.f32 0.0, %v1558
          %v1560 = vpop.f32.mrb[0].mxu0
          %v1561 = vpop.f32.mrb[0].mxu0
          %v1562 = vadd.f32 0.0, %v1561
          %v1563 = vpop.f32.mrb[0].mxu0
          %1564 = vmatprep.mubr.bf16.mxu0 %v1282
          %1565 = vmatmul.mubr.bf16.gmra.mrb[0].mxu0 %v1281
          %v1566 = vpop.f32.mrb[0].mxu0
          %v1567 = vadd.f32 0.0, %v1566
          %v1568 = vpop.f32.mrb[0].mxu0
          %v1569 = vpop.f32.mrb[0].mxu0
          %v1570 = vadd.f32 0.0, %v1569
          %v1571 = vpop.f32.mrb[0].mxu0
          %1572 = vmatprep.mubr.bf16.mxu0 %v1286
          %1573 = vmatmul.mubr.bf16.gmra.mrb[0].mxu0 %v1285
          %v1574 = vpop.f32.mrb[0].mxu0
          %v1575 = vadd.f32 0.0, %v1574
          %v1576 = vpop.f32.mrb[0].mxu0
          %v1577 = vpop.f32.mrb[0].mxu0
          %v1578 = vadd.f32 0.0, %v1577
          %v1579 = vpop.f32.mrb[0].mxu0
          %1580 = vmatprep.mubr.bf16.mxu0 %v1290
          %1581 = vmatmul.mubr.bf16.gmra.mrb[0].mxu0 %v1289
          %v1582 = vpop.f32.mrb[0].mxu0
          %v1583 = vadd.f32 0.0, %v1582
          %v1584 = vpop.f32.mrb[0].mxu0
          %v1585 = vpop.f32.mrb[0].mxu0
          %v1586 = vadd.f32 0.0, %v1585
          %v1587 = vpop.f32.mrb[0].mxu0
          %1588 = vdwg.mxu0
          %1589 = vmatprep.subr.bf16.mxu0 0
          %1590 = vmatpush1.bf16.msra.mxu0 %v1471
          %1591 = vmatprep.subr.bf16.mxu0 0
          %1592 = vmatpush1.bf16.msra.mxu0 %v1472
          %1593 = vmatprep.subr.bf16.mxu0 0
          %1594 = vmatpush1.bf16.msra.mxu0 %v1473
          %1595 = vmatprep.subr.bf16.mxu0 0
          %1596 = vmatpush1.bf16.msra.mxu0 %v1474
          %1597 = vmatprep.subr.bf16.mxu0 0
          %1598 = vmatpush1.bf16.msra.mxu0 %v1475
          %1599 = vmatprep.subr.bf16.mxu0 0
          %1600 = vmatpush1.bf16.msra.mxu0 %v1476
          %1601 = vmatprep.subr.bf16.mxu0 0
          %1602 = vmatpush1.bf16.msra.mxu0 %v1477
          %1603 = vmatprep.subr.bf16.mxu0 0
          %1604 = vmatpush1.bf16.msra.mxu0 %v1478
          %1605 = vmatprep.subr.bf16.mxu0 0
          %1606 = vmatpush1.bf16.msra.mxu0 %v1479
          %1607 = vmatprep.subr.bf16.mxu0 0
          %1608 = vmatpush1.bf16.msra.mxu0 %v1480
          %1609 = vmatprep.subr.bf16.mxu0 0
          %1610 = vmatpush1.bf16.msra.mxu0 %v1522
          %1611 = vmatprep.subr.bf16.mxu0 0
          %1612 = vmatpush1.bf16.msra.mxu0 0
          %1613 = vmatprep.subr.bf16.mxu0 0
          %1614 = vmatpush1.bf16.msra.mxu0 0
          %1615 = vmatprep.subr.bf16.mxu0 0
          %1616 = vmatpush1.bf16.msra.mxu0 0
          %1617 = vmatprep.subr.bf16.mxu0 0
          %1618 = vmatpush1.bf16.msra.mxu0 0
          %1619 = vmatprep.subr.bf16.mxu0 0
          %1620 = vmatpush1.bf16.msra.mxu0 0
          %1621 = vmatprep.mubr.bf16.mxu0 %v1509
          %1622 = vmatmul.mubr.bf16.gmra.mrb[0].mxu0 %v1279
          %v1623 = vpop.f32.mrb[0].mxu0
          %v1624 = vadd.f32 %v1559, %v1623
          %v1625 = vpop.f32.mrb[0].mxu0
          %v1626 = vpop.f32.mrb[0].mxu0
          %v1627 = vadd.f32 %v1562, %v1626
          %v1628 = vpop.f32.mrb[0].mxu0
          %1629 = vmatprep.mubr.bf16.mxu0 %v1512
          %1630 = vmatmul.mubr.bf16.gmra.mrb[0].mxu0 %v1283
          %v1631 = vpop.f32.mrb[0].mxu0
          %v1632 = vadd.f32 %v1567, %v1631
          %v1633 = vpop.f32.mrb[0].mxu0
          %v1634 = vpop.f32.mrb[0].mxu0
          %v1635 = vadd.f32 %v1570, %v1634
          %v1636 = vpop.f32.mrb[0].mxu0
          %1637 = vmatprep.mubr.bf16.mxu0 %v1515
          %1638 = vmatmul.mubr.bf16.gmra.mrb[0].mxu0 %v1287
          %v1639 = vpop.f32.mrb[0].mxu0
          %v1640 = vadd.f32 %v1575, %v1639
          %v1641 = vpop.f32.mrb[0].mxu0
          %v1642 = vpop.f32.mrb[0].mxu0
          %v1643 = vadd.f32 %v1578, %v1642
          %v1644 = vpop.f32.mrb[0].mxu0
          %1645 = vmatprep.mubr.bf16.mxu0 %v1518
          %1646 = vmatmul.mubr.bf16.gmra.mrb[0].mxu0 %v1291
          %v1647 = vpop.f32.mrb[0].mxu0
          %v1648 = vadd.f32 %v1583, %v1647
          %v1649 = vpop.f32.mrb[0].mxu0
          %v1650 = vpop.f32.mrb[0].mxu0
          %v1651 = vadd.f32 %v1586, %v1650
          %v1652 = vpop.f32.mrb[0].mxu0
          %1653 = vdwg.mxu0
          %v1654 = vadd.f32 %v1269, %v1624
          %v1655 = vadd.f32 %v1270, %v1627
          %v1656 = vadd.f32 %v1271, %v1632
          %v1657 = vadd.f32 %v1272, %v1635
          %v1658 = vadd.f32 %v1273, %v1640
          %v1659 = vadd.f32 %v1274, %v1643
          %v1660 = vadd.f32 %v1275, %v1648
          %v1661 = vadd.f32 %v1276, %v1651
          %1662 = vst [vmem:[#allocation4] sm:$0xff] %v1654
          %1663 = vst [vmem:[#allocation4 + $0x8] sm:$0xff] %v1655
          %1664 = vst [vmem:[#allocation4 + $0x10] sm:$0xff] %v1656
          %1665 = vst [vmem:[#allocation4 + $0x18] sm:$0xff] %v1657
          %1666 = vst [vmem:[#allocation4 + $0x20] sm:$0xff] %v1658
          %1667 = vst [vmem:[#allocation4 + $0x28] sm:$0xff] %v1659
          %1668 = vst [vmem:[#allocation4 + $0x30] sm:$0xff] %v1660
          %1669 = vst [vmem:[#allocation4 + $0x38] sm:$0xff] %v1661
        $region41: #{_lambda_.4} parent=31 // loop_footer
          %s382 = sadd.s32 1, %s378
        $region42: #{_lambda_.4} parent=31 // loop_footer_branch
          %377 = sbr.rel target = $region38
        $region43: #{_lambda_.4} parent=31 // loop_exit
          _
        %v1670 = vld [vmem:[#allocation4] sm:$0xff]
        %v1671 = vld [vmem:[#allocation4 + $0x8] sm:$0xff]
        %v1672 = vld [vmem:[#allocation4 + $0x10] sm:$0xff]
        %v1673 = vld [vmem:[#allocation4 + $0x18] sm:$0xff]
        %v1674 = vld [vmem:[#allocation4 + $0x20] sm:$0xff]
        %v1675 = vld [vmem:[#allocation4 + $0x28] sm:$0xff]
        %v1676 = vld [vmem:[#allocation4 + $0x30] sm:$0xff]
        %v1677 = vld [vmem:[#allocation4 + $0x38] sm:$0xff]
        %v1678 = vld [vmem:[%s2] sm:$0x1]
        %v1680 = vlaneseq
        %v1681 = vshrl.u32 %v1680, 7
        %v1682 = vsub.s32 0, %v1681
        %v1683 = vrot.slane %v1678, %v1682
        %v1685 = vadd.f32 %v1670, %v1683
        %v1686 = vadd.f32 %v1671, %v1683
        %v1687 = vadd.f32 %v1672, %v1683
        %v1688 = vadd.f32 %v1673, %v1683
        %v1689 = vadd.f32 %v1674, %v1683
        %v1690 = vadd.f32 %v1675, %v1683
        %v1691 = vadd.f32 %v1676, %v1683
        %v1692 = vadd.f32 %v1677, %v1683
        %v1693 = vmax.f32 %v1685, 0.0
        %v1694 = vmax.f32 %v1686, 0.0
        %v1695 = vmax.f32 %v1687, 0.0
        %v1696 = vmax.f32 %v1688, 0.0
        %v1697 = vmax.f32 %v1689, 0.0
        %v1698 = vmax.f32 %v1690, 0.0
        %v1699 = vmax.f32 %v1691, 0.0
        %v1700 = vmax.f32 %v1692, 0.0
        %v1701 = vpack.c.bf16 %v1694, %v1693
        %v1702 = vpack.c.bf16 %v1696, %v1695
        %v1703 = vpack.c.bf16 %v1698, %v1697
        %v1704 = vpack.c.bf16 %v1700, %v1699
        %v1709 = vunpack.c.l.b16 %v1701
        %v1710 = vunpack.c.h.b16 %v1701
        %v1711 = vunpack.c.l.b16 %v1702
        %v1712 = vunpack.c.h.b16 %v1702
        %v1713 = vunpack.c.l.b16 %v1703
        %v1714 = vunpack.c.h.b16 %v1703
        %v1715 = vunpack.c.l.b16 %v1704
        %v1716 = vunpack.c.h.b16 %v1704
        %v1717 = vpack.c.b16 %v1709, %v1709
        %v1718 = vpack.c.b16 %v1710, %v1710
        %v1719 = vpack.c.b16 %v1711, %v1711
        %v1720 = vpack.c.b16 %v1712, %v1712
        %v1721 = vpack.c.b16 %v1713, %v1713
        %v1722 = vpack.c.b16 %v1714, %v1714
        %v1723 = vpack.c.b16 %v1715, %v1715
        %v1724 = vpack.c.b16 %v1716, %v1716
        %v1733 = vmax.bf16 %v1717, %v1718
        %v1734 = vmax.bf16 %v1719, %v1720
        %v1735 = vmax.bf16 %v1721, %v1722
        %v1736 = vmax.bf16 %v1723, %v1724
        %v1742 = vunpack.c.l.s4 1966171168
        %v1743 = vunpack.c.0.s8 %v1742
        %v1744 = vlaneseq
        %v1745 = vshrl.u32 %v1744, 7
        %v1746 = vsub.s32 %v1743, %v1745
        %v1747 = vrot.slane %v1733, %v1746
        %v1748 = vcombine.high %v1747, %v1747
        %v1750 = vunpack.c.l.s4 1966171168
        %v1751 = vunpack.c.0.s8 %v1750
        %v1752 = vlaneseq
        %v1753 = vshrl.u32 %v1752, 7
        %v1754 = vsub.s32 %v1751, %v1753
        %v1755 = vrot.slane %v1747, %v1754
        %v1757 = vunpack.c.l.s4 1966171168
        %v1758 = vunpack.c.0.s8 %v1757
        %v1759 = vlaneseq
        %v1760 = vshrl.u32 %v1759, 7
        %v1761 = vsub.s32 %v1758, %v1760
        %v1762 = vrot.slane %v1748, %v1761
        %v1763 = vcombine.high %v1755, %v1755
        %v1764 = vcombine.high %v1762, %v1762
        %v1766 = vunpack.c.l.s4 1966171168
        %v1767 = vunpack.c.0.s8 %v1766
        %v1768 = vlaneseq
        %v1769 = vshrl.u32 %v1768, 7
        %v1770 = vsub.s32 %v1767, %v1769
        %v1771 = vrot.slane %v1734, %v1770
        %v1772 = vcombine.high %v1771, %v1771
        %v1774 = vunpack.c.l.s4 1966171168
        %v1775 = vunpack.c.0.s8 %v1774
        %v1776 = vlaneseq
        %v1777 = vshrl.u32 %v1776, 7
        %v1778 = vsub.s32 %v1775, %v1777
        %v1779 = vrot.slane %v1771, %v1778
        %v1781 = vunpack.c.l.s4 1966171168
        %v1782 = vunpack.c.0.s8 %v1781
        %v1783 = vlaneseq
        %v1784 = vshrl.u32 %v1783, 7
        %v1785 = vsub.s32 %v1782, %v1784
        %v1786 = vrot.slane %v1772, %v1785
        %v1787 = vcombine.high %v1779, %v1779
        %v1788 = vcombine.high %v1786, %v1786
        %v1790 = vunpack.c.l.s4 1966171168
        %v1791 = vunpack.c.0.s8 %v1790
        %v1792 = vlaneseq
        %v1793 = vshrl.u32 %v1792, 7
        %v1794 = vsub.s32 %v1791, %v1793
        %v1795 = vrot.slane %v1735, %v1794
        %v1796 = vcombine.high %v1795, %v1795
        %v1798 = vunpack.c.l.s4 1966171168
        %v1799 = vunpack.c.0.s8 %v1798
        %v1800 = vlaneseq
        %v1801 = vshrl.u32 %v1800, 7
        %v1802 = vsub.s32 %v1799, %v1801
        %v1803 = vrot.slane %v1795, %v1802
        %v1805 = vunpack.c.l.s4 1966171168
        %v1806 = vunpack.c.0.s8 %v1805
        %v1807 = vlaneseq
        %v1808 = vshrl.u32 %v1807, 7
        %v1809 = vsub.s32 %v1806, %v1808
        %v1810 = vrot.slane %v1796, %v1809
        %v1811 = vcombine.high %v1803, %v1803
        %v1812 = vcombine.high %v1810, %v1810
        %v1814 = vunpack.c.l.s4 1966171168
        %v1815 = vunpack.c.0.s8 %v1814
        %v1816 = vlaneseq
        %v1817 = vshrl.u32 %v1816, 7
        %v1818 = vsub.s32 %v1815, %v1817
        %v1819 = vrot.slane %v1736, %v1818
        %v1820 = vcombine.high %v1819, %v1819
        %v1822 = vunpack.c.l.s4 1966171168
        %v1823 = vunpack.c.0.s8 %v1822
        %v1824 = vlaneseq
        %v1825 = vshrl.u32 %v1824, 7
        %v1826 = vsub.s32 %v1823, %v1825
        %v1827 = vrot.slane %v1819, %v1826
        %v1829 = vunpack.c.l.s4 1966171168
        %v1830 = vunpack.c.0.s8 %v1829
        %v1831 = vlaneseq
        %v1832 = vshrl.u32 %v1831, 7
        %v1833 = vsub.s32 %v1830, %v1832
        %v1834 = vrot.slane %v1820, %v1833
        %v1835 = vcombine.high %v1827, %v1827
        %v1836 = vcombine.high %v1834, %v1834
        %vm1837 = vcmask 1040384
        %v1840 = vsel %vm1837, %v1755, 4286644096
        %v1842 = vunpack.i.l.bf16 %v1840
        %v1843 = vunpack.i.h.bf16 %v1840
        %v1844 = vmax.f32 %v1842, %v1843
        %v1845 = vrot.slane %v1844, 4
        %v1846 = vmax.f32 %v1844, %v1845
        %v1847 = vrot.slane %v1846, 2
        %v1848 = vmax.f32 %v1846, %v1847
        %v1849 = vrot.slane %v1848, 1
        %v1850 = vmax.f32 %v1848, %v1849
        %v1851 = vpack.i.bf16 %v1850, %v1850
        %v1853 = vsel %vm1837, %v1762, 4286644096
        %v1855 = vunpack.i.l.bf16 %v1853
        %v1856 = vunpack.i.h.bf16 %v1853
        %v1857 = vmax.f32 %v1855, %v1856
        %v1858 = vrot.slane %v1857, 4
        %v1859 = vmax.f32 %v1857, %v1858
        %v1860 = vrot.slane %v1859, 2
        %v1861 = vmax.f32 %v1859, %v1860
        %v1862 = vrot.slane %v1861, 1
        %v1863 = vmax.f32 %v1861, %v1862
        %v1864 = vpack.i.bf16 %v1863, %v1863
        %v1866 = vsel %vm1837, %v1763, 4286644096
        %v1868 = vunpack.i.l.bf16 %v1866
        %v1869 = vunpack.i.h.bf16 %v1866
        %v1870 = vmax.f32 %v1868, %v1869
        %v1871 = vrot.slane %v1870, 4
        %v1872 = vmax.f32 %v1870, %v1871
        %v1873 = vrot.slane %v1872, 2
        %v1874 = vmax.f32 %v1872, %v1873
        %v1875 = vrot.slane %v1874, 1
        %v1876 = vmax.f32 %v1874, %v1875
        %v1877 = vpack.i.bf16 %v1876, %v1876
        %v1879 = vsel %vm1837, %v1764, 4286644096
        %v1881 = vunpack.i.l.bf16 %v1879
        %v1882 = vunpack.i.h.bf16 %v1879
        %v1883 = vmax.f32 %v1881, %v1882
        %v1884 = vrot.slane %v1883, 4
        %v1885 = vmax.f32 %v1883, %v1884
        %v1886 = vrot.slane %v1885, 2
        %v1887 = vmax.f32 %v1885, %v1886
        %v1888 = vrot.slane %v1887, 1
        %v1889 = vmax.f32 %v1887, %v1888
        %v1890 = vpack.i.bf16 %v1889, %v1889
        %v1892 = vsel %vm1837, %v1779, 4286644096
        %v1894 = vunpack.i.l.bf16 %v1892
        %v1895 = vunpack.i.h.bf16 %v1892
        %v1896 = vmax.f32 %v1894, %v1895
        %v1897 = vrot.slane %v1896, 4
        %v1898 = vmax.f32 %v1896, %v1897
        %v1899 = vrot.slane %v1898, 2
        %v1900 = vmax.f32 %v1898, %v1899
        %v1901 = vrot.slane %v1900, 1
        %v1902 = vmax.f32 %v1900, %v1901
        %v1903 = vpack.i.bf16 %v1902, %v1902
        %v1905 = vsel %vm1837, %v1786, 4286644096
        %v1907 = vunpack.i.l.bf16 %v1905
        %v1908 = vunpack.i.h.bf16 %v1905
        %v1909 = vmax.f32 %v1907, %v1908
        %v1910 = vrot.slane %v1909, 4
        %v1911 = vmax.f32 %v1909, %v1910
        %v1912 = vrot.slane %v1911, 2
        %v1913 = vmax.f32 %v1911, %v1912
        %v1914 = vrot.slane %v1913, 1
        %v1915 = vmax.f32 %v1913, %v1914
        %v1916 = vpack.i.bf16 %v1915, %v1915
        %v1918 = vsel %vm1837, %v1787, 4286644096
        %v1920 = vunpack.i.l.bf16 %v1918
        %v1921 = vunpack.i.h.bf16 %v1918
        %v1922 = vmax.f32 %v1920, %v1921
        %v1923 = vrot.slane %v1922, 4
        %v1924 = vmax.f32 %v1922, %v1923
        %v1925 = vrot.slane %v1924, 2
        %v1926 = vmax.f32 %v1924, %v1925
        %v1927 = vrot.slane %v1926, 1
        %v1928 = vmax.f32 %v1926, %v1927
        %v1929 = vpack.i.bf16 %v1928, %v1928
        %v1931 = vsel %vm1837, %v1788, 4286644096
        %v1933 = vunpack.i.l.bf16 %v1931
        %v1934 = vunpack.i.h.bf16 %v1931
        %v1935 = vmax.f32 %v1933, %v1934
        %v1936 = vrot.slane %v1935, 4
        %v1937 = vmax.f32 %v1935, %v1936
        %v1938 = vrot.slane %v1937, 2
        %v1939 = vmax.f32 %v1937, %v1938
        %v1940 = vrot.slane %v1939, 1
        %v1941 = vmax.f32 %v1939, %v1940
        %v1942 = vpack.i.bf16 %v1941, %v1941
        %v1944 = vsel %vm1837, %v1803, 4286644096
        %v1946 = vunpack.i.l.bf16 %v1944
        %v1947 = vunpack.i.h.bf16 %v1944
        %v1948 = vmax.f32 %v1946, %v1947
        %v1949 = vrot.slane %v1948, 4
        %v1950 = vmax.f32 %v1948, %v1949
        %v1951 = vrot.slane %v1950, 2
        %v1952 = vmax.f32 %v1950, %v1951
        %v1953 = vrot.slane %v1952, 1
        %v1954 = vmax.f32 %v1952, %v1953
        %v1955 = vpack.i.bf16 %v1954, %v1954
        %v1957 = vsel %vm1837, %v1810, 4286644096
        %v1959 = vunpack.i.l.bf16 %v1957
        %v1960 = vunpack.i.h.bf16 %v1957
        %v1961 = vmax.f32 %v1959, %v1960
        %v1962 = vrot.slane %v1961, 4
        %v1963 = vmax.f32 %v1961, %v1962
        %v1964 = vrot.slane %v1963, 2
        %v1965 = vmax.f32 %v1963, %v1964
        %v1966 = vrot.slane %v1965, 1
        %v1967 = vmax.f32 %v1965, %v1966
        %v1968 = vpack.i.bf16 %v1967, %v1967
        %v1970 = vsel %vm1837, %v1811, 4286644096
        %v1972 = vunpack.i.l.bf16 %v1970
        %v1973 = vunpack.i.h.bf16 %v1970
        %v1974 = vmax.f32 %v1972, %v1973
        %v1975 = vrot.slane %v1974, 4
        %v1976 = vmax.f32 %v1974, %v1975
        %v1977 = vrot.slane %v1976, 2
        %v1978 = vmax.f32 %v1976, %v1977
        %v1979 = vrot.slane %v1978, 1
        %v1980 = vmax.f32 %v1978, %v1979
        %v1981 = vpack.i.bf16 %v1980, %v1980
        %v1983 = vsel %vm1837, %v1812, 4286644096
        %v1985 = vunpack.i.l.bf16 %v1983
        %v1986 = vunpack.i.h.bf16 %v1983
        %v1987 = vmax.f32 %v1985, %v1986
        %v1988 = vrot.slane %v1987, 4
        %v1989 = vmax.f32 %v1987, %v1988
        %v1990 = vrot.slane %v1989, 2
        %v1991 = vmax.f32 %v1989, %v1990
        %v1992 = vrot.slane %v1991, 1
        %v1993 = vmax.f32 %v1991, %v1992
        %v1994 = vpack.i.bf16 %v1993, %v1993
        %v1996 = vsel %vm1837, %v1827, 4286644096
        %v1998 = vunpack.i.l.bf16 %v1996
        %v1999 = vunpack.i.h.bf16 %v1996
        %v2000 = vmax.f32 %v1998, %v1999
        %v2001 = vrot.slane %v2000, 4
        %v2002 = vmax.f32 %v2000, %v2001
        %v2003 = vrot.slane %v2002, 2
        %v2004 = vmax.f32 %v2002, %v2003
        %v2005 = vrot.slane %v2004, 1
        %v2006 = vmax.f32 %v2004, %v2005
        %v2007 = vpack.i.bf16 %v2006, %v2006
        %v2009 = vsel %vm1837, %v1834, 4286644096
        %v2011 = vunpack.i.l.bf16 %v2009
        %v2012 = vunpack.i.h.bf16 %v2009
        %v2013 = vmax.f32 %v2011, %v2012
        %v2014 = vrot.slane %v2013, 4
        %v2015 = vmax.f32 %v2013, %v2014
        %v2016 = vrot.slane %v2015, 2
        %v2017 = vmax.f32 %v2015, %v2016
        %v2018 = vrot.slane %v2017, 1
        %v2019 = vmax.f32 %v2017, %v2018
        %v2020 = vpack.i.bf16 %v2019, %v2019
        %v2022 = vsel %vm1837, %v1835, 4286644096
        %v2024 = vunpack.i.l.bf16 %v2022
        %v2025 = vunpack.i.h.bf16 %v2022
        %v2026 = vmax.f32 %v2024, %v2025
        %v2027 = vrot.slane %v2026, 4
        %v2028 = vmax.f32 %v2026, %v2027
        %v2029 = vrot.slane %v2028, 2
        %v2030 = vmax.f32 %v2028, %v2029
        %v2031 = vrot.slane %v2030, 1
        %v2032 = vmax.f32 %v2030, %v2031
        %v2033 = vpack.i.bf16 %v2032, %v2032
        %v2035 = vsel %vm1837, %v1836, 4286644096
        %v2037 = vunpack.i.l.bf16 %v2035
        %v2038 = vunpack.i.h.bf16 %v2035
        %v2039 = vmax.f32 %v2037, %v2038
        %v2040 = vrot.slane %v2039, 4
        %v2041 = vmax.f32 %v2039, %v2040
        %v2042 = vrot.slane %v2041, 2
        %v2043 = vmax.f32 %v2041, %v2042
        %v2044 = vrot.slane %v2043, 1
        %v2045 = vmax.f32 %v2043, %v2044
        %v2046 = vpack.i.bf16 %v2045, %v2045
        %v2064 = vunpack.c.l.s4 1983009808
        %v2065 = vunpack.c.0.s8 %v2064
        %v2066 = vlaneseq
        %v2067 = vshrl.u32 %v2066, 7
        %v2068 = vsub.s32 %v2065, %v2067
        %v2069 = vrot.slane %v1851, %v2068
        %v2071 = vunpack.c.l.s4 1983009808
        %v2072 = vunpack.c.0.s8 %v2071
        %v2073 = vlaneseq
        %v2074 = vshrl.u32 %v2073, 7
        %v2075 = vsub.s32 %v2072, %v2074
        %v2076 = vrot.slane %v1864, %v2075
        %v2078 = vunpack.c.l.s4 1983009808
        %v2079 = vunpack.c.0.s8 %v2078
        %v2080 = vlaneseq
        %v2081 = vshrl.u32 %v2080, 7
        %v2082 = vsub.s32 %v2079, %v2081
        %v2083 = vrot.slane %v1877, %v2082
        %v2085 = vunpack.c.l.s4 1983009808
        %v2086 = vunpack.c.0.s8 %v2085
        %v2087 = vlaneseq
        %v2088 = vshrl.u32 %v2087, 7
        %v2089 = vsub.s32 %v2086, %v2088
        %v2090 = vrot.slane %v1890, %v2089
        %v2092 = vunpack.c.l.s4 1983009808
        %v2093 = vunpack.c.0.s8 %v2092
        %v2094 = vlaneseq
        %v2095 = vshrl.u32 %v2094, 7
        %v2096 = vsub.s32 %v2093, %v2095
        %v2097 = vrot.slane %v1903, %v2096
        %v2099 = vunpack.c.l.s4 1983009808
        %v2100 = vunpack.c.0.s8 %v2099
        %v2101 = vlaneseq
        %v2102 = vshrl.u32 %v2101, 7
        %v2103 = vsub.s32 %v2100, %v2102
        %v2104 = vrot.slane %v1916, %v2103
        %v2106 = vunpack.c.l.s4 1983009808
        %v2107 = vunpack.c.0.s8 %v2106
        %v2108 = vlaneseq
        %v2109 = vshrl.u32 %v2108, 7
        %v2110 = vsub.s32 %v2107, %v2109
        %v2111 = vrot.slane %v1929, %v2110
        %v2113 = vunpack.c.l.s4 1983009808
        %v2114 = vunpack.c.0.s8 %v2113
        %v2115 = vlaneseq
        %v2116 = vshrl.u32 %v2115, 7
        %v2117 = vsub.s32 %v2114, %v2116
        %v2118 = vrot.slane %v1942, %v2117
        %v2120 = vunpack.c.l.s4 1983009808
        %v2121 = vunpack.c.0.s8 %v2120
        %v2122 = vlaneseq
        %v2123 = vshrl.u32 %v2122, 7
        %v2124 = vsub.s32 %v2121, %v2123
        %v2125 = vrot.slane %v1955, %v2124
        %v2127 = vunpack.c.l.s4 1983009808
        %v2128 = vunpack.c.0.s8 %v2127
        %v2129 = vlaneseq
        %v2130 = vshrl.u32 %v2129, 7
        %v2131 = vsub.s32 %v2128, %v2130
        %v2132 = vrot.slane %v1968, %v2131
        %v2134 = vunpack.c.l.s4 1983009808
        %v2135 = vunpack.c.0.s8 %v2134
        %v2136 = vlaneseq
        %v2137 = vshrl.u32 %v2136, 7
        %v2138 = vsub.s32 %v2135, %v2137
        %v2139 = vrot.slane %v1981, %v2138
        %v2141 = vunpack.c.l.s4 1983009808
        %v2142 = vunpack.c.0.s8 %v2141
        %v2143 = vlaneseq
        %v2144 = vshrl.u32 %v2143, 7
        %v2145 = vsub.s32 %v2142, %v2144
        %v2146 = vrot.slane %v1994, %v2145
        %v2148 = vunpack.c.l.s4 1983009808
        %v2149 = vunpack.c.0.s8 %v2148
        %v2150 = vlaneseq
        %v2151 = vshrl.u32 %v2150, 7
        %v2152 = vsub.s32 %v2149, %v2151
        %v2153 = vrot.slane %v2007, %v2152
        %v2155 = vunpack.c.l.s4 1983009808
        %v2156 = vunpack.c.0.s8 %v2155
        %v2157 = vlaneseq
        %v2158 = vshrl.u32 %v2157, 7
        %v2159 = vsub.s32 %v2156, %v2158
        %v2160 = vrot.slane %v2020, %v2159
        %v2162 = vunpack.c.l.s4 1983009808
        %v2163 = vunpack.c.0.s8 %v2162
        %v2164 = vlaneseq
        %v2165 = vshrl.u32 %v2164, 7
        %v2166 = vsub.s32 %v2163, %v2165
        %v2167 = vrot.slane %v2033, %v2166
        %v2169 = vunpack.c.l.s4 1983009808
        %v2170 = vunpack.c.0.s8 %v2169
        %v2171 = vlaneseq
        %v2172 = vshrl.u32 %v2171, 7
        %v2173 = vsub.s32 %v2170, %v2172
        %v2174 = vrot.slane %v2046, %v2173
        %v2176 = vunpack.c.l.s4 1983009808
        %v2177 = vunpack.c.0.s8 %v2176
        %v2178 = vlaneseq
        %v2179 = vshrl.u32 %v2178, 7
        %v2180 = vsub.s32 %v2177, %v2179
        %v2181 = vrot.slane %v2069, %v2180
        %v2183 = vunpack.c.l.s4 1983009808
        %v2184 = vunpack.c.0.s8 %v2183
        %v2185 = vlaneseq
        %v2186 = vshrl.u32 %v2185, 7
        %v2187 = vsub.s32 %v2184, %v2186
        %v2188 = vrot.slane %v2076, %v2187
        %v2190 = vunpack.c.l.s4 1983009808
        %v2191 = vunpack.c.0.s8 %v2190
        %v2192 = vlaneseq
        %v2193 = vshrl.u32 %v2192, 7
        %v2194 = vsub.s32 %v2191, %v2193
        %v2195 = vrot.slane %v2083, %v2194
        %v2197 = vunpack.c.l.s4 1983009808
        %v2198 = vunpack.c.0.s8 %v2197
        %v2199 = vlaneseq
        %v2200 = vshrl.u32 %v2199, 7
        %v2201 = vsub.s32 %v2198, %v2200
        %v2202 = vrot.slane %v2090, %v2201
        %v2204 = vunpack.c.l.s4 1983009808
        %v2205 = vunpack.c.0.s8 %v2204
        %v2206 = vlaneseq
        %v2207 = vshrl.u32 %v2206, 7
        %v2208 = vsub.s32 %v2205, %v2207
        %v2209 = vrot.slane %v2097, %v2208
        %v2211 = vunpack.c.l.s4 1983009808
        %v2212 = vunpack.c.0.s8 %v2211
        %v2213 = vlaneseq
        %v2214 = vshrl.u32 %v2213, 7
        %v2215 = vsub.s32 %v2212, %v2214
        %v2216 = vrot.slane %v2104, %v2215
        %v2218 = vunpack.c.l.s4 1983009808
        %v2219 = vunpack.c.0.s8 %v2218
        %v2220 = vlaneseq
        %v2221 = vshrl.u32 %v2220, 7
        %v2222 = vsub.s32 %v2219, %v2221
        %v2223 = vrot.slane %v2111, %v2222
        %v2225 = vunpack.c.l.s4 1983009808
        %v2226 = vunpack.c.0.s8 %v2225
        %v2227 = vlaneseq
        %v2228 = vshrl.u32 %v2227, 7
        %v2229 = vsub.s32 %v2226, %v2228
        %v2230 = vrot.slane %v2118, %v2229
        %v2232 = vunpack.c.l.s4 1983009808
        %v2233 = vunpack.c.0.s8 %v2232
        %v2234 = vlaneseq
        %v2235 = vshrl.u32 %v2234, 7
        %v2236 = vsub.s32 %v2233, %v2235
        %v2237 = vrot.slane %v2125, %v2236
        %v2239 = vunpack.c.l.s4 1983009808
        %v2240 = vunpack.c.0.s8 %v2239
        %v2241 = vlaneseq
        %v2242 = vshrl.u32 %v2241, 7
        %v2243 = vsub.s32 %v2240, %v2242
        %v2244 = vrot.slane %v2132, %v2243
        %v2246 = vunpack.c.l.s4 1983009808
        %v2247 = vunpack.c.0.s8 %v2246
        %v2248 = vlaneseq
        %v2249 = vshrl.u32 %v2248, 7
        %v2250 = vsub.s32 %v2247, %v2249
        %v2251 = vrot.slane %v2139, %v2250
        %v2253 = vunpack.c.l.s4 1983009808
        %v2254 = vunpack.c.0.s8 %v2253
        %v2255 = vlaneseq
        %v2256 = vshrl.u32 %v2255, 7
        %v2257 = vsub.s32 %v2254, %v2256
        %v2258 = vrot.slane %v2146, %v2257
        %v2260 = vunpack.c.l.s4 1983009808
        %v2261 = vunpack.c.0.s8 %v2260
        %v2262 = vlaneseq
        %v2263 = vshrl.u32 %v2262, 7
        %v2264 = vsub.s32 %v2261, %v2263
        %v2265 = vrot.slane %v2153, %v2264
        %v2267 = vunpack.c.l.s4 1983009808
        %v2268 = vunpack.c.0.s8 %v2267
        %v2269 = vlaneseq
        %v2270 = vshrl.u32 %v2269, 7
        %v2271 = vsub.s32 %v2268, %v2270
        %v2272 = vrot.slane %v2160, %v2271
        %v2274 = vunpack.c.l.s4 1983009808
        %v2275 = vunpack.c.0.s8 %v2274
        %v2276 = vlaneseq
        %v2277 = vshrl.u32 %v2276, 7
        %v2278 = vsub.s32 %v2275, %v2277
        %v2279 = vrot.slane %v2167, %v2278
        %v2281 = vunpack.c.l.s4 1983009808
        %v2282 = vunpack.c.0.s8 %v2281
        %v2283 = vlaneseq
        %v2284 = vshrl.u32 %v2283, 7
        %v2285 = vsub.s32 %v2282, %v2284
        %v2286 = vrot.slane %v2174, %v2285
        %v2287 = vunpack.c.l.b16 %v2181
        %v2288 = vunpack.c.l.b16 %v2188
        %v2289 = vunpack.c.l.b16 %v2195
        %v2290 = vunpack.c.l.b16 %v2202
        %v2291 = vunpack.c.l.b16 %v2209
        %v2292 = vunpack.c.l.b16 %v2216
        %v2293 = vunpack.c.l.b16 %v2223
        %v2294 = vunpack.c.l.b16 %v2230
        %v2295 = vunpack.c.l.b16 %v2237
        %v2296 = vunpack.c.l.b16 %v2244
        %v2297 = vunpack.c.l.b16 %v2251
        %v2298 = vunpack.c.l.b16 %v2258
        %v2299 = vunpack.c.l.b16 %v2265
        %v2300 = vunpack.c.l.b16 %v2272
        %v2301 = vunpack.c.l.b16 %v2279
        %v2302 = vunpack.c.l.b16 %v2286
        %v2303 = vrot.slane %v2288, 7
        %vm2304 = vcmask 1041409
        %v2305 = vsel %vm2304, %v2303, %v2287
        %v2306 = vrot.slane %v2289, 6
        %vm2307 = vcmask 1042434
        %v2308 = vsel %vm2307, %v2306, %v2305
        %v2309 = vrot.slane %v2290, 5
        %vm2310 = vcmask 1043459
        %v2311 = vsel %vm2310, %v2309, %v2308
        %v2312 = vrot.slane %v2292, 7
        %v2313 = vsel %vm2304, %v2312, %v2291
        %v2314 = vrot.slane %v2293, 6
        %v2315 = vsel %vm2307, %v2314, %v2313
        %v2316 = vrot.slane %v2294, 5
        %v2317 = vsel %vm2310, %v2316, %v2315
        %v2318 = vrot.slane %v2296, 7
        %v2319 = vsel %vm2304, %v2318, %v2295
        %v2320 = vrot.slane %v2297, 6
        %v2321 = vsel %vm2307, %v2320, %v2319
        %v2322 = vrot.slane %v2298, 5
        %v2323 = vsel %vm2310, %v2322, %v2321
        %v2324 = vrot.slane %v2300, 7
        %v2325 = vsel %vm2304, %v2324, %v2299
        %v2326 = vrot.slane %v2301, 6
        %v2327 = vsel %vm2307, %v2326, %v2325
        %v2328 = vrot.slane %v2302, 5
        %v2329 = vsel %vm2310, %v2328, %v2327
        %v2330 = vpack.c.b16 %v2311, %v2311
        %v2331 = vpack.c.b16 %v2317, %v2317
        %v2332 = vpack.c.b16 %v2323, %v2323
        %v2333 = vpack.c.b16 %v2329, %v2329
        %v2335 = vunpack.c.l.s4 1983009808
        %v2336 = vunpack.c.0.s8 %v2335
        %v2337 = vlaneseq
        %v2338 = vshrl.u32 %v2337, 7
        %v2339 = vsub.s32 %v2336, %v2338
        %v2340 = vrot.slane %v2330, %v2339
        %v2342 = vunpack.c.l.s4 1983009808
        %v2343 = vunpack.c.0.s8 %v2342
        %v2344 = vlaneseq
        %v2345 = vshrl.u32 %v2344, 7
        %v2346 = vsub.s32 %v2343, %v2345
        %v2347 = vrot.slane %v2331, %v2346
        %v2349 = vunpack.c.l.s4 1983009808
        %v2350 = vunpack.c.0.s8 %v2349
        %v2351 = vlaneseq
        %v2352 = vshrl.u32 %v2351, 7
        %v2353 = vsub.s32 %v2350, %v2352
        %v2354 = vrot.slane %v2332, %v2353
        %v2356 = vunpack.c.l.s4 1983009808
        %v2357 = vunpack.c.0.s8 %v2356
        %v2358 = vlaneseq
        %v2359 = vshrl.u32 %v2358, 7
        %v2360 = vsub.s32 %v2357, %v2359
        %v2361 = vrot.slane %v2333, %v2360
        %2366 = vst [vmem:[%s185] sm:$0x3] %v2340
        %2367 = vst [vmem:[%s185 + $0x2] sm:$0x3] %v2347
        %2368 = vst [vmem:[%s185 + $0x4] sm:$0x3] %v2354
        %2369 = vst [vmem:[%s185 + $0x6] sm:$0x3] %v2361
        %p2370 = scmp.lt.s32.totalorder %s15, 1
        %s2371 = scalar_select %p2370, %s15, 1
        %s2372 = smul.addr %s2371, 4
        %s2373 = smul.addr %s2372, 2
        %s2374 = scalar_lea.vmem %s3, %s2373
        // Predicated region
        $region44: #{_lambda_.4} parent=31 // pred_check
          %p2375 = pneg %p101
        $region45: #{_lambda_.4} parent=31 // pred_check_branch
          %2377 = sbr.rel (%p2375) target = $region47
        $region46: #{_lambda_.4} parent=31 // pred_region
          _
        $region47: #{_lambda_.4} parent=31 // pred_fallthru
          _
      $region32: #{_lambda_.4} parent=5 // pred_fallthru
        _
      %p2378 = scmp.le.s32.totalorder 2, %s10
      // Predicated region
      $region48: #{_lambda_.4} parent=5 // pred_check
        %p2379 = pneg %p2378
      $region49: #{_lambda_.4} parent=5 // pred_check_branch
        %2381 = sbr.rel (%p2379) target = $region51
      $region50: #{_lambda_.4} parent=5 // pred_region
        %s2382 = ssub.s32 %s10, 2
        // Predicated region
        $region52: #{_lambda_.4} parent=50 // pred_check
          %p2383 = pneg %p107
        $region53: #{_lambda_.4} parent=50 // pred_check_branch
          %2385 = sbr.rel (%p2383) target = $region55
        $region54: #{_lambda_.4} parent=50 // pred_region
          %p2386 = scmp.lt.s32.totalorder %s16, 1
          %s2387 = scalar_select %p2386, %s16, 1
          %s2388 = smul.addr %s2387, 4
          %s2389 = smul.addr %s2388, 2
          %s2390 = scalar_lea.vmem %s3, %s2389
        $region55: #{_lambda_.4} parent=50 // pred_fallthru
          _
      $region51: #{_lambda_.4} parent=5 // pred_fallthru
        _
    $region6: #{_lambda_.4} parent=1 // loop_footer
      %s14 = sadd.s32 1, %s10
    $region7: #{_lambda_.4} parent=1 // loop_footer_branch
      %9 = sbr.rel target = $region3
    $region8: #{_lambda_.4} parent=1 // loop_exit
      _
    %2391 = vsyncpa [#allocation6], 1
    %s2392 = scalar_lea.sflag [#allocation6], 1
    %2393 = vsyncpa %s2392, 1

// kernel: _lambda_.5
$region0: #{_lambda_.5}
  #allocation0 [shape = 'u32[]', space=smem, size = 0x4, offset = 0x4, fixed_abs, tag = 'smem constant byte address 0x4 - core index']
  #allocation1 [shape = 'u32[144,128]{1,0:T(1,128)}', space=vmem, size = 0x12000, scoped, tag = 'internal scratch']
  #allocation2 [shape = 'bf16[10,10,128]{2,1,0:T(8,128)(2,1)}', space=vmem, size = 0xa000, scoped, tag = 'scratch operand']
  #allocation3 [shape = 'bf16[16,896]{1,0:T(16,128)(2,1)}', space=vmem, size = 0x7000, scoped, tag = 'scratch operand']
  #allocation4 [shape = 'f32[16,60]{1,0:T(8,128)}', space=vmem, size = 0x2000, scoped, tag = 'scratch operand']
  #allocation5 [shape = 'bf16[10,10,60]{2,1,0:T(8,128)(2,1)}', space=vmem, size = 0xa000, scoped, tag = 'scratch operand']
  #allocation6 [shape = 'bf16[16,420]{1,0:T(16,128)(2,1)}', space=vmem, size = 0x4000, scoped, tag = 'scratch operand']
  #allocation7 [shape = 'f32[16,30]{1,0:T(8,128)}', space=vmem, size = 0x2000, scoped, tag = 'scratch operand']
  #allocation8 [shape = 'f32[1,1]{1,0:T(1,128)S(1)}', space=vmem, size = 0x200, scoped, tag = 'scoped memory for _lambda_.5']
  %s0 = inlined_call_operand.vmem [shape: bf16[2,4,4,128], index: 0, kind: input, shape index: {}]
  %s1 = inlined_call_operand.hbm [shape: bf16[7,896,60], index: 1, kind: input, shape index: {}]
  %s2 = inlined_call_operand.vmem [shape: f32[1,60], index: 2, kind: input, shape index: {}]
  %s3 = inlined_call_operand.vmem [shape: bf16[7,420,30], index: 3, kind: input, shape index: {}]
  %s4 = inlined_call_operand.vmem [shape: f32[1,30], index: 4, kind: input, shape index: {}]
  %s5 = inlined_call_operand.hbm [shape: f32[1,1,30], index: 5, kind: input, shape index: {}]
  %s6 = inlined_call_operand.<no memory space> [shape: f32[1,1], index: 6, kind: input, shape index: {}]
  %s7 = inlined_call_operand.hbm [shape: f32[2,4,4], index: 7, kind: output, shape index: {}]
  %s8 = sld [smem:[#allocation0]]
  $region83: #{_lambda_.5} parent=0
    _
  %s10 = ssub.s32 1, %s8
  %s11 = scalar_select 0, %s10, %s8
  %v12 = vstv %s6
  %13 = vst [vmem:[#allocation8] sm:$0x1] %v12
  $region1: #{_lambda_.5} parent=0
    #allocation9 [shape = 'u8[1605632]{0}', space=vmem, size = 0x188000, scoped, tag = 'input window, operand 1, single buffered']
    #allocation10 [shape = 's32[2]{0}', space=sflag, size = 0x8, scoped, tag = 'scoped memory for _lambda_.5']
    #allocation11 [shape = 's32[2]{0}', space=sflag, size = 0x8, scoped, tag = 'scoped memory for _lambda_.5']
    #allocation12 [shape = 'u8[512]{0}', space=vmem, size = 0x400, scoped, tag = 'input window, operand 5, single buffered']
    #allocation13 [shape = 's32[1]{0}', space=sflag, size = 0x4, scoped, tag = 'scoped memory for _lambda_.5']
    #allocation14 [shape = 'u8[4096]{0}', space=vmem, size = 0x1000, scoped, tag = 'output window, operand 0']
    %14 = vsyncpa [#allocation10], 0
    %15 = vsyncpa [#allocation13], 0
    %16 = vsyncpa [#allocation11], 0
    %s17 = scalar_lea.sflag [#allocation11], 1
    %18 = vsyncpa %s17, 0
    loop: start=0, step=1, limit=4
    $region2: #{_lambda_.5} parent=1 // loop_pre_header
      _
    $region3: #{_lambda_.5} parent=1 // loop_header
      %s20 = sphi 0, %s24
      %p21 = scmp.ge.s32.totalorder %s20, 4
      %s30 = sphi 0, %s32
      %s33 = sphi 0, %s30
      %s34 = sphi 0, %s33
      %s50 = sphi 0, %s34
      %s54 = sphi 0, %s54
      %s56 = sphi 0, %s54
      %s57 = sphi 0, %s56
      %s71 = sphi 0, %s57
      %s75 = sphi 0, %s75
      %s77 = sphi 0, %s75
      %s78 = sphi 0, %s77
      %s92 = sphi 0, %s78
      %s96 = sphi 0, %s96
      %s98 = sphi 0, %s96
      %s99 = sphi 0, %s98
      %s113 = sphi 0, %s99
      %s117 = sphi 0, %s117
      %s119 = sphi 0, %s117
      %s120 = sphi 0, %s119
      %s134 = sphi 0, %s120
      %s138 = sphi 0, %s138
      %s140 = sphi 0, %s138
      %s141 = sphi 0, %s140
      %s155 = sphi 0, %s141
      %s159 = sphi 0, %s159
      %s161 = sphi 0, %s159
      %s162 = sphi 0, %s161
      %s176 = sphi 0, %s162
      %s182 = sphi 0, %s184
      %s185 = sphi 0, %s182
      %s186 = sphi 0, %s185
      %s202 = sphi 0, %s186
    $region4: #{_lambda_.5} parent=1 // loop_header_branch
      %23 = sbr.rel (%p21) target = $region8
    $region5: #{_lambda_.5} parent=1 // loop_body
      %s25 = ssub.s32 %s20, 1
      %s26 = ssub.s32 %s20, 2
      %s27 = sadd.s32 %s20, 1
      %s28 = ssub.s32 %s20, %s27
      %p29 = scmp.eq.s32.totalorder %s28, 0
      %s31 = sadd.s32 %s30, 1
      %s32 = scalar_select %p29, %s30, %s31
      %p35 = pneg %p29
      %p36 = scmp.eq.s32.totalorder %s20, 1
      %p37 = por %p35, %p36
      %p38 = scmp.ne.s32.totalorder %s30, %s33
      %p39 = scmp.eq.s32.totalorder %s20, 0
      %p40 = por %p38, %p39
      %p41 = scmp.ne.s32.totalorder %s30, %s33
      %p42 = scmp.eq.s32.totalorder %s25, 1
      %p43 = por %p41, %p42
      %p44 = scmp.ne.s32.totalorder %s33, %s34
      %p45 = scmp.eq.s32.totalorder %s25, 0
      %p46 = por %p44, %p45
      %p47 = scmp.ne.s32.totalorder %s33, %s34
      %p48 = scmp.eq.s32.totalorder %s26, 1
      %p49 = por %p47, %p48
      %p51 = scmp.ne.s32.totalorder %s34, %s50
      %p52 = scmp.eq.s32.totalorder %s26, 0
      %p53 = por %p51, %p52
      %s55 = sadd.s32 %s54, 1
      %p58 = scmp.eq.s32.totalorder %s20, 1
      %p59 = scmp.ne.s32.totalorder %s54, %s56
      %p60 = scmp.eq.s32.totalorder %s20, 0
      %p61 = por %p59, %p60
      %p62 = scmp.ne.s32.totalorder %s54, %s56
      %p63 = scmp.eq.s32.totalorder %s25, 1
      %p64 = por %p62, %p63
      %p65 = scmp.ne.s32.totalorder %s56, %s57
      %p66 = scmp.eq.s32.totalorder %s25, 0
      %p67 = por %p65, %p66
      %p68 = scmp.ne.s32.totalorder %s56, %s57
      %p69 = scmp.eq.s32.totalorder %s26, 1
      %p70 = por %p68, %p69
      %p72 = scmp.ne.s32.totalorder %s57, %s71
      %p73 = scmp.eq.s32.totalorder %s26, 0
      %p74 = por %p72, %p73
      %s76 = sadd.s32 %s75, 1
      %p79 = scmp.eq.s32.totalorder %s20, 1
      %p80 = scmp.ne.s32.totalorder %s75, %s77
      %p81 = scmp.eq.s32.totalorder %s20, 0
      %p82 = por %p80, %p81
      %p83 = scmp.ne.s32.totalorder %s75, %s77
      %p84 = scmp.eq.s32.totalorder %s25, 1
      %p85 = por %p83, %p84
      %p86 = scmp.ne.s32.totalorder %s77, %s78
      %p87 = scmp.eq.s32.totalorder %s25, 0
      %p88 = por %p86, %p87
      %p89 = scmp.ne.s32.totalorder %s77, %s78
      %p90 = scmp.eq.s32.totalorder %s26, 1
      %p91 = por %p89, %p90
      %p93 = scmp.ne.s32.totalorder %s78, %s92
      %p94 = scmp.eq.s32.totalorder %s26, 0
      %p95 = por %p93, %p94
      %s97 = sadd.s32 %s96, 1
      %p100 = scmp.eq.s32.totalorder %s20, 1
      %p101 = scmp.ne.s32.totalorder %s96, %s98
      %p102 = scmp.eq.s32.totalorder %s20, 0
      %p103 = por %p101, %p102
      %p104 = scmp.ne.s32.totalorder %s96, %s98
      %p105 = scmp.eq.s32.totalorder %s25, 1
      %p106 = por %p104, %p105
      %p107 = scmp.ne.s32.totalorder %s98, %s99
      %p108 = scmp.eq.s32.totalorder %s25, 0
      %p109 = por %p107, %p108
      %p110 = scmp.ne.s32.totalorder %s98, %s99
      %p111 = scmp.eq.s32.totalorder %s26, 1
      %p112 = por %p110, %p111
      %p114 = scmp.ne.s32.totalorder %s99, %s113
      %p115 = scmp.eq.s32.totalorder %s26, 0
      %p116 = por %p114, %p115
      %s118 = sadd.s32 %s117, 1
      %p121 = scmp.eq.s32.totalorder %s20, 1
      %p122 = scmp.ne.s32.totalorder %s117, %s119
      %p123 = scmp.eq.s32.totalorder %s20, 0
      %p124 = por %p122, %p123
      %p125 = scmp.ne.s32.totalorder %s117, %s119
      %p126 = scmp.eq.s32.totalorder %s25, 1
      %p127 = por %p125, %p126
      %p128 = scmp.ne.s32.totalorder %s119, %s120
      %p129 = scmp.eq.s32.totalorder %s25, 0
      %p130 = por %p128, %p129
      %p131 = scmp.ne.s32.totalorder %s119, %s120
      %p132 = scmp.eq.s32.totalorder %s26, 1
      %p133 = por %p131, %p132
      %p135 = scmp.ne.s32.totalorder %s120, %s134
      %p136 = scmp.eq.s32.totalorder %s26, 0
      %p137 = por %p135, %p136
      %s139 = sadd.s32 %s138, 1
      %p142 = scmp.eq.s32.totalorder %s20, 1
      %p143 = scmp.ne.s32.totalorder %s138, %s140
      %p144 = scmp.eq.s32.totalorder %s20, 0
      %p145 = por %p143, %p144
      %p146 = scmp.ne.s32.totalorder %s138, %s140
      %p147 = scmp.eq.s32.totalorder %s25, 1
      %p148 = por %p146, %p147
      %p149 = scmp.ne.s32.totalorder %s140, %s141
      %p150 = scmp.eq.s32.totalorder %s25, 0
      %p151 = por %p149, %p150
      %p152 = scmp.ne.s32.totalorder %s140, %s141
      %p153 = scmp.eq.s32.totalorder %s26, 1
      %p154 = por %p152, %p153
      %p156 = scmp.ne.s32.totalorder %s141, %s155
      %p157 = scmp.eq.s32.totalorder %s26, 0
      %p158 = por %p156, %p157
      %s160 = sadd.s32 %s159, 1
      %p163 = scmp.eq.s32.totalorder %s20, 1
      %p164 = scmp.ne.s32.totalorder %s159, %s161
      %p165 = scmp.eq.s32.totalorder %s20, 0
      %p166 = por %p164, %p165
      %p167 = scmp.ne.s32.totalorder %s159, %s161
      %p168 = scmp.eq.s32.totalorder %s25, 1
      %p169 = por %p167, %p168
      %p170 = scmp.ne.s32.totalorder %s161, %s162
      %p171 = scmp.eq.s32.totalorder %s25, 0
      %p172 = por %p170, %p171
      %p173 = scmp.ne.s32.totalorder %s161, %s162
      %p174 = scmp.eq.s32.totalorder %s26, 1
      %p175 = por %p173, %p174
      %p177 = scmp.ne.s32.totalorder %s162, %s176
      %p178 = scmp.eq.s32.totalorder %s26, 0
      %p179 = por %p177, %p178
      %s180 = ssub.s32 %s20, %s27
      %p181 = scmp.eq.s32.totalorder %s180, 0
      %s183 = sadd.s32 %s182, 1
      %s184 = scalar_select %p181, %s182, %s183
      %p187 = pneg %p181
      %p188 = scmp.eq.s32.totalorder %s20, 1
      %p189 = por %p187, %p188
      %p190 = scmp.ne.s32.totalorder %s182, %s185
      %p191 = scmp.eq.s32.totalorder %s20, 0
      %p192 = por %p190, %p191
      %p193 = scmp.ne.s32.totalorder %s182, %s185
      %p194 = scmp.eq.s32.totalorder %s25, 1
      %p195 = por %p193, %p194
      %p196 = scmp.ne.s32.totalorder %s185, %s186
      %p197 = scmp.eq.s32.totalorder %s25, 0
      %p198 = por %p196, %p197
      %p199 = scmp.ne.s32.totalorder %s185, %s186
      %p200 = scmp.eq.s32.totalorder %s26, 1
      %p201 = por %p199, %p200
      %p203 = scmp.ne.s32.totalorder %s186, %s202
      %p204 = scmp.eq.s32.totalorder %s26, 0
      %p205 = por %p203, %p204
      %p206 = scmp.le.s32.totalorder 1, %s20
      %p207 = scmp.lt.s32.totalorder %s20, 3
      %p208 = pnand %p206, %p207
      %p209 = pneg %p208
      // Predicated region
      $region9: #{_lambda_.5} parent=5 // pred_check
        _
      $region10: #{_lambda_.5} parent=5 // pred_check_branch
        %211 = sbr.rel (%p208) target = $region12
      $region11: #{_lambda_.5} parent=5 // pred_region
        %s212 = ssub.s32 %s20, 1
        // Predicated region
        $region13: #{_lambda_.5} parent=11 // pred_check
          %p213 = pneg %p67
        $region14: #{_lambda_.5} parent=11 // pred_check_branch
          %215 = sbr.rel (%p213) target = $region16
        $region15: #{_lambda_.5} parent=11 // pred_region
          %s217 = ssub.s32 50176, 50176
          %218 = vsyncadd [#allocation10], %s217
          %s219 = sshll.u32 [#allocation9], 4
          %s220 = int_to_ptr.vmem [resolvable:$true] %s219
          %225 = dma.hbm_to_vmem [thread:$0]  %s1, 50176, %s220, [#allocation10], 64, 64, 4
        $region16: #{_lambda_.5} parent=11 // pred_fallthru
          _
        // Predicated region
        $region17: #{_lambda_.5} parent=11 // pred_check
          %p226 = pneg %p88
        $region18: #{_lambda_.5} parent=11 // pred_check_branch
          %228 = sbr.rel (%p226) target = $region20
        $region19: #{_lambda_.5} parent=11 // pred_region
          _
        $region20: #{_lambda_.5} parent=11 // pred_fallthru
          _
        // Predicated region
        $region21: #{_lambda_.5} parent=11 // pred_check
          %p229 = pneg %p109
        $region22: #{_lambda_.5} parent=11 // pred_check_branch
          %231 = sbr.rel (%p229) target = $region24
        $region23: #{_lambda_.5} parent=11 // pred_region
          _
        $region24: #{_lambda_.5} parent=11 // pred_fallthru
          _
        // Predicated region
        $region25: #{_lambda_.5} parent=11 // pred_check
          %p232 = pneg %p130
        $region26: #{_lambda_.5} parent=11 // pred_check_branch
          %234 = sbr.rel (%p232) target = $region28
        $region27: #{_lambda_.5} parent=11 // pred_region
          _
        $region28: #{_lambda_.5} parent=11 // pred_fallthru
          _
        // Predicated region
        $region29: #{_lambda_.5} parent=11 // pred_check
          %p235 = pneg %p151
        $region30: #{_lambda_.5} parent=11 // pred_check_branch
          %237 = sbr.rel (%p235) target = $region32
        $region31: #{_lambda_.5} parent=11 // pred_region
          %s239 = ssub.s32 16, 16
          %240 = vsyncadd [#allocation13], %s239
          %s242 = sshll.u32 [#allocation12], 4
          %s243 = int_to_ptr.vmem [resolvable:$true] %s242
          %245 = dma.hbm_to_vmem [thread:$0]  %s5, 16, %s243, [#allocation13]
        $region32: #{_lambda_.5} parent=11 // pred_fallthru
          _
        // Predicated region
        $region33: #{_lambda_.5} parent=11 // pred_check
          %p246 = pneg %p172
        $region34: #{_lambda_.5} parent=11 // pred_check_branch
          %248 = sbr.rel (%p246) target = $region36
        $region35: #{_lambda_.5} parent=11 // pred_region
          _
        $region36: #{_lambda_.5} parent=11 // pred_fallthru
          _
      $region12: #{_lambda_.5} parent=5 // pred_fallthru
        _
      %p249 = scmp.lt.s32.totalorder %s20, 2
      // Predicated region
      $region37: #{_lambda_.5} parent=5 // pred_check
        %p250 = pneg %p249
      $region38: #{_lambda_.5} parent=5 // pred_check_branch
        %252 = sbr.rel (%p250) target = $region40
      $region39: #{_lambda_.5} parent=5 // pred_region
        // Predicated region
        $region41: #{_lambda_.5} parent=39 // pred_check
          %p253 = pneg %p40
        $region42: #{_lambda_.5} parent=39 // pred_check_branch
          %255 = sbr.rel (%p253) target = $region44
        $region43: #{_lambda_.5} parent=39 // pred_region
          %p256 = scmp.lt.s32.totalorder %s20, 1
          %s257 = scalar_select %p256, %s20, 1
          %s258 = smul.addr %s257, 4
          %s259 = smul.addr %s258, 2
          %s260 = scalar_lea.vmem %s0, %s259
        $region44: #{_lambda_.5} parent=39 // pred_fallthru
          _
      $region40: #{_lambda_.5} parent=5 // pred_fallthru
        _
      %p261 = scmp.le.s32.totalorder 1, %s20
      %p262 = scmp.lt.s32.totalorder %s20, 3
      %p263 = pnand %p261, %p262
      %p264 = pneg %p263
      // Predicated region
      $region45: #{_lambda_.5} parent=5 // pred_check
        _
      $region46: #{_lambda_.5} parent=5 // pred_check_branch
        %266 = sbr.rel (%p263) target = $region48
      $region47: #{_lambda_.5} parent=5 // pred_region
        %s267 = ssub.s32 %s20, 1
        // Predicated region
        $region49: #{_lambda_.5} parent=47 // pred_check
          %p268 = pneg %p67
        $region50: #{_lambda_.5} parent=47 // pred_check_branch
          %270 = sbr.rel (%p268) target = $region52
        $region51: #{_lambda_.5} parent=47 // pred_region
          %271 = dma.done [#allocation10], 50176
        $region52: #{_lambda_.5} parent=47 // pred_fallthru
          _
        // Predicated region
        $region53: #{_lambda_.5} parent=47 // pred_check
          %p272 = pneg %p151
        $region54: #{_lambda_.5} parent=47 // pred_check_branch
          %274 = sbr.rel (%p272) target = $region56
        $region55: #{_lambda_.5} parent=47 // pred_region
          %275 = dma.done [#allocation13], 16
        $region56: #{_lambda_.5} parent=47 // pred_fallthru
          _
        %p276 = scmp.lt.s32.totalorder %s25, 1
        %s277 = scalar_select %p276, %s25, 1
        %s278 = smul.addr %s277, 4
        %s279 = smul.addr %s278, 2
        %s280 = scalar_lea.vmem %s0, %s279
        %p281 = pneg %p46
        %p282 = pneg %p43
        %p283 = pneg %p67
        %p284 = pneg %p64
        %p285 = pneg %p88
        %p286 = pneg %p85
        %p287 = pneg %p109
        %p288 = pneg %p106
        %p289 = pneg %p130
        %p290 = pneg %p127
        %p291 = pneg %p151
        %p292 = pneg %p148
        %p293 = pneg %p172
        %p294 = pneg %p169
        %p295 = pneg %p198
        %p296 = pneg %p195
        %s297 = sand.u32 %s185, 1
        %s298 = scalar_lea.sflag [#allocation11], %s297
        %s299 = sand.u32 %s185, 1
        %s300 = smul.addr %s299, 4
        %s301 = scalar_lea.vmem [#allocation14], %s300
        %p302 = scmp.lt.s32.totalorder %s25, 1
        %s303 = scalar_select %p302, %s25, 1
        %s304 = smul.addr %s303, 4
        %s305 = smul.addr %s304, 2
        %s306 = scalar_lea.vmem %s0, %s305
        %v308 = vld [vmem:[%s306] sm:$0x3]
        %v309 = vld [vmem:[%s306 + $0x2] sm:$0x3]
        %v310 = vld [vmem:[%s306 + $0x4] sm:$0x3]
        %v311 = vld [vmem:[%s306 + $0x6] sm:$0x3]
        %312 = vst [vmem:[#allocation2] sm:$0xf] 0
        %313 = vst [vmem:[#allocation2 + $0x4] sm:$0x1] 0
        %314 = vst [vmem:[#allocation2 + $0x8] sm:$0xf] 0
        %315 = vst [vmem:[#allocation2 + $0xc] sm:$0x1] 0
        %316 = vst [vmem:[#allocation2 + $0x10] sm:$0xf] 0
        %317 = vst [vmem:[#allocation2 + $0x14] sm:$0x1] 0
        %318 = vst [vmem:[#allocation2 + $0x18] sm:$0xf] 0
        %319 = vst [vmem:[#allocation2 + $0x1c] sm:$0x1] 0
        %320 = vst [vmem:[#allocation2 + $0x20] sm:$0xf] 0
        %321 = vst [vmem:[#allocation2 + $0x24] sm:$0x1] 0
        %322 = vst [vmem:[#allocation2 + $0x28] sm:$0xf] 0
        %323 = vst [vmem:[#allocation2 + $0x2c] sm:$0x1] 0
        %324 = vst [vmem:[#allocation2 + $0x30] sm:$0xf] 0
        %325 = vst [vmem:[#allocation2 + $0x34] sm:$0x1] 0
        %326 = vst [vmem:[#allocation2 + $0x38] sm:$0xf] 0
        %327 = vst [vmem:[#allocation2 + $0x3c] sm:$0x1] 0
        %328 = vst [vmem:[#allocation2 + $0x40] sm:$0xf] 0
        %329 = vst [vmem:[#allocation2 + $0x44] sm:$0x1] 0
        %330 = vst [vmem:[#allocation2 + $0x48] sm:$0xf] 0
        %331 = vst [vmem:[#allocation2 + $0x4c] sm:$0x1] 0
        %v337 = vunpack.c.l.s4 1983009808
        %v338 = vunpack.c.0.s8 %v337
        %v339 = vlaneseq
        %v340 = vshrl.u32 %v339, 7
        %v341 = vsub.s32 %v338, %v340
        %v342 = vrot.slane %v308, %v341
        %v344 = vunpack.c.l.s4 1983009808
        %v345 = vunpack.c.0.s8 %v344
        %v346 = vlaneseq
        %v347 = vshrl.u32 %v346, 7
        %v348 = vsub.s32 %v345, %v347
        %v349 = vrot.slane %v309, %v348
        %v351 = vunpack.c.l.s4 1983009808
        %v352 = vunpack.c.0.s8 %v351
        %v353 = vlaneseq
        %v354 = vshrl.u32 %v353, 7
        %v355 = vsub.s32 %v352, %v354
        %v356 = vrot.slane %v310, %v355
        %v358 = vunpack.c.l.s4 1983009808
        %v359 = vunpack.c.0.s8 %v358
        %v360 = vlaneseq
        %v361 = vshrl.u32 %v360, 7
        %v362 = vsub.s32 %v359, %v361
        %v363 = vrot.slane %v311, %v362
        %v365 = vshrl.u32 %v342, 16
        %v367 = vrot.slane %v365, 6
        %v368 = vshll.u32 %v342, 16
        %v370 = vrot.slane %v368, 7
        %v371 = vor.u32 %v367, %v370
        %v373 = vshrl.u32 %v349, 16
        %v375 = vrot.slane %v373, 6
        %v376 = vshll.u32 %v349, 16
        %v378 = vrot.slane %v376, 7
        %v379 = vor.u32 %v375, %v378
        %v381 = vshrl.u32 %v356, 16
        %v383 = vrot.slane %v381, 6
        %v384 = vshll.u32 %v356, 16
        %v386 = vrot.slane %v384, 7
        %v387 = vor.u32 %v383, %v386
        %v389 = vshrl.u32 %v363, 16
        %v391 = vrot.slane %v389, 6
        %v392 = vshll.u32 %v363, 16
        %v394 = vrot.slane %v392, 7
        %v395 = vor.u32 %v391, %v394
        %s400 = scalar_lea.vmem [#allocation2], 24
        %vm401 = vcmask 1043457
        %vm402 = vsmask.f32 3334
        %vm403 = vmand %vm401, %vm402
        %v404 = vld [vmem:[%s400] sm:$0xe]
        %v405 = vsel %vm403, %v371, %v404
        %406 = vst [vmem:[%s400] sm:$0xe] %v405
        %v407 = vld [vmem:[%s400 + $0x8] sm:$0xe]
        %v408 = vsel %vm403, %v379, %v407
        %409 = vst [vmem:[%s400 + $0x8] sm:$0xe] %v408
        %v410 = vld [vmem:[%s400 + $0x10] sm:$0xe]
        %v411 = vsel %vm403, %v387, %v410
        %412 = vst [vmem:[%s400 + $0x10] sm:$0xe] %v411
        %v413 = vld [vmem:[%s400 + $0x18] sm:$0xe]
        %v414 = vsel %vm403, %v395, %v413
        %415 = vst [vmem:[%s400 + $0x18] sm:$0xe] %v414
        %vm416 = vcmask 490496
        %417 = vst.msk [vmem:[#allocation4] sm:$0xff] %vm416, 0.0
        %418 = vst.msk [vmem:[#allocation4 + $0x8] sm:$0xff] %vm416, 0.0
        loop: start=0, step=1, limit=7
        $region57: #{_lambda_.5} parent=47 // loop_pre_header
          _
        $region58: #{_lambda_.5} parent=47 // loop_header
          %s420 = sphi 0, %s424
          %p421 = scmp.ge.s32.totalorder %s420, 7
        $region59: #{_lambda_.5} parent=47 // loop_header_branch
          %423 = sbr.rel (%p421) target = $region63
        $region60: #{_lambda_.5} parent=47 // loop_body
          %s425 = smul.u32 %s420, 2
          %s426 = smul.addr %s425, 4
          %s427 = scalar_lea.vmem [#allocation2], %s426
          %v428 = vld [vmem:[%s427] sm:$0x3]
          %v429 = vld [vmem:[%s427 + $0x8] sm:$0x3]
          %v430 = vld [vmem:[%s427 + $0x10] sm:$0x3]
          %v431 = vld [vmem:[%s427 + $0x18] sm:$0x3]
          %v436 = vcombine.low %v428, %v429
          %v437 = vcombine.low %v430, %v431
          %v439 = vunpack.c.l.s4 1983009808
          %v440 = vunpack.c.0.s8 %v439
          %v441 = vlaneseq
          %v442 = vshrl.u32 %v441, 7
          %v443 = vsub.s32 %v440, %v442
          %v444 = vrot.slane %v436, %v443
          %v446 = vunpack.c.l.s4 1983009808
          %v447 = vunpack.c.0.s8 %v446
          %v448 = vlaneseq
          %v449 = vshrl.u32 %v448, 7
          %v450 = vsub.s32 %v447, %v449
          %v451 = vrot.slane %v437, %v450
          %v452 = vcombine.low %v444, %v451
          %454 = vst [vmem:[#allocation3] sm:$0xff] %v452
          %v455 = vld [vmem:[%s427] sm:$0x7]
          %v456 = vld [vmem:[%s427 + $0x8] sm:$0x7]
          %v457 = vld [vmem:[%s427 + $0x10] sm:$0x7]
          %v458 = vld [vmem:[%s427 + $0x18] sm:$0x7]
          %v464 = vunpack.c.l.s4 1983009808
          %v465 = vunpack.c.0.s8 %v464
          %v466 = vlaneseq
          %v467 = vshrl.u32 %v466, 7
          %v468 = vsub.s32 %v465, %v467
          %v469 = vrot.slane %v455, %v468
          %v470 = vcombine.high %v469, %v469
          %v472 = vunpack.c.l.s4 1983009808
          %v473 = vunpack.c.0.s8 %v472
          %v474 = vlaneseq
          %v475 = vshrl.u32 %v474, 7
          %v476 = vsub.s32 %v473, %v475
          %v477 = vrot.slane %v456, %v476
          %v478 = vcombine.high %v477, %v477
          %v480 = vunpack.c.l.s4 1983009808
          %v481 = vunpack.c.0.s8 %v480
          %v482 = vlaneseq
          %v483 = vshrl.u32 %v482, 7
          %v484 = vsub.s32 %v481, %v483
          %v485 = vrot.slane %v457, %v484
          %v486 = vcombine.high %v485, %v485
          %v488 = vunpack.c.l.s4 1983009808
          %v489 = vunpack.c.0.s8 %v488
          %v490 = vlaneseq
          %v491 = vshrl.u32 %v490, 7
          %v492 = vsub.s32 %v489, %v491
          %v493 = vrot.slane %v458, %v492
          %v494 = vcombine.high %v493, %v493
          %vm495 = vsmask.f32 1280
          %vm496 = vsmask.f32 3336
          %vm497 = vmor %vm495, %vm496
          %vm498 = vsmask.f32 5392
          %vm499 = vmor %vm497, %vm498
          %vm500 = vsmask.f32 7448
          %vm501 = vmor %vm499, %vm500
          %v503 = vshrl.u32 %v469, 16
          %v505 = vrot.slane %v503, 6
          %v506 = vshll.u32 %v469, 16
          %v508 = vrot.slane %v506, 7
          %v509 = vor.u32 %v505, %v508
          %v510 = vrot.slane %v509, 2
          %v512 = vshll.u32 %v470, 16
          %v514 = vrot.slane %v512, 7
          %v515 = vsel %vm501, %v510, %v514
          %v517 = vshrl.u32 %v477, 16
          %v519 = vrot.slane %v517, 6
          %v520 = vshll.u32 %v477, 16
          %v522 = vrot.slane %v520, 7
          %v523 = vor.u32 %v519, %v522
          %v524 = vrot.slane %v523, 2
          %v526 = vshll.u32 %v478, 16
          %v528 = vrot.slane %v526, 7
          %v529 = vsel %vm501, %v524, %v528
          %v531 = vshrl.u32 %v485, 16
          %v533 = vrot.slane %v531, 6
          %v534 = vshll.u32 %v485, 16
          %v536 = vrot.slane %v534, 7
          %v537 = vor.u32 %v533, %v536
          %v538 = vrot.slane %v537, 2
          %v540 = vshll.u32 %v486, 16
          %v542 = vrot.slane %v540, 7
          %v543 = vsel %vm501, %v538, %v542
          %v545 = vshrl.u32 %v493, 16
          %v547 = vrot.slane %v545, 6
          %v548 = vshll.u32 %v493, 16
          %v550 = vrot.slane %v548, 7
          %v551 = vor.u32 %v547, %v550
          %v552 = vrot.slane %v551, 2
          %v554 = vshll.u32 %v494, 16
          %v556 = vrot.slane %v554, 7
          %v557 = vsel %vm501, %v552, %v556
          %v558 = vcombine.low %v515, %v529
          %v559 = vcombine.low %v543, %v557
          %v561 = vunpack.c.l.s4 1983009808
          %v562 = vunpack.c.0.s8 %v561
          %v563 = vlaneseq
          %v564 = vshrl.u32 %v563, 7
          %v565 = vsub.s32 %v562, %v564
          %v566 = vrot.slane %v558, %v565
          %v568 = vunpack.c.l.s4 1983009808
          %v569 = vunpack.c.0.s8 %v568
          %v570 = vlaneseq
          %v571 = vshrl.u32 %v570, 7
          %v572 = vsub.s32 %v569, %v571
          %v573 = vrot.slane %v559, %v572
          %v574 = vcombine.low %v566, %v573
          %576 = vst [vmem:[#allocation3 + $0x8] sm:$0xff] %v574
          %v577 = vld [vmem:[%s427] sm:$0x6]
          %v578 = vld [vmem:[%s427 + $0x8] sm:$0x6]
          %v579 = vld [vmem:[%s427 + $0x10] sm:$0x6]
          %v580 = vld [vmem:[%s427 + $0x18] sm:$0x6]
          %v586 = vunpack.c.l.s4 1983009808
          %v587 = vunpack.c.0.s8 %v586
          %v588 = vlaneseq
          %v589 = vshrl.u32 %v588, 7
          %v590 = vsub.s32 %v587, %v589
          %v591 = vrot.slane %v577, %v590
          %v592 = vcombine.high %v591, %v591
          %v594 = vunpack.c.l.s4 1983009808
          %v595 = vunpack.c.0.s8 %v594
          %v596 = vlaneseq
          %v597 = vshrl.u32 %v596, 7
          %v598 = vsub.s32 %v595, %v597
          %v599 = vrot.slane %v578, %v598
          %v600 = vcombine.high %v599, %v599
          %v602 = vunpack.c.l.s4 1983009808
          %v603 = vunpack.c.0.s8 %v602
          %v604 = vlaneseq
          %v605 = vshrl.u32 %v604, 7
          %v606 = vsub.s32 %v603, %v605
          %v607 = vrot.slane %v579, %v606
          %v608 = vcombine.high %v607, %v607
          %v610 = vunpack.c.l.s4 1983009808
          %v611 = vunpack.c.0.s8 %v610
          %v612 = vlaneseq
          %v613 = vshrl.u32 %v612, 7
          %v614 = vsub.s32 %v611, %v613
          %v615 = vrot.slane %v580, %v614
          %v616 = vcombine.high %v615, %v615
          %vm617 = vcmask 1040384
          %vm618 = vcmask 1042434
          %vm619 = vmor %vm617, %vm618
          %vm620 = vcmask 1044484
          %vm621 = vmor %vm619, %vm620
          %vm622 = vcmask 1046534
          %vm623 = vmor %vm621, %vm622
          %v624 = vrot.slane %v591, 7
          %v625 = vrot.slane %v624, 2
          %v626 = vrot.slane %v592, 7
          %v627 = vsel %vm623, %v625, %v626
          %v628 = vrot.slane %v599, 7
          %v629 = vrot.slane %v628, 2
          %v630 = vrot.slane %v600, 7
          %v631 = vsel %vm623, %v629, %v630
          %v632 = vrot.slane %v607, 7
          %v633 = vrot.slane %v632, 2
          %v634 = vrot.slane %v608, 7
          %v635 = vsel %vm623, %v633, %v634
          %v636 = vrot.slane %v615, 7
          %v637 = vrot.slane %v636, 2
          %v638 = vrot.slane %v616, 7
          %v639 = vsel %vm623, %v637, %v638
          %v640 = vcombine.low %v627, %v631
          %v641 = vcombine.low %v635, %v639
          %v643 = vunpack.c.l.s4 1983009808
          %v644 = vunpack.c.0.s8 %v643
          %v645 = vlaneseq
          %v646 = vshrl.u32 %v645, 7
          %v647 = vsub.s32 %v644, %v646
          %v648 = vrot.slane %v640, %v647
          %v650 = vunpack.c.l.s4 1983009808
          %v651 = vunpack.c.0.s8 %v650
          %v652 = vlaneseq
          %v653 = vshrl.u32 %v652, 7
          %v654 = vsub.s32 %v651, %v653
          %v655 = vrot.slane %v641, %v654
          %v656 = vcombine.low %v648, %v655
          %658 = vst [vmem:[#allocation3 + $0x10] sm:$0xff] %v656
          %v659 = vld [vmem:[%s427] sm:$0xe]
          %v660 = vld [vmem:[%s427 + $0x8] sm:$0xe]
          %v661 = vld [vmem:[%s427 + $0x10] sm:$0xe]
          %v662 = vld [vmem:[%s427 + $0x18] sm:$0xe]
          %v668 = vunpack.c.l.s4 1983009808
          %v669 = vunpack.c.0.s8 %v668
          %v670 = vlaneseq
          %v671 = vshrl.u32 %v670, 7
          %v672 = vsub.s32 %v669, %v671
          %v673 = vrot.slane %v659, %v672
          %v674 = vcombine.high %v673, %v673
          %v676 = vunpack.c.l.s4 1983009808
          %v677 = vunpack.c.0.s8 %v676
          %v678 = vlaneseq
          %v679 = vshrl.u32 %v678, 7
          %v680 = vsub.s32 %v677, %v679
          %v681 = vrot.slane %v660, %v680
          %v682 = vcombine.high %v681, %v681
          %v684 = vunpack.c.l.s4 1983009808
          %v685 = vunpack.c.0.s8 %v684
          %v686 = vlaneseq
          %v687 = vshrl.u32 %v686, 7
          %v688 = vsub.s32 %v685, %v687
          %v689 = vrot.slane %v661, %v688
          %v690 = vcombine.high %v689, %v689
          %v692 = vunpack.c.l.s4 1983009808
          %v693 = vunpack.c.0.s8 %v692
          %v694 = vlaneseq
          %v695 = vshrl.u32 %v694, 7
          %v696 = vsub.s32 %v693, %v695
          %v697 = vrot.slane %v662, %v696
          %v698 = vcombine.high %v697, %v697
          %vm699 = vsmask.f32 256
          %vm700 = vsmask.f32 2312
          %vm701 = vmor %vm699, %vm700
          %vm702 = vsmask.f32 4368
          %vm703 = vmor %vm701, %vm702
          %vm704 = vsmask.f32 6424
          %vm705 = vmor %vm703, %vm704
          %v707 = vshrl.u32 %v673, 16
          %v709 = vrot.slane %v707, 7
          %v710 = vrot.slane %v709, 2
          %v712 = vshrl.u32 %v674, 16
          %v714 = vrot.slane %v712, 7
          %v715 = vshll.u32 %v674, 16
          %v717 = vor.u32 %v714, %v715
          %v718 = vsel %vm705, %v710, %v717
          %v720 = vshrl.u32 %v681, 16
          %v722 = vrot.slane %v720, 7
          %v723 = vrot.slane %v722, 2
          %v725 = vshrl.u32 %v682, 16
          %v727 = vrot.slane %v725, 7
          %v728 = vshll.u32 %v682, 16
          %v730 = vor.u32 %v727, %v728
          %v731 = vsel %vm705, %v723, %v730
          %v733 = vshrl.u32 %v689, 16
          %v735 = vrot.slane %v733, 7
          %v736 = vrot.slane %v735, 2
          %v738 = vshrl.u32 %v690, 16
          %v740 = vrot.slane %v738, 7
          %v741 = vshll.u32 %v690, 16
          %v743 = vor.u32 %v740, %v741
          %v744 = vsel %vm705, %v736, %v743
          %v746 = vshrl.u32 %v697, 16
          %v748 = vrot.slane %v746, 7
          %v749 = vrot.slane %v748, 2
          %v751 = vshrl.u32 %v698, 16
          %v753 = vrot.slane %v751, 7
          %v754 = vshll.u32 %v698, 16
          %v756 = vor.u32 %v753, %v754
          %v757 = vsel %vm705, %v749, %v756
          %v758 = vcombine.low %v718, %v731
          %v759 = vcombine.low %v744, %v757
          %v761 = vunpack.c.l.s4 1983009808
          %v762 = vunpack.c.0.s8 %v761
          %v763 = vlaneseq
          %v764 = vshrl.u32 %v763, 7
          %v765 = vsub.s32 %v762, %v764
          %v766 = vrot.slane %v758, %v765
          %v768 = vunpack.c.l.s4 1983009808
          %v769 = vunpack.c.0.s8 %v768
          %v770 = vlaneseq
          %v771 = vshrl.u32 %v770, 7
          %v772 = vsub.s32 %v769, %v771
          %v773 = vrot.slane %v759, %v772
          %v774 = vcombine.low %v766, %v773
          %776 = vst [vmem:[#allocation3 + $0x18] sm:$0xff] %v774
          %v777 = vld [vmem:[%s427] sm:$0xc]
          %v778 = vld [vmem:[%s427 + $0x8] sm:$0xc]
          %v779 = vld [vmem:[%s427 + $0x10] sm:$0xc]
          %v780 = vld [vmem:[%s427 + $0x18] sm:$0xc]
          %v786 = vunpack.c.l.s4 1983009808
          %v787 = vunpack.c.0.s8 %v786
          %v788 = vlaneseq
          %v789 = vshrl.u32 %v788, 7
          %v790 = vsub.s32 %v787, %v789
          %v791 = vrot.slane %v777, %v790
          %v792 = vcombine.high %v791, %v791
          %v794 = vunpack.c.l.s4 1983009808
          %v795 = vunpack.c.0.s8 %v794
          %v796 = vlaneseq
          %v797 = vshrl.u32 %v796, 7
          %v798 = vsub.s32 %v795, %v797
          %v799 = vrot.slane %v778, %v798
          %v800 = vcombine.high %v799, %v799
          %v802 = vunpack.c.l.s4 1983009808
          %v803 = vunpack.c.0.s8 %v802
          %v804 = vlaneseq
          %v805 = vshrl.u32 %v804, 7
          %v806 = vsub.s32 %v803, %v805
          %v807 = vrot.slane %v779, %v806
          %v808 = vcombine.high %v807, %v807
          %v810 = vunpack.c.l.s4 1983009808
          %v811 = vunpack.c.0.s8 %v810
          %v812 = vlaneseq
          %v813 = vshrl.u32 %v812, 7
          %v814 = vsub.s32 %v811, %v813
          %v815 = vrot.slane %v780, %v814
          %v816 = vcombine.high %v815, %v815
          %v817 = vcombine.low %v792, %v800
          %v818 = vcombine.low %v808, %v816
          %v820 = vunpack.c.l.s4 1983009808
          %v821 = vunpack.c.0.s8 %v820
          %v822 = vlaneseq
          %v823 = vshrl.u32 %v822, 7
          %v824 = vsub.s32 %v821, %v823
          %v825 = vrot.slane %v817, %v824
          %v827 = vunpack.c.l.s4 1983009808
          %v828 = vunpack.c.0.s8 %v827
          %v829 = vlaneseq
          %v830 = vshrl.u32 %v829, 7
          %v831 = vsub.s32 %v828, %v830
          %v832 = vrot.slane %v818, %v831
          %v833 = vcombine.low %v825, %v832
          %835 = vst [vmem:[#allocation3 + $0x20] sm:$0xff] %v833
          %v836 = vld [vmem:[%s427] sm:$0xc]
          %v837 = vld [vmem:[%s427 + $0x4] sm:$0x1]
          %v838 = vld [vmem:[%s427 + $0x8] sm:$0xc]
          %v839 = vld [vmem:[%s427 + $0xc] sm:$0x1]
          %v840 = vld [vmem:[%s427 + $0x10] sm:$0xc]
          %v841 = vld [vmem:[%s427 + $0x14] sm:$0x1]
          %v842 = vld [vmem:[%s427 + $0x18] sm:$0xc]
          %v843 = vld [vmem:[%s427 + $0x1c] sm:$0x1]
          %v853 = vunpack.c.l.s4 1983009808
          %v854 = vunpack.c.0.s8 %v853
          %v855 = vlaneseq
          %v856 = vshrl.u32 %v855, 7
          %v857 = vsub.s32 %v854, %v856
          %v858 = vrot.slane %v836, %v857
          %v859 = vcombine.high %v858, %v858
          %v861 = vunpack.c.l.s4 1983009808
          %v862 = vunpack.c.0.s8 %v861
          %v863 = vlaneseq
          %v864 = vshrl.u32 %v863, 7
          %v865 = vsub.s32 %v862, %v864
          %v866 = vrot.slane %v837, %v865
          %v868 = vunpack.c.l.s4 1983009808
          %v869 = vunpack.c.0.s8 %v868
          %v870 = vlaneseq
          %v871 = vshrl.u32 %v870, 7
          %v872 = vsub.s32 %v869, %v871
          %v873 = vrot.slane %v838, %v872
          %v874 = vcombine.high %v873, %v873
          %v876 = vunpack.c.l.s4 1983009808
          %v877 = vunpack.c.0.s8 %v876
          %v878 = vlaneseq
          %v879 = vshrl.u32 %v878, 7
          %v880 = vsub.s32 %v877, %v879
          %v881 = vrot.slane %v839, %v880
          %v883 = vunpack.c.l.s4 1983009808
          %v884 = vunpack.c.0.s8 %v883
          %v885 = vlaneseq
          %v886 = vshrl.u32 %v885, 7
          %v887 = vsub.s32 %v884, %v886
          %v888 = vrot.slane %v840, %v887
          %v889 = vcombine.high %v888, %v888
          %v891 = vunpack.c.l.s4 1983009808
          %v892 = vunpack.c.0.s8 %v891
          %v893 = vlaneseq
          %v894 = vshrl.u32 %v893, 7
          %v895 = vsub.s32 %v892, %v894
          %v896 = vrot.slane %v841, %v895
          %v898 = vunpack.c.l.s4 1983009808
          %v899 = vunpack.c.0.s8 %v898
          %v900 = vlaneseq
          %v901 = vshrl.u32 %v900, 7
          %v902 = vsub.s32 %v899, %v901
          %v903 = vrot.slane %v842, %v902
          %v904 = vcombine.high %v903, %v903
          %v906 = vunpack.c.l.s4 1983009808
          %v907 = vunpack.c.0.s8 %v906
          %v908 = vlaneseq
          %v909 = vshrl.u32 %v908, 7
          %v910 = vsub.s32 %v907, %v909
          %v911 = vrot.slane %v843, %v910
          %v913 = vshrl.u32 %v859, 16
          %v915 = vrot.slane %v913, 6
          %v916 = vshll.u32 %v859, 16
          %v918 = vrot.slane %v916, 7
          %v919 = vor.u32 %v915, %v918
          %v920 = vrot.slane %v919, 2
          %v922 = vshll.u32 %v866, 16
          %v924 = vrot.slane %v922, 7
          %v925 = vsel %vm501, %v920, %v924
          %v927 = vshrl.u32 %v874, 16
          %v929 = vrot.slane %v927, 6
          %v930 = vshll.u32 %v874, 16
          %v932 = vrot.slane %v930, 7
          %v933 = vor.u32 %v929, %v932
          %v934 = vrot.slane %v933, 2
          %v936 = vshll.u32 %v881, 16
          %v938 = vrot.slane %v936, 7
          %v939 = vsel %vm501, %v934, %v938
          %v941 = vshrl.u32 %v889, 16
          %v943 = vrot.slane %v941, 6
          %v944 = vshll.u32 %v889, 16
          %v946 = vrot.slane %v944, 7
          %v947 = vor.u32 %v943, %v946
          %v948 = vrot.slane %v947, 2
          %v950 = vshll.u32 %v896, 16
          %v952 = vrot.slane %v950, 7
          %v953 = vsel %vm501, %v948, %v952
          %v955 = vshrl.u32 %v904, 16
          %v957 = vrot.slane %v955, 6
          %v958 = vshll.u32 %v904, 16
          %v960 = vrot.slane %v958, 7
          %v961 = vor.u32 %v957, %v960
          %v962 = vrot.slane %v961, 2
          %v964 = vshll.u32 %v911, 16
          %v966 = vrot.slane %v964, 7
          %v967 = vsel %vm501, %v962, %v966
          %v968 = vcombine.low %v925, %v939
          %v969 = vcombine.low %v953, %v967
          %v971 = vunpack.c.l.s4 1983009808
          %v972 = vunpack.c.0.s8 %v971
          %v973 = vlaneseq
          %v974 = vshrl.u32 %v973, 7
          %v975 = vsub.s32 %v972, %v974
          %v976 = vrot.slane %v968, %v975
          %v978 = vunpack.c.l.s4 1983009808
          %v979 = vunpack.c.0.s8 %v978
          %v980 = vlaneseq
          %v981 = vshrl.u32 %v980, 7
          %v982 = vsub.s32 %v979, %v981
          %v983 = vrot.slane %v969, %v982
          %v984 = vcombine.low %v976, %v983
          %986 = vst [vmem:[#allocation3 + $0x28] sm:$0xff] %v984
          %v987 = vld [vmem:[%s427] sm:$0x8]
          %v988 = vld [vmem:[%s427 + $0x4] sm:$0x1]
          %v989 = vld [vmem:[%s427 + $0x8] sm:$0x8]
          %v990 = vld [vmem:[%s427 + $0xc] sm:$0x1]
          %v991 = vld [vmem:[%s427 + $0x10] sm:$0x8]
          %v992 = vld [vmem:[%s427 + $0x14] sm:$0x1]
          %v993 = vld [vmem:[%s427 + $0x18] sm:$0x8]
          %v994 = vld [vmem:[%s427 + $0x1c] sm:$0x1]
          %v1004 = vunpack.c.l.s4 1983009808
          %v1005 = vunpack.c.0.s8 %v1004
          %v1006 = vlaneseq
          %v1007 = vshrl.u32 %v1006, 7
          %v1008 = vsub.s32 %v1005, %v1007
          %v1009 = vrot.slane %v987, %v1008
          %v1010 = vcombine.high %v1009, %v1009
          %v1012 = vunpack.c.l.s4 1983009808
          %v1013 = vunpack.c.0.s8 %v1012
          %v1014 = vlaneseq
          %v1015 = vshrl.u32 %v1014, 7
          %v1016 = vsub.s32 %v1013, %v1015
          %v1017 = vrot.slane %v988, %v1016
          %v1019 = vunpack.c.l.s4 1983009808
          %v1020 = vunpack.c.0.s8 %v1019
          %v1021 = vlaneseq
          %v1022 = vshrl.u32 %v1021, 7
          %v1023 = vsub.s32 %v1020, %v1022
          %v1024 = vrot.slane %v989, %v1023
          %v1025 = vcombine.high %v1024, %v1024
          %v1027 = vunpack.c.l.s4 1983009808
          %v1028 = vunpack.c.0.s8 %v1027
          %v1029 = vlaneseq
          %v1030 = vshrl.u32 %v1029, 7
          %v1031 = vsub.s32 %v1028, %v1030
          %v1032 = vrot.slane %v990, %v1031
          %v1034 = vunpack.c.l.s4 1983009808
          %v1035 = vunpack.c.0.s8 %v1034
          %v1036 = vlaneseq
          %v1037 = vshrl.u32 %v1036, 7
          %v1038 = vsub.s32 %v1035, %v1037
          %v1039 = vrot.slane %v991, %v1038
          %v1040 = vcombine.high %v1039, %v1039
          %v1042 = vunpack.c.l.s4 1983009808
          %v1043 = vunpack.c.0.s8 %v1042
          %v1044 = vlaneseq
          %v1045 = vshrl.u32 %v1044, 7
          %v1046 = vsub.s32 %v1043, %v1045
          %v1047 = vrot.slane %v992, %v1046
          %v1049 = vunpack.c.l.s4 1983009808
          %v1050 = vunpack.c.0.s8 %v1049
          %v1051 = vlaneseq
          %v1052 = vshrl.u32 %v1051, 7
          %v1053 = vsub.s32 %v1050, %v1052
          %v1054 = vrot.slane %v993, %v1053
          %v1055 = vcombine.high %v1054, %v1054
          %v1057 = vunpack.c.l.s4 1983009808
          %v1058 = vunpack.c.0.s8 %v1057
          %v1059 = vlaneseq
          %v1060 = vshrl.u32 %v1059, 7
          %v1061 = vsub.s32 %v1058, %v1060
          %v1062 = vrot.slane %v994, %v1061
          %v1063 = vrot.slane %v1010, 7
          %v1064 = vrot.slane %v1063, 2
          %v1065 = vrot.slane %v1017, 7
          %v1066 = vsel %vm623, %v1064, %v1065
          %v1067 = vrot.slane %v1025, 7
          %v1068 = vrot.slane %v1067, 2
          %v1069 = vrot.slane %v1032, 7
          %v1070 = vsel %vm623, %v1068, %v1069
          %v1071 = vrot.slane %v1040, 7
          %v1072 = vrot.slane %v1071, 2
          %v1073 = vrot.slane %v1047, 7
          %v1074 = vsel %vm623, %v1072, %v1073
          %v1075 = vrot.slane %v1055, 7
          %v1076 = vrot.slane %v1075, 2
          %v1077 = vrot.slane %v1062, 7
          %v1078 = vsel %vm623, %v1076, %v1077
          %v1079 = vcombine.low %v1066, %v1070
          %v1080 = vcombine.low %v1074, %v1078
          %v1082 = vunpack.c.l.s4 1983009808
          %v1083 = vunpack.c.0.s8 %v1082
          %v1084 = vlaneseq
          %v1085 = vshrl.u32 %v1084, 7
          %v1086 = vsub.s32 %v1083, %v1085
          %v1087 = vrot.slane %v1079, %v1086
          %v1089 = vunpack.c.l.s4 1983009808
          %v1090 = vunpack.c.0.s8 %v1089
          %v1091 = vlaneseq
          %v1092 = vshrl.u32 %v1091, 7
          %v1093 = vsub.s32 %v1090, %v1092
          %v1094 = vrot.slane %v1080, %v1093
          %v1095 = vcombine.low %v1087, %v1094
          %1097 = vst [vmem:[#allocation3 + $0x30] sm:$0xff] %v1095
          %v1098 = vld [vmem:[#allocation4] sm:$0xff]
          %v1099 = vld [vmem:[#allocation4 + $0x8] sm:$0xff]
          %v1100 = vld [vmem:[#allocation3] sm:$0xff]
          %v1101 = vld [vmem:[#allocation3 + $0x8] sm:$0xff]
          %v1102 = vld [vmem:[#allocation3 + $0x10] sm:$0xff]
          %v1103 = vld [vmem:[#allocation3 + $0x18] sm:$0xff]
          %v1104 = vld [vmem:[#allocation3 + $0x20] sm:$0xff]
          %v1105 = vld [vmem:[#allocation3 + $0x28] sm:$0xff]
          %v1106 = vld [vmem:[#allocation3 + $0x30] sm:$0xff]
          %s1107 = smul.u32 %s420, 112
          %s1108 = smul.addr %s1107, 4
          %s1109 = scalar_lea.vmem [#allocation9], %s1108
          %v1110 = vld [vmem:[%s1109] sm:$0xf]
          %v1111 = vld [vmem:[%s1109 + $0x4] sm:$0xf]
          %v1112 = vld [vmem:[%s1109 + $0x8] sm:$0xf]
          %v1113 = vld [vmem:[%s1109 + $0xc] sm:$0xf]
          %v1114 = vld [vmem:[%s1109 + $0x10] sm:$0xf]
          %v1115 = vld [vmem:[%s1109 + $0x14] sm:$0xf]
          %v1116 = vld [vmem:[%s1109 + $0x18] sm:$0xf]
          %v1117 = vld [vmem:[%s1109 + $0x1c] sm:$0xf]
          %v1118 = vld [vmem:[%s1109 + $0x20] sm:$0xf]
          %v1119 = vld [vmem:[%s1109 + $0x24] sm:$0xf]
          %v1120 = vld [vmem:[%s1109 + $0x28] sm:$0xf]
          %v1121 = vld [vmem:[%s1109 + $0x2c] sm:$0xf]
          %v1122 = vld [vmem:[%s1109 + $0x30] sm:$0xf]
          %v1123 = vld [vmem:[%s1109 + $0x34] sm:$0xf]
          %v1124 = vld [vmem:[%s1109 + $0x38] sm:$0xf]
          %v1125 = vld [vmem:[%s1109 + $0x3c] sm:$0xf]
          %v1126 = vld [vmem:[%s1109 + $0x40] sm:$0xf]
          %v1127 = vld [vmem:[%s1109 + $0x44] sm:$0xf]
          %v1128 = vld [vmem:[%s1109 + $0x48] sm:$0xf]
          %v1129 = vld [vmem:[%s1109 + $0x4c] sm:$0xf]
          %v1130 = vld [vmem:[%s1109 + $0x50] sm:$0xf]
          %v1131 = vld [vmem:[%s1109 + $0x54] sm:$0xf]
          %v1132 = vld [vmem:[%s1109 + $0x58] sm:$0xf]
          %v1133 = vld [vmem:[%s1109 + $0x5c] sm:$0xf]
          %v1134 = vld [vmem:[%s1109 + $0x60] sm:$0xf]
          %v1135 = vld [vmem:[%s1109 + $0x64] sm:$0xf]
          %v1136 = vld [vmem:[%s1109 + $0x68] sm:$0xf]
          %v1137 = vld [vmem:[%s1109 + $0x6c] sm:$0xf]
          %v1138 = vld [vmem:[%s1109 + $0x70] sm:$0xf]
          %v1139 = vld [vmem:[%s1109 + $0x74] sm:$0xf]
          %v1140 = vld [vmem:[%s1109 + $0x78] sm:$0xf]
          %v1141 = vld [vmem:[%s1109 + $0x7c] sm:$0xf]
          %v1142 = vld [vmem:[%s1109 + $0x80] sm:$0xf]
          %v1143 = vld [vmem:[%s1109 + $0x84] sm:$0xf]
          %v1144 = vld [vmem:[%s1109 + $0x88] sm:$0xf]
          %v1145 = vld [vmem:[%s1109 + $0x8c] sm:$0xf]
          %v1146 = vld [vmem:[%s1109 + $0x90] sm:$0xf]
          %v1147 = vld [vmem:[%s1109 + $0x94] sm:$0xf]
          %v1148 = vld [vmem:[%s1109 + $0x98] sm:$0xf]
          %v1149 = vld [vmem:[%s1109 + $0x9c] sm:$0xf]
          %v1150 = vld [vmem:[%s1109 + $0xa0] sm:$0xf]
          %v1151 = vld [vmem:[%s1109 + $0xa4] sm:$0xf]
          %v1152 = vld [vmem:[%s1109 + $0xa8] sm:$0xf]
          %v1153 = vld [vmem:[%s1109 + $0xac] sm:$0xf]
          %v1154 = vld [vmem:[%s1109 + $0xb0] sm:$0xf]
          %v1155 = vld [vmem:[%s1109 + $0xb4] sm:$0xf]
          %v1156 = vld [vmem:[%s1109 + $0xb8] sm:$0xf]
          %v1157 = vld [vmem:[%s1109 + $0xbc] sm:$0xf]
          %v1158 = vld [vmem:[%s1109 + $0xc0] sm:$0xf]
          %v1159 = vld [vmem:[%s1109 + $0xc4] sm:$0xf]
          %v1160 = vld [vmem:[%s1109 + $0xc8] sm:$0xf]
          %v1161 = vld [vmem:[%s1109 + $0xcc] sm:$0xf]
          %v1162 = vld [vmem:[%s1109 + $0xd0] sm:$0xf]
          %v1163 = vld [vmem:[%s1109 + $0xd4] sm:$0xf]
          %v1164 = vld [vmem:[%s1109 + $0xd8] sm:$0xf]
          %v1165 = vld [vmem:[%s1109 + $0xdc] sm:$0xf]
          %v1166 = vld [vmem:[%s1109 + $0xe0] sm:$0xf]
          %v1167 = vld [vmem:[%s1109 + $0xe4] sm:$0xf]
          %v1168 = vld [vmem:[%s1109 + $0xe8] sm:$0xf]
          %v1169 = vld [vmem:[%s1109 + $0xec] sm:$0xf]
          %v1170 = vld [vmem:[%s1109 + $0xf0] sm:$0xf]
          %v1171 = vld [vmem:[%s1109 + $0xf4] sm:$0xf]
          %v1172 = vld [vmem:[%s1109 + $0xf8] sm:$0xf]
          %v1173 = vld [vmem:[%s1109 + $0xfc] sm:$0xf]
          %v1174 = vld [vmem:[%s1109 + $0x100] sm:$0xf]
          %v1175 = vld [vmem:[%s1109 + $0x104] sm:$0xf]
          %v1176 = vld [vmem:[%s1109 + $0x108] sm:$0xf]
          %v1177 = vld [vmem:[%s1109 + $0x10c] sm:$0xf]
          %v1178 = vld [vmem:[%s1109 + $0x110] sm:$0xf]
          %v1179 = vld [vmem:[%s1109 + $0x114] sm:$0xf]
          %v1180 = vld [vmem:[%s1109 + $0x118] sm:$0xf]
          %v1181 = vld [vmem:[%s1109 + $0x11c] sm:$0xf]
          %v1182 = vld [vmem:[%s1109 + $0x120] sm:$0xf]
          %v1183 = vld [vmem:[%s1109 + $0x124] sm:$0xf]
          %v1184 = vld [vmem:[%s1109 + $0x128] sm:$0xf]
          %v1185 = vld [vmem:[%s1109 + $0x12c] sm:$0xf]
          %v1186 = vld [vmem:[%s1109 + $0x130] sm:$0xf]
          %v1187 = vld [vmem:[%s1109 + $0x134] sm:$0xf]
          %v1188 = vld [vmem:[%s1109 + $0x138] sm:$0xf]
          %v1189 = vld [vmem:[%s1109 + $0x13c] sm:$0xf]
          %v1190 = vld [vmem:[%s1109 + $0x140] sm:$0xf]
          %v1191 = vld [vmem:[%s1109 + $0x144] sm:$0xf]
          %v1192 = vld [vmem:[%s1109 + $0x148] sm:$0xf]
          %v1193 = vld [vmem:[%s1109 + $0x14c] sm:$0xf]
          %v1194 = vld [vmem:[%s1109 + $0x150] sm:$0xf]
          %v1195 = vld [vmem:[%s1109 + $0x154] sm:$0xf]
          %v1196 = vld [vmem:[%s1109 + $0x158] sm:$0xf]
          %v1197 = vld [vmem:[%s1109 + $0x15c] sm:$0xf]
          %v1198 = vld [vmem:[%s1109 + $0x160] sm:$0xf]
          %v1199 = vld [vmem:[%s1109 + $0x164] sm:$0xf]
          %v1200 = vld [vmem:[%s1109 + $0x168] sm:$0xf]
          %v1201 = vld [vmem:[%s1109 + $0x16c] sm:$0xf]
          %v1202 = vld [vmem:[%s1109 + $0x170] sm:$0xf]
          %v1203 = vld [vmem:[%s1109 + $0x174] sm:$0xf]
          %v1204 = vld [vmem:[%s1109 + $0x178] sm:$0xf]
          %v1205 = vld [vmem:[%s1109 + $0x17c] sm:$0xf]
          %v1206 = vld [vmem:[%s1109 + $0x180] sm:$0xf]
          %v1207 = vld [vmem:[%s1109 + $0x184] sm:$0xf]
          %v1208 = vld [vmem:[%s1109 + $0x188] sm:$0xf]
          %v1209 = vld [vmem:[%s1109 + $0x18c] sm:$0xf]
          %v1210 = vld [vmem:[%s1109 + $0x190] sm:$0xf]
          %v1211 = vld [vmem:[%s1109 + $0x194] sm:$0xf]
          %v1212 = vld [vmem:[%s1109 + $0x198] sm:$0xf]
          %v1213 = vld [vmem:[%s1109 + $0x19c] sm:$0xf]
          %v1214 = vld [vmem:[%s1109 + $0x1a0] sm:$0xf]
          %v1215 = vld [vmem:[%s1109 + $0x1a4] sm:$0xf]
          %v1216 = vld [vmem:[%s1109 + $0x1a8] sm:$0xf]
          %v1217 = vld [vmem:[%s1109 + $0x1ac] sm:$0xf]
          %v1218 = vld [vmem:[%s1109 + $0x1b0] sm:$0xf]
          %v1219 = vld [vmem:[%s1109 + $0x1b4] sm:$0xf]
          %v1220 = vld [vmem:[%s1109 + $0x1b8] sm:$0xf]
          %v1221 = vld [vmem:[%s1109 + $0x1bc] sm:$0xf]
          %v1334 = vunpack.c.l.b16 %v1110
          %v1335 = vunpack.c.l.b16 %v1111
          %v1336 = vunpack.c.l.b16 %v1112
          %v1337 = vunpack.c.l.b16 %v1113
          %v1338 = vunpack.c.l.b16 %v1114
          %v1339 = vunpack.c.l.b16 %v1115
          %v1340 = vunpack.c.l.b16 %v1116
          %v1341 = vunpack.c.l.b16 %v1117
          %v1342 = vunpack.c.l.b16 %v1118
          %v1343 = vunpack.c.l.b16 %v1119
          %v1344 = vunpack.c.l.b16 %v1120
          %v1345 = vunpack.c.l.b16 %v1121
          %v1346 = vunpack.c.l.b16 %v1122
          %v1347 = vunpack.c.l.b16 %v1123
          %v1348 = vunpack.c.l.b16 %v1124
          %v1349 = vunpack.c.l.b16 %v1125
          %v1350 = vunpack.c.l.b16 %v1126
          %v1351 = vunpack.c.l.b16 %v1127
          %v1352 = vunpack.c.l.b16 %v1128
          %v1353 = vunpack.c.l.b16 %v1129
          %v1354 = vunpack.c.l.b16 %v1130
          %v1355 = vunpack.c.l.b16 %v1131
          %v1356 = vunpack.c.l.b16 %v1132
          %v1357 = vunpack.c.l.b16 %v1133
          %v1358 = vunpack.c.l.b16 %v1134
          %v1359 = vunpack.c.l.b16 %v1135
          %v1360 = vunpack.c.l.b16 %v1136
          %v1361 = vunpack.c.l.b16 %v1137
          %v1362 = vunpack.c.l.b16 %v1138
          %v1363 = vunpack.c.l.b16 %v1139
          %v1364 = vunpack.c.l.b16 %v1140
          %v1365 = vunpack.c.l.b16 %v1141
          %v1366 = vunpack.c.l.b16 %v1142
          %v1367 = vunpack.c.l.b16 %v1143
          %v1368 = vunpack.c.l.b16 %v1144
          %v1369 = vunpack.c.l.b16 %v1145
          %v1370 = vunpack.c.l.b16 %v1146
          %v1371 = vunpack.c.l.b16 %v1147
          %v1372 = vunpack.c.l.b16 %v1148
          %v1373 = vunpack.c.l.b16 %v1149
          %v1374 = vunpack.c.l.b16 %v1150
          %v1375 = vunpack.c.l.b16 %v1151
          %v1376 = vunpack.c.l.b16 %v1152
          %v1377 = vunpack.c.l.b16 %v1153
          %v1378 = vunpack.c.l.b16 %v1154
          %v1379 = vunpack.c.l.b16 %v1155
          %v1380 = vunpack.c.l.b16 %v1156
          %v1381 = vunpack.c.l.b16 %v1157
          %v1382 = vunpack.c.l.b16 %v1158
          %v1383 = vunpack.c.l.b16 %v1159
          %v1384 = vunpack.c.l.b16 %v1160
          %v1385 = vunpack.c.l.b16 %v1161
          %v1386 = vunpack.c.l.b16 %v1162
          %v1387 = vunpack.c.l.b16 %v1163
          %v1388 = vunpack.c.l.b16 %v1164
          %v1389 = vunpack.c.l.b16 %v1165
          %v1390 = vunpack.c.l.b16 %v1166
          %v1391 = vunpack.c.l.b16 %v1167
          %v1392 = vunpack.c.l.b16 %v1168
          %v1393 = vunpack.c.l.b16 %v1169
          %v1394 = vunpack.c.l.b16 %v1170
          %v1395 = vunpack.c.l.b16 %v1171
          %v1396 = vunpack.c.l.b16 %v1172
          %v1397 = vunpack.c.l.b16 %v1173
          %v1398 = vunpack.c.l.b16 %v1174
          %v1399 = vunpack.c.l.b16 %v1175
          %v1400 = vunpack.c.l.b16 %v1176
          %v1401 = vunpack.c.l.b16 %v1177
          %v1402 = vunpack.c.l.b16 %v1178
          %v1403 = vunpack.c.l.b16 %v1179
          %v1404 = vunpack.c.l.b16 %v1180
          %v1405 = vunpack.c.l.b16 %v1181
          %v1406 = vunpack.c.l.b16 %v1182
          %v1407 = vunpack.c.l.b16 %v1183
          %v1408 = vunpack.c.l.b16 %v1184
          %v1409 = vunpack.c.l.b16 %v1185
          %v1410 = vunpack.c.l.b16 %v1186
          %v1411 = vunpack.c.l.b16 %v1187
          %v1412 = vunpack.c.l.b16 %v1188
          %v1413 = vunpack.c.l.b16 %v1189
          %v1414 = vunpack.c.l.b16 %v1190
          %v1415 = vunpack.c.l.b16 %v1191
          %v1416 = vunpack.c.l.b16 %v1192
          %v1417 = vunpack.c.l.b16 %v1193
          %v1418 = vunpack.c.l.b16 %v1194
          %v1419 = vunpack.c.l.b16 %v1195
          %v1420 = vunpack.c.l.b16 %v1196
          %v1421 = vunpack.c.l.b16 %v1197
          %v1422 = vunpack.c.l.b16 %v1198
          %v1423 = vunpack.c.l.b16 %v1199
          %v1424 = vunpack.c.l.b16 %v1200
          %v1425 = vunpack.c.l.b16 %v1201
          %v1426 = vunpack.c.l.b16 %v1202
          %v1427 = vunpack.c.l.b16 %v1203
          %v1428 = vunpack.c.l.b16 %v1204
          %v1429 = vunpack.c.l.b16 %v1205
          %v1430 = vunpack.c.l.b16 %v1206
          %v1431 = vunpack.c.l.b16 %v1207
          %v1432 = vunpack.c.l.b16 %v1208
          %v1433 = vunpack.c.l.b16 %v1209
          %v1434 = vunpack.c.l.b16 %v1210
          %v1435 = vunpack.c.l.b16 %v1211
          %v1436 = vunpack.c.l.b16 %v1212
          %v1437 = vunpack.c.l.b16 %v1213
          %v1438 = vunpack.c.l.b16 %v1214
          %v1439 = vunpack.c.l.b16 %v1215
          %v1440 = vunpack.c.l.b16 %v1216
          %v1441 = vunpack.c.l.b16 %v1217
          %v1442 = vunpack.c.l.b16 %v1218
          %v1443 = vunpack.c.l.b16 %v1219
          %v1444 = vunpack.c.l.b16 %v1220
          %v1445 = vunpack.c.l.b16 %v1221
          %v1446 = vpack.c.b16 %v1335, %v1334
          %v1447 = vpack.c.b16 %v1337, %v1336
          %v1448 = vpack.c.b16 %v1339, %v1338
          %v1449 = vpack.c.b16 %v1341, %v1340
          %v1450 = vpack.c.b16 %v1343, %v1342
          %v1451 = vpack.c.b16 %v1345, %v1344
          %v1452 = vpack.c.b16 %v1347, %v1346
          %v1453 = vpack.c.b16 %v1349, %v1348
          %v1454 = vpack.c.b16 %v1351, %v1350
          %v1455 = vpack.c.b16 %v1353, %v1352
          %v1456 = vpack.c.b16 %v1355, %v1354
          %v1457 = vpack.c.b16 %v1357, %v1356
          %v1458 = vpack.c.b16 %v1359, %v1358
          %v1459 = vpack.c.b16 %v1361, %v1360
          %v1460 = vpack.c.b16 %v1363, %v1362
          %v1461 = vpack.c.b16 %v1365, %v1364
          %v1462 = vpack.c.b16 %v1367, %v1366
          %v1463 = vpack.c.b16 %v1369, %v1368
          %v1464 = vpack.c.b16 %v1371, %v1370
          %v1465 = vpack.c.b16 %v1373, %v1372
          %v1466 = vpack.c.b16 %v1375, %v1374
          %v1467 = vpack.c.b16 %v1377, %v1376
          %v1468 = vpack.c.b16 %v1379, %v1378
          %v1469 = vpack.c.b16 %v1381, %v1380
          %v1470 = vpack.c.b16 %v1383, %v1382
          %v1471 = vpack.c.b16 %v1385, %v1384
          %v1472 = vpack.c.b16 %v1387, %v1386
          %v1473 = vpack.c.b16 %v1389, %v1388
          %v1474 = vpack.c.b16 %v1391, %v1390
          %v1475 = vpack.c.b16 %v1393, %v1392
          %v1476 = vpack.c.b16 %v1395, %v1394
          %v1477 = vpack.c.b16 %v1397, %v1396
          %v1478 = vpack.c.b16 %v1399, %v1398
          %v1479 = vpack.c.b16 %v1401, %v1400
          %v1480 = vpack.c.b16 %v1403, %v1402
          %v1481 = vpack.c.b16 %v1405, %v1404
          %v1482 = vpack.c.b16 %v1407, %v1406
          %v1483 = vpack.c.b16 %v1409, %v1408
          %v1484 = vpack.c.b16 %v1411, %v1410
          %v1485 = vpack.c.b16 %v1413, %v1412
          %v1486 = vpack.c.b16 %v1415, %v1414
          %v1487 = vpack.c.b16 %v1417, %v1416
          %v1488 = vpack.c.b16 %v1419, %v1418
          %v1489 = vpack.c.b16 %v1421, %v1420
          %v1490 = vpack.c.b16 %v1423, %v1422
          %v1491 = vpack.c.b16 %v1425, %v1424
          %v1492 = vpack.c.b16 %v1427, %v1426
          %v1493 = vpack.c.b16 %v1429, %v1428
          %v1494 = vpack.c.b16 %v1431, %v1430
          %v1495 = vpack.c.b16 %v1433, %v1432
          %v1496 = vpack.c.b16 %v1435, %v1434
          %v1497 = vpack.c.b16 %v1437, %v1436
          %v1498 = vpack.c.b16 %v1439, %v1438
          %v1499 = vpack.c.b16 %v1441, %v1440
          %v1500 = vpack.c.b16 %v1443, %v1442
          %v1501 = vpack.c.b16 %v1445, %v1444
          %1558 = vmatprep.subr.bf16.mxu0 0
          %1559 = vmatpush1.bf16.msra.mxu0 %v1446
          %1560 = vmatprep.subr.bf16.mxu0 0
          %1561 = vmatpush1.bf16.msra.mxu0 %v1447
          %1562 = vmatprep.subr.bf16.mxu0 0
          %1563 = vmatpush1.bf16.msra.mxu0 %v1448
          %1564 = vmatprep.subr.bf16.mxu0 0
          %1565 = vmatpush1.bf16.msra.mxu0 %v1449
          %1566 = vmatprep.subr.bf16.mxu0 0
          %1567 = vmatpush1.bf16.msra.mxu0 %v1450
          %1568 = vmatprep.subr.bf16.mxu0 0
          %1569 = vmatpush1.bf16.msra.mxu0 %v1451
          %1570 = vmatprep.subr.bf16.mxu0 0
          %1571 = vmatpush1.bf16.msra.mxu0 %v1452
          %1572 = vmatprep.subr.bf16.mxu0 0
          %1573 = vmatpush1.bf16.msra.mxu0 %v1453
          %1574 = vmatprep.subr.bf16.mxu0 0
          %1575 = vmatpush1.bf16.msra.mxu0 %v1454
          %1576 = vmatprep.subr.bf16.mxu0 0
          %1577 = vmatpush1.bf16.msra.mxu0 %v1455
          %1578 = vmatprep.subr.bf16.mxu0 0
          %1579 = vmatpush1.bf16.msra.mxu0 %v1456
          %1580 = vmatprep.subr.bf16.mxu0 0
          %1581 = vmatpush1.bf16.msra.mxu0 %v1457
          %1582 = vmatprep.subr.bf16.mxu0 0
          %1583 = vmatpush1.bf16.msra.mxu0 %v1458
          %1584 = vmatprep.subr.bf16.mxu0 0
          %1585 = vmatpush1.bf16.msra.mxu0 %v1459
          %1586 = vmatprep.subr.bf16.mxu0 0
          %1587 = vmatpush1.bf16.msra.mxu0 %v1460
          %1588 = vmatprep.subr.bf16.mxu0 0
          %1589 = vmatpush1.bf16.msra.mxu0 %v1461
          %1590 = vmatprep.mubr.bf16.mxu0 %v1101
          %1591 = vmatmul.mubr.bf16.gmra.mrb[0].mxu0 %v1100
          %v1592 = vpop.f32.mrb[0].mxu0
          %v1593 = vadd.f32 0.0, %v1592
          %v1594 = vpop.f32.mrb[0].mxu0
          %v1595 = vpop.f32.mrb[0].mxu0
          %v1596 = vadd.f32 0.0, %v1595
          %v1597 = vpop.f32.mrb[0].mxu0
          %1598 = vdwg.mxu0
          %1599 = vmatprep.subr.bf16.mxu0 0
          %1600 = vmatpush1.bf16.msra.mxu0 %v1462
          %1601 = vmatprep.subr.bf16.mxu0 0
          %1602 = vmatpush1.bf16.msra.mxu0 %v1463
          %1603 = vmatprep.subr.bf16.mxu0 0
          %1604 = vmatpush1.bf16.msra.mxu0 %v1464
          %1605 = vmatprep.subr.bf16.mxu0 0
          %1606 = vmatpush1.bf16.msra.mxu0 %v1465
          %1607 = vmatprep.subr.bf16.mxu0 0
          %1608 = vmatpush1.bf16.msra.mxu0 %v1466
          %1609 = vmatprep.subr.bf16.mxu0 0
          %1610 = vmatpush1.bf16.msra.mxu0 %v1467
          %1611 = vmatprep.subr.bf16.mxu0 0
          %1612 = vmatpush1.bf16.msra.mxu0 %v1468
          %1613 = vmatprep.subr.bf16.mxu0 0
          %1614 = vmatpush1.bf16.msra.mxu0 %v1469
          %1615 = vmatprep.subr.bf16.mxu0 0
          %1616 = vmatpush1.bf16.msra.mxu0 %v1470
          %1617 = vmatprep.subr.bf16.mxu0 0
          %1618 = vmatpush1.bf16.msra.mxu0 %v1471
          %1619 = vmatprep.subr.bf16.mxu0 0
          %1620 = vmatpush1.bf16.msra.mxu0 %v1472
          %1621 = vmatprep.subr.bf16.mxu0 0
          %1622 = vmatpush1.bf16.msra.mxu0 %v1473
          %1623 = vmatprep.subr.bf16.mxu0 0
          %1624 = vmatpush1.bf16.msra.mxu0 %v1474
          %1625 = vmatprep.subr.bf16.mxu0 0
          %1626 = vmatpush1.bf16.msra.mxu0 %v1475
          %1627 = vmatprep.subr.bf16.mxu0 0
          %1628 = vmatpush1.bf16.msra.mxu0 %v1476
          %1629 = vmatprep.subr.bf16.mxu0 0
          %1630 = vmatpush1.bf16.msra.mxu0 %v1477
          %1631 = vmatprep.mubr.bf16.mxu0 %v1103
          %1632 = vmatmul.mubr.bf16.gmra.mrb[0].mxu0 %v1102
          %v1633 = vpop.f32.mrb[0].mxu0
          %v1634 = vadd.f32 %v1593, %v1633
          %v1635 = vpop.f32.mrb[0].mxu0
          %v1636 = vpop.f32.mrb[0].mxu0
          %v1637 = vadd.f32 %v1596, %v1636
          %v1638 = vpop.f32.mrb[0].mxu0
          %1639 = vdwg.mxu0
          %1640 = vmatprep.subr.bf16.mxu0 0
          %1641 = vmatpush1.bf16.msra.mxu0 %v1478
          %1642 = vmatprep.subr.bf16.mxu0 0
          %1643 = vmatpush1.bf16.msra.mxu0 %v1479
          %1644 = vmatprep.subr.bf16.mxu0 0
          %1645 = vmatpush1.bf16.msra.mxu0 %v1480
          %1646 = vmatprep.subr.bf16.mxu0 0
          %1647 = vmatpush1.bf16.msra.mxu0 %v1481
          %1648 = vmatprep.subr.bf16.mxu0 0
          %1649 = vmatpush1.bf16.msra.mxu0 %v1482
          %1650 = vmatprep.subr.bf16.mxu0 0
          %1651 = vmatpush1.bf16.msra.mxu0 %v1483
          %1652 = vmatprep.subr.bf16.mxu0 0
          %1653 = vmatpush1.bf16.msra.mxu0 %v1484
          %1654 = vmatprep.subr.bf16.mxu0 0
          %1655 = vmatpush1.bf16.msra.mxu0 %v1485
          %1656 = vmatprep.subr.bf16.mxu0 0
          %1657 = vmatpush1.bf16.msra.mxu0 %v1486
          %1658 = vmatprep.subr.bf16.mxu0 0
          %1659 = vmatpush1.bf16.msra.mxu0 %v1487
          %1660 = vmatprep.subr.bf16.mxu0 0
          %1661 = vmatpush1.bf16.msra.mxu0 %v1488
          %1662 = vmatprep.subr.bf16.mxu0 0
          %1663 = vmatpush1.bf16.msra.mxu0 %v1489
          %1664 = vmatprep.subr.bf16.mxu0 0
          %1665 = vmatpush1.bf16.msra.mxu0 %v1490
          %1666 = vmatprep.subr.bf16.mxu0 0
          %1667 = vmatpush1.bf16.msra.mxu0 %v1491
          %1668 = vmatprep.subr.bf16.mxu0 0
          %1669 = vmatpush1.bf16.msra.mxu0 %v1492
          %1670 = vmatprep.subr.bf16.mxu0 0
          %1671 = vmatpush1.bf16.msra.mxu0 %v1493
          %1672 = vmatprep.mubr.bf16.mxu0 %v1105
          %1673 = vmatmul.mubr.bf16.gmra.mrb[0].mxu0 %v1104
          %v1674 = vpop.f32.mrb[0].mxu0
          %v1675 = vadd.f32 %v1634, %v1674
          %v1676 = vpop.f32.mrb[0].mxu0
          %v1677 = vpop.f32.mrb[0].mxu0
          %v1678 = vadd.f32 %v1637, %v1677
          %v1679 = vpop.f32.mrb[0].mxu0
          %1680 = vdwg.mxu0
          %1681 = vmatprep.subr.bf16.mxu0 0
          %1682 = vmatpush1.bf16.msra.mxu0 %v1494
          %1683 = vmatprep.subr.bf16.mxu0 0
          %1684 = vmatpush1.bf16.msra.mxu0 %v1495
          %1685 = vmatprep.subr.bf16.mxu0 0
          %1686 = vmatpush1.bf16.msra.mxu0 %v1496
          %1687 = vmatprep.subr.bf16.mxu0 0
          %1688 = vmatpush1.bf16.msra.mxu0 %v1497
          %1689 = vmatprep.subr.bf16.mxu0 0
          %1690 = vmatpush1.bf16.msra.mxu0 %v1498
          %1691 = vmatprep.subr.bf16.mxu0 0
          %1692 = vmatpush1.bf16.msra.mxu0 %v1499
          %1693 = vmatprep.subr.bf16.mxu0 0
          %1694 = vmatpush1.bf16.msra.mxu0 %v1500
          %1695 = vmatprep.subr.bf16.mxu0 0
          %1696 = vmatpush1.bf16.msra.mxu0 %v1501
          %1697 = vmatprep.subr.bf16.mxu0 0
          %1698 = vmatpush1.bf16.msra.mxu0 0
          %1699 = vmatprep.subr.bf16.mxu0 0
          %1700 = vmatpush1.bf16.msra.mxu0 0
          %1701 = vmatprep.subr.bf16.mxu0 0
          %1702 = vmatpush1.bf16.msra.mxu0 0
          %1703 = vmatprep.subr.bf16.mxu0 0
          %1704 = vmatpush1.bf16.msra.mxu0 0
          %1705 = vmatprep.subr.bf16.mxu0 0
          %1706 = vmatpush1.bf16.msra.mxu0 0
          %1707 = vmatprep.subr.bf16.mxu0 0
          %1708 = vmatpush1.bf16.msra.mxu0 0
          %1709 = vmatprep.subr.bf16.mxu0 0
          %1710 = vmatpush1.bf16.msra.mxu0 0
          %1711 = vmatprep.subr.bf16.mxu0 0
          %1712 = vmatpush1.bf16.msra.mxu0 0
          %1713 = vmatprep.mubr.bf16.mxu0 0
          %1714 = vmatmul.mubr.bf16.gmra.mrb[0].mxu0 %v1106
          %v1715 = vpop.f32.mrb[0].mxu0
          %v1716 = vadd.f32 %v1675, %v1715
          %v1717 = vpop.f32.mrb[0].mxu0
          %v1718 = vpop.f32.mrb[0].mxu0
          %v1719 = vadd.f32 %v1678, %v1718
          %v1720 = vpop.f32.mrb[0].mxu0
          %1721 = vdwg.mxu0
          %v1722 = vadd.f32 %v1098, %v1716
          %v1723 = vadd.f32 %v1099, %v1719
          %1724 = vst.msk [vmem:[#allocation4] sm:$0xff] %vm416, %v1722
          %1725 = vst.msk [vmem:[#allocation4 + $0x8] sm:$0xff] %vm416, %v1723
        $region61: #{_lambda_.5} parent=47 // loop_footer
          %s424 = sadd.s32 1, %s420
        $region62: #{_lambda_.5} parent=47 // loop_footer_branch
          %419 = sbr.rel target = $region58
        $region63: #{_lambda_.5} parent=47 // loop_exit
          _
        %v1726 = vld [vmem:[#allocation4] sm:$0xff]
        %v1727 = vld [vmem:[#allocation4 + $0x8] sm:$0xff]
        %v1728 = vld [vmem:[%s2] sm:$0x1]
        %v1730 = vlaneseq
        %v1731 = vshrl.u32 %v1730, 7
        %v1732 = vsub.s32 0, %v1731
        %v1733 = vrot.slane %v1728, %v1732
        %v1735 = vadd.f32 %v1726, %v1733
        %v1736 = vadd.f32 %v1727, %v1733
        %v1737 = vmax.f32 %v1735, 0.0
        %v1738 = vmax.f32 %v1736, 0.0
        %v1739 = vpack.c.bf16 %v1738, %v1737
        %v1741 = vcombine.high %v1739, %v1739
        %v1743 = vunpack.c.l.s4 1983009808
        %v1744 = vunpack.c.0.s8 %v1743
        %v1745 = vlaneseq
        %v1746 = vshrl.u32 %v1745, 7
        %v1747 = vsub.s32 %v1744, %v1746
        %v1748 = vrot.slane %v1739, %v1747
        %v1750 = vunpack.c.l.s4 1983009808
        %v1751 = vunpack.c.0.s8 %v1750
        %v1752 = vlaneseq
        %v1753 = vshrl.u32 %v1752, 7
        %v1754 = vsub.s32 %v1751, %v1753
        %v1755 = vrot.slane %v1741, %v1754
        %v1756 = vcombine.high %v1748, %v1748
        %v1757 = vcombine.high %v1755, %v1755
        %vm1758 = vcmask 486400
        %1759 = vst.msk [vmem:[#allocation5] sm:$0xf] %vm1758, 0
        %vm1760 = vcmask 483328
        %1761 = vst.msk [vmem:[#allocation5 + $0x4] sm:$0x1] %vm1760, 0
        %1762 = vst.msk [vmem:[#allocation5 + $0x8] sm:$0xf] %vm1758, 0
        %1763 = vst.msk [vmem:[#allocation5 + $0xc] sm:$0x1] %vm1760, 0
        %1764 = vst.msk [vmem:[#allocation5 + $0x10] sm:$0xf] %vm1758, 0
        %1765 = vst.msk [vmem:[#allocation5 + $0x14] sm:$0x1] %vm1760, 0
        %1766 = vst.msk [vmem:[#allocation5 + $0x18] sm:$0xf] %vm1758, 0
        %1767 = vst.msk [vmem:[#allocation5 + $0x1c] sm:$0x1] %vm1760, 0
        %1768 = vst.msk [vmem:[#allocation5 + $0x20] sm:$0xf] %vm1758, 0
        %1769 = vst.msk [vmem:[#allocation5 + $0x24] sm:$0x1] %vm1760, 0
        %1770 = vst.msk [vmem:[#allocation5 + $0x28] sm:$0xf] %vm1758, 0
        %1771 = vst.msk [vmem:[#allocation5 + $0x2c] sm:$0x1] %vm1760, 0
        %1772 = vst.msk [vmem:[#allocation5 + $0x30] sm:$0xf] %vm1758, 0
        %1773 = vst.msk [vmem:[#allocation5 + $0x34] sm:$0x1] %vm1760, 0
        %1774 = vst.msk [vmem:[#allocation5 + $0x38] sm:$0xf] %vm1758, 0
        %1775 = vst.msk [vmem:[#allocation5 + $0x3c] sm:$0x1] %vm1760, 0
        %1776 = vst.msk [vmem:[#allocation5 + $0x40] sm:$0xf] %vm1758, 0
        %1777 = vst.msk [vmem:[#allocation5 + $0x44] sm:$0x1] %vm1760, 0
        %1778 = vst.msk [vmem:[#allocation5 + $0x48] sm:$0xf] %vm1758, 0
        %1779 = vst.msk [vmem:[#allocation5 + $0x4c] sm:$0x1] %vm1760, 0
        %v1781 = vunpack.c.l.s4 1983009808
        %v1782 = vunpack.c.0.s8 %v1781
        %v1783 = vlaneseq
        %v1784 = vshrl.u32 %v1783, 7
        %v1785 = vsub.s32 %v1782, %v1784
        %v1786 = vrot.slane %v1748, %v1785
        %v1788 = vunpack.c.l.s4 1983009808
        %v1789 = vunpack.c.0.s8 %v1788
        %v1790 = vlaneseq
        %v1791 = vshrl.u32 %v1790, 7
        %v1792 = vsub.s32 %v1789, %v1791
        %v1793 = vrot.slane %v1756, %v1792
        %v1795 = vunpack.c.l.s4 1983009808
        %v1796 = vunpack.c.0.s8 %v1795
        %v1797 = vlaneseq
        %v1798 = vshrl.u32 %v1797, 7
        %v1799 = vsub.s32 %v1796, %v1798
        %v1800 = vrot.slane %v1755, %v1799
        %v1802 = vunpack.c.l.s4 1983009808
        %v1803 = vunpack.c.0.s8 %v1802
        %v1804 = vlaneseq
        %v1805 = vshrl.u32 %v1804, 7
        %v1806 = vsub.s32 %v1803, %v1805
        %v1807 = vrot.slane %v1757, %v1806
        %v1809 = vshrl.u32 %v1786, 16
        %v1811 = vrot.slane %v1809, 6
        %v1812 = vshll.u32 %v1786, 16
        %v1814 = vrot.slane %v1812, 7
        %v1815 = vor.u32 %v1811, %v1814
        %v1817 = vshrl.u32 %v1793, 16
        %v1819 = vrot.slane %v1817, 6
        %v1820 = vshll.u32 %v1793, 16
        %v1822 = vrot.slane %v1820, 7
        %v1823 = vor.u32 %v1819, %v1822
        %v1825 = vshrl.u32 %v1800, 16
        %v1827 = vrot.slane %v1825, 6
        %v1828 = vshll.u32 %v1800, 16
        %v1830 = vrot.slane %v1828, 7
        %v1831 = vor.u32 %v1827, %v1830
        %v1833 = vshrl.u32 %v1807, 16
        %v1835 = vrot.slane %v1833, 6
        %v1836 = vshll.u32 %v1807, 16
        %v1838 = vrot.slane %v1836, 7
        %v1839 = vor.u32 %v1835, %v1838
        %s1844 = scalar_lea.vmem [#allocation5], 24
        %vm1845 = vcmask 486401
        %vm1846 = vmand %vm1845, %vm402
        %v1847 = vld [vmem:[%s1844] sm:$0xe]
        %v1848 = vsel %vm1846, %v1815, %v1847
        %1849 = vst [vmem:[%s1844] sm:$0xe] %v1848
        %v1850 = vld [vmem:[%s1844 + $0x8] sm:$0xe]
        %v1851 = vsel %vm1846, %v1823, %v1850
        %1852 = vst [vmem:[%s1844 + $0x8] sm:$0xe] %v1851
        %v1853 = vld [vmem:[%s1844 + $0x10] sm:$0xe]
        %v1854 = vsel %vm1846, %v1831, %v1853
        %1855 = vst [vmem:[%s1844 + $0x10] sm:$0xe] %v1854
        %v1856 = vld [vmem:[%s1844 + $0x18] sm:$0xe]
        %v1857 = vsel %vm1846, %v1839, %v1856
        %1858 = vst [vmem:[%s1844 + $0x18] sm:$0xe] %v1857
        %vm1859 = vcmask 244736
        %1860 = vst.msk [vmem:[#allocation7] sm:$0xff] %vm1859, 0.0
        %1861 = vst.msk [vmem:[#allocation7 + $0x8] sm:$0xff] %vm1859, 0.0
        loop: start=0, step=1, limit=7
        $region64: #{_lambda_.5} parent=47 // loop_pre_header
          _
        $region65: #{_lambda_.5} parent=47 // loop_header
          %s1863 = sphi 0, %s1867
          %p1864 = scmp.ge.s32.totalorder %s1863, 7
        $region66: #{_lambda_.5} parent=47 // loop_header_branch
          %1866 = sbr.rel (%p1864) target = $region70
        $region67: #{_lambda_.5} parent=47 // loop_body
          %s1868 = smul.u32 %s1863, 2
          %s1869 = smul.addr %s1868, 4
          %s1870 = scalar_lea.vmem [#allocation5], %s1869
          %v1871 = vld [vmem:[%s1870] sm:$0x3]
          %v1872 = vld [vmem:[%s1870 + $0x8] sm:$0x3]
          %v1873 = vld [vmem:[%s1870 + $0x10] sm:$0x3]
          %v1874 = vld [vmem:[%s1870 + $0x18] sm:$0x3]
          %v1879 = vcombine.low %v1871, %v1872
          %v1880 = vcombine.low %v1873, %v1874
          %v1882 = vunpack.c.l.s4 1983009808
          %v1883 = vunpack.c.0.s8 %v1882
          %v1884 = vlaneseq
          %v1885 = vshrl.u32 %v1884, 7
          %v1886 = vsub.s32 %v1883, %v1885
          %v1887 = vrot.slane %v1879, %v1886
          %v1889 = vunpack.c.l.s4 1983009808
          %v1890 = vunpack.c.0.s8 %v1889
          %v1891 = vlaneseq
          %v1892 = vshrl.u32 %v1891, 7
          %v1893 = vsub.s32 %v1890, %v1892
          %v1894 = vrot.slane %v1880, %v1893
          %v1895 = vcombine.low %v1887, %v1894
          %1897 = vst.msk [vmem:[#allocation6] sm:$0xff] %vm416, %v1895
          %v1898 = vld [vmem:[%s1870] sm:$0x7]
          %v1899 = vld [vmem:[%s1870 + $0x8] sm:$0x7]
          %v1900 = vld [vmem:[%s1870 + $0x10] sm:$0x7]
          %v1901 = vld [vmem:[%s1870 + $0x18] sm:$0x7]
          %v1907 = vunpack.c.l.s4 1983009808
          %v1908 = vunpack.c.0.s8 %v1907
          %v1909 = vlaneseq
          %v1910 = vshrl.u32 %v1909, 7
          %v1911 = vsub.s32 %v1908, %v1910
          %v1912 = vrot.slane %v1898, %v1911
          %v1913 = vcombine.high %v1912, %v1912
          %v1915 = vunpack.c.l.s4 1983009808
          %v1916 = vunpack.c.0.s8 %v1915
          %v1917 = vlaneseq
          %v1918 = vshrl.u32 %v1917, 7
          %v1919 = vsub.s32 %v1916, %v1918
          %v1920 = vrot.slane %v1899, %v1919
          %v1921 = vcombine.high %v1920, %v1920
          %v1923 = vunpack.c.l.s4 1983009808
          %v1924 = vunpack.c.0.s8 %v1923
          %v1925 = vlaneseq
          %v1926 = vshrl.u32 %v1925, 7
          %v1927 = vsub.s32 %v1924, %v1926
          %v1928 = vrot.slane %v1900, %v1927
          %v1929 = vcombine.high %v1928, %v1928
          %v1931 = vunpack.c.l.s4 1983009808
          %v1932 = vunpack.c.0.s8 %v1931
          %v1933 = vlaneseq
          %v1934 = vshrl.u32 %v1933, 7
          %v1935 = vsub.s32 %v1932, %v1934
          %v1936 = vrot.slane %v1901, %v1935
          %v1937 = vcombine.high %v1936, %v1936
          %vm1938 = vsmask.f32 1280
          %vm1939 = vsmask.f32 3336
          %vm1940 = vmor %vm1938, %vm1939
          %vm1941 = vsmask.f32 5392
          %vm1942 = vmor %vm1940, %vm1941
          %vm1943 = vsmask.f32 7448
          %vm1944 = vmor %vm1942, %vm1943
          %v1946 = vshrl.u32 %v1912, 16
          %v1948 = vrot.slane %v1946, 6
          %v1949 = vshll.u32 %v1912, 16
          %v1951 = vrot.slane %v1949, 7
          %v1952 = vor.u32 %v1948, %v1951
          %v1953 = vrot.slane %v1952, 2
          %v1955 = vshll.u32 %v1913, 16
          %v1957 = vrot.slane %v1955, 7
          %v1958 = vsel %vm1944, %v1953, %v1957
          %v1960 = vshrl.u32 %v1920, 16
          %v1962 = vrot.slane %v1960, 6
          %v1963 = vshll.u32 %v1920, 16
          %v1965 = vrot.slane %v1963, 7
          %v1966 = vor.u32 %v1962, %v1965
          %v1967 = vrot.slane %v1966, 2
          %v1969 = vshll.u32 %v1921, 16
          %v1971 = vrot.slane %v1969, 7
          %v1972 = vsel %vm1944, %v1967, %v1971
          %v1974 = vshrl.u32 %v1928, 16
          %v1976 = vrot.slane %v1974, 6
          %v1977 = vshll.u32 %v1928, 16
          %v1979 = vrot.slane %v1977, 7
          %v1980 = vor.u32 %v1976, %v1979
          %v1981 = vrot.slane %v1980, 2
          %v1983 = vshll.u32 %v1929, 16
          %v1985 = vrot.slane %v1983, 7
          %v1986 = vsel %vm1944, %v1981, %v1985
          %v1988 = vshrl.u32 %v1936, 16
          %v1990 = vrot.slane %v1988, 6
          %v1991 = vshll.u32 %v1936, 16
          %v1993 = vrot.slane %v1991, 7
          %v1994 = vor.u32 %v1990, %v1993
          %v1995 = vrot.slane %v1994, 2
          %v1997 = vshll.u32 %v1937, 16
          %v1999 = vrot.slane %v1997, 7
          %v2000 = vsel %vm1944, %v1995, %v1999
          %v2001 = vcombine.low %v1958, %v1972
          %v2002 = vcombine.low %v1986, %v2000
          %v2004 = vunpack.c.l.s4 1983009808
          %v2005 = vunpack.c.0.s8 %v2004
          %v2006 = vlaneseq
          %v2007 = vshrl.u32 %v2006, 7
          %v2008 = vsub.s32 %v2005, %v2007
          %v2009 = vrot.slane %v2001, %v2008
          %v2011 = vunpack.c.l.s4 1983009808
          %v2012 = vunpack.c.0.s8 %v2011
          %v2013 = vlaneseq
          %v2014 = vshrl.u32 %v2013, 7
          %v2015 = vsub.s32 %v2012, %v2014
          %v2016 = vrot.slane %v2002, %v2015
          %v2017 = vcombine.low %v2009, %v2016
          %2018 = vrot.lane.b32.xlu0 %v2017, 60
          %v2019 = vpop.permute.xlu0 %2018
          %vm2021 = vcmask 982496
          %2022 = vst.msk [vmem:[#allocation6] sm:$0xff] %vm2021, %v2019
          %v2023 = vld [vmem:[%s1870] sm:$0x6]
          %v2024 = vld [vmem:[%s1870 + $0x8] sm:$0x6]
          %v2025 = vld [vmem:[%s1870 + $0x10] sm:$0x6]
          %v2026 = vld [vmem:[%s1870 + $0x18] sm:$0x6]
          %v2032 = vunpack.c.l.s4 1983009808
          %v2033 = vunpack.c.0.s8 %v2032
          %v2034 = vlaneseq
          %v2035 = vshrl.u32 %v2034, 7
          %v2036 = vsub.s32 %v2033, %v2035
          %v2037 = vrot.slane %v2023, %v2036
          %v2038 = vcombine.high %v2037, %v2037
          %v2040 = vunpack.c.l.s4 1983009808
          %v2041 = vunpack.c.0.s8 %v2040
          %v2042 = vlaneseq
          %v2043 = vshrl.u32 %v2042, 7
          %v2044 = vsub.s32 %v2041, %v2043
          %v2045 = vrot.slane %v2024, %v2044
          %v2046 = vcombine.high %v2045, %v2045
          %v2048 = vunpack.c.l.s4 1983009808
          %v2049 = vunpack.c.0.s8 %v2048
          %v2050 = vlaneseq
          %v2051 = vshrl.u32 %v2050, 7
          %v2052 = vsub.s32 %v2049, %v2051
          %v2053 = vrot.slane %v2025, %v2052
          %v2054 = vcombine.high %v2053, %v2053
          %v2056 = vunpack.c.l.s4 1983009808
          %v2057 = vunpack.c.0.s8 %v2056
          %v2058 = vlaneseq
          %v2059 = vshrl.u32 %v2058, 7
          %v2060 = vsub.s32 %v2057, %v2059
          %v2061 = vrot.slane %v2026, %v2060
          %v2062 = vcombine.high %v2061, %v2061
          %vm2063 = vcmask 1040384
          %vm2064 = vcmask 1042434
          %vm2065 = vmor %vm2063, %vm2064
          %vm2066 = vcmask 1044484
          %vm2067 = vmor %vm2065, %vm2066
          %vm2068 = vcmask 1046534
          %vm2069 = vmor %vm2067, %vm2068
          %v2070 = vrot.slane %v2037, 7
          %v2071 = vrot.slane %v2070, 2
          %v2072 = vrot.slane %v2038, 7
          %v2073 = vsel %vm2069, %v2071, %v2072
          %v2074 = vrot.slane %v2045, 7
          %v2075 = vrot.slane %v2074, 2
          %v2076 = vrot.slane %v2046, 7
          %v2077 = vsel %vm2069, %v2075, %v2076
          %v2078 = vrot.slane %v2053, 7
          %v2079 = vrot.slane %v2078, 2
          %v2080 = vrot.slane %v2054, 7
          %v2081 = vsel %vm2069, %v2079, %v2080
          %v2082 = vrot.slane %v2061, 7
          %v2083 = vrot.slane %v2082, 2
          %v2084 = vrot.slane %v2062, 7
          %v2085 = vsel %vm2069, %v2083, %v2084
          %v2086 = vcombine.low %v2073, %v2077
          %v2087 = vcombine.low %v2081, %v2085
          %v2089 = vunpack.c.l.s4 1983009808
          %v2090 = vunpack.c.0.s8 %v2089
          %v2091 = vlaneseq
          %v2092 = vshrl.u32 %v2091, 7
          %v2093 = vsub.s32 %v2090, %v2092
          %v2094 = vrot.slane %v2086, %v2093
          %v2096 = vunpack.c.l.s4 1983009808
          %v2097 = vunpack.c.0.s8 %v2096
          %v2098 = vlaneseq
          %v2099 = vshrl.u32 %v2098, 7
          %v2100 = vsub.s32 %v2097, %v2099
          %v2101 = vrot.slane %v2087, %v2100
          %v2102 = vcombine.low %v2094, %v2101
          %2103 = vrot.lane.b32.xlu0 %v2102, 120
          %v2104 = vpop.permute.xlu0 %2103
          %vm2106 = vcmask 1048512
          %2107 = vst.msk [vmem:[#allocation6] sm:$0xff] %vm2106, %v2104
          %vm2108 = vcmask 424960
          %2109 = vst.msk [vmem:[#allocation6 + $0x8] sm:$0xff] %vm2108, %v2104
          %v2110 = vld [vmem:[%s1870] sm:$0xe]
          %v2111 = vld [vmem:[%s1870 + $0x8] sm:$0xe]
          %v2112 = vld [vmem:[%s1870 + $0x10] sm:$0xe]
          %v2113 = vld [vmem:[%s1870 + $0x18] sm:$0xe]
          %v2119 = vunpack.c.l.s4 1983009808
          %v2120 = vunpack.c.0.s8 %v2119
          %v2121 = vlaneseq
          %v2122 = vshrl.u32 %v2121, 7
          %v2123 = vsub.s32 %v2120, %v2122
          %v2124 = vrot.slane %v2110, %v2123
          %v2125 = vcombine.high %v2124, %v2124
          %v2127 = vunpack.c.l.s4 1983009808
          %v2128 = vunpack.c.0.s8 %v2127
          %v2129 = vlaneseq
          %v2130 = vshrl.u32 %v2129, 7
          %v2131 = vsub.s32 %v2128, %v2130
          %v2132 = vrot.slane %v2111, %v2131
          %v2133 = vcombine.high %v2132, %v2132
          %v2135 = vunpack.c.l.s4 1983009808
          %v2136 = vunpack.c.0.s8 %v2135
          %v2137 = vlaneseq
          %v2138 = vshrl.u32 %v2137, 7
          %v2139 = vsub.s32 %v2136, %v2138
          %v2140 = vrot.slane %v2112, %v2139
          %v2141 = vcombine.high %v2140, %v2140
          %v2143 = vunpack.c.l.s4 1983009808
          %v2144 = vunpack.c.0.s8 %v2143
          %v2145 = vlaneseq
          %v2146 = vshrl.u32 %v2145, 7
          %v2147 = vsub.s32 %v2144, %v2146
          %v2148 = vrot.slane %v2113, %v2147
          %v2149 = vcombine.high %v2148, %v2148
          %vm2150 = vsmask.f32 256
          %vm2151 = vsmask.f32 2312
          %vm2152 = vmor %vm2150, %vm2151
          %vm2153 = vsmask.f32 4368
          %vm2154 = vmor %vm2152, %vm2153
          %vm2155 = vsmask.f32 6424
          %vm2156 = vmor %vm2154, %vm2155
          %v2158 = vshrl.u32 %v2124, 16
          %v2160 = vrot.slane %v2158, 7
          %v2161 = vrot.slane %v2160, 2
          %v2163 = vshrl.u32 %v2125, 16
          %v2165 = vrot.slane %v2163, 7
          %v2166 = vshll.u32 %v2125, 16
          %v2168 = vor.u32 %v2165, %v2166
          %v2169 = vsel %vm2156, %v2161, %v2168
          %v2171 = vshrl.u32 %v2132, 16
          %v2173 = vrot.slane %v2171, 7
          %v2174 = vrot.slane %v2173, 2
          %v2176 = vshrl.u32 %v2133, 16
          %v2178 = vrot.slane %v2176, 7
          %v2179 = vshll.u32 %v2133, 16
          %v2181 = vor.u32 %v2178, %v2179
          %v2182 = vsel %vm2156, %v2174, %v2181
          %v2184 = vshrl.u32 %v2140, 16
          %v2186 = vrot.slane %v2184, 7
          %v2187 = vrot.slane %v2186, 2
          %v2189 = vshrl.u32 %v2141, 16
          %v2191 = vrot.slane %v2189, 7
          %v2192 = vshll.u32 %v2141, 16
          %v2194 = vor.u32 %v2191, %v2192
          %v2195 = vsel %vm2156, %v2187, %v2194
          %v2197 = vshrl.u32 %v2148, 16
          %v2199 = vrot.slane %v2197, 7
          %v2200 = vrot.slane %v2199, 2
          %v2202 = vshrl.u32 %v2149, 16
          %v2204 = vrot.slane %v2202, 7
          %v2205 = vshll.u32 %v2149, 16
          %v2207 = vor.u32 %v2204, %v2205
          %v2208 = vsel %vm2156, %v2200, %v2207
          %v2209 = vcombine.low %v2169, %v2182
          %v2210 = vcombine.low %v2195, %v2208
          %v2212 = vunpack.c.l.s4 1983009808
          %v2213 = vunpack.c.0.s8 %v2212
          %v2214 = vlaneseq
          %v2215 = vshrl.u32 %v2214, 7
          %v2216 = vsub.s32 %v2213, %v2215
          %v2217 = vrot.slane %v2209, %v2216
          %v2219 = vunpack.c.l.s4 1983009808
          %v2220 = vunpack.c.0.s8 %v2219
          %v2221 = vlaneseq
          %v2222 = vshrl.u32 %v2221, 7
          %v2223 = vsub.s32 %v2220, %v2222
          %v2224 = vrot.slane %v2210, %v2223
          %v2225 = vcombine.low %v2217, %v2224
          %2226 = vrot.lane.b32.xlu0 %v2225, 52
          %v2227 = vpop.permute.xlu0 %2226
          %vm2229 = vcmask 916896
          %2230 = vst.msk [vmem:[#allocation6 + $0x8] sm:$0xff] %vm2229, %v2227
          %v2231 = vld [vmem:[%s1870] sm:$0xc]
          %v2232 = vld [vmem:[%s1870 + $0x8] sm:$0xc]
          %v2233 = vld [vmem:[%s1870 + $0x10] sm:$0xc]
          %v2234 = vld [vmem:[%s1870 + $0x18] sm:$0xc]
          %v2240 = vunpack.c.l.s4 1983009808
          %v2241 = vunpack.c.0.s8 %v2240
          %v2242 = vlaneseq
          %v2243 = vshrl.u32 %v2242, 7
          %v2244 = vsub.s32 %v2241, %v2243
          %v2245 = vrot.slane %v2231, %v2244
          %v2246 = vcombine.high %v2245, %v2245
          %v2248 = vunpack.c.l.s4 1983009808
          %v2249 = vunpack.c.0.s8 %v2248
          %v2250 = vlaneseq
          %v2251 = vshrl.u32 %v2250, 7
          %v2252 = vsub.s32 %v2249, %v2251
          %v2253 = vrot.slane %v2232, %v2252
          %v2254 = vcombine.high %v2253, %v2253
          %v2256 = vunpack.c.l.s4 1983009808
          %v2257 = vunpack.c.0.s8 %v2256
          %v2258 = vlaneseq
          %v2259 = vshrl.u32 %v2258, 7
          %v2260 = vsub.s32 %v2257, %v2259
          %v2261 = vrot.slane %v2233, %v2260
          %v2262 = vcombine.high %v2261, %v2261
          %v2264 = vunpack.c.l.s4 1983009808
          %v2265 = vunpack.c.0.s8 %v2264
          %v2266 = vlaneseq
          %v2267 = vshrl.u32 %v2266, 7
          %v2268 = vsub.s32 %v2265, %v2267
          %v2269 = vrot.slane %v2234, %v2268
          %v2270 = vcombine.high %v2269, %v2269
          %v2271 = vcombine.low %v2246, %v2254
          %v2272 = vcombine.low %v2262, %v2270
          %v2274 = vunpack.c.l.s4 1983009808
          %v2275 = vunpack.c.0.s8 %v2274
          %v2276 = vlaneseq
          %v2277 = vshrl.u32 %v2276, 7
          %v2278 = vsub.s32 %v2275, %v2277
          %v2279 = vrot.slane %v2271, %v2278
          %v2281 = vunpack.c.l.s4 1983009808
          %v2282 = vunpack.c.0.s8 %v2281
          %v2283 = vlaneseq
          %v2284 = vshrl.u32 %v2283, 7
          %v2285 = vsub.s32 %v2282, %v2284
          %v2286 = vrot.slane %v2272, %v2285
          %v2287 = vcombine.low %v2279, %v2286
          %2288 = vrot.lane.b32.xlu0 %v2287, 112
          %v2289 = vpop.permute.xlu0 %2288
          %vm2291 = vcmask 1048448
          %2292 = vst.msk [vmem:[#allocation6 + $0x8] sm:$0xff] %vm2291, %v2289
          %vm2293 = vcmask 359424
          %2294 = vst.msk [vmem:[#allocation6 + $0x10] sm:$0xff] %vm2293, %v2289
          %v2295 = vld [vmem:[%s1870] sm:$0xc]
          %v2296 = vld [vmem:[%s1870 + $0x4] sm:$0x1]
          %v2297 = vld [vmem:[%s1870 + $0x8] sm:$0xc]
          %v2298 = vld [vmem:[%s1870 + $0xc] sm:$0x1]
          %v2299 = vld [vmem:[%s1870 + $0x10] sm:$0xc]
          %v2300 = vld [vmem:[%s1870 + $0x14] sm:$0x1]
          %v2301 = vld [vmem:[%s1870 + $0x18] sm:$0xc]
          %v2302 = vld [vmem:[%s1870 + $0x1c] sm:$0x1]
          %v2312 = vunpack.c.l.s4 1983009808
          %v2313 = vunpack.c.0.s8 %v2312
          %v2314 = vlaneseq
          %v2315 = vshrl.u32 %v2314, 7
          %v2316 = vsub.s32 %v2313, %v2315
          %v2317 = vrot.slane %v2295, %v2316
          %v2318 = vcombine.high %v2317, %v2317
          %v2320 = vunpack.c.l.s4 1983009808
          %v2321 = vunpack.c.0.s8 %v2320
          %v2322 = vlaneseq
          %v2323 = vshrl.u32 %v2322, 7
          %v2324 = vsub.s32 %v2321, %v2323
          %v2325 = vrot.slane %v2296, %v2324
          %v2327 = vunpack.c.l.s4 1983009808
          %v2328 = vunpack.c.0.s8 %v2327
          %v2329 = vlaneseq
          %v2330 = vshrl.u32 %v2329, 7
          %v2331 = vsub.s32 %v2328, %v2330
          %v2332 = vrot.slane %v2297, %v2331
          %v2333 = vcombine.high %v2332, %v2332
          %v2335 = vunpack.c.l.s4 1983009808
          %v2336 = vunpack.c.0.s8 %v2335
          %v2337 = vlaneseq
          %v2338 = vshrl.u32 %v2337, 7
          %v2339 = vsub.s32 %v2336, %v2338
          %v2340 = vrot.slane %v2298, %v2339
          %v2342 = vunpack.c.l.s4 1983009808
          %v2343 = vunpack.c.0.s8 %v2342
          %v2344 = vlaneseq
          %v2345 = vshrl.u32 %v2344, 7
          %v2346 = vsub.s32 %v2343, %v2345
          %v2347 = vrot.slane %v2299, %v2346
          %v2348 = vcombine.high %v2347, %v2347
          %v2350 = vunpack.c.l.s4 1983009808
          %v2351 = vunpack.c.0.s8 %v2350
          %v2352 = vlaneseq
          %v2353 = vshrl.u32 %v2352, 7
          %v2354 = vsub.s32 %v2351, %v2353
          %v2355 = vrot.slane %v2300, %v2354
          %v2357 = vunpack.c.l.s4 1983009808
          %v2358 = vunpack.c.0.s8 %v2357
          %v2359 = vlaneseq
          %v2360 = vshrl.u32 %v2359, 7
          %v2361 = vsub.s32 %v2358, %v2360
          %v2362 = vrot.slane %v2301, %v2361
          %v2363 = vcombine.high %v2362, %v2362
          %v2365 = vunpack.c.l.s4 1983009808
          %v2366 = vunpack.c.0.s8 %v2365
          %v2367 = vlaneseq
          %v2368 = vshrl.u32 %v2367, 7
          %v2369 = vsub.s32 %v2366, %v2368
          %v2370 = vrot.slane %v2302, %v2369
          %v2372 = vshrl.u32 %v2318, 16
          %v2374 = vrot.slane %v2372, 6
          %v2375 = vshll.u32 %v2318, 16
          %v2377 = vrot.slane %v2375, 7
          %v2378 = vor.u32 %v2374, %v2377
          %v2379 = vrot.slane %v2378, 2
          %v2381 = vshll.u32 %v2325, 16
          %v2383 = vrot.slane %v2381, 7
          %v2384 = vsel %vm1944, %v2379, %v2383
          %v2386 = vshrl.u32 %v2333, 16
          %v2388 = vrot.slane %v2386, 6
          %v2389 = vshll.u32 %v2333, 16
          %v2391 = vrot.slane %v2389, 7
          %v2392 = vor.u32 %v2388, %v2391
          %v2393 = vrot.slane %v2392, 2
          %v2395 = vshll.u32 %v2340, 16
          %v2397 = vrot.slane %v2395, 7
          %v2398 = vsel %vm1944, %v2393, %v2397
          %v2400 = vshrl.u32 %v2348, 16
          %v2402 = vrot.slane %v2400, 6
          %v2403 = vshll.u32 %v2348, 16
          %v2405 = vrot.slane %v2403, 7
          %v2406 = vor.u32 %v2402, %v2405
          %v2407 = vrot.slane %v2406, 2
          %v2409 = vshll.u32 %v2355, 16
          %v2411 = vrot.slane %v2409, 7
          %v2412 = vsel %vm1944, %v2407, %v2411
          %v2414 = vshrl.u32 %v2363, 16
          %v2416 = vrot.slane %v2414, 6
          %v2417 = vshll.u32 %v2363, 16
          %v2419 = vrot.slane %v2417, 7
          %v2420 = vor.u32 %v2416, %v2419
          %v2421 = vrot.slane %v2420, 2
          %v2423 = vshll.u32 %v2370, 16
          %v2425 = vrot.slane %v2423, 7
          %v2426 = vsel %vm1944, %v2421, %v2425
          %v2427 = vcombine.low %v2384, %v2398
          %v2428 = vcombine.low %v2412, %v2426
          %v2430 = vunpack.c.l.s4 1983009808
          %v2431 = vunpack.c.0.s8 %v2430
          %v2432 = vlaneseq
          %v2433 = vshrl.u32 %v2432, 7
          %v2434 = vsub.s32 %v2431, %v2433
          %v2435 = vrot.slane %v2427, %v2434
          %v2437 = vunpack.c.l.s4 1983009808
          %v2438 = vunpack.c.0.s8 %v2437
          %v2439 = vlaneseq
          %v2440 = vshrl.u32 %v2439, 7
          %v2441 = vsub.s32 %v2438, %v2440
          %v2442 = vrot.slane %v2428, %v2441
          %v2443 = vcombine.low %v2435, %v2442
          %2444 = vrot.lane.b32.xlu0 %v2443, 44
          %v2445 = vpop.permute.xlu0 %2444
          %vm2447 = vcmask 851296
          %2448 = vst.msk [vmem:[#allocation6 + $0x10] sm:$0xff] %vm2447, %v2445
          %v2449 = vld [vmem:[%s1870] sm:$0x8]
          %v2450 = vld [vmem:[%s1870 + $0x4] sm:$0x1]
          %v2451 = vld [vmem:[%s1870 + $0x8] sm:$0x8]
          %v2452 = vld [vmem:[%s1870 + $0xc] sm:$0x1]
          %v2453 = vld [vmem:[%s1870 + $0x10] sm:$0x8]
          %v2454 = vld [vmem:[%s1870 + $0x14] sm:$0x1]
          %v2455 = vld [vmem:[%s1870 + $0x18] sm:$0x8]
          %v2456 = vld [vmem:[%s1870 + $0x1c] sm:$0x1]
          %v2466 = vunpack.c.l.s4 1983009808
          %v2467 = vunpack.c.0.s8 %v2466
          %v2468 = vlaneseq
          %v2469 = vshrl.u32 %v2468, 7
          %v2470 = vsub.s32 %v2467, %v2469
          %v2471 = vrot.slane %v2449, %v2470
          %v2472 = vcombine.high %v2471, %v2471
          %v2474 = vunpack.c.l.s4 1983009808
          %v2475 = vunpack.c.0.s8 %v2474
          %v2476 = vlaneseq
          %v2477 = vshrl.u32 %v2476, 7
          %v2478 = vsub.s32 %v2475, %v2477
          %v2479 = vrot.slane %v2450, %v2478
          %v2481 = vunpack.c.l.s4 1983009808
          %v2482 = vunpack.c.0.s8 %v2481
          %v2483 = vlaneseq
          %v2484 = vshrl.u32 %v2483, 7
          %v2485 = vsub.s32 %v2482, %v2484
          %v2486 = vrot.slane %v2451, %v2485
          %v2487 = vcombine.high %v2486, %v2486
          %v2489 = vunpack.c.l.s4 1983009808
          %v2490 = vunpack.c.0.s8 %v2489
          %v2491 = vlaneseq
          %v2492 = vshrl.u32 %v2491, 7
          %v2493 = vsub.s32 %v2490, %v2492
          %v2494 = vrot.slane %v2452, %v2493
          %v2496 = vunpack.c.l.s4 1983009808
          %v2497 = vunpack.c.0.s8 %v2496
          %v2498 = vlaneseq
          %v2499 = vshrl.u32 %v2498, 7
          %v2500 = vsub.s32 %v2497, %v2499
          %v2501 = vrot.slane %v2453, %v2500
          %v2502 = vcombine.high %v2501, %v2501
          %v2504 = vunpack.c.l.s4 1983009808
          %v2505 = vunpack.c.0.s8 %v2504
          %v2506 = vlaneseq
          %v2507 = vshrl.u32 %v2506, 7
          %v2508 = vsub.s32 %v2505, %v2507
          %v2509 = vrot.slane %v2454, %v2508
          %v2511 = vunpack.c.l.s4 1983009808
          %v2512 = vunpack.c.0.s8 %v2511
          %v2513 = vlaneseq
          %v2514 = vshrl.u32 %v2513, 7
          %v2515 = vsub.s32 %v2512, %v2514
          %v2516 = vrot.slane %v2455, %v2515
          %v2517 = vcombine.high %v2516, %v2516
          %v2519 = vunpack.c.l.s4 1983009808
          %v2520 = vunpack.c.0.s8 %v2519
          %v2521 = vlaneseq
          %v2522 = vshrl.u32 %v2521, 7
          %v2523 = vsub.s32 %v2520, %v2522
          %v2524 = vrot.slane %v2456, %v2523
          %v2525 = vrot.slane %v2472, 7
          %v2526 = vrot.slane %v2525, 2
          %v2527 = vrot.slane %v2479, 7
          %v2528 = vsel %vm2069, %v2526, %v2527
          %v2529 = vrot.slane %v2487, 7
          %v2530 = vrot.slane %v2529, 2
          %v2531 = vrot.slane %v2494, 7
          %v2532 = vsel %vm2069, %v2530, %v2531
          %v2533 = vrot.slane %v2502, 7
          %v2534 = vrot.slane %v2533, 2
          %v2535 = vrot.slane %v2509, 7
          %v2536 = vsel %vm2069, %v2534, %v2535
          %v2537 = vrot.slane %v2517, 7
          %v2538 = vrot.slane %v2537, 2
          %v2539 = vrot.slane %v2524, 7
          %v2540 = vsel %vm2069, %v2538, %v2539
          %v2541 = vcombine.low %v2528, %v2532
          %v2542 = vcombine.low %v2536, %v2540
          %v2544 = vunpack.c.l.s4 1983009808
          %v2545 = vunpack.c.0.s8 %v2544
          %v2546 = vlaneseq
          %v2547 = vshrl.u32 %v2546, 7
          %v2548 = vsub.s32 %v2545, %v2547
          %v2549 = vrot.slane %v2541, %v2548
          %v2551 = vunpack.c.l.s4 1983009808
          %v2552 = vunpack.c.0.s8 %v2551
          %v2553 = vlaneseq
          %v2554 = vshrl.u32 %v2553, 7
          %v2555 = vsub.s32 %v2552, %v2554
          %v2556 = vrot.slane %v2542, %v2555
          %v2557 = vcombine.low %v2549, %v2556
          %2558 = vrot.lane.b32.xlu0 %v2557, 104
          %v2559 = vpop.permute.xlu0 %2558
          %vm2561 = vcmask 1048384
          %2562 = vst.msk [vmem:[#allocation6 + $0x10] sm:$0xff] %vm2561, %v2559
          %vm2563 = vcmask 293888
          %2564 = vst.msk [vmem:[#allocation6 + $0x18] sm:$0xff] %vm2563, %v2559
          %v2565 = vld [vmem:[#allocation7] sm:$0xff]
          %v2566 = vld [vmem:[#allocation7 + $0x8] sm:$0xff]
          %v2567 = vld [vmem:[#allocation6] sm:$0xff]
          %v2568 = vld [vmem:[#allocation6 + $0x8] sm:$0xff]
          %v2569 = vld [vmem:[#allocation6 + $0x10] sm:$0xff]
          %v2570 = vld [vmem:[#allocation6 + $0x18] sm:$0xff]
          %s2571 = smul.u32 %s1863, 53
          %s2572 = smul.addr %s2571, 4
          %s2573 = scalar_lea.vmem %s3, %s2572
          %v2574 = vld [vmem:[%s2573] sm:$0xf]
          %v2575 = vld [vmem:[%s2573 + $0x4] sm:$0xf]
          %v2576 = vld [vmem:[%s2573 + $0x8] sm:$0xf]
          %v2577 = vld [vmem:[%s2573 + $0xc] sm:$0xf]
          %v2578 = vld [vmem:[%s2573 + $0x10] sm:$0xf]
          %v2579 = vld [vmem:[%s2573 + $0x14] sm:$0xf]
          %v2580 = vld [vmem:[%s2573 + $0x18] sm:$0xf]
          %v2581 = vld [vmem:[%s2573 + $0x1c] sm:$0xf]
          %v2582 = vld [vmem:[%s2573 + $0x20] sm:$0xf]
          %v2583 = vld [vmem:[%s2573 + $0x24] sm:$0xf]
          %v2584 = vld [vmem:[%s2573 + $0x28] sm:$0xf]
          %v2585 = vld [vmem:[%s2573 + $0x2c] sm:$0xf]
          %v2586 = vld [vmem:[%s2573 + $0x30] sm:$0xf]
          %v2587 = vld [vmem:[%s2573 + $0x34] sm:$0xf]
          %v2588 = vld [vmem:[%s2573 + $0x38] sm:$0xf]
          %v2589 = vld [vmem:[%s2573 + $0x3c] sm:$0xf]
          %v2590 = vld [vmem:[%s2573 + $0x40] sm:$0xf]
          %v2591 = vld [vmem:[%s2573 + $0x44] sm:$0xf]
          %v2592 = vld [vmem:[%s2573 + $0x48] sm:$0xf]
          %v2593 = vld [vmem:[%s2573 + $0x4c] sm:$0xf]
          %v2594 = vld [vmem:[%s2573 + $0x50] sm:$0xf]
          %v2595 = vld [vmem:[%s2573 + $0x54] sm:$0xf]
          %v2596 = vld [vmem:[%s2573 + $0x58] sm:$0xf]
          %v2597 = vld [vmem:[%s2573 + $0x5c] sm:$0xf]
          %v2598 = vld [vmem:[%s2573 + $0x60] sm:$0xf]
          %v2599 = vld [vmem:[%s2573 + $0x64] sm:$0xf]
          %v2600 = vld [vmem:[%s2573 + $0x68] sm:$0xf]
          %v2601 = vld [vmem:[%s2573 + $0x6c] sm:$0xf]
          %v2602 = vld [vmem:[%s2573 + $0x70] sm:$0xf]
          %v2603 = vld [vmem:[%s2573 + $0x74] sm:$0xf]
          %v2604 = vld [vmem:[%s2573 + $0x78] sm:$0xf]
          %v2605 = vld [vmem:[%s2573 + $0x7c] sm:$0xf]
          %v2606 = vld [vmem:[%s2573 + $0x80] sm:$0xf]
          %v2607 = vld [vmem:[%s2573 + $0x84] sm:$0xf]
          %v2608 = vld [vmem:[%s2573 + $0x88] sm:$0xf]
          %v2609 = vld [vmem:[%s2573 + $0x8c] sm:$0xf]
          %v2610 = vld [vmem:[%s2573 + $0x90] sm:$0xf]
          %v2611 = vld [vmem:[%s2573 + $0x94] sm:$0xf]
          %v2612 = vld [vmem:[%s2573 + $0x98] sm:$0xf]
          %v2613 = vld [vmem:[%s2573 + $0x9c] sm:$0xf]
          %v2614 = vld [vmem:[%s2573 + $0xa0] sm:$0xf]
          %v2615 = vld [vmem:[%s2573 + $0xa4] sm:$0xf]
          %v2616 = vld [vmem:[%s2573 + $0xa8] sm:$0xf]
          %v2617 = vld [vmem:[%s2573 + $0xac] sm:$0xf]
          %v2618 = vld [vmem:[%s2573 + $0xb0] sm:$0xf]
          %v2619 = vld [vmem:[%s2573 + $0xb4] sm:$0xf]
          %v2620 = vld [vmem:[%s2573 + $0xb8] sm:$0xf]
          %v2621 = vld [vmem:[%s2573 + $0xbc] sm:$0xf]
          %v2622 = vld [vmem:[%s2573 + $0xc0] sm:$0xf]
          %v2623 = vld [vmem:[%s2573 + $0xc4] sm:$0xf]
          %v2624 = vld [vmem:[%s2573 + $0xc8] sm:$0xf]
          %v2625 = vld [vmem:[%s2573 + $0xcc] sm:$0xf]
          %v2626 = vld [vmem:[%s2573 + $0xd0] sm:$0x3]
          %v2680 = vunpack.c.l.b16 %v2574
          %v2681 = vunpack.c.l.b16 %v2575
          %v2682 = vunpack.c.l.b16 %v2576
          %v2683 = vunpack.c.l.b16 %v2577
          %v2684 = vunpack.c.l.b16 %v2578
          %v2685 = vunpack.c.l.b16 %v2579
          %v2686 = vunpack.c.l.b16 %v2580
          %v2687 = vunpack.c.l.b16 %v2581
          %v2688 = vunpack.c.l.b16 %v2582
          %v2689 = vunpack.c.l.b16 %v2583
          %v2690 = vunpack.c.l.b16 %v2584
          %v2691 = vunpack.c.l.b16 %v2585
          %v2692 = vunpack.c.l.b16 %v2586
          %v2693 = vunpack.c.l.b16 %v2587
          %v2694 = vunpack.c.l.b16 %v2588
          %v2695 = vunpack.c.l.b16 %v2589
          %v2696 = vunpack.c.l.b16 %v2590
          %v2697 = vunpack.c.l.b16 %v2591
          %v2698 = vunpack.c.l.b16 %v2592
          %v2699 = vunpack.c.l.b16 %v2593
          %v2700 = vunpack.c.l.b16 %v2594
          %v2701 = vunpack.c.l.b16 %v2595
          %v2702 = vunpack.c.l.b16 %v2596
          %v2703 = vunpack.c.l.b16 %v2597
          %v2704 = vunpack.c.l.b16 %v2598
          %v2705 = vunpack.c.l.b16 %v2599
          %v2706 = vunpack.c.l.b16 %v2600
          %v2707 = vunpack.c.l.b16 %v2601
          %v2708 = vunpack.c.l.b16 %v2602
          %v2709 = vunpack.c.l.b16 %v2603
          %v2710 = vunpack.c.l.b16 %v2604
          %v2711 = vunpack.c.l.b16 %v2605
          %v2712 = vunpack.c.l.b16 %v2606
          %v2713 = vunpack.c.l.b16 %v2607
          %v2714 = vunpack.c.l.b16 %v2608
          %v2715 = vunpack.c.l.b16 %v2609
          %v2716 = vunpack.c.l.b16 %v2610
          %v2717 = vunpack.c.l.b16 %v2611
          %v2718 = vunpack.c.l.b16 %v2612
          %v2719 = vunpack.c.l.b16 %v2613
          %v2720 = vunpack.c.l.b16 %v2614
          %v2721 = vunpack.c.l.b16 %v2615
          %v2722 = vunpack.c.l.b16 %v2616
          %v2723 = vunpack.c.l.b16 %v2617
          %v2724 = vunpack.c.l.b16 %v2618
          %v2725 = vunpack.c.l.b16 %v2619
          %v2726 = vunpack.c.l.b16 %v2620
          %v2727 = vunpack.c.l.b16 %v2621
          %v2728 = vunpack.c.l.b16 %v2622
          %v2729 = vunpack.c.l.b16 %v2623
          %v2730 = vunpack.c.l.b16 %v2624
          %v2731 = vunpack.c.l.b16 %v2625
          %v2732 = vunpack.c.l.b16 %v2626
          %v2733 = vpack.c.b16 %v2681, %v2680
          %v2734 = vpack.c.b16 %v2683, %v2682
          %v2735 = vpack.c.b16 %v2685, %v2684
          %v2736 = vpack.c.b16 %v2687, %v2686
          %v2737 = vpack.c.b16 %v2689, %v2688
          %v2738 = vpack.c.b16 %v2691, %v2690
          %v2739 = vpack.c.b16 %v2693, %v2692
          %v2740 = vpack.c.b16 %v2695, %v2694
          %v2741 = vpack.c.b16 %v2697, %v2696
          %v2742 = vpack.c.b16 %v2699, %v2698
          %v2743 = vpack.c.b16 %v2701, %v2700
          %v2744 = vpack.c.b16 %v2703, %v2702
          %v2745 = vpack.c.b16 %v2705, %v2704
          %v2746 = vpack.c.b16 %v2707, %v2706
          %v2747 = vpack.c.b16 %v2709, %v2708
          %v2748 = vpack.c.b16 %v2711, %v2710
          %v2749 = vpack.c.b16 %v2713, %v2712
          %v2750 = vpack.c.b16 %v2715, %v2714
          %v2751 = vpack.c.b16 %v2717, %v2716
          %v2752 = vpack.c.b16 %v2719, %v2718
          %v2753 = vpack.c.b16 %v2721, %v2720
          %v2754 = vpack.c.b16 %v2723, %v2722
          %v2755 = vpack.c.b16 %v2725, %v2724
          %v2756 = vpack.c.b16 %v2727, %v2726
          %v2757 = vpack.c.b16 %v2729, %v2728
          %v2758 = vpack.c.b16 %v2731, %v2730
          %v2759 = vpack.c.b16 %v2732, %v2732
          %v2787 = vsel %vm2563, %v2570, 0
          %vm2789 = vcmask 1041408
          %v2791 = vsel %vm2789, %v2759, 0
          %2793 = vmatprep.subr.bf16.mxu0 0
          %2794 = vmatpush1.bf16.msra.mxu0 %v2733
          %2795 = vmatprep.subr.bf16.mxu0 0
          %2796 = vmatpush1.bf16.msra.mxu0 %v2734
          %2797 = vmatprep.subr.bf16.mxu0 0
          %2798 = vmatpush1.bf16.msra.mxu0 %v2735
          %2799 = vmatprep.subr.bf16.mxu0 0
          %2800 = vmatpush1.bf16.msra.mxu0 %v2736
          %2801 = vmatprep.subr.bf16.mxu0 0
          %2802 = vmatpush1.bf16.msra.mxu0 %v2737
          %2803 = vmatprep.subr.bf16.mxu0 0
          %2804 = vmatpush1.bf16.msra.mxu0 %v2738
          %2805 = vmatprep.subr.bf16.mxu0 0
          %2806 = vmatpush1.bf16.msra.mxu0 %v2739
          %2807 = vmatprep.subr.bf16.mxu0 0
          %2808 = vmatpush1.bf16.msra.mxu0 %v2740
          %2809 = vmatprep.subr.bf16.mxu0 0
          %2810 = vmatpush1.bf16.msra.mxu0 %v2741
          %2811 = vmatprep.subr.bf16.mxu0 0
          %2812 = vmatpush1.bf16.msra.mxu0 %v2742
          %2813 = vmatprep.subr.bf16.mxu0 0
          %2814 = vmatpush1.bf16.msra.mxu0 %v2743
          %2815 = vmatprep.subr.bf16.mxu0 0
          %2816 = vmatpush1.bf16.msra.mxu0 %v2744
          %2817 = vmatprep.subr.bf16.mxu0 0
          %2818 = vmatpush1.bf16.msra.mxu0 %v2745
          %2819 = vmatprep.subr.bf16.mxu0 0
          %2820 = vmatpush1.bf16.msra.mxu0 %v2746
          %2821 = vmatprep.subr.bf16.mxu0 0
          %2822 = vmatpush1.bf16.msra.mxu0 %v2747
          %2823 = vmatprep.subr.bf16.mxu0 0
          %2824 = vmatpush1.bf16.msra.mxu0 %v2748
          %2825 = vmatprep.mubr.bf16.mxu0 %v2568
          %2826 = vmatmul.mubr.bf16.gmra.mrb[0].mxu0 %v2567
          %v2827 = vpop.f32.mrb[0].mxu0
          %v2828 = vadd.f32 0.0, %v2827
          %v2829 = vpop.f32.mrb[0].mxu0
          %v2830 = vpop.f32.mrb[0].mxu0
          %v2831 = vadd.f32 0.0, %v2830
          %v2832 = vpop.f32.mrb[0].mxu0
          %2833 = vdwg.mxu0
          %2834 = vmatprep.subr.bf16.mxu0 0
          %2835 = vmatpush1.bf16.msra.mxu0 %v2749
          %2836 = vmatprep.subr.bf16.mxu0 0
          %2837 = vmatpush1.bf16.msra.mxu0 %v2750
          %2838 = vmatprep.subr.bf16.mxu0 0
          %2839 = vmatpush1.bf16.msra.mxu0 %v2751
          %2840 = vmatprep.subr.bf16.mxu0 0
          %2841 = vmatpush1.bf16.msra.mxu0 %v2752
          %2842 = vmatprep.subr.bf16.mxu0 0
          %2843 = vmatpush1.bf16.msra.mxu0 %v2753
          %2844 = vmatprep.subr.bf16.mxu0 0
          %2845 = vmatpush1.bf16.msra.mxu0 %v2754
          %2846 = vmatprep.subr.bf16.mxu0 0
          %2847 = vmatpush1.bf16.msra.mxu0 %v2755
          %2848 = vmatprep.subr.bf16.mxu0 0
          %2849 = vmatpush1.bf16.msra.mxu0 %v2756
          %2850 = vmatprep.subr.bf16.mxu0 0
          %2851 = vmatpush1.bf16.msra.mxu0 %v2757
          %2852 = vmatprep.subr.bf16.mxu0 0
          %2853 = vmatpush1.bf16.msra.mxu0 %v2758
          %2854 = vmatprep.subr.bf16.mxu0 0
          %2855 = vmatpush1.bf16.msra.mxu0 %v2791
          %2856 = vmatprep.subr.bf16.mxu0 0
          %2857 = vmatpush1.bf16.msra.mxu0 0
          %2858 = vmatprep.subr.bf16.mxu0 0
          %2859 = vmatpush1.bf16.msra.mxu0 0
          %2860 = vmatprep.subr.bf16.mxu0 0
          %2861 = vmatpush1.bf16.msra.mxu0 0
          %2862 = vmatprep.subr.bf16.mxu0 0
          %2863 = vmatpush1.bf16.msra.mxu0 0
          %2864 = vmatprep.subr.bf16.mxu0 0
          %2865 = vmatpush1.bf16.msra.mxu0 0
          %2866 = vmatprep.mubr.bf16.mxu0 %v2787
          %2867 = vmatmul.mubr.bf16.gmra.mrb[0].mxu0 %v2569
          %v2868 = vpop.f32.mrb[0].mxu0
          %v2869 = vadd.f32 %v2828, %v2868
          %v2870 = vpop.f32.mrb[0].mxu0
          %v2871 = vpop.f32.mrb[0].mxu0
          %v2872 = vadd.f32 %v2831, %v2871
          %v2873 = vpop.f32.mrb[0].mxu0
          %2874 = vdwg.mxu0
          %v2875 = vadd.f32 %v2565, %v2869
          %v2876 = vadd.f32 %v2566, %v2872
          %2877 = vst.msk [vmem:[#allocation7] sm:$0xff] %vm1859, %v2875
          %2878 = vst.msk [vmem:[#allocation7 + $0x8] sm:$0xff] %vm1859, %v2876
        $region68: #{_lambda_.5} parent=47 // loop_footer
          %s1867 = sadd.s32 1, %s1863
        $region69: #{_lambda_.5} parent=47 // loop_footer_branch
          %1862 = sbr.rel target = $region65
        $region70: #{_lambda_.5} parent=47 // loop_exit
          _
        %v2879 = vld [vmem:[#allocation7] sm:$0xff]
        %v2880 = vld [vmem:[#allocation7 + $0x8] sm:$0xff]
        %v2881 = vld [vmem:[%s4] sm:$0x1]
        %v2883 = vlaneseq
        %v2884 = vshrl.u32 %v2883, 7
        %v2885 = vsub.s32 0, %v2884
        %v2886 = vrot.slane %v2881, %v2885
        %v2888 = vadd.f32 %v2879, %v2886
        %v2889 = vadd.f32 %v2880, %v2886
        %v2890 = vmax.f32 %v2888, 0.0
        %v2891 = vmax.f32 %v2889, 0.0
        %v2894 = vcombine.high %v2890, %v2890
        %v2895 = vcombine.high %v2891, %v2891
        %v2898 = vld [vmem:[#allocation12] sm:$0x1]
        %v2900 = vlaneseq
        %v2901 = vshrl.u32 %v2900, 7
        %v2902 = vsub.s32 0, %v2901
        %v2903 = vrot.slane %v2898, %v2902
        %v2905 = vmul.f32 %v2890, %v2903
        %v2906 = vmul.f32 %v2894, %v2903
        %v2907 = vmul.f32 %v2891, %v2903
        %v2908 = vmul.f32 %v2895, %v2903
        %vm2909 = vcmask 240640
        %v2910 = vsel %vm2909, %v2905, 0.0
        %2911 = vadd.xlane.f32.xlu0 %v2910
        %v2912 = vpop.xlane.xlu0 %2911
        %v2913 = vsel %vm2909, %v2906, 0.0
        %2914 = vadd.xlane.f32.xlu0 %v2913
        %v2915 = vpop.xlane.xlu0 %2914
        %v2916 = vsel %vm2909, %v2907, 0.0
        %2917 = vadd.xlane.f32.xlu0 %v2916
        %v2918 = vpop.xlane.xlu0 %2917
        %v2919 = vsel %vm2909, %v2908, 0.0
        %2920 = vadd.xlane.f32.xlu0 %v2919
        %v2921 = vpop.xlane.xlu0 %2920
        %v2922 = vld [vmem:[#allocation8] sm:$0x1]
        %v2924 = vlaneseq
        %v2925 = vshrl.u32 %v2924, 7
        %v2926 = vsub.s32 0, %v2925
        %v2927 = vrot.slane %v2922, %v2926
        %2928 = vset.pattern.permute.xlu0 0
        %2929 = vperm.xlu0 %2928, %v2927
        %v2930 = vpop.permute.xlu0 %2929
        %v2932 = vadd.f32 %v2912, %v2930
        %v2933 = vadd.f32 %v2915, %v2930
        %v2934 = vadd.f32 %v2918, %v2930
        %v2935 = vadd.f32 %v2921, %v2930
        %v2936 = vmax.f32 %v2932, 0.0
        %v2937 = vmax.f32 %v2933, 0.0
        %v2938 = vmax.f32 %v2934, 0.0
        %v2939 = vmax.f32 %v2935, 0.0
        %v2944 = vlaneseq
        %v2945 = vand.u32 %v2944, 127
        %v2946 = vlaneseq
        %v2947 = vshrl.u32 %v2946, 7
        %v2948 = vsub.s32 %v2945, %v2947
        %v2949 = vrot.slane %v2936, %v2948
        %v2950 = vlaneseq
        %v2951 = vshrl.u32 %v2950, 7
        %v2952 = vsub.s32 %v2945, %v2951
        %v2953 = vrot.slane %v2937, %v2952
        %v2954 = vlaneseq
        %v2955 = vshrl.u32 %v2954, 7
        %v2956 = vsub.s32 %v2945, %v2955
        %v2957 = vrot.slane %v2938, %v2956
        %v2958 = vlaneseq
        %v2959 = vshrl.u32 %v2958, 7
        %v2960 = vsub.s32 %v2945, %v2959
        %v2961 = vrot.slane %v2939, %v2960
        %vm2962 = vcmask 1041409
        %v2963 = vsel %vm2962, %v2953, %v2949
        %vm2964 = vcmask 1042434
        %v2965 = vsel %vm2964, %v2957, %v2963
        %vm2966 = vcmask 1043459
        %v2967 = vsel %vm2966, %v2961, %v2965
        %vm2969 = vcmask 27648
        %2970 = vst.msk [vmem:[%s301] sm:$0xf] %vm2969, %v2967
        %s2971 = sand.u32 %s185, 1
        %s2972 = scalar_lea.sflag [#allocation11], %s2971
        %s2973 = sand.u32 %s185, 1
        %s2974 = smul.addr %s2973, 4
        %s2975 = scalar_lea.vmem [#allocation14], %s2974
        // Predicated region
        $region71: #{_lambda_.5} parent=47 // pred_check
          %p2976 = pneg %p195
        $region72: #{_lambda_.5} parent=47 // pred_check_branch
          %2978 = sbr.rel (%p2976) target = $region74
        $region73: #{_lambda_.5} parent=47 // pred_region
          %s2980 = ssub.s32 64, 64
          %2981 = vsyncadd %s2972, %s2980
          %s2982 = smul.addr %s25, 64
          %s2983 = scalar_lea.hbm %s7, %s2982
          %s2985 = sshll.u32 %s2975, 4
          %s2986 = int_to_ptr.vmem [resolvable:$true] %s2985
          %2988 = dma.vmem_to_hbm [thread:$0]  %s2986, 64, %s2983, %s2972
        $region74: #{_lambda_.5} parent=47 // pred_fallthru
          _
      $region48: #{_lambda_.5} parent=5 // pred_fallthru
        _
      %p2989 = scmp.le.s32.totalorder 2, %s20
      // Predicated region
      $region75: #{_lambda_.5} parent=5 // pred_check
        %p2990 = pneg %p2989
      $region76: #{_lambda_.5} parent=5 // pred_check_branch
        %2992 = sbr.rel (%p2990) target = $region78
      $region77: #{_lambda_.5} parent=5 // pred_region
        %s2993 = ssub.s32 %s20, 2
        // Predicated region
        $region79: #{_lambda_.5} parent=77 // pred_check
          %p2994 = pneg %p201
        $region80: #{_lambda_.5} parent=77 // pred_check_branch
          %2996 = sbr.rel (%p2994) target = $region82
        $region81: #{_lambda_.5} parent=77 // pred_region
          %s2997 = sand.u32 %s186, 1
          %s2998 = scalar_lea.sflag [#allocation11], %s2997
          %s2999 = sand.u32 %s186, 1
          %s3000 = smul.addr %s2999, 4
          %s3001 = scalar_lea.vmem [#allocation14], %s3000
          %3002 = dma.done %s2998, 64
        $region82: #{_lambda_.5} parent=77 // pred_fallthru
          _
      $region78: #{_lambda_.5} parent=5 // pred_fallthru
        _
    $region6: #{_lambda_.5} parent=1 // loop_footer
      %s24 = sadd.s32 1, %s20
    $region7: #{_lambda_.5} parent=1 // loop_footer_branch
      %19 = sbr.rel target = $region3
    $region8: #{_lambda_.5} parent=1 // loop_exit
      _
    %3003 = vsyncpa [#allocation10], 1
    %s3004 = scalar_lea.sflag [#allocation10], 1
    %3005 = vsyncpa %s3004, 1
    %3006 = vsyncpa [#allocation13], 1
    %3007 = vsyncpa [#allocation11], 1
    %s3008 = scalar_lea.sflag [#allocation11], 1
    %3009 = vsyncpa %s3008, 1

// kernel: _lambda_.3
$region0: #{_lambda_.3}
  #allocation0 [shape = 'u32[]', space=smem, size = 0x4, offset = 0x4, fixed_abs, tag = 'smem constant byte address 0x4 - core index']
  #allocation1 [shape = 'u32[144,128]{1,0:T(1,128)}', space=vmem, size = 0x12000, scoped, tag = 'internal scratch']
  #allocation2 [shape = 'bf16[24,24,3]{2,1,0:T(8,128)(2,1)}', space=vmem, size = 0x24000, scoped, tag = 'scratch operand']
  #allocation3 [shape = 'bf16[256,27]{1,0:T(16,128)(2,1)}', space=vmem, size = 0x10000, scoped, tag = 'scratch operand']
  #allocation4 [shape = 'f32[256,60]{1,0:T(8,128)}', space=vmem, size = 0x20000, scoped, tag = 'scratch operand']
  %s0 = inlined_call_operand.vmem [shape: bf16[2,16,16,3], index: 0, kind: input, shape index: {}]
  %s1 = inlined_call_operand.hbm [shape: bf16[9,27,60], index: 1, kind: input, shape index: {}]
  %s2 = inlined_call_operand.vmem [shape: f32[1,60], index: 2, kind: input, shape index: {}]
  %s3 = inlined_call_operand.vmem [shape: bf16[2,8,8,60], index: 3, kind: output, shape index: {}]
  %s4 = sld [smem:[#allocation0]]
  $region56: #{_lambda_.3} parent=0
    _
  %s6 = ssub.s32 1, %s4
  %s7 = scalar_select 0, %s6, %s4
  $region1: #{_lambda_.3} parent=0
    #allocation5 [shape = 'u8[73728]{0}', space=vmem, size = 0x12000, scoped, tag = 'input window, operand 1, single buffered']
    #allocation6 [shape = 's32[2]{0}', space=sflag, size = 0x8, scoped, tag = 'scoped memory for _lambda_.3']
    %8 = vsyncpa [#allocation6], 0
    loop: start=0, step=1, limit=4
    $region2: #{_lambda_.3} parent=1 // loop_pre_header
      _
    $region3: #{_lambda_.3} parent=1 // loop_header
      %s10 = sphi 0, %s14
      %p11 = scmp.ge.s32.totalorder %s10, 4
      %s20 = sphi 0, %s22
      %s23 = sphi 0, %s20
      %s24 = sphi 0, %s23
      %s40 = sphi 0, %s24
      %s44 = sphi 0, %s44
      %s46 = sphi 0, %s44
      %s47 = sphi 0, %s46
      %s61 = sphi 0, %s47
      %s65 = sphi 0, %s65
      %s67 = sphi 0, %s65
      %s68 = sphi 0, %s67
      %s82 = sphi 0, %s68
      %s88 = sphi 0, %s90
      %s91 = sphi 0, %s88
      %s92 = sphi 0, %s91
      %s108 = sphi 0, %s92
    $region4: #{_lambda_.3} parent=1 // loop_header_branch
      %13 = sbr.rel (%p11) target = $region8
    $region5: #{_lambda_.3} parent=1 // loop_body
      %s15 = ssub.s32 %s10, 1
      %s16 = ssub.s32 %s10, 2
      %s17 = sadd.s32 %s10, 1
      %s18 = ssub.s32 %s10, %s17
      %p19 = scmp.eq.s32.totalorder %s18, 0
      %s21 = sadd.s32 %s20, 1
      %s22 = scalar_select %p19, %s20, %s21
      %p25 = pneg %p19
      %p26 = scmp.eq.s32.totalorder %s10, 1
      %p27 = por %p25, %p26
      %p28 = scmp.ne.s32.totalorder %s20, %s23
      %p29 = scmp.eq.s32.totalorder %s10, 0
      %p30 = por %p28, %p29
      %p31 = scmp.ne.s32.totalorder %s20, %s23
      %p32 = scmp.eq.s32.totalorder %s15, 1
      %p33 = por %p31, %p32
      %p34 = scmp.ne.s32.totalorder %s23, %s24
      %p35 = scmp.eq.s32.totalorder %s15, 0
      %p36 = por %p34, %p35
      %p37 = scmp.ne.s32.totalorder %s23, %s24
      %p38 = scmp.eq.s32.totalorder %s16, 1
      %p39 = por %p37, %p38
      %p41 = scmp.ne.s32.totalorder %s24, %s40
      %p42 = scmp.eq.s32.totalorder %s16, 0
      %p43 = por %p41, %p42
      %s45 = sadd.s32 %s44, 1
      %p48 = scmp.eq.s32.totalorder %s10, 1
      %p49 = scmp.ne.s32.totalorder %s44, %s46
      %p50 = scmp.eq.s32.totalorder %s10, 0
      %p51 = por %p49, %p50
      %p52 = scmp.ne.s32.totalorder %s44, %s46
      %p53 = scmp.eq.s32.totalorder %s15, 1
      %p54 = por %p52, %p53
      %p55 = scmp.ne.s32.totalorder %s46, %s47
      %p56 = scmp.eq.s32.totalorder %s15, 0
      %p57 = por %p55, %p56
      %p58 = scmp.ne.s32.totalorder %s46, %s47
      %p59 = scmp.eq.s32.totalorder %s16, 1
      %p60 = por %p58, %p59
      %p62 = scmp.ne.s32.totalorder %s47, %s61
      %p63 = scmp.eq.s32.totalorder %s16, 0
      %p64 = por %p62, %p63
      %s66 = sadd.s32 %s65, 1
      %p69 = scmp.eq.s32.totalorder %s10, 1
      %p70 = scmp.ne.s32.totalorder %s65, %s67
      %p71 = scmp.eq.s32.totalorder %s10, 0
      %p72 = por %p70, %p71
      %p73 = scmp.ne.s32.totalorder %s65, %s67
      %p74 = scmp.eq.s32.totalorder %s15, 1
      %p75 = por %p73, %p74
      %p76 = scmp.ne.s32.totalorder %s67, %s68
      %p77 = scmp.eq.s32.totalorder %s15, 0
      %p78 = por %p76, %p77
      %p79 = scmp.ne.s32.totalorder %s67, %s68
      %p80 = scmp.eq.s32.totalorder %s16, 1
      %p81 = por %p79, %p80
      %p83 = scmp.ne.s32.totalorder %s68, %s82
      %p84 = scmp.eq.s32.totalorder %s16, 0
      %p85 = por %p83, %p84
      %s86 = ssub.s32 %s10, %s17
      %p87 = scmp.eq.s32.totalorder %s86, 0
      %s89 = sadd.s32 %s88, 1
      %s90 = scalar_select %p87, %s88, %s89
      %p93 = pneg %p87
      %p94 = scmp.eq.s32.totalorder %s10, 1
      %p95 = por %p93, %p94
      %p96 = scmp.ne.s32.totalorder %s88, %s91
      %p97 = scmp.eq.s32.totalorder %s10, 0
      %p98 = por %p96, %p97
      %p99 = scmp.ne.s32.totalorder %s88, %s91
      %p100 = scmp.eq.s32.totalorder %s15, 1
      %p101 = por %p99, %p100
      %p102 = scmp.ne.s32.totalorder %s91, %s92
      %p103 = scmp.eq.s32.totalorder %s15, 0
      %p104 = por %p102, %p103
      %p105 = scmp.ne.s32.totalorder %s91, %s92
      %p106 = scmp.eq.s32.totalorder %s16, 1
      %p107 = por %p105, %p106
      %p109 = scmp.ne.s32.totalorder %s92, %s108
      %p110 = scmp.eq.s32.totalorder %s16, 0
      %p111 = por %p109, %p110
      %p112 = scmp.le.s32.totalorder 1, %s10
      %p113 = scmp.lt.s32.totalorder %s10, 3
      %p114 = pnand %p112, %p113
      %p115 = pneg %p114
      // Predicated region
      $region9: #{_lambda_.3} parent=5 // pred_check
        _
      $region10: #{_lambda_.3} parent=5 // pred_check_branch
        %117 = sbr.rel (%p114) target = $region12
      $region11: #{_lambda_.3} parent=5 // pred_region
        %s118 = ssub.s32 %s10, 1
        // Predicated region
        $region13: #{_lambda_.3} parent=11 // pred_check
          %p119 = pneg %p57
        $region14: #{_lambda_.3} parent=11 // pred_check_branch
          %121 = sbr.rel (%p119) target = $region16
        $region15: #{_lambda_.3} parent=11 // pred_region
          %s123 = ssub.s32 2304, 2304
          %124 = vsyncadd [#allocation6], %s123
          %s125 = sshll.u32 [#allocation5], 4
          %s126 = int_to_ptr.vmem [resolvable:$true] %s125
          %131 = dma.hbm_to_vmem [thread:$0]  %s1, 2304, %s126, [#allocation6], 64, 64, 4
        $region16: #{_lambda_.3} parent=11 // pred_fallthru
          _
        // Predicated region
        $region17: #{_lambda_.3} parent=11 // pred_check
          %p132 = pneg %p78
        $region18: #{_lambda_.3} parent=11 // pred_check_branch
          %134 = sbr.rel (%p132) target = $region20
        $region19: #{_lambda_.3} parent=11 // pred_region
          _
        $region20: #{_lambda_.3} parent=11 // pred_fallthru
          _
      $region12: #{_lambda_.3} parent=5 // pred_fallthru
        _
      %p135 = scmp.lt.s32.totalorder %s10, 2
      // Predicated region
      $region21: #{_lambda_.3} parent=5 // pred_check
        %p136 = pneg %p135
      $region22: #{_lambda_.3} parent=5 // pred_check_branch
        %138 = sbr.rel (%p136) target = $region24
      $region23: #{_lambda_.3} parent=5 // pred_region
        // Predicated region
        $region25: #{_lambda_.3} parent=23 // pred_check
          %p139 = pneg %p30
        $region26: #{_lambda_.3} parent=23 // pred_check_branch
          %141 = sbr.rel (%p139) target = $region28
        $region27: #{_lambda_.3} parent=23 // pred_region
          %p142 = scmp.lt.s32.totalorder %s10, 1
          %s143 = scalar_select %p142, %s10, 1
          %s144 = smul.addr %s143, 32
          %s145 = smul.addr %s144, 4
          %s146 = scalar_lea.vmem %s0, %s145
        $region28: #{_lambda_.3} parent=23 // pred_fallthru
          _
      $region24: #{_lambda_.3} parent=5 // pred_fallthru
        _
      %p147 = scmp.le.s32.totalorder 1, %s10
      %p148 = scmp.lt.s32.totalorder %s10, 3
      %p149 = pnand %p147, %p148
      %p150 = pneg %p149
      // Predicated region
      $region29: #{_lambda_.3} parent=5 // pred_check
        _
      $region30: #{_lambda_.3} parent=5 // pred_check_branch
        %152 = sbr.rel (%p149) target = $region32
      $region31: #{_lambda_.3} parent=5 // pred_region
        %s153 = ssub.s32 %s10, 1
        // Predicated region
        $region33: #{_lambda_.3} parent=31 // pred_check
          %p154 = pneg %p57
        $region34: #{_lambda_.3} parent=31 // pred_check_branch
          %156 = sbr.rel (%p154) target = $region36
        $region35: #{_lambda_.3} parent=31 // pred_region
          %157 = dma.done [#allocation6], 2304
        $region36: #{_lambda_.3} parent=31 // pred_fallthru
          _
        %p158 = scmp.lt.s32.totalorder %s15, 1
        %s159 = scalar_select %p158, %s15, 1
        %s160 = smul.addr %s159, 32
        %s161 = smul.addr %s160, 4
        %s162 = scalar_lea.vmem %s0, %s161
        %p163 = pneg %p36
        %p164 = pneg %p33
        %p165 = pneg %p57
        %p166 = pneg %p54
        %p167 = pneg %p78
        %p168 = pneg %p75
        %p169 = pneg %p104
        %p170 = pneg %p101
        %p171 = scmp.lt.s32.totalorder %s15, 1
        %s172 = scalar_select %p171, %s15, 1
        %s173 = smul.addr %s172, 8
        %s174 = smul.addr %s173, 4
        %s175 = scalar_lea.vmem %s3, %s174
        %p176 = scmp.lt.s32.totalorder %s15, 1
        %s177 = scalar_select %p176, %s15, 1
        %s178 = smul.addr %s177, 32
        %s179 = smul.addr %s178, 4
        %s180 = scalar_lea.vmem %s0, %s179
        %p181 = scmp.lt.s32.totalorder %s15, 1
        %s182 = scalar_select %p181, %s15, 1
        %s183 = smul.addr %s182, 8
        %s184 = smul.addr %s183, 4
        %s185 = scalar_lea.vmem %s3, %s184
        %v188 = vld [vmem:[%s180] sm:$0xf]
        %v189 = vld [vmem:[%s180 + $0x4] sm:$0xf]
        %v190 = vld [vmem:[%s180 + $0x8] sm:$0xf]
        %v191 = vld [vmem:[%s180 + $0xc] sm:$0xf]
        %v192 = vld [vmem:[%s180 + $0x10] sm:$0xf]
        %v193 = vld [vmem:[%s180 + $0x14] sm:$0xf]
        %v194 = vld [vmem:[%s180 + $0x18] sm:$0xf]
        %v195 = vld [vmem:[%s180 + $0x1c] sm:$0xf]
        %v196 = vld [vmem:[%s180 + $0x20] sm:$0xf]
        %v197 = vld [vmem:[%s180 + $0x24] sm:$0xf]
        %v198 = vld [vmem:[%s180 + $0x28] sm:$0xf]
        %v199 = vld [vmem:[%s180 + $0x2c] sm:$0xf]
        %v200 = vld [vmem:[%s180 + $0x30] sm:$0xf]
        %v201 = vld [vmem:[%s180 + $0x34] sm:$0xf]
        %v202 = vld [vmem:[%s180 + $0x38] sm:$0xf]
        %v203 = vld [vmem:[%s180 + $0x3c] sm:$0xf]
        %v204 = vld [vmem:[%s180 + $0x40] sm:$0xf]
        %v205 = vld [vmem:[%s180 + $0x44] sm:$0xf]
        %v206 = vld [vmem:[%s180 + $0x48] sm:$0xf]
        %v207 = vld [vmem:[%s180 + $0x4c] sm:$0xf]
        %v208 = vld [vmem:[%s180 + $0x50] sm:$0xf]
        %v209 = vld [vmem:[%s180 + $0x54] sm:$0xf]
        %v210 = vld [vmem:[%s180 + $0x58] sm:$0xf]
        %v211 = vld [vmem:[%s180 + $0x5c] sm:$0xf]
        %v212 = vld [vmem:[%s180 + $0x60] sm:$0xf]
        %v213 = vld [vmem:[%s180 + $0x64] sm:$0xf]
        %v214 = vld [vmem:[%s180 + $0x68] sm:$0xf]
        %v215 = vld [vmem:[%s180 + $0x6c] sm:$0xf]
        %v216 = vld [vmem:[%s180 + $0x70] sm:$0xf]
        %v217 = vld [vmem:[%s180 + $0x74] sm:$0xf]
        %v218 = vld [vmem:[%s180 + $0x78] sm:$0xf]
        %v219 = vld [vmem:[%s180 + $0x7c] sm:$0xf]
        %vm220 = vcmask 19456
        %221 = vst.msk [vmem:[#allocation2] sm:$0xf] %vm220, 0
        %222 = vst.msk [vmem:[#allocation2 + $0x4] sm:$0xf] %vm220, 0
        %223 = vst.msk [vmem:[#allocation2 + $0x8] sm:$0xf] %vm220, 0
        %224 = vst.msk [vmem:[#allocation2 + $0xc] sm:$0xf] %vm220, 0
        %225 = vst.msk [vmem:[#allocation2 + $0x10] sm:$0xf] %vm220, 0
        %226 = vst.msk [vmem:[#allocation2 + $0x14] sm:$0xf] %vm220, 0
        %227 = vst.msk [vmem:[#allocation2 + $0x18] sm:$0xf] %vm220, 0
        %228 = vst.msk [vmem:[#allocation2 + $0x1c] sm:$0xf] %vm220, 0
        %229 = vst.msk [vmem:[#allocation2 + $0x20] sm:$0xf] %vm220, 0
        %230 = vst.msk [vmem:[#allocation2 + $0x24] sm:$0xf] %vm220, 0
        %231 = vst.msk [vmem:[#allocation2 + $0x28] sm:$0xf] %vm220, 0
        %232 = vst.msk [vmem:[#allocation2 + $0x2c] sm:$0xf] %vm220, 0
        %233 = vst.msk [vmem:[#allocation2 + $0x30] sm:$0xf] %vm220, 0
        %234 = vst.msk [vmem:[#allocation2 + $0x34] sm:$0xf] %vm220, 0
        %235 = vst.msk [vmem:[#allocation2 + $0x38] sm:$0xf] %vm220, 0
        %236 = vst.msk [vmem:[#allocation2 + $0x3c] sm:$0xf] %vm220, 0
        %237 = vst.msk [vmem:[#allocation2 + $0x40] sm:$0xf] %vm220, 0
        %238 = vst.msk [vmem:[#allocation2 + $0x44] sm:$0xf] %vm220, 0
        %239 = vst.msk [vmem:[#allocation2 + $0x48] sm:$0xf] %vm220, 0
        %240 = vst.msk [vmem:[#allocation2 + $0x4c] sm:$0xf] %vm220, 0
        %241 = vst.msk [vmem:[#allocation2 + $0x50] sm:$0xf] %vm220, 0
        %242 = vst.msk [vmem:[#allocation2 + $0x54] sm:$0xf] %vm220, 0
        %243 = vst.msk [vmem:[#allocation2 + $0x58] sm:$0xf] %vm220, 0
        %244 = vst.msk [vmem:[#allocation2 + $0x5c] sm:$0xf] %vm220, 0
        %245 = vst.msk [vmem:[#allocation2 + $0x60] sm:$0xf] %vm220, 0
        %246 = vst.msk [vmem:[#allocation2 + $0x64] sm:$0xf] %vm220, 0
        %247 = vst.msk [vmem:[#allocation2 + $0x68] sm:$0xf] %vm220, 0
        %248 = vst.msk [vmem:[#allocation2 + $0x6c] sm:$0xf] %vm220, 0
        %249 = vst.msk [vmem:[#allocation2 + $0x70] sm:$0xf] %vm220, 0
        %250 = vst.msk [vmem:[#allocation2 + $0x74] sm:$0xf] %vm220, 0
        %251 = vst.msk [vmem:[#allocation2 + $0x78] sm:$0xf] %vm220, 0
        %252 = vst.msk [vmem:[#allocation2 + $0x7c] sm:$0xf] %vm220, 0
        %253 = vst.msk [vmem:[#allocation2 + $0x80] sm:$0xf] %vm220, 0
        %254 = vst.msk [vmem:[#allocation2 + $0x84] sm:$0xf] %vm220, 0
        %255 = vst.msk [vmem:[#allocation2 + $0x88] sm:$0xf] %vm220, 0
        %256 = vst.msk [vmem:[#allocation2 + $0x8c] sm:$0xf] %vm220, 0
        %257 = vst.msk [vmem:[#allocation2 + $0x90] sm:$0xf] %vm220, 0
        %258 = vst.msk [vmem:[#allocation2 + $0x94] sm:$0xf] %vm220, 0
        %259 = vst.msk [vmem:[#allocation2 + $0x98] sm:$0xf] %vm220, 0
        %260 = vst.msk [vmem:[#allocation2 + $0x9c] sm:$0xf] %vm220, 0
        %261 = vst.msk [vmem:[#allocation2 + $0xa0] sm:$0xf] %vm220, 0
        %262 = vst.msk [vmem:[#allocation2 + $0xa4] sm:$0xf] %vm220, 0
        %263 = vst.msk [vmem:[#allocation2 + $0xa8] sm:$0xf] %vm220, 0
        %264 = vst.msk [vmem:[#allocation2 + $0xac] sm:$0xf] %vm220, 0
        %265 = vst.msk [vmem:[#allocation2 + $0xb0] sm:$0xf] %vm220, 0
        %266 = vst.msk [vmem:[#allocation2 + $0xb4] sm:$0xf] %vm220, 0
        %267 = vst.msk [vmem:[#allocation2 + $0xb8] sm:$0xf] %vm220, 0
        %268 = vst.msk [vmem:[#allocation2 + $0xbc] sm:$0xf] %vm220, 0
        %269 = vst.msk [vmem:[#allocation2 + $0xc0] sm:$0xf] %vm220, 0
        %270 = vst.msk [vmem:[#allocation2 + $0xc4] sm:$0xf] %vm220, 0
        %271 = vst.msk [vmem:[#allocation2 + $0xc8] sm:$0xf] %vm220, 0
        %272 = vst.msk [vmem:[#allocation2 + $0xcc] sm:$0xf] %vm220, 0
        %273 = vst.msk [vmem:[#allocation2 + $0xd0] sm:$0xf] %vm220, 0
        %274 = vst.msk [vmem:[#allocation2 + $0xd4] sm:$0xf] %vm220, 0
        %275 = vst.msk [vmem:[#allocation2 + $0xd8] sm:$0xf] %vm220, 0
        %276 = vst.msk [vmem:[#allocation2 + $0xdc] sm:$0xf] %vm220, 0
        %277 = vst.msk [vmem:[#allocation2 + $0xe0] sm:$0xf] %vm220, 0
        %278 = vst.msk [vmem:[#allocation2 + $0xe4] sm:$0xf] %vm220, 0
        %279 = vst.msk [vmem:[#allocation2 + $0xe8] sm:$0xf] %vm220, 0
        %280 = vst.msk [vmem:[#allocation2 + $0xec] sm:$0xf] %vm220, 0
        %281 = vst.msk [vmem:[#allocation2 + $0xf0] sm:$0xf] %vm220, 0
        %282 = vst.msk [vmem:[#allocation2 + $0xf4] sm:$0xf] %vm220, 0
        %283 = vst.msk [vmem:[#allocation2 + $0xf8] sm:$0xf] %vm220, 0
        %284 = vst.msk [vmem:[#allocation2 + $0xfc] sm:$0xf] %vm220, 0
        %285 = vst.msk [vmem:[#allocation2 + $0x100] sm:$0xf] %vm220, 0
        %286 = vst.msk [vmem:[#allocation2 + $0x104] sm:$0xf] %vm220, 0
        %287 = vst.msk [vmem:[#allocation2 + $0x108] sm:$0xf] %vm220, 0
        %288 = vst.msk [vmem:[#allocation2 + $0x10c] sm:$0xf] %vm220, 0
        %289 = vst.msk [vmem:[#allocation2 + $0x110] sm:$0xf] %vm220, 0
        %290 = vst.msk [vmem:[#allocation2 + $0x114] sm:$0xf] %vm220, 0
        %291 = vst.msk [vmem:[#allocation2 + $0x118] sm:$0xf] %vm220, 0
        %292 = vst.msk [vmem:[#allocation2 + $0x11c] sm:$0xf] %vm220, 0
        %vm325 = vcmask 1041408
        %vm326 = vcmask 1045508
        %vm327 = vmor %vm325, %vm326
        %v328 = vrot.slane %v188, 6
        %v329 = vrot.slane %v328, 4
        %v330 = vrot.slane %v189, 6
        %v331 = vsel %vm327, %v329, %v330
        %v332 = vrot.slane %v330, 4
        %v333 = vrot.slane %v190, 6
        %v334 = vrot.slane %v333, 4
        %v335 = vrot.slane %v191, 6
        %v336 = vsel %vm327, %v334, %v335
        %v337 = vrot.slane %v335, 4
        %v338 = vrot.slane %v192, 6
        %v339 = vrot.slane %v338, 4
        %v340 = vrot.slane %v193, 6
        %v341 = vsel %vm327, %v339, %v340
        %v342 = vrot.slane %v340, 4
        %v343 = vrot.slane %v194, 6
        %v344 = vrot.slane %v343, 4
        %v345 = vrot.slane %v195, 6
        %v346 = vsel %vm327, %v344, %v345
        %v347 = vrot.slane %v345, 4
        %v348 = vrot.slane %v196, 6
        %v349 = vrot.slane %v348, 4
        %v350 = vrot.slane %v197, 6
        %v351 = vsel %vm327, %v349, %v350
        %v352 = vrot.slane %v350, 4
        %v353 = vrot.slane %v198, 6
        %v354 = vrot.slane %v353, 4
        %v355 = vrot.slane %v199, 6
        %v356 = vsel %vm327, %v354, %v355
        %v357 = vrot.slane %v355, 4
        %v358 = vrot.slane %v200, 6
        %v359 = vrot.slane %v358, 4
        %v360 = vrot.slane %v201, 6
        %v361 = vsel %vm327, %v359, %v360
        %v362 = vrot.slane %v360, 4
        %v363 = vrot.slane %v202, 6
        %v364 = vrot.slane %v363, 4
        %v365 = vrot.slane %v203, 6
        %v366 = vsel %vm327, %v364, %v365
        %v367 = vrot.slane %v365, 4
        %v368 = vrot.slane %v204, 6
        %v369 = vrot.slane %v368, 4
        %v370 = vrot.slane %v205, 6
        %v371 = vsel %vm327, %v369, %v370
        %v372 = vrot.slane %v370, 4
        %v373 = vrot.slane %v206, 6
        %v374 = vrot.slane %v373, 4
        %v375 = vrot.slane %v207, 6
        %v376 = vsel %vm327, %v374, %v375
        %v377 = vrot.slane %v375, 4
        %v378 = vrot.slane %v208, 6
        %v379 = vrot.slane %v378, 4
        %v380 = vrot.slane %v209, 6
        %v381 = vsel %vm327, %v379, %v380
        %v382 = vrot.slane %v380, 4
        %v383 = vrot.slane %v210, 6
        %v384 = vrot.slane %v383, 4
        %v385 = vrot.slane %v211, 6
        %v386 = vsel %vm327, %v384, %v385
        %v387 = vrot.slane %v385, 4
        %v388 = vrot.slane %v212, 6
        %v389 = vrot.slane %v388, 4
        %v390 = vrot.slane %v213, 6
        %v391 = vsel %vm327, %v389, %v390
        %v392 = vrot.slane %v390, 4
        %v393 = vrot.slane %v214, 6
        %v394 = vrot.slane %v393, 4
        %v395 = vrot.slane %v215, 6
        %v396 = vsel %vm327, %v394, %v395
        %v397 = vrot.slane %v395, 4
        %v398 = vrot.slane %v216, 6
        %v399 = vrot.slane %v398, 4
        %v400 = vrot.slane %v217, 6
        %v401 = vsel %vm327, %v399, %v400
        %v402 = vrot.slane %v400, 4
        %v403 = vrot.slane %v218, 6
        %v404 = vrot.slane %v403, 4
        %v405 = vrot.slane %v219, 6
        %v406 = vsel %vm327, %v404, %v405
        %v407 = vrot.slane %v405, 4
        %s456 = scalar_lea.vmem [#allocation2], 48
        %vm457 = vcmask 19458
        %458 = vst.msk [vmem:[%s456] sm:$0xc] %vm457, %v328
        %459 = vst.msk [vmem:[%s456 + $0x4] sm:$0xf] %vm220, %v331
        %vm460 = vcmask 17408
        %461 = vst.msk [vmem:[%s456 + $0x8] sm:$0x3] %vm460, %v332
        %462 = vst.msk [vmem:[%s456 + $0xc] sm:$0xc] %vm457, %v333
        %463 = vst.msk [vmem:[%s456 + $0x10] sm:$0xf] %vm220, %v336
        %464 = vst.msk [vmem:[%s456 + $0x14] sm:$0x3] %vm460, %v337
        %465 = vst.msk [vmem:[%s456 + $0x18] sm:$0xc] %vm457, %v338
        %466 = vst.msk [vmem:[%s456 + $0x1c] sm:$0xf] %vm220, %v341
        %467 = vst.msk [vmem:[%s456 + $0x20] sm:$0x3] %vm460, %v342
        %468 = vst.msk [vmem:[%s456 + $0x24] sm:$0xc] %vm457, %v343
        %469 = vst.msk [vmem:[%s456 + $0x28] sm:$0xf] %vm220, %v346
        %470 = vst.msk [vmem:[%s456 + $0x2c] sm:$0x3] %vm460, %v347
        %471 = vst.msk [vmem:[%s456 + $0x30] sm:$0xc] %vm457, %v348
        %472 = vst.msk [vmem:[%s456 + $0x34] sm:$0xf] %vm220, %v351
        %473 = vst.msk [vmem:[%s456 + $0x38] sm:$0x3] %vm460, %v352
        %474 = vst.msk [vmem:[%s456 + $0x3c] sm:$0xc] %vm457, %v353
        %475 = vst.msk [vmem:[%s456 + $0x40] sm:$0xf] %vm220, %v356
        %476 = vst.msk [vmem:[%s456 + $0x44] sm:$0x3] %vm460, %v357
        %477 = vst.msk [vmem:[%s456 + $0x48] sm:$0xc] %vm457, %v358
        %478 = vst.msk [vmem:[%s456 + $0x4c] sm:$0xf] %vm220, %v361
        %479 = vst.msk [vmem:[%s456 + $0x50] sm:$0x3] %vm460, %v362
        %480 = vst.msk [vmem:[%s456 + $0x54] sm:$0xc] %vm457, %v363
        %481 = vst.msk [vmem:[%s456 + $0x58] sm:$0xf] %vm220, %v366
        %482 = vst.msk [vmem:[%s456 + $0x5c] sm:$0x3] %vm460, %v367
        %483 = vst.msk [vmem:[%s456 + $0x60] sm:$0xc] %vm457, %v368
        %484 = vst.msk [vmem:[%s456 + $0x64] sm:$0xf] %vm220, %v371
        %485 = vst.msk [vmem:[%s456 + $0x68] sm:$0x3] %vm460, %v372
        %486 = vst.msk [vmem:[%s456 + $0x6c] sm:$0xc] %vm457, %v373
        %487 = vst.msk [vmem:[%s456 + $0x70] sm:$0xf] %vm220, %v376
        %488 = vst.msk [vmem:[%s456 + $0x74] sm:$0x3] %vm460, %v377
        %489 = vst.msk [vmem:[%s456 + $0x78] sm:$0xc] %vm457, %v378
        %490 = vst.msk [vmem:[%s456 + $0x7c] sm:$0xf] %vm220, %v381
        %491 = vst.msk [vmem:[%s456 + $0x80] sm:$0x3] %vm460, %v382
        %492 = vst.msk [vmem:[%s456 + $0x84] sm:$0xc] %vm457, %v383
        %493 = vst.msk [vmem:[%s456 + $0x88] sm:$0xf] %vm220, %v386
        %494 = vst.msk [vmem:[%s456 + $0x8c] sm:$0x3] %vm460, %v387
        %495 = vst.msk [vmem:[%s456 + $0x90] sm:$0xc] %vm457, %v388
        %496 = vst.msk [vmem:[%s456 + $0x94] sm:$0xf] %vm220, %v391
        %497 = vst.msk [vmem:[%s456 + $0x98] sm:$0x3] %vm460, %v392
        %498 = vst.msk [vmem:[%s456 + $0x9c] sm:$0xc] %vm457, %v393
        %499 = vst.msk [vmem:[%s456 + $0xa0] sm:$0xf] %vm220, %v396
        %500 = vst.msk [vmem:[%s456 + $0xa4] sm:$0x3] %vm460, %v397
        %501 = vst.msk [vmem:[%s456 + $0xa8] sm:$0xc] %vm457, %v398
        %502 = vst.msk [vmem:[%s456 + $0xac] sm:$0xf] %vm220, %v401
        %503 = vst.msk [vmem:[%s456 + $0xb0] sm:$0x3] %vm460, %v402
        %504 = vst.msk [vmem:[%s456 + $0xb4] sm:$0xc] %vm457, %v403
        %505 = vst.msk [vmem:[%s456 + $0xb8] sm:$0xf] %vm220, %v406
        %506 = vst.msk [vmem:[%s456 + $0xbc] sm:$0x3] %vm460, %v407
        %vm507 = vcmask 490496
        %508 = vst.msk [vmem:[#allocation4] sm:$0xff] %vm507, 0.0
        %509 = vst.msk [vmem:[#allocation4 + $0x8] sm:$0xff] %vm507, 0.0
        %510 = vst.msk [vmem:[#allocation4 + $0x10] sm:$0xff] %vm507, 0.0
        %511 = vst.msk [vmem:[#allocation4 + $0x18] sm:$0xff] %vm507, 0.0
        %512 = vst.msk [vmem:[#allocation4 + $0x20] sm:$0xff] %vm507, 0.0
        %513 = vst.msk [vmem:[#allocation4 + $0x28] sm:$0xff] %vm507, 0.0
        %514 = vst.msk [vmem:[#allocation4 + $0x30] sm:$0xff] %vm507, 0.0
        %515 = vst.msk [vmem:[#allocation4 + $0x38] sm:$0xff] %vm507, 0.0
        %516 = vst.msk [vmem:[#allocation4 + $0x40] sm:$0xff] %vm507, 0.0
        %517 = vst.msk [vmem:[#allocation4 + $0x48] sm:$0xff] %vm507, 0.0
        %518 = vst.msk [vmem:[#allocation4 + $0x50] sm:$0xff] %vm507, 0.0
        %519 = vst.msk [vmem:[#allocation4 + $0x58] sm:$0xff] %vm507, 0.0
        %520 = vst.msk [vmem:[#allocation4 + $0x60] sm:$0xff] %vm507, 0.0
        %521 = vst.msk [vmem:[#allocation4 + $0x68] sm:$0xff] %vm507, 0.0
        %522 = vst.msk [vmem:[#allocation4 + $0x70] sm:$0xff] %vm507, 0.0
        %523 = vst.msk [vmem:[#allocation4 + $0x78] sm:$0xff] %vm507, 0.0
        %524 = vst.msk [vmem:[#allocation4 + $0x80] sm:$0xff] %vm507, 0.0
        %525 = vst.msk [vmem:[#allocation4 + $0x88] sm:$0xff] %vm507, 0.0
        %526 = vst.msk [vmem:[#allocation4 + $0x90] sm:$0xff] %vm507, 0.0
        %527 = vst.msk [vmem:[#allocation4 + $0x98] sm:$0xff] %vm507, 0.0
        %528 = vst.msk [vmem:[#allocation4 + $0xa0] sm:$0xff] %vm507, 0.0
        %529 = vst.msk [vmem:[#allocation4 + $0xa8] sm:$0xff] %vm507, 0.0
        %530 = vst.msk [vmem:[#allocation4 + $0xb0] sm:$0xff] %vm507, 0.0
        %531 = vst.msk [vmem:[#allocation4 + $0xb8] sm:$0xff] %vm507, 0.0
        %532 = vst.msk [vmem:[#allocation4 + $0xc0] sm:$0xff] %vm507, 0.0
        %533 = vst.msk [vmem:[#allocation4 + $0xc8] sm:$0xff] %vm507, 0.0
        %534 = vst.msk [vmem:[#allocation4 + $0xd0] sm:$0xff] %vm507, 0.0
        %535 = vst.msk [vmem:[#allocation4 + $0xd8] sm:$0xff] %vm507, 0.0
        %536 = vst.msk [vmem:[#allocation4 + $0xe0] sm:$0xff] %vm507, 0.0
        %537 = vst.msk [vmem:[#allocation4 + $0xe8] sm:$0xff] %vm507, 0.0
        %538 = vst.msk [vmem:[#allocation4 + $0xf0] sm:$0xff] %vm507, 0.0
        %539 = vst.msk [vmem:[#allocation4 + $0xf8] sm:$0xff] %vm507, 0.0
        loop: start=0, step=1, limit=9
        $region37: #{_lambda_.3} parent=31 // loop_pre_header
          _
        $region38: #{_lambda_.3} parent=31 // loop_header
          %s541 = sphi 0, %s545
          %p542 = scmp.ge.s32.totalorder %s541, 9
        $region39: #{_lambda_.3} parent=31 // loop_header_branch
          %544 = sbr.rel (%p542) target = $region43
        $region40: #{_lambda_.3} parent=31 // loop_body
          %s546 = smul.u32 %s541, 3
          %s547 = smul.addr %s546, 4
          %s548 = scalar_lea.vmem [#allocation2], %s547
          %v549 = vld [vmem:[%s548] sm:$0xf]
          %v550 = vld [vmem:[%s548 + $0x4] sm:$0xf]
          %v551 = vld [vmem:[%s548 + $0xc] sm:$0xf]
          %v552 = vld [vmem:[%s548 + $0x10] sm:$0xf]
          %v553 = vld [vmem:[%s548 + $0x18] sm:$0xf]
          %v554 = vld [vmem:[%s548 + $0x1c] sm:$0xf]
          %v555 = vld [vmem:[%s548 + $0x24] sm:$0xf]
          %v556 = vld [vmem:[%s548 + $0x28] sm:$0xf]
          %v557 = vld [vmem:[%s548 + $0x30] sm:$0xf]
          %v558 = vld [vmem:[%s548 + $0x34] sm:$0xf]
          %v559 = vld [vmem:[%s548 + $0x3c] sm:$0xf]
          %v560 = vld [vmem:[%s548 + $0x40] sm:$0xf]
          %v561 = vld [vmem:[%s548 + $0x48] sm:$0xf]
          %v562 = vld [vmem:[%s548 + $0x4c] sm:$0xf]
          %v563 = vld [vmem:[%s548 + $0x54] sm:$0xf]
          %v564 = vld [vmem:[%s548 + $0x58] sm:$0xf]
          %v565 = vld [vmem:[%s548 + $0x60] sm:$0xf]
          %v566 = vld [vmem:[%s548 + $0x64] sm:$0xf]
          %v567 = vld [vmem:[%s548 + $0x6c] sm:$0xf]
          %v568 = vld [vmem:[%s548 + $0x70] sm:$0xf]
          %v569 = vld [vmem:[%s548 + $0x78] sm:$0xf]
          %v570 = vld [vmem:[%s548 + $0x7c] sm:$0xf]
          %v571 = vld [vmem:[%s548 + $0x84] sm:$0xf]
          %v572 = vld [vmem:[%s548 + $0x88] sm:$0xf]
          %v573 = vld [vmem:[%s548 + $0x90] sm:$0xf]
          %v574 = vld [vmem:[%s548 + $0x94] sm:$0xf]
          %v575 = vld [vmem:[%s548 + $0x9c] sm:$0xf]
          %v576 = vld [vmem:[%s548 + $0xa0] sm:$0xf]
          %v577 = vld [vmem:[%s548 + $0xa8] sm:$0xf]
          %v578 = vld [vmem:[%s548 + $0xac] sm:$0xf]
          %v579 = vld [vmem:[%s548 + $0xb4] sm:$0xf]
          %v580 = vld [vmem:[%s548 + $0xb8] sm:$0xf]
          %v613 = vunpack.c.l.b16 %v549
          %v614 = vunpack.c.l.b16 %v550
          %v615 = vunpack.c.l.b16 %v551
          %v616 = vunpack.c.l.b16 %v552
          %v617 = vunpack.c.l.b16 %v553
          %v618 = vunpack.c.l.b16 %v554
          %v619 = vunpack.c.l.b16 %v555
          %v620 = vunpack.c.l.b16 %v556
          %v621 = vunpack.c.l.b16 %v557
          %v622 = vunpack.c.l.b16 %v558
          %v623 = vunpack.c.l.b16 %v559
          %v624 = vunpack.c.l.b16 %v560
          %v625 = vunpack.c.l.b16 %v561
          %v626 = vunpack.c.l.b16 %v562
          %v627 = vunpack.c.l.b16 %v563
          %v628 = vunpack.c.l.b16 %v564
          %v629 = vunpack.c.l.b16 %v565
          %v630 = vunpack.c.l.b16 %v566
          %v631 = vunpack.c.l.b16 %v567
          %v632 = vunpack.c.l.b16 %v568
          %v633 = vunpack.c.l.b16 %v569
          %v634 = vunpack.c.l.b16 %v570
          %v635 = vunpack.c.l.b16 %v571
          %v636 = vunpack.c.l.b16 %v572
          %v637 = vunpack.c.l.b16 %v573
          %v638 = vunpack.c.l.b16 %v574
          %v639 = vunpack.c.l.b16 %v575
          %v640 = vunpack.c.l.b16 %v576
          %v641 = vunpack.c.l.b16 %v577
          %v642 = vunpack.c.l.b16 %v578
          %v643 = vunpack.c.l.b16 %v579
          %v644 = vunpack.c.l.b16 %v580
          %v645 = vpack.c.b16 %v614, %v613
          %v646 = vpack.c.b16 %v616, %v615
          %v647 = vpack.c.b16 %v618, %v617
          %v648 = vpack.c.b16 %v620, %v619
          %v649 = vpack.c.b16 %v622, %v621
          %v650 = vpack.c.b16 %v624, %v623
          %v651 = vpack.c.b16 %v626, %v625
          %v652 = vpack.c.b16 %v628, %v627
          %v653 = vpack.c.b16 %v630, %v629
          %v654 = vpack.c.b16 %v632, %v631
          %v655 = vpack.c.b16 %v634, %v633
          %v656 = vpack.c.b16 %v636, %v635
          %v657 = vpack.c.b16 %v638, %v637
          %v658 = vpack.c.b16 %v640, %v639
          %v659 = vpack.c.b16 %v642, %v641
          %v660 = vpack.c.b16 %v644, %v643
          %vm677 = vcmask 23552
          %678 = vst.msk [vmem:[#allocation3] sm:$0xff] %vm677, %v645
          %679 = vst.msk [vmem:[#allocation3 + $0x8] sm:$0xff] %vm677, %v646
          %680 = vst.msk [vmem:[#allocation3 + $0x10] sm:$0xff] %vm677, %v647
          %681 = vst.msk [vmem:[#allocation3 + $0x18] sm:$0xff] %vm677, %v648
          %682 = vst.msk [vmem:[#allocation3 + $0x20] sm:$0xff] %vm677, %v649
          %683 = vst.msk [vmem:[#allocation3 + $0x28] sm:$0xff] %vm677, %v650
          %684 = vst.msk [vmem:[#allocation3 + $0x30] sm:$0xff] %vm677, %v651
          %685 = vst.msk [vmem:[#allocation3 + $0x38] sm:$0xff] %vm677, %v652
          %686 = vst.msk [vmem:[#allocation3 + $0x40] sm:$0xff] %vm677, %v653
          %687 = vst.msk [vmem:[#allocation3 + $0x48] sm:$0xff] %vm677, %v654
          %688 = vst.msk [vmem:[#allocation3 + $0x50] sm:$0xff] %vm677, %v655
          %689 = vst.msk [vmem:[#allocation3 + $0x58] sm:$0xff] %vm677, %v656
          %690 = vst.msk [vmem:[#allocation3 + $0x60] sm:$0xff] %vm677, %v657
          %691 = vst.msk [vmem:[#allocation3 + $0x68] sm:$0xff] %vm677, %v658
          %692 = vst.msk [vmem:[#allocation3 + $0x70] sm:$0xff] %vm677, %v659
          %693 = vst.msk [vmem:[#allocation3 + $0x78] sm:$0xff] %vm677, %v660
          %v694 = vld [vmem:[%s548] sm:$0xf]
          %v695 = vld [vmem:[%s548 + $0x4] sm:$0xf]
          %v696 = vld [vmem:[%s548 + $0x8] sm:$0x1]
          %v697 = vld [vmem:[%s548 + $0xc] sm:$0xf]
          %v698 = vld [vmem:[%s548 + $0x10] sm:$0xf]
          %v699 = vld [vmem:[%s548 + $0x14] sm:$0x1]
          %v700 = vld [vmem:[%s548 + $0x18] sm:$0xf]
          %v701 = vld [vmem:[%s548 + $0x1c] sm:$0xf]
          %v702 = vld [vmem:[%s548 + $0x20] sm:$0x1]
          %v703 = vld [vmem:[%s548 + $0x24] sm:$0xf]
          %v704 = vld [vmem:[%s548 + $0x28] sm:$0xf]
          %v705 = vld [vmem:[%s548 + $0x2c] sm:$0x1]
          %v706 = vld [vmem:[%s548 + $0x30] sm:$0xf]
          %v707 = vld [vmem:[%s548 + $0x34] sm:$0xf]
          %v708 = vld [vmem:[%s548 + $0x38] sm:$0x1]
          %v709 = vld [vmem:[%s548 + $0x3c] sm:$0xf]
          %v710 = vld [vmem:[%s548 + $0x40] sm:$0xf]
          %v711 = vld [vmem:[%s548 + $0x44] sm:$0x1]
          %v712 = vld [vmem:[%s548 + $0x48] sm:$0xf]
          %v713 = vld [vmem:[%s548 + $0x4c] sm:$0xf]
          %v714 = vld [vmem:[%s548 + $0x50] sm:$0x1]
          %v715 = vld [vmem:[%s548 + $0x54] sm:$0xf]
          %v716 = vld [vmem:[%s548 + $0x58] sm:$0xf]
          %v717 = vld [vmem:[%s548 + $0x5c] sm:$0x1]
          %v718 = vld [vmem:[%s548 + $0x60] sm:$0xf]
          %v719 = vld [vmem:[%s548 + $0x64] sm:$0xf]
          %v720 = vld [vmem:[%s548 + $0x68] sm:$0x1]
          %v721 = vld [vmem:[%s548 + $0x6c] sm:$0xf]
          %v722 = vld [vmem:[%s548 + $0x70] sm:$0xf]
          %v723 = vld [vmem:[%s548 + $0x74] sm:$0x1]
          %v724 = vld [vmem:[%s548 + $0x78] sm:$0xf]
          %v725 = vld [vmem:[%s548 + $0x7c] sm:$0xf]
          %v726 = vld [vmem:[%s548 + $0x80] sm:$0x1]
          %v727 = vld [vmem:[%s548 + $0x84] sm:$0xf]
          %v728 = vld [vmem:[%s548 + $0x88] sm:$0xf]
          %v729 = vld [vmem:[%s548 + $0x8c] sm:$0x1]
          %v730 = vld [vmem:[%s548 + $0x90] sm:$0xf]
          %v731 = vld [vmem:[%s548 + $0x94] sm:$0xf]
          %v732 = vld [vmem:[%s548 + $0x98] sm:$0x1]
          %v733 = vld [vmem:[%s548 + $0x9c] sm:$0xf]
          %v734 = vld [vmem:[%s548 + $0xa0] sm:$0xf]
          %v735 = vld [vmem:[%s548 + $0xa4] sm:$0x1]
          %v736 = vld [vmem:[%s548 + $0xa8] sm:$0xf]
          %v737 = vld [vmem:[%s548 + $0xac] sm:$0xf]
          %v738 = vld [vmem:[%s548 + $0xb0] sm:$0x1]
          %v739 = vld [vmem:[%s548 + $0xb4] sm:$0xf]
          %v740 = vld [vmem:[%s548 + $0xb8] sm:$0xf]
          %v741 = vld [vmem:[%s548 + $0xbc] sm:$0x1]
          %vm742 = vsmask.f32 3328
          %vm743 = vsmask.f32 7440
          %vm744 = vmor %vm742, %vm743
          %v746 = vshrl.u32 %v694, 16
          %v748 = vrot.slane %v746, 4
          %v749 = vshll.u32 %v694, 16
          %v751 = vrot.slane %v749, 5
          %v752 = vor.u32 %v748, %v751
          %v753 = vrot.slane %v752, 4
          %v755 = vshll.u32 %v695, 16
          %v757 = vrot.slane %v755, 5
          %v758 = vsel %vm744, %v753, %v757
          %v759 = vshrl.u32 %v695, 16
          %v761 = vrot.slane %v759, 4
          %v762 = vor.u32 %v761, %v757
          %v763 = vrot.slane %v762, 4
          %v765 = vshll.u32 %v696, 16
          %v767 = vrot.slane %v765, 5
          %v768 = vsel %vm744, %v763, %v767
          %v770 = vshrl.u32 %v697, 16
          %v772 = vrot.slane %v770, 4
          %v773 = vshll.u32 %v697, 16
          %v775 = vrot.slane %v773, 5
          %v776 = vor.u32 %v772, %v775
          %v777 = vrot.slane %v776, 4
          %v779 = vshll.u32 %v698, 16
          %v781 = vrot.slane %v779, 5
          %v782 = vsel %vm744, %v777, %v781
          %v783 = vshrl.u32 %v698, 16
          %v785 = vrot.slane %v783, 4
          %v786 = vor.u32 %v785, %v781
          %v787 = vrot.slane %v786, 4
          %v789 = vshll.u32 %v699, 16
          %v791 = vrot.slane %v789, 5
          %v792 = vsel %vm744, %v787, %v791
          %v794 = vshrl.u32 %v700, 16
          %v796 = vrot.slane %v794, 4
          %v797 = vshll.u32 %v700, 16
          %v799 = vrot.slane %v797, 5
          %v800 = vor.u32 %v796, %v799
          %v801 = vrot.slane %v800, 4
          %v803 = vshll.u32 %v701, 16
          %v805 = vrot.slane %v803, 5
          %v806 = vsel %vm744, %v801, %v805
          %v807 = vshrl.u32 %v701, 16
          %v809 = vrot.slane %v807, 4
          %v810 = vor.u32 %v809, %v805
          %v811 = vrot.slane %v810, 4
          %v813 = vshll.u32 %v702, 16
          %v815 = vrot.slane %v813, 5
          %v816 = vsel %vm744, %v811, %v815
          %v818 = vshrl.u32 %v703, 16
          %v820 = vrot.slane %v818, 4
          %v821 = vshll.u32 %v703, 16
          %v823 = vrot.slane %v821, 5
          %v824 = vor.u32 %v820, %v823
          %v825 = vrot.slane %v824, 4
          %v827 = vshll.u32 %v704, 16
          %v829 = vrot.slane %v827, 5
          %v830 = vsel %vm744, %v825, %v829
          %v831 = vshrl.u32 %v704, 16
          %v833 = vrot.slane %v831, 4
          %v834 = vor.u32 %v833, %v829
          %v835 = vrot.slane %v834, 4
          %v837 = vshll.u32 %v705, 16
          %v839 = vrot.slane %v837, 5
          %v840 = vsel %vm744, %v835, %v839
          %v842 = vshrl.u32 %v706, 16
          %v844 = vrot.slane %v842, 4
          %v845 = vshll.u32 %v706, 16
          %v847 = vrot.slane %v845, 5
          %v848 = vor.u32 %v844, %v847
          %v849 = vrot.slane %v848, 4
          %v851 = vshll.u32 %v707, 16
          %v853 = vrot.slane %v851, 5
          %v854 = vsel %vm744, %v849, %v853
          %v855 = vshrl.u32 %v707, 16
          %v857 = vrot.slane %v855, 4
          %v858 = vor.u32 %v857, %v853
          %v859 = vrot.slane %v858, 4
          %v861 = vshll.u32 %v708, 16
          %v863 = vrot.slane %v861, 5
          %v864 = vsel %vm744, %v859, %v863
          %v866 = vshrl.u32 %v709, 16
          %v868 = vrot.slane %v866, 4
          %v869 = vshll.u32 %v709, 16
          %v871 = vrot.slane %v869, 5
          %v872 = vor.u32 %v868, %v871
          %v873 = vrot.slane %v872, 4
          %v875 = vshll.u32 %v710, 16
          %v877 = vrot.slane %v875, 5
          %v878 = vsel %vm744, %v873, %v877
          %v879 = vshrl.u32 %v710, 16
          %v881 = vrot.slane %v879, 4
          %v882 = vor.u32 %v881, %v877
          %v883 = vrot.slane %v882, 4
          %v885 = vshll.u32 %v711, 16
          %v887 = vrot.slane %v885, 5
          %v888 = vsel %vm744, %v883, %v887
          %v890 = vshrl.u32 %v712, 16
          %v892 = vrot.slane %v890, 4
          %v893 = vshll.u32 %v712, 16
          %v895 = vrot.slane %v893, 5
          %v896 = vor.u32 %v892, %v895
          %v897 = vrot.slane %v896, 4
          %v899 = vshll.u32 %v713, 16
          %v901 = vrot.slane %v899, 5
          %v902 = vsel %vm744, %v897, %v901
          %v903 = vshrl.u32 %v713, 16
          %v905 = vrot.slane %v903, 4
          %v906 = vor.u32 %v905, %v901
          %v907 = vrot.slane %v906, 4
          %v909 = vshll.u32 %v714, 16
          %v911 = vrot.slane %v909, 5
          %v912 = vsel %vm744, %v907, %v911
          %v914 = vshrl.u32 %v715, 16
          %v916 = vrot.slane %v914, 4
          %v917 = vshll.u32 %v715, 16
          %v919 = vrot.slane %v917, 5
          %v920 = vor.u32 %v916, %v919
          %v921 = vrot.slane %v920, 4
          %v923 = vshll.u32 %v716, 16
          %v925 = vrot.slane %v923, 5
          %v926 = vsel %vm744, %v921, %v925
          %v927 = vshrl.u32 %v716, 16
          %v929 = vrot.slane %v927, 4
          %v930 = vor.u32 %v929, %v925
          %v931 = vrot.slane %v930, 4
          %v933 = vshll.u32 %v717, 16
          %v935 = vrot.slane %v933, 5
          %v936 = vsel %vm744, %v931, %v935
          %v938 = vshrl.u32 %v718, 16
          %v940 = vrot.slane %v938, 4
          %v941 = vshll.u32 %v718, 16
          %v943 = vrot.slane %v941, 5
          %v944 = vor.u32 %v940, %v943
          %v945 = vrot.slane %v944, 4
          %v947 = vshll.u32 %v719, 16
          %v949 = vrot.slane %v947, 5
          %v950 = vsel %vm744, %v945, %v949
          %v951 = vshrl.u32 %v719, 16
          %v953 = vrot.slane %v951, 4
          %v954 = vor.u32 %v953, %v949
          %v955 = vrot.slane %v954, 4
          %v957 = vshll.u32 %v720, 16
          %v959 = vrot.slane %v957, 5
          %v960 = vsel %vm744, %v955, %v959
          %v962 = vshrl.u32 %v721, 16
          %v964 = vrot.slane %v962, 4
          %v965 = vshll.u32 %v721, 16
          %v967 = vrot.slane %v965, 5
          %v968 = vor.u32 %v964, %v967
          %v969 = vrot.slane %v968, 4
          %v971 = vshll.u32 %v722, 16
          %v973 = vrot.slane %v971, 5
          %v974 = vsel %vm744, %v969, %v973
          %v975 = vshrl.u32 %v722, 16
          %v977 = vrot.slane %v975, 4
          %v978 = vor.u32 %v977, %v973
          %v979 = vrot.slane %v978, 4
          %v981 = vshll.u32 %v723, 16
          %v983 = vrot.slane %v981, 5
          %v984 = vsel %vm744, %v979, %v983
          %v986 = vshrl.u32 %v724, 16
          %v988 = vrot.slane %v986, 4
          %v989 = vshll.u32 %v724, 16
          %v991 = vrot.slane %v989, 5
          %v992 = vor.u32 %v988, %v991
          %v993 = vrot.slane %v992, 4
          %v995 = vshll.u32 %v725, 16
          %v997 = vrot.slane %v995, 5
          %v998 = vsel %vm744, %v993, %v997
          %v999 = vshrl.u32 %v725, 16
          %v1001 = vrot.slane %v999, 4
          %v1002 = vor.u32 %v1001, %v997
          %v1003 = vrot.slane %v1002, 4
          %v1005 = vshll.u32 %v726, 16
          %v1007 = vrot.slane %v1005, 5
          %v1008 = vsel %vm744, %v1003, %v1007
          %v1010 = vshrl.u32 %v727, 16
          %v1012 = vrot.slane %v1010, 4
          %v1013 = vshll.u32 %v727, 16
          %v1015 = vrot.slane %v1013, 5
          %v1016 = vor.u32 %v1012, %v1015
          %v1017 = vrot.slane %v1016, 4
          %v1019 = vshll.u32 %v728, 16
          %v1021 = vrot.slane %v1019, 5
          %v1022 = vsel %vm744, %v1017, %v1021
          %v1023 = vshrl.u32 %v728, 16
          %v1025 = vrot.slane %v1023, 4
          %v1026 = vor.u32 %v1025, %v1021
          %v1027 = vrot.slane %v1026, 4
          %v1029 = vshll.u32 %v729, 16
          %v1031 = vrot.slane %v1029, 5
          %v1032 = vsel %vm744, %v1027, %v1031
          %v1034 = vshrl.u32 %v730, 16
          %v1036 = vrot.slane %v1034, 4
          %v1037 = vshll.u32 %v730, 16
          %v1039 = vrot.slane %v1037, 5
          %v1040 = vor.u32 %v1036, %v1039
          %v1041 = vrot.slane %v1040, 4
          %v1043 = vshll.u32 %v731, 16
          %v1045 = vrot.slane %v1043, 5
          %v1046 = vsel %vm744, %v1041, %v1045
          %v1047 = vshrl.u32 %v731, 16
          %v1049 = vrot.slane %v1047, 4
          %v1050 = vor.u32 %v1049, %v1045
          %v1051 = vrot.slane %v1050, 4
          %v1053 = vshll.u32 %v732, 16
          %v1055 = vrot.slane %v1053, 5
          %v1056 = vsel %vm744, %v1051, %v1055
          %v1058 = vshrl.u32 %v733, 16
          %v1060 = vrot.slane %v1058, 4
          %v1061 = vshll.u32 %v733, 16
          %v1063 = vrot.slane %v1061, 5
          %v1064 = vor.u32 %v1060, %v1063
          %v1065 = vrot.slane %v1064, 4
          %v1067 = vshll.u32 %v734, 16
          %v1069 = vrot.slane %v1067, 5
          %v1070 = vsel %vm744, %v1065, %v1069
          %v1071 = vshrl.u32 %v734, 16
          %v1073 = vrot.slane %v1071, 4
          %v1074 = vor.u32 %v1073, %v1069
          %v1075 = vrot.slane %v1074, 4
          %v1077 = vshll.u32 %v735, 16
          %v1079 = vrot.slane %v1077, 5
          %v1080 = vsel %vm744, %v1075, %v1079
          %v1082 = vshrl.u32 %v736, 16
          %v1084 = vrot.slane %v1082, 4
          %v1085 = vshll.u32 %v736, 16
          %v1087 = vrot.slane %v1085, 5
          %v1088 = vor.u32 %v1084, %v1087
          %v1089 = vrot.slane %v1088, 4
          %v1091 = vshll.u32 %v737, 16
          %v1093 = vrot.slane %v1091, 5
          %v1094 = vsel %vm744, %v1089, %v1093
          %v1095 = vshrl.u32 %v737, 16
          %v1097 = vrot.slane %v1095, 4
          %v1098 = vor.u32 %v1097, %v1093
          %v1099 = vrot.slane %v1098, 4
          %v1101 = vshll.u32 %v738, 16
          %v1103 = vrot.slane %v1101, 5
          %v1104 = vsel %vm744, %v1099, %v1103
          %v1106 = vshrl.u32 %v739, 16
          %v1108 = vrot.slane %v1106, 4
          %v1109 = vshll.u32 %v739, 16
          %v1111 = vrot.slane %v1109, 5
          %v1112 = vor.u32 %v1108, %v1111
          %v1113 = vrot.slane %v1112, 4
          %v1115 = vshll.u32 %v740, 16
          %v1117 = vrot.slane %v1115, 5
          %v1118 = vsel %vm744, %v1113, %v1117
          %v1119 = vshrl.u32 %v740, 16
          %v1121 = vrot.slane %v1119, 4
          %v1122 = vor.u32 %v1121, %v1117
          %v1123 = vrot.slane %v1122, 4
          %v1125 = vshll.u32 %v741, 16
          %v1127 = vrot.slane %v1125, 5
          %v1128 = vsel %vm744, %v1123, %v1127
          %v1129 = vunpack.c.l.b16 %v758
          %v1130 = vunpack.c.l.b16 %v768
          %v1131 = vunpack.c.l.b16 %v782
          %v1132 = vunpack.c.l.b16 %v792
          %v1133 = vunpack.c.l.b16 %v806
          %v1134 = vunpack.c.l.b16 %v816
          %v1135 = vunpack.c.l.b16 %v830
          %v1136 = vunpack.c.l.b16 %v840
          %v1137 = vunpack.c.l.b16 %v854
          %v1138 = vunpack.c.l.b16 %v864
          %v1139 = vunpack.c.l.b16 %v878
          %v1140 = vunpack.c.l.b16 %v888
          %v1141 = vunpack.c.l.b16 %v902
          %v1142 = vunpack.c.l.b16 %v912
          %v1143 = vunpack.c.l.b16 %v926
          %v1144 = vunpack.c.l.b16 %v936
          %v1145 = vunpack.c.l.b16 %v950
          %v1146 = vunpack.c.l.b16 %v960
          %v1147 = vunpack.c.l.b16 %v974
          %v1148 = vunpack.c.l.b16 %v984
          %v1149 = vunpack.c.l.b16 %v998
          %v1150 = vunpack.c.l.b16 %v1008
          %v1151 = vunpack.c.l.b16 %v1022
          %v1152 = vunpack.c.l.b16 %v1032
          %v1153 = vunpack.c.l.b16 %v1046
          %v1154 = vunpack.c.l.b16 %v1056
          %v1155 = vunpack.c.l.b16 %v1070
          %v1156 = vunpack.c.l.b16 %v1080
          %v1157 = vunpack.c.l.b16 %v1094
          %v1158 = vunpack.c.l.b16 %v1104
          %v1159 = vunpack.c.l.b16 %v1118
          %v1160 = vunpack.c.l.b16 %v1128
          %v1161 = vpack.c.b16 %v1130, %v1129
          %v1162 = vpack.c.b16 %v1132, %v1131
          %v1163 = vpack.c.b16 %v1134, %v1133
          %v1164 = vpack.c.b16 %v1136, %v1135
          %v1165 = vpack.c.b16 %v1138, %v1137
          %v1166 = vpack.c.b16 %v1140, %v1139
          %v1167 = vpack.c.b16 %v1142, %v1141
          %v1168 = vpack.c.b16 %v1144, %v1143
          %v1169 = vpack.c.b16 %v1146, %v1145
          %v1170 = vpack.c.b16 %v1148, %v1147
          %v1171 = vpack.c.b16 %v1150, %v1149
          %v1172 = vpack.c.b16 %v1152, %v1151
          %v1173 = vpack.c.b16 %v1154, %v1153
          %v1174 = vpack.c.b16 %v1156, %v1155
          %v1175 = vpack.c.b16 %v1158, %v1157
          %v1176 = vpack.c.b16 %v1160, %v1159
          %1177 = vrot.lane.b32.xlu0 %v1161, 3
          %v1178 = vpop.permute.xlu0 %1177
          %1179 = vrot.lane.b32.xlu0 %v1162, 3
          %v1180 = vpop.permute.xlu0 %1179
          %1181 = vrot.lane.b32.xlu0 %v1163, 3
          %v1182 = vpop.permute.xlu0 %1181
          %1183 = vrot.lane.b32.xlu0 %v1164, 3
          %v1184 = vpop.permute.xlu0 %1183
          %1185 = vrot.lane.b32.xlu0 %v1165, 3
          %v1186 = vpop.permute.xlu0 %1185
          %1187 = vrot.lane.b32.xlu0 %v1166, 3
          %v1188 = vpop.permute.xlu0 %1187
          %1189 = vrot.lane.b32.xlu0 %v1167, 3
          %v1190 = vpop.permute.xlu0 %1189
          %1191 = vrot.lane.b32.xlu0 %v1168, 3
          %v1192 = vpop.permute.xlu0 %1191
          %1193 = vrot.lane.b32.xlu0 %v1169, 3
          %v1194 = vpop.permute.xlu0 %1193
          %1195 = vrot.lane.b32.xlu0 %v1170, 3
          %v1196 = vpop.permute.xlu0 %1195
          %1197 = vrot.lane.b32.xlu0 %v1171, 3
          %v1198 = vpop.permute.xlu0 %1197
          %1199 = vrot.lane.b32.xlu0 %v1172, 3
          %v1200 = vpop.permute.xlu0 %1199
          %1201 = vrot.lane.b32.xlu0 %v1173, 3
          %v1202 = vpop.permute.xlu0 %1201
          %1203 = vrot.lane.b32.xlu0 %v1174, 3
          %v1204 = vpop.permute.xlu0 %1203
          %1205 = vrot.lane.b32.xlu0 %v1175, 3
          %v1206 = vpop.permute.xlu0 %1205
          %1207 = vrot.lane.b32.xlu0 %v1176, 3
          %v1208 = vpop.permute.xlu0 %1207
          %vm1225 = vcmask 48152
          %1226 = vst.msk [vmem:[#allocation3] sm:$0xff] %vm1225, %v1178
          %1227 = vst.msk [vmem:[#allocation3 + $0x8] sm:$0xff] %vm1225, %v1180
          %1228 = vst.msk [vmem:[#allocation3 + $0x10] sm:$0xff] %vm1225, %v1182
          %1229 = vst.msk [vmem:[#allocation3 + $0x18] sm:$0xff] %vm1225, %v1184
          %1230 = vst.msk [vmem:[#allocation3 + $0x20] sm:$0xff] %vm1225, %v1186
          %1231 = vst.msk [vmem:[#allocation3 + $0x28] sm:$0xff] %vm1225, %v1188
          %1232 = vst.msk [vmem:[#allocation3 + $0x30] sm:$0xff] %vm1225, %v1190
          %1233 = vst.msk [vmem:[#allocation3 + $0x38] sm:$0xff] %vm1225, %v1192
          %1234 = vst.msk [vmem:[#allocation3 + $0x40] sm:$0xff] %vm1225, %v1194
          %1235 = vst.msk [vmem:[#allocation3 + $0x48] sm:$0xff] %vm1225, %v1196
          %1236 = vst.msk [vmem:[#allocation3 + $0x50] sm:$0xff] %vm1225, %v1198
          %1237 = vst.msk [vmem:[#allocation3 + $0x58] sm:$0xff] %vm1225, %v1200
          %1238 = vst.msk [vmem:[#allocation3 + $0x60] sm:$0xff] %vm1225, %v1202
          %1239 = vst.msk [vmem:[#allocation3 + $0x68] sm:$0xff] %vm1225, %v1204
          %1240 = vst.msk [vmem:[#allocation3 + $0x70] sm:$0xff] %vm1225, %v1206
          %1241 = vst.msk [vmem:[#allocation3 + $0x78] sm:$0xff] %vm1225, %v1208
          %v1242 = vld [vmem:[%s548] sm:$0xe]
          %v1243 = vld [vmem:[%s548 + $0x4] sm:$0xf]
          %v1244 = vld [vmem:[%s548 + $0x8] sm:$0x1]
          %v1245 = vld [vmem:[%s548 + $0xc] sm:$0xe]
          %v1246 = vld [vmem:[%s548 + $0x10] sm:$0xf]
          %v1247 = vld [vmem:[%s548 + $0x14] sm:$0x1]
          %v1248 = vld [vmem:[%s548 + $0x18] sm:$0xe]
          %v1249 = vld [vmem:[%s548 + $0x1c] sm:$0xf]
          %v1250 = vld [vmem:[%s548 + $0x20] sm:$0x1]
          %v1251 = vld [vmem:[%s548 + $0x24] sm:$0xe]
          %v1252 = vld [vmem:[%s548 + $0x28] sm:$0xf]
          %v1253 = vld [vmem:[%s548 + $0x2c] sm:$0x1]
          %v1254 = vld [vmem:[%s548 + $0x30] sm:$0xe]
          %v1255 = vld [vmem:[%s548 + $0x34] sm:$0xf]
          %v1256 = vld [vmem:[%s548 + $0x38] sm:$0x1]
          %v1257 = vld [vmem:[%s548 + $0x3c] sm:$0xe]
          %v1258 = vld [vmem:[%s548 + $0x40] sm:$0xf]
          %v1259 = vld [vmem:[%s548 + $0x44] sm:$0x1]
          %v1260 = vld [vmem:[%s548 + $0x48] sm:$0xe]
          %v1261 = vld [vmem:[%s548 + $0x4c] sm:$0xf]
          %v1262 = vld [vmem:[%s548 + $0x50] sm:$0x1]
          %v1263 = vld [vmem:[%s548 + $0x54] sm:$0xe]
          %v1264 = vld [vmem:[%s548 + $0x58] sm:$0xf]
          %v1265 = vld [vmem:[%s548 + $0x5c] sm:$0x1]
          %v1266 = vld [vmem:[%s548 + $0x60] sm:$0xe]
          %v1267 = vld [vmem:[%s548 + $0x64] sm:$0xf]
          %v1268 = vld [vmem:[%s548 + $0x68] sm:$0x1]
          %v1269 = vld [vmem:[%s548 + $0x6c] sm:$0xe]
          %v1270 = vld [vmem:[%s548 + $0x70] sm:$0xf]
          %v1271 = vld [vmem:[%s548 + $0x74] sm:$0x1]
          %v1272 = vld [vmem:[%s548 + $0x78] sm:$0xe]
          %v1273 = vld [vmem:[%s548 + $0x7c] sm:$0xf]
          %v1274 = vld [vmem:[%s548 + $0x80] sm:$0x1]
          %v1275 = vld [vmem:[%s548 + $0x84] sm:$0xe]
          %v1276 = vld [vmem:[%s548 + $0x88] sm:$0xf]
          %v1277 = vld [vmem:[%s548 + $0x8c] sm:$0x1]
          %v1278 = vld [vmem:[%s548 + $0x90] sm:$0xe]
          %v1279 = vld [vmem:[%s548 + $0x94] sm:$0xf]
          %v1280 = vld [vmem:[%s548 + $0x98] sm:$0x1]
          %v1281 = vld [vmem:[%s548 + $0x9c] sm:$0xe]
          %v1282 = vld [vmem:[%s548 + $0xa0] sm:$0xf]
          %v1283 = vld [vmem:[%s548 + $0xa4] sm:$0x1]
          %v1284 = vld [vmem:[%s548 + $0xa8] sm:$0xe]
          %v1285 = vld [vmem:[%s548 + $0xac] sm:$0xf]
          %v1286 = vld [vmem:[%s548 + $0xb0] sm:$0x1]
          %v1287 = vld [vmem:[%s548 + $0xb4] sm:$0xe]
          %v1288 = vld [vmem:[%s548 + $0xb8] sm:$0xf]
          %v1289 = vld [vmem:[%s548 + $0xbc] sm:$0x1]
          %vm1338 = vcmask 1042432
          %vm1339 = vcmask 1046532
          %vm1340 = vmor %vm1338, %vm1339
          %v1341 = vrot.slane %v1242, 5
          %v1342 = vrot.slane %v1341, 4
          %v1343 = vrot.slane %v1243, 5
          %v1344 = vsel %vm1340, %v1342, %v1343
          %v1345 = vrot.slane %v1343, 4
          %v1346 = vrot.slane %v1244, 5
          %v1347 = vsel %vm1340, %v1345, %v1346
          %v1348 = vrot.slane %v1245, 5
          %v1349 = vrot.slane %v1348, 4
          %v1350 = vrot.slane %v1246, 5
          %v1351 = vsel %vm1340, %v1349, %v1350
          %v1352 = vrot.slane %v1350, 4
          %v1353 = vrot.slane %v1247, 5
          %v1354 = vsel %vm1340, %v1352, %v1353
          %v1355 = vrot.slane %v1248, 5
          %v1356 = vrot.slane %v1355, 4
          %v1357 = vrot.slane %v1249, 5
          %v1358 = vsel %vm1340, %v1356, %v1357
          %v1359 = vrot.slane %v1357, 4
          %v1360 = vrot.slane %v1250, 5
          %v1361 = vsel %vm1340, %v1359, %v1360
          %v1362 = vrot.slane %v1251, 5
          %v1363 = vrot.slane %v1362, 4
          %v1364 = vrot.slane %v1252, 5
          %v1365 = vsel %vm1340, %v1363, %v1364
          %v1366 = vrot.slane %v1364, 4
          %v1367 = vrot.slane %v1253, 5
          %v1368 = vsel %vm1340, %v1366, %v1367
          %v1369 = vrot.slane %v1254, 5
          %v1370 = vrot.slane %v1369, 4
          %v1371 = vrot.slane %v1255, 5
          %v1372 = vsel %vm1340, %v1370, %v1371
          %v1373 = vrot.slane %v1371, 4
          %v1374 = vrot.slane %v1256, 5
          %v1375 = vsel %vm1340, %v1373, %v1374
          %v1376 = vrot.slane %v1257, 5
          %v1377 = vrot.slane %v1376, 4
          %v1378 = vrot.slane %v1258, 5
          %v1379 = vsel %vm1340, %v1377, %v1378
          %v1380 = vrot.slane %v1378, 4
          %v1381 = vrot.slane %v1259, 5
          %v1382 = vsel %vm1340, %v1380, %v1381
          %v1383 = vrot.slane %v1260, 5
          %v1384 = vrot.slane %v1383, 4
          %v1385 = vrot.slane %v1261, 5
          %v1386 = vsel %vm1340, %v1384, %v1385
          %v1387 = vrot.slane %v1385, 4
          %v1388 = vrot.slane %v1262, 5
          %v1389 = vsel %vm1340, %v1387, %v1388
          %v1390 = vrot.slane %v1263, 5
          %v1391 = vrot.slane %v1390, 4
          %v1392 = vrot.slane %v1264, 5
          %v1393 = vsel %vm1340, %v1391, %v1392
          %v1394 = vrot.slane %v1392, 4
          %v1395 = vrot.slane %v1265, 5
          %v1396 = vsel %vm1340, %v1394, %v1395
          %v1397 = vrot.slane %v1266, 5
          %v1398 = vrot.slane %v1397, 4
          %v1399 = vrot.slane %v1267, 5
          %v1400 = vsel %vm1340, %v1398, %v1399
          %v1401 = vrot.slane %v1399, 4
          %v1402 = vrot.slane %v1268, 5
          %v1403 = vsel %vm1340, %v1401, %v1402
          %v1404 = vrot.slane %v1269, 5
          %v1405 = vrot.slane %v1404, 4
          %v1406 = vrot.slane %v1270, 5
          %v1407 = vsel %vm1340, %v1405, %v1406
          %v1408 = vrot.slane %v1406, 4
          %v1409 = vrot.slane %v1271, 5
          %v1410 = vsel %vm1340, %v1408, %v1409
          %v1411 = vrot.slane %v1272, 5
          %v1412 = vrot.slane %v1411, 4
          %v1413 = vrot.slane %v1273, 5
          %v1414 = vsel %vm1340, %v1412, %v1413
          %v1415 = vrot.slane %v1413, 4
          %v1416 = vrot.slane %v1274, 5
          %v1417 = vsel %vm1340, %v1415, %v1416
          %v1418 = vrot.slane %v1275, 5
          %v1419 = vrot.slane %v1418, 4
          %v1420 = vrot.slane %v1276, 5
          %v1421 = vsel %vm1340, %v1419, %v1420
          %v1422 = vrot.slane %v1420, 4
          %v1423 = vrot.slane %v1277, 5
          %v1424 = vsel %vm1340, %v1422, %v1423
          %v1425 = vrot.slane %v1278, 5
          %v1426 = vrot.slane %v1425, 4
          %v1427 = vrot.slane %v1279, 5
          %v1428 = vsel %vm1340, %v1426, %v1427
          %v1429 = vrot.slane %v1427, 4
          %v1430 = vrot.slane %v1280, 5
          %v1431 = vsel %vm1340, %v1429, %v1430
          %v1432 = vrot.slane %v1281, 5
          %v1433 = vrot.slane %v1432, 4
          %v1434 = vrot.slane %v1282, 5
          %v1435 = vsel %vm1340, %v1433, %v1434
          %v1436 = vrot.slane %v1434, 4
          %v1437 = vrot.slane %v1283, 5
          %v1438 = vsel %vm1340, %v1436, %v1437
          %v1439 = vrot.slane %v1284, 5
          %v1440 = vrot.slane %v1439, 4
          %v1441 = vrot.slane %v1285, 5
          %v1442 = vsel %vm1340, %v1440, %v1441
          %v1443 = vrot.slane %v1441, 4
          %v1444 = vrot.slane %v1286, 5
          %v1445 = vsel %vm1340, %v1443, %v1444
          %v1446 = vrot.slane %v1287, 5
          %v1447 = vrot.slane %v1446, 4
          %v1448 = vrot.slane %v1288, 5
          %v1449 = vsel %vm1340, %v1447, %v1448
          %v1450 = vrot.slane %v1448, 4
          %v1451 = vrot.slane %v1289, 5
          %v1452 = vsel %vm1340, %v1450, %v1451
          %v1453 = vunpack.c.l.b16 %v1344
          %v1454 = vunpack.c.l.b16 %v1347
          %v1455 = vunpack.c.l.b16 %v1351
          %v1456 = vunpack.c.l.b16 %v1354
          %v1457 = vunpack.c.l.b16 %v1358
          %v1458 = vunpack.c.l.b16 %v1361
          %v1459 = vunpack.c.l.b16 %v1365
          %v1460 = vunpack.c.l.b16 %v1368
          %v1461 = vunpack.c.l.b16 %v1372
          %v1462 = vunpack.c.l.b16 %v1375
          %v1463 = vunpack.c.l.b16 %v1379
          %v1464 = vunpack.c.l.b16 %v1382
          %v1465 = vunpack.c.l.b16 %v1386
          %v1466 = vunpack.c.l.b16 %v1389
          %v1467 = vunpack.c.l.b16 %v1393
          %v1468 = vunpack.c.l.b16 %v1396
          %v1469 = vunpack.c.l.b16 %v1400
          %v1470 = vunpack.c.l.b16 %v1403
          %v1471 = vunpack.c.l.b16 %v1407
          %v1472 = vunpack.c.l.b16 %v1410
          %v1473 = vunpack.c.l.b16 %v1414
          %v1474 = vunpack.c.l.b16 %v1417
          %v1475 = vunpack.c.l.b16 %v1421
          %v1476 = vunpack.c.l.b16 %v1424
          %v1477 = vunpack.c.l.b16 %v1428
          %v1478 = vunpack.c.l.b16 %v1431
          %v1479 = vunpack.c.l.b16 %v1435
          %v1480 = vunpack.c.l.b16 %v1438
          %v1481 = vunpack.c.l.b16 %v1442
          %v1482 = vunpack.c.l.b16 %v1445
          %v1483 = vunpack.c.l.b16 %v1449
          %v1484 = vunpack.c.l.b16 %v1452
          %v1485 = vpack.c.b16 %v1454, %v1453
          %v1486 = vpack.c.b16 %v1456, %v1455
          %v1487 = vpack.c.b16 %v1458, %v1457
          %v1488 = vpack.c.b16 %v1460, %v1459
          %v1489 = vpack.c.b16 %v1462, %v1461
          %v1490 = vpack.c.b16 %v1464, %v1463
          %v1491 = vpack.c.b16 %v1466, %v1465
          %v1492 = vpack.c.b16 %v1468, %v1467
          %v1493 = vpack.c.b16 %v1470, %v1469
          %v1494 = vpack.c.b16 %v1472, %v1471
          %v1495 = vpack.c.b16 %v1474, %v1473
          %v1496 = vpack.c.b16 %v1476, %v1475
          %v1497 = vpack.c.b16 %v1478, %v1477
          %v1498 = vpack.c.b16 %v1480, %v1479
          %v1499 = vpack.c.b16 %v1482, %v1481
          %v1500 = vpack.c.b16 %v1484, %v1483
          %1501 = vrot.lane.b32.xlu0 %v1485, 6
          %v1502 = vpop.permute.xlu0 %1501
          %1503 = vrot.lane.b32.xlu0 %v1486, 6
          %v1504 = vpop.permute.xlu0 %1503
          %1505 = vrot.lane.b32.xlu0 %v1487, 6
          %v1506 = vpop.permute.xlu0 %1505
          %1507 = vrot.lane.b32.xlu0 %v1488, 6
          %v1508 = vpop.permute.xlu0 %1507
          %1509 = vrot.lane.b32.xlu0 %v1489, 6
          %v1510 = vpop.permute.xlu0 %1509
          %1511 = vrot.lane.b32.xlu0 %v1490, 6
          %v1512 = vpop.permute.xlu0 %1511
          %1513 = vrot.lane.b32.xlu0 %v1491, 6
          %v1514 = vpop.permute.xlu0 %1513
          %1515 = vrot.lane.b32.xlu0 %v1492, 6
          %v1516 = vpop.permute.xlu0 %1515
          %1517 = vrot.lane.b32.xlu0 %v1493, 6
          %v1518 = vpop.permute.xlu0 %1517
          %1519 = vrot.lane.b32.xlu0 %v1494, 6
          %v1520 = vpop.permute.xlu0 %1519
          %1521 = vrot.lane.b32.xlu0 %v1495, 6
          %v1522 = vpop.permute.xlu0 %1521
          %1523 = vrot.lane.b32.xlu0 %v1496, 6
          %v1524 = vpop.permute.xlu0 %1523
          %1525 = vrot.lane.b32.xlu0 %v1497, 6
          %v1526 = vpop.permute.xlu0 %1525
          %1527 = vrot.lane.b32.xlu0 %v1498, 6
          %v1528 = vpop.permute.xlu0 %1527
          %1529 = vrot.lane.b32.xlu0 %v1499, 6
          %v1530 = vpop.permute.xlu0 %1529
          %1531 = vrot.lane.b32.xlu0 %v1500, 6
          %v1532 = vpop.permute.xlu0 %1531
          %vm1549 = vcmask 72752
          %1550 = vst.msk [vmem:[#allocation3] sm:$0xff] %vm1549, %v1502
          %1551 = vst.msk [vmem:[#allocation3 + $0x8] sm:$0xff] %vm1549, %v1504
          %1552 = vst.msk [vmem:[#allocation3 + $0x10] sm:$0xff] %vm1549, %v1506
          %1553 = vst.msk [vmem:[#allocation3 + $0x18] sm:$0xff] %vm1549, %v1508
          %1554 = vst.msk [vmem:[#allocation3 + $0x20] sm:$0xff] %vm1549, %v1510
          %1555 = vst.msk [vmem:[#allocation3 + $0x28] sm:$0xff] %vm1549, %v1512
          %1556 = vst.msk [vmem:[#allocation3 + $0x30] sm:$0xff] %vm1549, %v1514
          %1557 = vst.msk [vmem:[#allocation3 + $0x38] sm:$0xff] %vm1549, %v1516
          %1558 = vst.msk [vmem:[#allocation3 + $0x40] sm:$0xff] %vm1549, %v1518
          %1559 = vst.msk [vmem:[#allocation3 + $0x48] sm:$0xff] %vm1549, %v1520
          %1560 = vst.msk [vmem:[#allocation3 + $0x50] sm:$0xff] %vm1549, %v1522
          %1561 = vst.msk [vmem:[#allocation3 + $0x58] sm:$0xff] %vm1549, %v1524
          %1562 = vst.msk [vmem:[#allocation3 + $0x60] sm:$0xff] %vm1549, %v1526
          %1563 = vst.msk [vmem:[#allocation3 + $0x68] sm:$0xff] %vm1549, %v1528
          %1564 = vst.msk [vmem:[#allocation3 + $0x70] sm:$0xff] %vm1549, %v1530
          %1565 = vst.msk [vmem:[#allocation3 + $0x78] sm:$0xff] %vm1549, %v1532
          %v1566 = vld [vmem:[%s548] sm:$0xe]
          %v1567 = vld [vmem:[%s548 + $0x4] sm:$0xf]
          %v1568 = vld [vmem:[%s548 + $0x8] sm:$0x3]
          %v1569 = vld [vmem:[%s548 + $0xc] sm:$0xe]
          %v1570 = vld [vmem:[%s548 + $0x10] sm:$0xf]
          %v1571 = vld [vmem:[%s548 + $0x14] sm:$0x3]
          %v1572 = vld [vmem:[%s548 + $0x18] sm:$0xe]
          %v1573 = vld [vmem:[%s548 + $0x1c] sm:$0xf]
          %v1574 = vld [vmem:[%s548 + $0x20] sm:$0x3]
          %v1575 = vld [vmem:[%s548 + $0x24] sm:$0xe]
          %v1576 = vld [vmem:[%s548 + $0x28] sm:$0xf]
          %v1577 = vld [vmem:[%s548 + $0x2c] sm:$0x3]
          %v1578 = vld [vmem:[%s548 + $0x30] sm:$0xe]
          %v1579 = vld [vmem:[%s548 + $0x34] sm:$0xf]
          %v1580 = vld [vmem:[%s548 + $0x38] sm:$0x3]
          %v1581 = vld [vmem:[%s548 + $0x3c] sm:$0xe]
          %v1582 = vld [vmem:[%s548 + $0x40] sm:$0xf]
          %v1583 = vld [vmem:[%s548 + $0x44] sm:$0x3]
          %v1584 = vld [vmem:[%s548 + $0x48] sm:$0xe]
          %v1585 = vld [vmem:[%s548 + $0x4c] sm:$0xf]
          %v1586 = vld [vmem:[%s548 + $0x50] sm:$0x3]
          %v1587 = vld [vmem:[%s548 + $0x54] sm:$0xe]
          %v1588 = vld [vmem:[%s548 + $0x58] sm:$0xf]
          %v1589 = vld [vmem:[%s548 + $0x5c] sm:$0x3]
          %v1590 = vld [vmem:[%s548 + $0x60] sm:$0xe]
          %v1591 = vld [vmem:[%s548 + $0x64] sm:$0xf]
          %v1592 = vld [vmem:[%s548 + $0x68] sm:$0x3]
          %v1593 = vld [vmem:[%s548 + $0x6c] sm:$0xe]
          %v1594 = vld [vmem:[%s548 + $0x70] sm:$0xf]
          %v1595 = vld [vmem:[%s548 + $0x74] sm:$0x3]
          %v1596 = vld [vmem:[%s548 + $0x78] sm:$0xe]
          %v1597 = vld [vmem:[%s548 + $0x7c] sm:$0xf]
          %v1598 = vld [vmem:[%s548 + $0x80] sm:$0x3]
          %v1599 = vld [vmem:[%s548 + $0x84] sm:$0xe]
          %v1600 = vld [vmem:[%s548 + $0x88] sm:$0xf]
          %v1601 = vld [vmem:[%s548 + $0x8c] sm:$0x3]
          %v1602 = vld [vmem:[%s548 + $0x90] sm:$0xe]
          %v1603 = vld [vmem:[%s548 + $0x94] sm:$0xf]
          %v1604 = vld [vmem:[%s548 + $0x98] sm:$0x3]
          %v1605 = vld [vmem:[%s548 + $0x9c] sm:$0xe]
          %v1606 = vld [vmem:[%s548 + $0xa0] sm:$0xf]
          %v1607 = vld [vmem:[%s548 + $0xa4] sm:$0x3]
          %v1608 = vld [vmem:[%s548 + $0xa8] sm:$0xe]
          %v1609 = vld [vmem:[%s548 + $0xac] sm:$0xf]
          %v1610 = vld [vmem:[%s548 + $0xb0] sm:$0x3]
          %v1611 = vld [vmem:[%s548 + $0xb4] sm:$0xe]
          %v1612 = vld [vmem:[%s548 + $0xb8] sm:$0xf]
          %v1613 = vld [vmem:[%s548 + $0xbc] sm:$0x3]
          %vm1614 = vsmask.f32 2304
          %vm1615 = vsmask.f32 6416
          %vm1616 = vmor %vm1614, %vm1615
          %v1618 = vshrl.u32 %v1566, 16
          %v1620 = vrot.slane %v1618, 5
          %v1621 = vshll.u32 %v1566, 16
          %v1623 = vrot.slane %v1621, 6
          %v1624 = vor.u32 %v1620, %v1623
          %v1625 = vrot.slane %v1624, 4
          %v1627 = vshrl.u32 %v1567, 16
          %v1629 = vrot.slane %v1627, 5
          %v1630 = vshll.u32 %v1567, 16
          %v1632 = vrot.slane %v1630, 6
          %v1633 = vor.u32 %v1629, %v1632
          %v1634 = vsel %vm1616, %v1625, %v1633
          %v1635 = vrot.slane %v1633, 4
          %v1637 = vshrl.u32 %v1568, 16
          %v1639 = vrot.slane %v1637, 5
          %v1640 = vshll.u32 %v1568, 16
          %v1642 = vrot.slane %v1640, 6
          %v1643 = vor.u32 %v1639, %v1642
          %v1644 = vsel %vm1616, %v1635, %v1643
          %v1646 = vshrl.u32 %v1569, 16
          %v1648 = vrot.slane %v1646, 5
          %v1649 = vshll.u32 %v1569, 16
          %v1651 = vrot.slane %v1649, 6
          %v1652 = vor.u32 %v1648, %v1651
          %v1653 = vrot.slane %v1652, 4
          %v1655 = vshrl.u32 %v1570, 16
          %v1657 = vrot.slane %v1655, 5
          %v1658 = vshll.u32 %v1570, 16
          %v1660 = vrot.slane %v1658, 6
          %v1661 = vor.u32 %v1657, %v1660
          %v1662 = vsel %vm1616, %v1653, %v1661
          %v1663 = vrot.slane %v1661, 4
          %v1665 = vshrl.u32 %v1571, 16
          %v1667 = vrot.slane %v1665, 5
          %v1668 = vshll.u32 %v1571, 16
          %v1670 = vrot.slane %v1668, 6
          %v1671 = vor.u32 %v1667, %v1670
          %v1672 = vsel %vm1616, %v1663, %v1671
          %v1674 = vshrl.u32 %v1572, 16
          %v1676 = vrot.slane %v1674, 5
          %v1677 = vshll.u32 %v1572, 16
          %v1679 = vrot.slane %v1677, 6
          %v1680 = vor.u32 %v1676, %v1679
          %v1681 = vrot.slane %v1680, 4
          %v1683 = vshrl.u32 %v1573, 16
          %v1685 = vrot.slane %v1683, 5
          %v1686 = vshll.u32 %v1573, 16
          %v1688 = vrot.slane %v1686, 6
          %v1689 = vor.u32 %v1685, %v1688
          %v1690 = vsel %vm1616, %v1681, %v1689
          %v1691 = vrot.slane %v1689, 4
          %v1693 = vshrl.u32 %v1574, 16
          %v1695 = vrot.slane %v1693, 5
          %v1696 = vshll.u32 %v1574, 16
          %v1698 = vrot.slane %v1696, 6
          %v1699 = vor.u32 %v1695, %v1698
          %v1700 = vsel %vm1616, %v1691, %v1699
          %v1702 = vshrl.u32 %v1575, 16
          %v1704 = vrot.slane %v1702, 5
          %v1705 = vshll.u32 %v1575, 16
          %v1707 = vrot.slane %v1705, 6
          %v1708 = vor.u32 %v1704, %v1707
          %v1709 = vrot.slane %v1708, 4
          %v1711 = vshrl.u32 %v1576, 16
          %v1713 = vrot.slane %v1711, 5
          %v1714 = vshll.u32 %v1576, 16
          %v1716 = vrot.slane %v1714, 6
          %v1717 = vor.u32 %v1713, %v1716
          %v1718 = vsel %vm1616, %v1709, %v1717
          %v1719 = vrot.slane %v1717, 4
          %v1721 = vshrl.u32 %v1577, 16
          %v1723 = vrot.slane %v1721, 5
          %v1724 = vshll.u32 %v1577, 16
          %v1726 = vrot.slane %v1724, 6
          %v1727 = vor.u32 %v1723, %v1726
          %v1728 = vsel %vm1616, %v1719, %v1727
          %v1730 = vshrl.u32 %v1578, 16
          %v1732 = vrot.slane %v1730, 5
          %v1733 = vshll.u32 %v1578, 16
          %v1735 = vrot.slane %v1733, 6
          %v1736 = vor.u32 %v1732, %v1735
          %v1737 = vrot.slane %v1736, 4
          %v1739 = vshrl.u32 %v1579, 16
          %v1741 = vrot.slane %v1739, 5
          %v1742 = vshll.u32 %v1579, 16
          %v1744 = vrot.slane %v1742, 6
          %v1745 = vor.u32 %v1741, %v1744
          %v1746 = vsel %vm1616, %v1737, %v1745
          %v1747 = vrot.slane %v1745, 4
          %v1749 = vshrl.u32 %v1580, 16
          %v1751 = vrot.slane %v1749, 5
          %v1752 = vshll.u32 %v1580, 16
          %v1754 = vrot.slane %v1752, 6
          %v1755 = vor.u32 %v1751, %v1754
          %v1756 = vsel %vm1616, %v1747, %v1755
          %v1758 = vshrl.u32 %v1581, 16
          %v1760 = vrot.slane %v1758, 5
          %v1761 = vshll.u32 %v1581, 16
          %v1763 = vrot.slane %v1761, 6
          %v1764 = vor.u32 %v1760, %v1763
          %v1765 = vrot.slane %v1764, 4
          %v1767 = vshrl.u32 %v1582, 16
          %v1769 = vrot.slane %v1767, 5
          %v1770 = vshll.u32 %v1582, 16
          %v1772 = vrot.slane %v1770, 6
          %v1773 = vor.u32 %v1769, %v1772
          %v1774 = vsel %vm1616, %v1765, %v1773
          %v1775 = vrot.slane %v1773, 4
          %v1777 = vshrl.u32 %v1583, 16
          %v1779 = vrot.slane %v1777, 5
          %v1780 = vshll.u32 %v1583, 16
          %v1782 = vrot.slane %v1780, 6
          %v1783 = vor.u32 %v1779, %v1782
          %v1784 = vsel %vm1616, %v1775, %v1783
          %v1786 = vshrl.u32 %v1584, 16
          %v1788 = vrot.slane %v1786, 5
          %v1789 = vshll.u32 %v1584, 16
          %v1791 = vrot.slane %v1789, 6
          %v1792 = vor.u32 %v1788, %v1791
          %v1793 = vrot.slane %v1792, 4
          %v1795 = vshrl.u32 %v1585, 16
          %v1797 = vrot.slane %v1795, 5
          %v1798 = vshll.u32 %v1585, 16
          %v1800 = vrot.slane %v1798, 6
          %v1801 = vor.u32 %v1797, %v1800
          %v1802 = vsel %vm1616, %v1793, %v1801
          %v1803 = vrot.slane %v1801, 4
          %v1805 = vshrl.u32 %v1586, 16
          %v1807 = vrot.slane %v1805, 5
          %v1808 = vshll.u32 %v1586, 16
          %v1810 = vrot.slane %v1808, 6
          %v1811 = vor.u32 %v1807, %v1810
          %v1812 = vsel %vm1616, %v1803, %v1811
          %v1814 = vshrl.u32 %v1587, 16
          %v1816 = vrot.slane %v1814, 5
          %v1817 = vshll.u32 %v1587, 16
          %v1819 = vrot.slane %v1817, 6
          %v1820 = vor.u32 %v1816, %v1819
          %v1821 = vrot.slane %v1820, 4
          %v1823 = vshrl.u32 %v1588, 16
          %v1825 = vrot.slane %v1823, 5
          %v1826 = vshll.u32 %v1588, 16
          %v1828 = vrot.slane %v1826, 6
          %v1829 = vor.u32 %v1825, %v1828
          %v1830 = vsel %vm1616, %v1821, %v1829
          %v1831 = vrot.slane %v1829, 4
          %v1833 = vshrl.u32 %v1589, 16
          %v1835 = vrot.slane %v1833, 5
          %v1836 = vshll.u32 %v1589, 16
          %v1838 = vrot.slane %v1836, 6
          %v1839 = vor.u32 %v1835, %v1838
          %v1840 = vsel %vm1616, %v1831, %v1839
          %v1842 = vshrl.u32 %v1590, 16
          %v1844 = vrot.slane %v1842, 5
          %v1845 = vshll.u32 %v1590, 16
          %v1847 = vrot.slane %v1845, 6
          %v1848 = vor.u32 %v1844, %v1847
          %v1849 = vrot.slane %v1848, 4
          %v1851 = vshrl.u32 %v1591, 16
          %v1853 = vrot.slane %v1851, 5
          %v1854 = vshll.u32 %v1591, 16
          %v1856 = vrot.slane %v1854, 6
          %v1857 = vor.u32 %v1853, %v1856
          %v1858 = vsel %vm1616, %v1849, %v1857
          %v1859 = vrot.slane %v1857, 4
          %v1861 = vshrl.u32 %v1592, 16
          %v1863 = vrot.slane %v1861, 5
          %v1864 = vshll.u32 %v1592, 16
          %v1866 = vrot.slane %v1864, 6
          %v1867 = vor.u32 %v1863, %v1866
          %v1868 = vsel %vm1616, %v1859, %v1867
          %v1870 = vshrl.u32 %v1593, 16
          %v1872 = vrot.slane %v1870, 5
          %v1873 = vshll.u32 %v1593, 16
          %v1875 = vrot.slane %v1873, 6
          %v1876 = vor.u32 %v1872, %v1875
          %v1877 = vrot.slane %v1876, 4
          %v1879 = vshrl.u32 %v1594, 16
          %v1881 = vrot.slane %v1879, 5
          %v1882 = vshll.u32 %v1594, 16
          %v1884 = vrot.slane %v1882, 6
          %v1885 = vor.u32 %v1881, %v1884
          %v1886 = vsel %vm1616, %v1877, %v1885
          %v1887 = vrot.slane %v1885, 4
          %v1889 = vshrl.u32 %v1595, 16
          %v1891 = vrot.slane %v1889, 5
          %v1892 = vshll.u32 %v1595, 16
          %v1894 = vrot.slane %v1892, 6
          %v1895 = vor.u32 %v1891, %v1894
          %v1896 = vsel %vm1616, %v1887, %v1895
          %v1898 = vshrl.u32 %v1596, 16
          %v1900 = vrot.slane %v1898, 5
          %v1901 = vshll.u32 %v1596, 16
          %v1903 = vrot.slane %v1901, 6
          %v1904 = vor.u32 %v1900, %v1903
          %v1905 = vrot.slane %v1904, 4
          %v1907 = vshrl.u32 %v1597, 16
          %v1909 = vrot.slane %v1907, 5
          %v1910 = vshll.u32 %v1597, 16
          %v1912 = vrot.slane %v1910, 6
          %v1913 = vor.u32 %v1909, %v1912
          %v1914 = vsel %vm1616, %v1905, %v1913
          %v1915 = vrot.slane %v1913, 4
          %v1917 = vshrl.u32 %v1598, 16
          %v1919 = vrot.slane %v1917, 5
          %v1920 = vshll.u32 %v1598, 16
          %v1922 = vrot.slane %v1920, 6
          %v1923 = vor.u32 %v1919, %v1922
          %v1924 = vsel %vm1616, %v1915, %v1923
          %v1926 = vshrl.u32 %v1599, 16
          %v1928 = vrot.slane %v1926, 5
          %v1929 = vshll.u32 %v1599, 16
          %v1931 = vrot.slane %v1929, 6
          %v1932 = vor.u32 %v1928, %v1931
          %v1933 = vrot.slane %v1932, 4
          %v1935 = vshrl.u32 %v1600, 16
          %v1937 = vrot.slane %v1935, 5
          %v1938 = vshll.u32 %v1600, 16
          %v1940 = vrot.slane %v1938, 6
          %v1941 = vor.u32 %v1937, %v1940
          %v1942 = vsel %vm1616, %v1933, %v1941
          %v1943 = vrot.slane %v1941, 4
          %v1945 = vshrl.u32 %v1601, 16
          %v1947 = vrot.slane %v1945, 5
          %v1948 = vshll.u32 %v1601, 16
          %v1950 = vrot.slane %v1948, 6
          %v1951 = vor.u32 %v1947, %v1950
          %v1952 = vsel %vm1616, %v1943, %v1951
          %v1954 = vshrl.u32 %v1602, 16
          %v1956 = vrot.slane %v1954, 5
          %v1957 = vshll.u32 %v1602, 16
          %v1959 = vrot.slane %v1957, 6
          %v1960 = vor.u32 %v1956, %v1959
          %v1961 = vrot.slane %v1960, 4
          %v1963 = vshrl.u32 %v1603, 16
          %v1965 = vrot.slane %v1963, 5
          %v1966 = vshll.u32 %v1603, 16
          %v1968 = vrot.slane %v1966, 6
          %v1969 = vor.u32 %v1965, %v1968
          %v1970 = vsel %vm1616, %v1961, %v1969
          %v1971 = vrot.slane %v1969, 4
          %v1973 = vshrl.u32 %v1604, 16
          %v1975 = vrot.slane %v1973, 5
          %v1976 = vshll.u32 %v1604, 16
          %v1978 = vrot.slane %v1976, 6
          %v1979 = vor.u32 %v1975, %v1978
          %v1980 = vsel %vm1616, %v1971, %v1979
          %v1982 = vshrl.u32 %v1605, 16
          %v1984 = vrot.slane %v1982, 5
          %v1985 = vshll.u32 %v1605, 16
          %v1987 = vrot.slane %v1985, 6
          %v1988 = vor.u32 %v1984, %v1987
          %v1989 = vrot.slane %v1988, 4
          %v1991 = vshrl.u32 %v1606, 16
          %v1993 = vrot.slane %v1991, 5
          %v1994 = vshll.u32 %v1606, 16
          %v1996 = vrot.slane %v1994, 6
          %v1997 = vor.u32 %v1993, %v1996
          %v1998 = vsel %vm1616, %v1989, %v1997
          %v1999 = vrot.slane %v1997, 4
          %v2001 = vshrl.u32 %v1607, 16
          %v2003 = vrot.slane %v2001, 5
          %v2004 = vshll.u32 %v1607, 16
          %v2006 = vrot.slane %v2004, 6
          %v2007 = vor.u32 %v2003, %v2006
          %v2008 = vsel %vm1616, %v1999, %v2007
          %v2010 = vshrl.u32 %v1608, 16
          %v2012 = vrot.slane %v2010, 5
          %v2013 = vshll.u32 %v1608, 16
          %v2015 = vrot.slane %v2013, 6
          %v2016 = vor.u32 %v2012, %v2015
          %v2017 = vrot.slane %v2016, 4
          %v2019 = vshrl.u32 %v1609, 16
          %v2021 = vrot.slane %v2019, 5
          %v2022 = vshll.u32 %v1609, 16
          %v2024 = vrot.slane %v2022, 6
          %v2025 = vor.u32 %v2021, %v2024
          %v2026 = vsel %vm1616, %v2017, %v2025
          %v2027 = vrot.slane %v2025, 4
          %v2029 = vshrl.u32 %v1610, 16
          %v2031 = vrot.slane %v2029, 5
          %v2032 = vshll.u32 %v1610, 16
          %v2034 = vrot.slane %v2032, 6
          %v2035 = vor.u32 %v2031, %v2034
          %v2036 = vsel %vm1616, %v2027, %v2035
          %v2038 = vshrl.u32 %v1611, 16
          %v2040 = vrot.slane %v2038, 5
          %v2041 = vshll.u32 %v1611, 16
          %v2043 = vrot.slane %v2041, 6
          %v2044 = vor.u32 %v2040, %v2043
          %v2045 = vrot.slane %v2044, 4
          %v2047 = vshrl.u32 %v1612, 16
          %v2049 = vrot.slane %v2047, 5
          %v2050 = vshll.u32 %v1612, 16
          %v2052 = vrot.slane %v2050, 6
          %v2053 = vor.u32 %v2049, %v2052
          %v2054 = vsel %vm1616, %v2045, %v2053
          %v2055 = vrot.slane %v2053, 4
          %v2057 = vshrl.u32 %v1613, 16
          %v2059 = vrot.slane %v2057, 5
          %v2060 = vshll.u32 %v1613, 16
          %v2062 = vrot.slane %v2060, 6
          %v2063 = vor.u32 %v2059, %v2062
          %v2064 = vsel %vm1616, %v2055, %v2063
          %v2065 = vunpack.c.l.b16 %v1634
          %v2066 = vunpack.c.l.b16 %v1644
          %v2067 = vunpack.c.l.b16 %v1662
          %v2068 = vunpack.c.l.b16 %v1672
          %v2069 = vunpack.c.l.b16 %v1690
          %v2070 = vunpack.c.l.b16 %v1700
          %v2071 = vunpack.c.l.b16 %v1718
          %v2072 = vunpack.c.l.b16 %v1728
          %v2073 = vunpack.c.l.b16 %v1746
          %v2074 = vunpack.c.l.b16 %v1756
          %v2075 = vunpack.c.l.b16 %v1774
          %v2076 = vunpack.c.l.b16 %v1784
          %v2077 = vunpack.c.l.b16 %v1802
          %v2078 = vunpack.c.l.b16 %v1812
          %v2079 = vunpack.c.l.b16 %v1830
          %v2080 = vunpack.c.l.b16 %v1840
          %v2081 = vunpack.c.l.b16 %v1858
          %v2082 = vunpack.c.l.b16 %v1868
          %v2083 = vunpack.c.l.b16 %v1886
          %v2084 = vunpack.c.l.b16 %v1896
          %v2085 = vunpack.c.l.b16 %v1914
          %v2086 = vunpack.c.l.b16 %v1924
          %v2087 = vunpack.c.l.b16 %v1942
          %v2088 = vunpack.c.l.b16 %v1952
          %v2089 = vunpack.c.l.b16 %v1970
          %v2090 = vunpack.c.l.b16 %v1980
          %v2091 = vunpack.c.l.b16 %v1998
          %v2092 = vunpack.c.l.b16 %v2008
          %v2093 = vunpack.c.l.b16 %v2026
          %v2094 = vunpack.c.l.b16 %v2036
          %v2095 = vunpack.c.l.b16 %v2054
          %v2096 = vunpack.c.l.b16 %v2064
          %v2097 = vpack.c.b16 %v2066, %v2065
          %v2098 = vpack.c.b16 %v2068, %v2067
          %v2099 = vpack.c.b16 %v2070, %v2069
          %v2100 = vpack.c.b16 %v2072, %v2071
          %v2101 = vpack.c.b16 %v2074, %v2073
          %v2102 = vpack.c.b16 %v2076, %v2075
          %v2103 = vpack.c.b16 %v2078, %v2077
          %v2104 = vpack.c.b16 %v2080, %v2079
          %v2105 = vpack.c.b16 %v2082, %v2081
          %v2106 = vpack.c.b16 %v2084, %v2083
          %v2107 = vpack.c.b16 %v2086, %v2085
          %v2108 = vpack.c.b16 %v2088, %v2087
          %v2109 = vpack.c.b16 %v2090, %v2089
          %v2110 = vpack.c.b16 %v2092, %v2091
          %v2111 = vpack.c.b16 %v2094, %v2093
          %v2112 = vpack.c.b16 %v2096, %v2095
          %2113 = vrot.lane.b32.xlu0 %v2097, 9
          %v2114 = vpop.permute.xlu0 %2113
          %2115 = vrot.lane.b32.xlu0 %v2098, 9
          %v2116 = vpop.permute.xlu0 %2115
          %2117 = vrot.lane.b32.xlu0 %v2099, 9
          %v2118 = vpop.permute.xlu0 %2117
          %2119 = vrot.lane.b32.xlu0 %v2100, 9
          %v2120 = vpop.permute.xlu0 %2119
          %2121 = vrot.lane.b32.xlu0 %v2101, 9
          %v2122 = vpop.permute.xlu0 %2121
          %2123 = vrot.lane.b32.xlu0 %v2102, 9
          %v2124 = vpop.permute.xlu0 %2123
          %2125 = vrot.lane.b32.xlu0 %v2103, 9
          %v2126 = vpop.permute.xlu0 %2125
          %2127 = vrot.lane.b32.xlu0 %v2104, 9
          %v2128 = vpop.permute.xlu0 %2127
          %2129 = vrot.lane.b32.xlu0 %v2105, 9
          %v2130 = vpop.permute.xlu0 %2129
          %2131 = vrot.lane.b32.xlu0 %v2106, 9
          %v2132 = vpop.permute.xlu0 %2131
          %2133 = vrot.lane.b32.xlu0 %v2107, 9
          %v2134 = vpop.permute.xlu0 %2133
          %2135 = vrot.lane.b32.xlu0 %v2108, 9
          %v2136 = vpop.permute.xlu0 %2135
          %2137 = vrot.lane.b32.xlu0 %v2109, 9
          %v2138 = vpop.permute.xlu0 %2137
          %2139 = vrot.lane.b32.xlu0 %v2110, 9
          %v2140 = vpop.permute.xlu0 %2139
          %2141 = vrot.lane.b32.xlu0 %v2111, 9
          %v2142 = vpop.permute.xlu0 %2141
          %2143 = vrot.lane.b32.xlu0 %v2112, 9
          %v2144 = vpop.permute.xlu0 %2143
          %vm2161 = vcmask 97352
          %2162 = vst.msk [vmem:[#allocation3] sm:$0xff] %vm2161, %v2114
          %2163 = vst.msk [vmem:[#allocation3 + $0x8] sm:$0xff] %vm2161, %v2116
          %2164 = vst.msk [vmem:[#allocation3 + $0x10] sm:$0xff] %vm2161, %v2118
          %2165 = vst.msk [vmem:[#allocation3 + $0x18] sm:$0xff] %vm2161, %v2120
          %2166 = vst.msk [vmem:[#allocation3 + $0x20] sm:$0xff] %vm2161, %v2122
          %2167 = vst.msk [vmem:[#allocation3 + $0x28] sm:$0xff] %vm2161, %v2124
          %2168 = vst.msk [vmem:[#allocation3 + $0x30] sm:$0xff] %vm2161, %v2126
          %2169 = vst.msk [vmem:[#allocation3 + $0x38] sm:$0xff] %vm2161, %v2128
          %2170 = vst.msk [vmem:[#allocation3 + $0x40] sm:$0xff] %vm2161, %v2130
          %2171 = vst.msk [vmem:[#allocation3 + $0x48] sm:$0xff] %vm2161, %v2132
          %2172 = vst.msk [vmem:[#allocation3 + $0x50] sm:$0xff] %vm2161, %v2134
          %2173 = vst.msk [vmem:[#allocation3 + $0x58] sm:$0xff] %vm2161, %v2136
          %2174 = vst.msk [vmem:[#allocation3 + $0x60] sm:$0xff] %vm2161, %v2138
          %2175 = vst.msk [vmem:[#allocation3 + $0x68] sm:$0xff] %vm2161, %v2140
          %2176 = vst.msk [vmem:[#allocation3 + $0x70] sm:$0xff] %vm2161, %v2142
          %2177 = vst.msk [vmem:[#allocation3 + $0x78] sm:$0xff] %vm2161, %v2144
          %v2178 = vld [vmem:[%s548] sm:$0xc]
          %v2179 = vld [vmem:[%s548 + $0x4] sm:$0xf]
          %v2180 = vld [vmem:[%s548 + $0x8] sm:$0x3]
          %v2181 = vld [vmem:[%s548 + $0xc] sm:$0xc]
          %v2182 = vld [vmem:[%s548 + $0x10] sm:$0xf]
          %v2183 = vld [vmem:[%s548 + $0x14] sm:$0x3]
          %v2184 = vld [vmem:[%s548 + $0x18] sm:$0xc]
          %v2185 = vld [vmem:[%s548 + $0x1c] sm:$0xf]
          %v2186 = vld [vmem:[%s548 + $0x20] sm:$0x3]
          %v2187 = vld [vmem:[%s548 + $0x24] sm:$0xc]
          %v2188 = vld [vmem:[%s548 + $0x28] sm:$0xf]
          %v2189 = vld [vmem:[%s548 + $0x2c] sm:$0x3]
          %v2190 = vld [vmem:[%s548 + $0x30] sm:$0xc]
          %v2191 = vld [vmem:[%s548 + $0x34] sm:$0xf]
          %v2192 = vld [vmem:[%s548 + $0x38] sm:$0x3]
          %v2193 = vld [vmem:[%s548 + $0x3c] sm:$0xc]
          %v2194 = vld [vmem:[%s548 + $0x40] sm:$0xf]
          %v2195 = vld [vmem:[%s548 + $0x44] sm:$0x3]
          %v2196 = vld [vmem:[%s548 + $0x48] sm:$0xc]
          %v2197 = vld [vmem:[%s548 + $0x4c] sm:$0xf]
          %v2198 = vld [vmem:[%s548 + $0x50] sm:$0x3]
          %v2199 = vld [vmem:[%s548 + $0x54] sm:$0xc]
          %v2200 = vld [vmem:[%s548 + $0x58] sm:$0xf]
          %v2201 = vld [vmem:[%s548 + $0x5c] sm:$0x3]
          %v2202 = vld [vmem:[%s548 + $0x60] sm:$0xc]
          %v2203 = vld [vmem:[%s548 + $0x64] sm:$0xf]
          %v2204 = vld [vmem:[%s548 + $0x68] sm:$0x3]
          %v2205 = vld [vmem:[%s548 + $0x6c] sm:$0xc]
          %v2206 = vld [vmem:[%s548 + $0x70] sm:$0xf]
          %v2207 = vld [vmem:[%s548 + $0x74] sm:$0x3]
          %v2208 = vld [vmem:[%s548 + $0x78] sm:$0xc]
          %v2209 = vld [vmem:[%s548 + $0x7c] sm:$0xf]
          %v2210 = vld [vmem:[%s548 + $0x80] sm:$0x3]
          %v2211 = vld [vmem:[%s548 + $0x84] sm:$0xc]
          %v2212 = vld [vmem:[%s548 + $0x88] sm:$0xf]
          %v2213 = vld [vmem:[%s548 + $0x8c] sm:$0x3]
          %v2214 = vld [vmem:[%s548 + $0x90] sm:$0xc]
          %v2215 = vld [vmem:[%s548 + $0x94] sm:$0xf]
          %v2216 = vld [vmem:[%s548 + $0x98] sm:$0x3]
          %v2217 = vld [vmem:[%s548 + $0x9c] sm:$0xc]
          %v2218 = vld [vmem:[%s548 + $0xa0] sm:$0xf]
          %v2219 = vld [vmem:[%s548 + $0xa4] sm:$0x3]
          %v2220 = vld [vmem:[%s548 + $0xa8] sm:$0xc]
          %v2221 = vld [vmem:[%s548 + $0xac] sm:$0xf]
          %v2222 = vld [vmem:[%s548 + $0xb0] sm:$0x3]
          %v2223 = vld [vmem:[%s548 + $0xb4] sm:$0xc]
          %v2224 = vld [vmem:[%s548 + $0xb8] sm:$0xf]
          %v2225 = vld [vmem:[%s548 + $0xbc] sm:$0x3]
          %v2274 = vrot.slane %v2178, 6
          %v2275 = vrot.slane %v2274, 4
          %v2276 = vrot.slane %v2179, 6
          %v2277 = vsel %vm327, %v2275, %v2276
          %v2278 = vrot.slane %v2276, 4
          %v2279 = vrot.slane %v2180, 6
          %v2280 = vsel %vm327, %v2278, %v2279
          %v2281 = vrot.slane %v2181, 6
          %v2282 = vrot.slane %v2281, 4
          %v2283 = vrot.slane %v2182, 6
          %v2284 = vsel %vm327, %v2282, %v2283
          %v2285 = vrot.slane %v2283, 4
          %v2286 = vrot.slane %v2183, 6
          %v2287 = vsel %vm327, %v2285, %v2286
          %v2288 = vrot.slane %v2184, 6
          %v2289 = vrot.slane %v2288, 4
          %v2290 = vrot.slane %v2185, 6
          %v2291 = vsel %vm327, %v2289, %v2290
          %v2292 = vrot.slane %v2290, 4
          %v2293 = vrot.slane %v2186, 6
          %v2294 = vsel %vm327, %v2292, %v2293
          %v2295 = vrot.slane %v2187, 6
          %v2296 = vrot.slane %v2295, 4
          %v2297 = vrot.slane %v2188, 6
          %v2298 = vsel %vm327, %v2296, %v2297
          %v2299 = vrot.slane %v2297, 4
          %v2300 = vrot.slane %v2189, 6
          %v2301 = vsel %vm327, %v2299, %v2300
          %v2302 = vrot.slane %v2190, 6
          %v2303 = vrot.slane %v2302, 4
          %v2304 = vrot.slane %v2191, 6
          %v2305 = vsel %vm327, %v2303, %v2304
          %v2306 = vrot.slane %v2304, 4
          %v2307 = vrot.slane %v2192, 6
          %v2308 = vsel %vm327, %v2306, %v2307
          %v2309 = vrot.slane %v2193, 6
          %v2310 = vrot.slane %v2309, 4
          %v2311 = vrot.slane %v2194, 6
          %v2312 = vsel %vm327, %v2310, %v2311
          %v2313 = vrot.slane %v2311, 4
          %v2314 = vrot.slane %v2195, 6
          %v2315 = vsel %vm327, %v2313, %v2314
          %v2316 = vrot.slane %v2196, 6
          %v2317 = vrot.slane %v2316, 4
          %v2318 = vrot.slane %v2197, 6
          %v2319 = vsel %vm327, %v2317, %v2318
          %v2320 = vrot.slane %v2318, 4
          %v2321 = vrot.slane %v2198, 6
          %v2322 = vsel %vm327, %v2320, %v2321
          %v2323 = vrot.slane %v2199, 6
          %v2324 = vrot.slane %v2323, 4
          %v2325 = vrot.slane %v2200, 6
          %v2326 = vsel %vm327, %v2324, %v2325
          %v2327 = vrot.slane %v2325, 4
          %v2328 = vrot.slane %v2201, 6
          %v2329 = vsel %vm327, %v2327, %v2328
          %v2330 = vrot.slane %v2202, 6
          %v2331 = vrot.slane %v2330, 4
          %v2332 = vrot.slane %v2203, 6
          %v2333 = vsel %vm327, %v2331, %v2332
          %v2334 = vrot.slane %v2332, 4
          %v2335 = vrot.slane %v2204, 6
          %v2336 = vsel %vm327, %v2334, %v2335
          %v2337 = vrot.slane %v2205, 6
          %v2338 = vrot.slane %v2337, 4
          %v2339 = vrot.slane %v2206, 6
          %v2340 = vsel %vm327, %v2338, %v2339
          %v2341 = vrot.slane %v2339, 4
          %v2342 = vrot.slane %v2207, 6
          %v2343 = vsel %vm327, %v2341, %v2342
          %v2344 = vrot.slane %v2208, 6
          %v2345 = vrot.slane %v2344, 4
          %v2346 = vrot.slane %v2209, 6
          %v2347 = vsel %vm327, %v2345, %v2346
          %v2348 = vrot.slane %v2346, 4
          %v2349 = vrot.slane %v2210, 6
          %v2350 = vsel %vm327, %v2348, %v2349
          %v2351 = vrot.slane %v2211, 6
          %v2352 = vrot.slane %v2351, 4
          %v2353 = vrot.slane %v2212, 6
          %v2354 = vsel %vm327, %v2352, %v2353
          %v2355 = vrot.slane %v2353, 4
          %v2356 = vrot.slane %v2213, 6
          %v2357 = vsel %vm327, %v2355, %v2356
          %v2358 = vrot.slane %v2214, 6
          %v2359 = vrot.slane %v2358, 4
          %v2360 = vrot.slane %v2215, 6
          %v2361 = vsel %vm327, %v2359, %v2360
          %v2362 = vrot.slane %v2360, 4
          %v2363 = vrot.slane %v2216, 6
          %v2364 = vsel %vm327, %v2362, %v2363
          %v2365 = vrot.slane %v2217, 6
          %v2366 = vrot.slane %v2365, 4
          %v2367 = vrot.slane %v2218, 6
          %v2368 = vsel %vm327, %v2366, %v2367
          %v2369 = vrot.slane %v2367, 4
          %v2370 = vrot.slane %v2219, 6
          %v2371 = vsel %vm327, %v2369, %v2370
          %v2372 = vrot.slane %v2220, 6
          %v2373 = vrot.slane %v2372, 4
          %v2374 = vrot.slane %v2221, 6
          %v2375 = vsel %vm327, %v2373, %v2374
          %v2376 = vrot.slane %v2374, 4
          %v2377 = vrot.slane %v2222, 6
          %v2378 = vsel %vm327, %v2376, %v2377
          %v2379 = vrot.slane %v2223, 6
          %v2380 = vrot.slane %v2379, 4
          %v2381 = vrot.slane %v2224, 6
          %v2382 = vsel %vm327, %v2380, %v2381
          %v2383 = vrot.slane %v2381, 4
          %v2384 = vrot.slane %v2225, 6
          %v2385 = vsel %vm327, %v2383, %v2384
          %v2386 = vunpack.c.l.b16 %v2277
          %v2387 = vunpack.c.l.b16 %v2280
          %v2388 = vunpack.c.l.b16 %v2284
          %v2389 = vunpack.c.l.b16 %v2287
          %v2390 = vunpack.c.l.b16 %v2291
          %v2391 = vunpack.c.l.b16 %v2294
          %v2392 = vunpack.c.l.b16 %v2298
          %v2393 = vunpack.c.l.b16 %v2301
          %v2394 = vunpack.c.l.b16 %v2305
          %v2395 = vunpack.c.l.b16 %v2308
          %v2396 = vunpack.c.l.b16 %v2312
          %v2397 = vunpack.c.l.b16 %v2315
          %v2398 = vunpack.c.l.b16 %v2319
          %v2399 = vunpack.c.l.b16 %v2322
          %v2400 = vunpack.c.l.b16 %v2326
          %v2401 = vunpack.c.l.b16 %v2329
          %v2402 = vunpack.c.l.b16 %v2333
          %v2403 = vunpack.c.l.b16 %v2336
          %v2404 = vunpack.c.l.b16 %v2340
          %v2405 = vunpack.c.l.b16 %v2343
          %v2406 = vunpack.c.l.b16 %v2347
          %v2407 = vunpack.c.l.b16 %v2350
          %v2408 = vunpack.c.l.b16 %v2354
          %v2409 = vunpack.c.l.b16 %v2357
          %v2410 = vunpack.c.l.b16 %v2361
          %v2411 = vunpack.c.l.b16 %v2364
          %v2412 = vunpack.c.l.b16 %v2368
          %v2413 = vunpack.c.l.b16 %v2371
          %v2414 = vunpack.c.l.b16 %v2375
          %v2415 = vunpack.c.l.b16 %v2378
          %v2416 = vunpack.c.l.b16 %v2382
          %v2417 = vunpack.c.l.b16 %v2385
          %v2418 = vpack.c.b16 %v2387, %v2386
          %v2419 = vpack.c.b16 %v2389, %v2388
          %v2420 = vpack.c.b16 %v2391, %v2390
          %v2421 = vpack.c.b16 %v2393, %v2392
          %v2422 = vpack.c.b16 %v2395, %v2394
          %v2423 = vpack.c.b16 %v2397, %v2396
          %v2424 = vpack.c.b16 %v2399, %v2398
          %v2425 = vpack.c.b16 %v2401, %v2400
          %v2426 = vpack.c.b16 %v2403, %v2402
          %v2427 = vpack.c.b16 %v2405, %v2404
          %v2428 = vpack.c.b16 %v2407, %v2406
          %v2429 = vpack.c.b16 %v2409, %v2408
          %v2430 = vpack.c.b16 %v2411, %v2410
          %v2431 = vpack.c.b16 %v2413, %v2412
          %v2432 = vpack.c.b16 %v2415, %v2414
          %v2433 = vpack.c.b16 %v2417, %v2416
          %2434 = vrot.lane.b32.xlu0 %v2418, 12
          %v2435 = vpop.permute.xlu0 %2434
          %2436 = vrot.lane.b32.xlu0 %v2419, 12
          %v2437 = vpop.permute.xlu0 %2436
          %2438 = vrot.lane.b32.xlu0 %v2420, 12
          %v2439 = vpop.permute.xlu0 %2438
          %2440 = vrot.lane.b32.xlu0 %v2421, 12
          %v2441 = vpop.permute.xlu0 %2440
          %2442 = vrot.lane.b32.xlu0 %v2422, 12
          %v2443 = vpop.permute.xlu0 %2442
          %2444 = vrot.lane.b32.xlu0 %v2423, 12
          %v2445 = vpop.permute.xlu0 %2444
          %2446 = vrot.lane.b32.xlu0 %v2424, 12
          %v2447 = vpop.permute.xlu0 %2446
          %2448 = vrot.lane.b32.xlu0 %v2425, 12
          %v2449 = vpop.permute.xlu0 %2448
          %2450 = vrot.lane.b32.xlu0 %v2426, 12
          %v2451 = vpop.permute.xlu0 %2450
          %2452 = vrot.lane.b32.xlu0 %v2427, 12
          %v2453 = vpop.permute.xlu0 %2452
          %2454 = vrot.lane.b32.xlu0 %v2428, 12
          %v2455 = vpop.permute.xlu0 %2454
          %2456 = vrot.lane.b32.xlu0 %v2429, 12
          %v2457 = vpop.permute.xlu0 %2456
          %2458 = vrot.lane.b32.xlu0 %v2430, 12
          %v2459 = vpop.permute.xlu0 %2458
          %2460 = vrot.lane.b32.xlu0 %v2431, 12
          %v2461 = vpop.permute.xlu0 %2460
          %2462 = vrot.lane.b32.xlu0 %v2432, 12
          %v2463 = vpop.permute.xlu0 %2462
          %2464 = vrot.lane.b32.xlu0 %v2433, 12
          %v2465 = vpop.permute.xlu0 %2464
          %vm2482 = vcmask 121952
          %2483 = vst.msk [vmem:[#allocation3] sm:$0xff] %vm2482, %v2435
          %2484 = vst.msk [vmem:[#allocation3 + $0x8] sm:$0xff] %vm2482, %v2437
          %2485 = vst.msk [vmem:[#allocation3 + $0x10] sm:$0xff] %vm2482, %v2439
          %2486 = vst.msk [vmem:[#allocation3 + $0x18] sm:$0xff] %vm2482, %v2441
          %2487 = vst.msk [vmem:[#allocation3 + $0x20] sm:$0xff] %vm2482, %v2443
          %2488 = vst.msk [vmem:[#allocation3 + $0x28] sm:$0xff] %vm2482, %v2445
          %2489 = vst.msk [vmem:[#allocation3 + $0x30] sm:$0xff] %vm2482, %v2447
          %2490 = vst.msk [vmem:[#allocation3 + $0x38] sm:$0xff] %vm2482, %v2449
          %2491 = vst.msk [vmem:[#allocation3 + $0x40] sm:$0xff] %vm2482, %v2451
          %2492 = vst.msk [vmem:[#allocation3 + $0x48] sm:$0xff] %vm2482, %v2453
          %2493 = vst.msk [vmem:[#allocation3 + $0x50] sm:$0xff] %vm2482, %v2455
          %2494 = vst.msk [vmem:[#allocation3 + $0x58] sm:$0xff] %vm2482, %v2457
          %2495 = vst.msk [vmem:[#allocation3 + $0x60] sm:$0xff] %vm2482, %v2459
          %2496 = vst.msk [vmem:[#allocation3 + $0x68] sm:$0xff] %vm2482, %v2461
          %2497 = vst.msk [vmem:[#allocation3 + $0x70] sm:$0xff] %vm2482, %v2463
          %2498 = vst.msk [vmem:[#allocation3 + $0x78] sm:$0xff] %vm2482, %v2465
          %v2499 = vld [vmem:[%s548] sm:$0xc]
          %v2500 = vld [vmem:[%s548 + $0x4] sm:$0xf]
          %v2501 = vld [vmem:[%s548 + $0x8] sm:$0x7]
          %v2502 = vld [vmem:[%s548 + $0xc] sm:$0xc]
          %v2503 = vld [vmem:[%s548 + $0x10] sm:$0xf]
          %v2504 = vld [vmem:[%s548 + $0x14] sm:$0x7]
          %v2505 = vld [vmem:[%s548 + $0x18] sm:$0xc]
          %v2506 = vld [vmem:[%s548 + $0x1c] sm:$0xf]
          %v2507 = vld [vmem:[%s548 + $0x20] sm:$0x7]
          %v2508 = vld [vmem:[%s548 + $0x24] sm:$0xc]
          %v2509 = vld [vmem:[%s548 + $0x28] sm:$0xf]
          %v2510 = vld [vmem:[%s548 + $0x2c] sm:$0x7]
          %v2511 = vld [vmem:[%s548 + $0x30] sm:$0xc]
          %v2512 = vld [vmem:[%s548 + $0x34] sm:$0xf]
          %v2513 = vld [vmem:[%s548 + $0x38] sm:$0x7]
          %v2514 = vld [vmem:[%s548 + $0x3c] sm:$0xc]
          %v2515 = vld [vmem:[%s548 + $0x40] sm:$0xf]
          %v2516 = vld [vmem:[%s548 + $0x44] sm:$0x7]
          %v2517 = vld [vmem:[%s548 + $0x48] sm:$0xc]
          %v2518 = vld [vmem:[%s548 + $0x4c] sm:$0xf]
          %v2519 = vld [vmem:[%s548 + $0x50] sm:$0x7]
          %v2520 = vld [vmem:[%s548 + $0x54] sm:$0xc]
          %v2521 = vld [vmem:[%s548 + $0x58] sm:$0xf]
          %v2522 = vld [vmem:[%s548 + $0x5c] sm:$0x7]
          %v2523 = vld [vmem:[%s548 + $0x60] sm:$0xc]
          %v2524 = vld [vmem:[%s548 + $0x64] sm:$0xf]
          %v2525 = vld [vmem:[%s548 + $0x68] sm:$0x7]
          %v2526 = vld [vmem:[%s548 + $0x6c] sm:$0xc]
          %v2527 = vld [vmem:[%s548 + $0x70] sm:$0xf]
          %v2528 = vld [vmem:[%s548 + $0x74] sm:$0x7]
          %v2529 = vld [vmem:[%s548 + $0x78] sm:$0xc]
          %v2530 = vld [vmem:[%s548 + $0x7c] sm:$0xf]
          %v2531 = vld [vmem:[%s548 + $0x80] sm:$0x7]
          %v2532 = vld [vmem:[%s548 + $0x84] sm:$0xc]
          %v2533 = vld [vmem:[%s548 + $0x88] sm:$0xf]
          %v2534 = vld [vmem:[%s548 + $0x8c] sm:$0x7]
          %v2535 = vld [vmem:[%s548 + $0x90] sm:$0xc]
          %v2536 = vld [vmem:[%s548 + $0x94] sm:$0xf]
          %v2537 = vld [vmem:[%s548 + $0x98] sm:$0x7]
          %v2538 = vld [vmem:[%s548 + $0x9c] sm:$0xc]
          %v2539 = vld [vmem:[%s548 + $0xa0] sm:$0xf]
          %v2540 = vld [vmem:[%s548 + $0xa4] sm:$0x7]
          %v2541 = vld [vmem:[%s548 + $0xa8] sm:$0xc]
          %v2542 = vld [vmem:[%s548 + $0xac] sm:$0xf]
          %v2543 = vld [vmem:[%s548 + $0xb0] sm:$0x7]
          %v2544 = vld [vmem:[%s548 + $0xb4] sm:$0xc]
          %v2545 = vld [vmem:[%s548 + $0xb8] sm:$0xf]
          %v2546 = vld [vmem:[%s548 + $0xbc] sm:$0x7]
          %vm2547 = vsmask.f32 1280
          %vm2548 = vsmask.f32 5392
          %vm2549 = vmor %vm2547, %vm2548
          %v2551 = vshrl.u32 %v2499, 16
          %v2553 = vrot.slane %v2551, 6
          %v2554 = vshll.u32 %v2499, 16
          %v2556 = vrot.slane %v2554, 7
          %v2557 = vor.u32 %v2553, %v2556
          %v2558 = vrot.slane %v2557, 4
          %v2560 = vshrl.u32 %v2500, 16
          %v2562 = vrot.slane %v2560, 6
          %v2563 = vshll.u32 %v2500, 16
          %v2565 = vrot.slane %v2563, 7
          %v2566 = vor.u32 %v2562, %v2565
          %v2567 = vsel %vm2549, %v2558, %v2566
          %v2568 = vrot.slane %v2566, 4
          %v2570 = vshrl.u32 %v2501, 16
          %v2572 = vrot.slane %v2570, 6
          %v2573 = vshll.u32 %v2501, 16
          %v2575 = vrot.slane %v2573, 7
          %v2576 = vor.u32 %v2572, %v2575
          %v2577 = vsel %vm2549, %v2568, %v2576
          %v2579 = vshrl.u32 %v2502, 16
          %v2581 = vrot.slane %v2579, 6
          %v2582 = vshll.u32 %v2502, 16
          %v2584 = vrot.slane %v2582, 7
          %v2585 = vor.u32 %v2581, %v2584
          %v2586 = vrot.slane %v2585, 4
          %v2588 = vshrl.u32 %v2503, 16
          %v2590 = vrot.slane %v2588, 6
          %v2591 = vshll.u32 %v2503, 16
          %v2593 = vrot.slane %v2591, 7
          %v2594 = vor.u32 %v2590, %v2593
          %v2595 = vsel %vm2549, %v2586, %v2594
          %v2596 = vrot.slane %v2594, 4
          %v2598 = vshrl.u32 %v2504, 16
          %v2600 = vrot.slane %v2598, 6
          %v2601 = vshll.u32 %v2504, 16
          %v2603 = vrot.slane %v2601, 7
          %v2604 = vor.u32 %v2600, %v2603
          %v2605 = vsel %vm2549, %v2596, %v2604
          %v2607 = vshrl.u32 %v2505, 16
          %v2609 = vrot.slane %v2607, 6
          %v2610 = vshll.u32 %v2505, 16
          %v2612 = vrot.slane %v2610, 7
          %v2613 = vor.u32 %v2609, %v2612
          %v2614 = vrot.slane %v2613, 4
          %v2616 = vshrl.u32 %v2506, 16
          %v2618 = vrot.slane %v2616, 6
          %v2619 = vshll.u32 %v2506, 16
          %v2621 = vrot.slane %v2619, 7
          %v2622 = vor.u32 %v2618, %v2621
          %v2623 = vsel %vm2549, %v2614, %v2622
          %v2624 = vrot.slane %v2622, 4
          %v2626 = vshrl.u32 %v2507, 16
          %v2628 = vrot.slane %v2626, 6
          %v2629 = vshll.u32 %v2507, 16
          %v2631 = vrot.slane %v2629, 7
          %v2632 = vor.u32 %v2628, %v2631
          %v2633 = vsel %vm2549, %v2624, %v2632
          %v2635 = vshrl.u32 %v2508, 16
          %v2637 = vrot.slane %v2635, 6
          %v2638 = vshll.u32 %v2508, 16
          %v2640 = vrot.slane %v2638, 7
          %v2641 = vor.u32 %v2637, %v2640
          %v2642 = vrot.slane %v2641, 4
          %v2644 = vshrl.u32 %v2509, 16
          %v2646 = vrot.slane %v2644, 6
          %v2647 = vshll.u32 %v2509, 16
          %v2649 = vrot.slane %v2647, 7
          %v2650 = vor.u32 %v2646, %v2649
          %v2651 = vsel %vm2549, %v2642, %v2650
          %v2652 = vrot.slane %v2650, 4
          %v2654 = vshrl.u32 %v2510, 16
          %v2656 = vrot.slane %v2654, 6
          %v2657 = vshll.u32 %v2510, 16
          %v2659 = vrot.slane %v2657, 7
          %v2660 = vor.u32 %v2656, %v2659
          %v2661 = vsel %vm2549, %v2652, %v2660
          %v2663 = vshrl.u32 %v2511, 16
          %v2665 = vrot.slane %v2663, 6
          %v2666 = vshll.u32 %v2511, 16
          %v2668 = vrot.slane %v2666, 7
          %v2669 = vor.u32 %v2665, %v2668
          %v2670 = vrot.slane %v2669, 4
          %v2672 = vshrl.u32 %v2512, 16
          %v2674 = vrot.slane %v2672, 6
          %v2675 = vshll.u32 %v2512, 16
          %v2677 = vrot.slane %v2675, 7
          %v2678 = vor.u32 %v2674, %v2677
          %v2679 = vsel %vm2549, %v2670, %v2678
          %v2680 = vrot.slane %v2678, 4
          %v2682 = vshrl.u32 %v2513, 16
          %v2684 = vrot.slane %v2682, 6
          %v2685 = vshll.u32 %v2513, 16
          %v2687 = vrot.slane %v2685, 7
          %v2688 = vor.u32 %v2684, %v2687
          %v2689 = vsel %vm2549, %v2680, %v2688
          %v2691 = vshrl.u32 %v2514, 16
          %v2693 = vrot.slane %v2691, 6
          %v2694 = vshll.u32 %v2514, 16
          %v2696 = vrot.slane %v2694, 7
          %v2697 = vor.u32 %v2693, %v2696
          %v2698 = vrot.slane %v2697, 4
          %v2700 = vshrl.u32 %v2515, 16
          %v2702 = vrot.slane %v2700, 6
          %v2703 = vshll.u32 %v2515, 16
          %v2705 = vrot.slane %v2703, 7
          %v2706 = vor.u32 %v2702, %v2705
          %v2707 = vsel %vm2549, %v2698, %v2706
          %v2708 = vrot.slane %v2706, 4
          %v2710 = vshrl.u32 %v2516, 16
          %v2712 = vrot.slane %v2710, 6
          %v2713 = vshll.u32 %v2516, 16
          %v2715 = vrot.slane %v2713, 7
          %v2716 = vor.u32 %v2712, %v2715
          %v2717 = vsel %vm2549, %v2708, %v2716
          %v2719 = vshrl.u32 %v2517, 16
          %v2721 = vrot.slane %v2719, 6
          %v2722 = vshll.u32 %v2517, 16
          %v2724 = vrot.slane %v2722, 7
          %v2725 = vor.u32 %v2721, %v2724
          %v2726 = vrot.slane %v2725, 4
          %v2728 = vshrl.u32 %v2518, 16
          %v2730 = vrot.slane %v2728, 6
          %v2731 = vshll.u32 %v2518, 16
          %v2733 = vrot.slane %v2731, 7
          %v2734 = vor.u32 %v2730, %v2733
          %v2735 = vsel %vm2549, %v2726, %v2734
          %v2736 = vrot.slane %v2734, 4
          %v2738 = vshrl.u32 %v2519, 16
          %v2740 = vrot.slane %v2738, 6
          %v2741 = vshll.u32 %v2519, 16
          %v2743 = vrot.slane %v2741, 7
          %v2744 = vor.u32 %v2740, %v2743
          %v2745 = vsel %vm2549, %v2736, %v2744
          %v2747 = vshrl.u32 %v2520, 16
          %v2749 = vrot.slane %v2747, 6
          %v2750 = vshll.u32 %v2520, 16
          %v2752 = vrot.slane %v2750, 7
          %v2753 = vor.u32 %v2749, %v2752
          %v2754 = vrot.slane %v2753, 4
          %v2756 = vshrl.u32 %v2521, 16
          %v2758 = vrot.slane %v2756, 6
          %v2759 = vshll.u32 %v2521, 16
          %v2761 = vrot.slane %v2759, 7
          %v2762 = vor.u32 %v2758, %v2761
          %v2763 = vsel %vm2549, %v2754, %v2762
          %v2764 = vrot.slane %v2762, 4
          %v2766 = vshrl.u32 %v2522, 16
          %v2768 = vrot.slane %v2766, 6
          %v2769 = vshll.u32 %v2522, 16
          %v2771 = vrot.slane %v2769, 7
          %v2772 = vor.u32 %v2768, %v2771
          %v2773 = vsel %vm2549, %v2764, %v2772
          %v2775 = vshrl.u32 %v2523, 16
          %v2777 = vrot.slane %v2775, 6
          %v2778 = vshll.u32 %v2523, 16
          %v2780 = vrot.slane %v2778, 7
          %v2781 = vor.u32 %v2777, %v2780
          %v2782 = vrot.slane %v2781, 4
          %v2784 = vshrl.u32 %v2524, 16
          %v2786 = vrot.slane %v2784, 6
          %v2787 = vshll.u32 %v2524, 16
          %v2789 = vrot.slane %v2787, 7
          %v2790 = vor.u32 %v2786, %v2789
          %v2791 = vsel %vm2549, %v2782, %v2790
          %v2792 = vrot.slane %v2790, 4
          %v2794 = vshrl.u32 %v2525, 16
          %v2796 = vrot.slane %v2794, 6
          %v2797 = vshll.u32 %v2525, 16
          %v2799 = vrot.slane %v2797, 7
          %v2800 = vor.u32 %v2796, %v2799
          %v2801 = vsel %vm2549, %v2792, %v2800
          %v2803 = vshrl.u32 %v2526, 16
          %v2805 = vrot.slane %v2803, 6
          %v2806 = vshll.u32 %v2526, 16
          %v2808 = vrot.slane %v2806, 7
          %v2809 = vor.u32 %v2805, %v2808
          %v2810 = vrot.slane %v2809, 4
          %v2812 = vshrl.u32 %v2527, 16
          %v2814 = vrot.slane %v2812, 6
          %v2815 = vshll.u32 %v2527, 16
          %v2817 = vrot.slane %v2815, 7
          %v2818 = vor.u32 %v2814, %v2817
          %v2819 = vsel %vm2549, %v2810, %v2818
          %v2820 = vrot.slane %v2818, 4
          %v2822 = vshrl.u32 %v2528, 16
          %v2824 = vrot.slane %v2822, 6
          %v2825 = vshll.u32 %v2528, 16
          %v2827 = vrot.slane %v2825, 7
          %v2828 = vor.u32 %v2824, %v2827
          %v2829 = vsel %vm2549, %v2820, %v2828
          %v2831 = vshrl.u32 %v2529, 16
          %v2833 = vrot.slane %v2831, 6
          %v2834 = vshll.u32 %v2529, 16
          %v2836 = vrot.slane %v2834, 7
          %v2837 = vor.u32 %v2833, %v2836
          %v2838 = vrot.slane %v2837, 4
          %v2840 = vshrl.u32 %v2530, 16
          %v2842 = vrot.slane %v2840, 6
          %v2843 = vshll.u32 %v2530, 16
          %v2845 = vrot.slane %v2843, 7
          %v2846 = vor.u32 %v2842, %v2845
          %v2847 = vsel %vm2549, %v2838, %v2846
          %v2848 = vrot.slane %v2846, 4
          %v2850 = vshrl.u32 %v2531, 16
          %v2852 = vrot.slane %v2850, 6
          %v2853 = vshll.u32 %v2531, 16
          %v2855 = vrot.slane %v2853, 7
          %v2856 = vor.u32 %v2852, %v2855
          %v2857 = vsel %vm2549, %v2848, %v2856
          %v2859 = vshrl.u32 %v2532, 16
          %v2861 = vrot.slane %v2859, 6
          %v2862 = vshll.u32 %v2532, 16
          %v2864 = vrot.slane %v2862, 7
          %v2865 = vor.u32 %v2861, %v2864
          %v2866 = vrot.slane %v2865, 4
          %v2868 = vshrl.u32 %v2533, 16
          %v2870 = vrot.slane %v2868, 6
          %v2871 = vshll.u32 %v2533, 16
          %v2873 = vrot.slane %v2871, 7
          %v2874 = vor.u32 %v2870, %v2873
          %v2875 = vsel %vm2549, %v2866, %v2874
          %v2876 = vrot.slane %v2874, 4
          %v2878 = vshrl.u32 %v2534, 16
          %v2880 = vrot.slane %v2878, 6
          %v2881 = vshll.u32 %v2534, 16
          %v2883 = vrot.slane %v2881, 7
          %v2884 = vor.u32 %v2880, %v2883
          %v2885 = vsel %vm2549, %v2876, %v2884
          %v2887 = vshrl.u32 %v2535, 16
          %v2889 = vrot.slane %v2887, 6
          %v2890 = vshll.u32 %v2535, 16
          %v2892 = vrot.slane %v2890, 7
          %v2893 = vor.u32 %v2889, %v2892
          %v2894 = vrot.slane %v2893, 4
          %v2896 = vshrl.u32 %v2536, 16
          %v2898 = vrot.slane %v2896, 6
          %v2899 = vshll.u32 %v2536, 16
          %v2901 = vrot.slane %v2899, 7
          %v2902 = vor.u32 %v2898, %v2901
          %v2903 = vsel %vm2549, %v2894, %v2902
          %v2904 = vrot.slane %v2902, 4
          %v2906 = vshrl.u32 %v2537, 16
          %v2908 = vrot.slane %v2906, 6
          %v2909 = vshll.u32 %v2537, 16
          %v2911 = vrot.slane %v2909, 7
          %v2912 = vor.u32 %v2908, %v2911
          %v2913 = vsel %vm2549, %v2904, %v2912
          %v2915 = vshrl.u32 %v2538, 16
          %v2917 = vrot.slane %v2915, 6
          %v2918 = vshll.u32 %v2538, 16
          %v2920 = vrot.slane %v2918, 7
          %v2921 = vor.u32 %v2917, %v2920
          %v2922 = vrot.slane %v2921, 4
          %v2924 = vshrl.u32 %v2539, 16
          %v2926 = vrot.slane %v2924, 6
          %v2927 = vshll.u32 %v2539, 16
          %v2929 = vrot.slane %v2927, 7
          %v2930 = vor.u32 %v2926, %v2929
          %v2931 = vsel %vm2549, %v2922, %v2930
          %v2932 = vrot.slane %v2930, 4
          %v2934 = vshrl.u32 %v2540, 16
          %v2936 = vrot.slane %v2934, 6
          %v2937 = vshll.u32 %v2540, 16
          %v2939 = vrot.slane %v2937, 7
          %v2940 = vor.u32 %v2936, %v2939
          %v2941 = vsel %vm2549, %v2932, %v2940
          %v2943 = vshrl.u32 %v2541, 16
          %v2945 = vrot.slane %v2943, 6
          %v2946 = vshll.u32 %v2541, 16
          %v2948 = vrot.slane %v2946, 7
          %v2949 = vor.u32 %v2945, %v2948
          %v2950 = vrot.slane %v2949, 4
          %v2952 = vshrl.u32 %v2542, 16
          %v2954 = vrot.slane %v2952, 6
          %v2955 = vshll.u32 %v2542, 16
          %v2957 = vrot.slane %v2955, 7
          %v2958 = vor.u32 %v2954, %v2957
          %v2959 = vsel %vm2549, %v2950, %v2958
          %v2960 = vrot.slane %v2958, 4
          %v2962 = vshrl.u32 %v2543, 16
          %v2964 = vrot.slane %v2962, 6
          %v2965 = vshll.u32 %v2543, 16
          %v2967 = vrot.slane %v2965, 7
          %v2968 = vor.u32 %v2964, %v2967
          %v2969 = vsel %vm2549, %v2960, %v2968
          %v2971 = vshrl.u32 %v2544, 16
          %v2973 = vrot.slane %v2971, 6
          %v2974 = vshll.u32 %v2544, 16
          %v2976 = vrot.slane %v2974, 7
          %v2977 = vor.u32 %v2973, %v2976
          %v2978 = vrot.slane %v2977, 4
          %v2980 = vshrl.u32 %v2545, 16
          %v2982 = vrot.slane %v2980, 6
          %v2983 = vshll.u32 %v2545, 16
          %v2985 = vrot.slane %v2983, 7
          %v2986 = vor.u32 %v2982, %v2985
          %v2987 = vsel %vm2549, %v2978, %v2986
          %v2988 = vrot.slane %v2986, 4
          %v2990 = vshrl.u32 %v2546, 16
          %v2992 = vrot.slane %v2990, 6
          %v2993 = vshll.u32 %v2546, 16
          %v2995 = vrot.slane %v2993, 7
          %v2996 = vor.u32 %v2992, %v2995
          %v2997 = vsel %vm2549, %v2988, %v2996
          %v2998 = vunpack.c.l.b16 %v2567
          %v2999 = vunpack.c.l.b16 %v2577
          %v3000 = vunpack.c.l.b16 %v2595
          %v3001 = vunpack.c.l.b16 %v2605
          %v3002 = vunpack.c.l.b16 %v2623
          %v3003 = vunpack.c.l.b16 %v2633
          %v3004 = vunpack.c.l.b16 %v2651
          %v3005 = vunpack.c.l.b16 %v2661
          %v3006 = vunpack.c.l.b16 %v2679
          %v3007 = vunpack.c.l.b16 %v2689
          %v3008 = vunpack.c.l.b16 %v2707
          %v3009 = vunpack.c.l.b16 %v2717
          %v3010 = vunpack.c.l.b16 %v2735
          %v3011 = vunpack.c.l.b16 %v2745
          %v3012 = vunpack.c.l.b16 %v2763
          %v3013 = vunpack.c.l.b16 %v2773
          %v3014 = vunpack.c.l.b16 %v2791
          %v3015 = vunpack.c.l.b16 %v2801
          %v3016 = vunpack.c.l.b16 %v2819
          %v3017 = vunpack.c.l.b16 %v2829
          %v3018 = vunpack.c.l.b16 %v2847
          %v3019 = vunpack.c.l.b16 %v2857
          %v3020 = vunpack.c.l.b16 %v2875
          %v3021 = vunpack.c.l.b16 %v2885
          %v3022 = vunpack.c.l.b16 %v2903
          %v3023 = vunpack.c.l.b16 %v2913
          %v3024 = vunpack.c.l.b16 %v2931
          %v3025 = vunpack.c.l.b16 %v2941
          %v3026 = vunpack.c.l.b16 %v2959
          %v3027 = vunpack.c.l.b16 %v2969
          %v3028 = vunpack.c.l.b16 %v2987
          %v3029 = vunpack.c.l.b16 %v2997
          %v3030 = vpack.c.b16 %v2999, %v2998
          %v3031 = vpack.c.b16 %v3001, %v3000
          %v3032 = vpack.c.b16 %v3003, %v3002
          %v3033 = vpack.c.b16 %v3005, %v3004
          %v3034 = vpack.c.b16 %v3007, %v3006
          %v3035 = vpack.c.b16 %v3009, %v3008
          %v3036 = vpack.c.b16 %v3011, %v3010
          %v3037 = vpack.c.b16 %v3013, %v3012
          %v3038 = vpack.c.b16 %v3015, %v3014
          %v3039 = vpack.c.b16 %v3017, %v3016
          %v3040 = vpack.c.b16 %v3019, %v3018
          %v3041 = vpack.c.b16 %v3021, %v3020
          %v3042 = vpack.c.b16 %v3023, %v3022
          %v3043 = vpack.c.b16 %v3025, %v3024
          %v3044 = vpack.c.b16 %v3027, %v3026
          %v3045 = vpack.c.b16 %v3029, %v3028
          %3046 = vrot.lane.b32.xlu0 %v3030, 15
          %v3047 = vpop.permute.xlu0 %3046
          %3048 = vrot.lane.b32.xlu0 %v3031, 15
          %v3049 = vpop.permute.xlu0 %3048
          %3050 = vrot.lane.b32.xlu0 %v3032, 15
          %v3051 = vpop.permute.xlu0 %3050
          %3052 = vrot.lane.b32.xlu0 %v3033, 15
          %v3053 = vpop.permute.xlu0 %3052
          %3054 = vrot.lane.b32.xlu0 %v3034, 15
          %v3055 = vpop.permute.xlu0 %3054
          %3056 = vrot.lane.b32.xlu0 %v3035, 15
          %v3057 = vpop.permute.xlu0 %3056
          %3058 = vrot.lane.b32.xlu0 %v3036, 15
          %v3059 = vpop.permute.xlu0 %3058
          %3060 = vrot.lane.b32.xlu0 %v3037, 15
          %v3061 = vpop.permute.xlu0 %3060
          %3062 = vrot.lane.b32.xlu0 %v3038, 15
          %v3063 = vpop.permute.xlu0 %3062
          %3064 = vrot.lane.b32.xlu0 %v3039, 15
          %v3065 = vpop.permute.xlu0 %3064
          %3066 = vrot.lane.b32.xlu0 %v3040, 15
          %v3067 = vpop.permute.xlu0 %3066
          %3068 = vrot.lane.b32.xlu0 %v3041, 15
          %v3069 = vpop.permute.xlu0 %3068
          %3070 = vrot.lane.b32.xlu0 %v3042, 15
          %v3071 = vpop.permute.xlu0 %3070
          %3072 = vrot.lane.b32.xlu0 %v3043, 15
          %v3073 = vpop.permute.xlu0 %3072
          %3074 = vrot.lane.b32.xlu0 %v3044, 15
          %v3075 = vpop.permute.xlu0 %3074
          %3076 = vrot.lane.b32.xlu0 %v3045, 15
          %v3077 = vpop.permute.xlu0 %3076
          %vm3094 = vcmask 146552
          %3095 = vst.msk [vmem:[#allocation3] sm:$0xff] %vm3094, %v3047
          %3096 = vst.msk [vmem:[#allocation3 + $0x8] sm:$0xff] %vm3094, %v3049
          %3097 = vst.msk [vmem:[#allocation3 + $0x10] sm:$0xff] %vm3094, %v3051
          %3098 = vst.msk [vmem:[#allocation3 + $0x18] sm:$0xff] %vm3094, %v3053
          %3099 = vst.msk [vmem:[#allocation3 + $0x20] sm:$0xff] %vm3094, %v3055
          %3100 = vst.msk [vmem:[#allocation3 + $0x28] sm:$0xff] %vm3094, %v3057
          %3101 = vst.msk [vmem:[#allocation3 + $0x30] sm:$0xff] %vm3094, %v3059
          %3102 = vst.msk [vmem:[#allocation3 + $0x38] sm:$0xff] %vm3094, %v3061
          %3103 = vst.msk [vmem:[#allocation3 + $0x40] sm:$0xff] %vm3094, %v3063
          %3104 = vst.msk [vmem:[#allocation3 + $0x48] sm:$0xff] %vm3094, %v3065
          %3105 = vst.msk [vmem:[#allocation3 + $0x50] sm:$0xff] %vm3094, %v3067
          %3106 = vst.msk [vmem:[#allocation3 + $0x58] sm:$0xff] %vm3094, %v3069
          %3107 = vst.msk [vmem:[#allocation3 + $0x60] sm:$0xff] %vm3094, %v3071
          %3108 = vst.msk [vmem:[#allocation3 + $0x68] sm:$0xff] %vm3094, %v3073
          %3109 = vst.msk [vmem:[#allocation3 + $0x70] sm:$0xff] %vm3094, %v3075
          %3110 = vst.msk [vmem:[#allocation3 + $0x78] sm:$0xff] %vm3094, %v3077
          %v3111 = vld [vmem:[%s548] sm:$0x8]
          %v3112 = vld [vmem:[%s548 + $0x4] sm:$0xf]
          %v3113 = vld [vmem:[%s548 + $0x8] sm:$0x7]
          %v3114 = vld [vmem:[%s548 + $0xc] sm:$0x8]
          %v3115 = vld [vmem:[%s548 + $0x10] sm:$0xf]
          %v3116 = vld [vmem:[%s548 + $0x14] sm:$0x7]
          %v3117 = vld [vmem:[%s548 + $0x18] sm:$0x8]
          %v3118 = vld [vmem:[%s548 + $0x1c] sm:$0xf]
          %v3119 = vld [vmem:[%s548 + $0x20] sm:$0x7]
          %v3120 = vld [vmem:[%s548 + $0x24] sm:$0x8]
          %v3121 = vld [vmem:[%s548 + $0x28] sm:$0xf]
          %v3122 = vld [vmem:[%s548 + $0x2c] sm:$0x7]
          %v3123 = vld [vmem:[%s548 + $0x30] sm:$0x8]
          %v3124 = vld [vmem:[%s548 + $0x34] sm:$0xf]
          %v3125 = vld [vmem:[%s548 + $0x38] sm:$0x7]
          %v3126 = vld [vmem:[%s548 + $0x3c] sm:$0x8]
          %v3127 = vld [vmem:[%s548 + $0x40] sm:$0xf]
          %v3128 = vld [vmem:[%s548 + $0x44] sm:$0x7]
          %v3129 = vld [vmem:[%s548 + $0x48] sm:$0x8]
          %v3130 = vld [vmem:[%s548 + $0x4c] sm:$0xf]
          %v3131 = vld [vmem:[%s548 + $0x50] sm:$0x7]
          %v3132 = vld [vmem:[%s548 + $0x54] sm:$0x8]
          %v3133 = vld [vmem:[%s548 + $0x58] sm:$0xf]
          %v3134 = vld [vmem:[%s548 + $0x5c] sm:$0x7]
          %v3135 = vld [vmem:[%s548 + $0x60] sm:$0x8]
          %v3136 = vld [vmem:[%s548 + $0x64] sm:$0xf]
          %v3137 = vld [vmem:[%s548 + $0x68] sm:$0x7]
          %v3138 = vld [vmem:[%s548 + $0x6c] sm:$0x8]
          %v3139 = vld [vmem:[%s548 + $0x70] sm:$0xf]
          %v3140 = vld [vmem:[%s548 + $0x74] sm:$0x7]
          %v3141 = vld [vmem:[%s548 + $0x78] sm:$0x8]
          %v3142 = vld [vmem:[%s548 + $0x7c] sm:$0xf]
          %v3143 = vld [vmem:[%s548 + $0x80] sm:$0x7]
          %v3144 = vld [vmem:[%s548 + $0x84] sm:$0x8]
          %v3145 = vld [vmem:[%s548 + $0x88] sm:$0xf]
          %v3146 = vld [vmem:[%s548 + $0x8c] sm:$0x7]
          %v3147 = vld [vmem:[%s548 + $0x90] sm:$0x8]
          %v3148 = vld [vmem:[%s548 + $0x94] sm:$0xf]
          %v3149 = vld [vmem:[%s548 + $0x98] sm:$0x7]
          %v3150 = vld [vmem:[%s548 + $0x9c] sm:$0x8]
          %v3151 = vld [vmem:[%s548 + $0xa0] sm:$0xf]
          %v3152 = vld [vmem:[%s548 + $0xa4] sm:$0x7]
          %v3153 = vld [vmem:[%s548 + $0xa8] sm:$0x8]
          %v3154 = vld [vmem:[%s548 + $0xac] sm:$0xf]
          %v3155 = vld [vmem:[%s548 + $0xb0] sm:$0x7]
          %v3156 = vld [vmem:[%s548 + $0xb4] sm:$0x8]
          %v3157 = vld [vmem:[%s548 + $0xb8] sm:$0xf]
          %v3158 = vld [vmem:[%s548 + $0xbc] sm:$0x7]
          %vm3207 = vcmask 1040384
          %vm3208 = vcmask 1044484
          %vm3209 = vmor %vm3207, %vm3208
          %v3210 = vrot.slane %v3111, 7
          %v3211 = vrot.slane %v3210, 4
          %v3212 = vrot.slane %v3112, 7
          %v3213 = vsel %vm3209, %v3211, %v3212
          %v3214 = vrot.slane %v3212, 4
          %v3215 = vrot.slane %v3113, 7
          %v3216 = vsel %vm3209, %v3214, %v3215
          %v3217 = vrot.slane %v3114, 7
          %v3218 = vrot.slane %v3217, 4
          %v3219 = vrot.slane %v3115, 7
          %v3220 = vsel %vm3209, %v3218, %v3219
          %v3221 = vrot.slane %v3219, 4
          %v3222 = vrot.slane %v3116, 7
          %v3223 = vsel %vm3209, %v3221, %v3222
          %v3224 = vrot.slane %v3117, 7
          %v3225 = vrot.slane %v3224, 4
          %v3226 = vrot.slane %v3118, 7
          %v3227 = vsel %vm3209, %v3225, %v3226
          %v3228 = vrot.slane %v3226, 4
          %v3229 = vrot.slane %v3119, 7
          %v3230 = vsel %vm3209, %v3228, %v3229
          %v3231 = vrot.slane %v3120, 7
          %v3232 = vrot.slane %v3231, 4
          %v3233 = vrot.slane %v3121, 7
          %v3234 = vsel %vm3209, %v3232, %v3233
          %v3235 = vrot.slane %v3233, 4
          %v3236 = vrot.slane %v3122, 7
          %v3237 = vsel %vm3209, %v3235, %v3236
          %v3238 = vrot.slane %v3123, 7
          %v3239 = vrot.slane %v3238, 4
          %v3240 = vrot.slane %v3124, 7
          %v3241 = vsel %vm3209, %v3239, %v3240
          %v3242 = vrot.slane %v3240, 4
          %v3243 = vrot.slane %v3125, 7
          %v3244 = vsel %vm3209, %v3242, %v3243
          %v3245 = vrot.slane %v3126, 7
          %v3246 = vrot.slane %v3245, 4
          %v3247 = vrot.slane %v3127, 7
          %v3248 = vsel %vm3209, %v3246, %v3247
          %v3249 = vrot.slane %v3247, 4
          %v3250 = vrot.slane %v3128, 7
          %v3251 = vsel %vm3209, %v3249, %v3250
          %v3252 = vrot.slane %v3129, 7
          %v3253 = vrot.slane %v3252, 4
          %v3254 = vrot.slane %v3130, 7
          %v3255 = vsel %vm3209, %v3253, %v3254
          %v3256 = vrot.slane %v3254, 4
          %v3257 = vrot.slane %v3131, 7
          %v3258 = vsel %vm3209, %v3256, %v3257
          %v3259 = vrot.slane %v3132, 7
          %v3260 = vrot.slane %v3259, 4
          %v3261 = vrot.slane %v3133, 7
          %v3262 = vsel %vm3209, %v3260, %v3261
          %v3263 = vrot.slane %v3261, 4
          %v3264 = vrot.slane %v3134, 7
          %v3265 = vsel %vm3209, %v3263, %v3264
          %v3266 = vrot.slane %v3135, 7
          %v3267 = vrot.slane %v3266, 4
          %v3268 = vrot.slane %v3136, 7
          %v3269 = vsel %vm3209, %v3267, %v3268
          %v3270 = vrot.slane %v3268, 4
          %v3271 = vrot.slane %v3137, 7
          %v3272 = vsel %vm3209, %v3270, %v3271
          %v3273 = vrot.slane %v3138, 7
          %v3274 = vrot.slane %v3273, 4
          %v3275 = vrot.slane %v3139, 7
          %v3276 = vsel %vm3209, %v3274, %v3275
          %v3277 = vrot.slane %v3275, 4
          %v3278 = vrot.slane %v3140, 7
          %v3279 = vsel %vm3209, %v3277, %v3278
          %v3280 = vrot.slane %v3141, 7
          %v3281 = vrot.slane %v3280, 4
          %v3282 = vrot.slane %v3142, 7
          %v3283 = vsel %vm3209, %v3281, %v3282
          %v3284 = vrot.slane %v3282, 4
          %v3285 = vrot.slane %v3143, 7
          %v3286 = vsel %vm3209, %v3284, %v3285
          %v3287 = vrot.slane %v3144, 7
          %v3288 = vrot.slane %v3287, 4
          %v3289 = vrot.slane %v3145, 7
          %v3290 = vsel %vm3209, %v3288, %v3289
          %v3291 = vrot.slane %v3289, 4
          %v3292 = vrot.slane %v3146, 7
          %v3293 = vsel %vm3209, %v3291, %v3292
          %v3294 = vrot.slane %v3147, 7
          %v3295 = vrot.slane %v3294, 4
          %v3296 = vrot.slane %v3148, 7
          %v3297 = vsel %vm3209, %v3295, %v3296
          %v3298 = vrot.slane %v3296, 4
          %v3299 = vrot.slane %v3149, 7
          %v3300 = vsel %vm3209, %v3298, %v3299
          %v3301 = vrot.slane %v3150, 7
          %v3302 = vrot.slane %v3301, 4
          %v3303 = vrot.slane %v3151, 7
          %v3304 = vsel %vm3209, %v3302, %v3303
          %v3305 = vrot.slane %v3303, 4
          %v3306 = vrot.slane %v3152, 7
          %v3307 = vsel %vm3209, %v3305, %v3306
          %v3308 = vrot.slane %v3153, 7
          %v3309 = vrot.slane %v3308, 4
          %v3310 = vrot.slane %v3154, 7
          %v3311 = vsel %vm3209, %v3309, %v3310
          %v3312 = vrot.slane %v3310, 4
          %v3313 = vrot.slane %v3155, 7
          %v3314 = vsel %vm3209, %v3312, %v3313
          %v3315 = vrot.slane %v3156, 7
          %v3316 = vrot.slane %v3315, 4
          %v3317 = vrot.slane %v3157, 7
          %v3318 = vsel %vm3209, %v3316, %v3317
          %v3319 = vrot.slane %v3317, 4
          %v3320 = vrot.slane %v3158, 7
          %v3321 = vsel %vm3209, %v3319, %v3320
          %v3322 = vunpack.c.l.b16 %v3213
          %v3323 = vunpack.c.l.b16 %v3216
          %v3324 = vunpack.c.l.b16 %v3220
          %v3325 = vunpack.c.l.b16 %v3223
          %v3326 = vunpack.c.l.b16 %v3227
          %v3327 = vunpack.c.l.b16 %v3230
          %v3328 = vunpack.c.l.b16 %v3234
          %v3329 = vunpack.c.l.b16 %v3237
          %v3330 = vunpack.c.l.b16 %v3241
          %v3331 = vunpack.c.l.b16 %v3244
          %v3332 = vunpack.c.l.b16 %v3248
          %v3333 = vunpack.c.l.b16 %v3251
          %v3334 = vunpack.c.l.b16 %v3255
          %v3335 = vunpack.c.l.b16 %v3258
          %v3336 = vunpack.c.l.b16 %v3262
          %v3337 = vunpack.c.l.b16 %v3265
          %v3338 = vunpack.c.l.b16 %v3269
          %v3339 = vunpack.c.l.b16 %v3272
          %v3340 = vunpack.c.l.b16 %v3276
          %v3341 = vunpack.c.l.b16 %v3279
          %v3342 = vunpack.c.l.b16 %v3283
          %v3343 = vunpack.c.l.b16 %v3286
          %v3344 = vunpack.c.l.b16 %v3290
          %v3345 = vunpack.c.l.b16 %v3293
          %v3346 = vunpack.c.l.b16 %v3297
          %v3347 = vunpack.c.l.b16 %v3300
          %v3348 = vunpack.c.l.b16 %v3304
          %v3349 = vunpack.c.l.b16 %v3307
          %v3350 = vunpack.c.l.b16 %v3311
          %v3351 = vunpack.c.l.b16 %v3314
          %v3352 = vunpack.c.l.b16 %v3318
          %v3353 = vunpack.c.l.b16 %v3321
          %v3354 = vpack.c.b16 %v3323, %v3322
          %v3355 = vpack.c.b16 %v3325, %v3324
          %v3356 = vpack.c.b16 %v3327, %v3326
          %v3357 = vpack.c.b16 %v3329, %v3328
          %v3358 = vpack.c.b16 %v3331, %v3330
          %v3359 = vpack.c.b16 %v3333, %v3332
          %v3360 = vpack.c.b16 %v3335, %v3334
          %v3361 = vpack.c.b16 %v3337, %v3336
          %v3362 = vpack.c.b16 %v3339, %v3338
          %v3363 = vpack.c.b16 %v3341, %v3340
          %v3364 = vpack.c.b16 %v3343, %v3342
          %v3365 = vpack.c.b16 %v3345, %v3344
          %v3366 = vpack.c.b16 %v3347, %v3346
          %v3367 = vpack.c.b16 %v3349, %v3348
          %v3368 = vpack.c.b16 %v3351, %v3350
          %v3369 = vpack.c.b16 %v3353, %v3352
          %3370 = vrot.lane.b32.xlu0 %v3354, 18
          %v3371 = vpop.permute.xlu0 %3370
          %3372 = vrot.lane.b32.xlu0 %v3355, 18
          %v3373 = vpop.permute.xlu0 %3372
          %3374 = vrot.lane.b32.xlu0 %v3356, 18
          %v3375 = vpop.permute.xlu0 %3374
          %3376 = vrot.lane.b32.xlu0 %v3357, 18
          %v3377 = vpop.permute.xlu0 %3376
          %3378 = vrot.lane.b32.xlu0 %v3358, 18
          %v3379 = vpop.permute.xlu0 %3378
          %3380 = vrot.lane.b32.xlu0 %v3359, 18
          %v3381 = vpop.permute.xlu0 %3380
          %3382 = vrot.lane.b32.xlu0 %v3360, 18
          %v3383 = vpop.permute.xlu0 %3382
          %3384 = vrot.lane.b32.xlu0 %v3361, 18
          %v3385 = vpop.permute.xlu0 %3384
          %3386 = vrot.lane.b32.xlu0 %v3362, 18
          %v3387 = vpop.permute.xlu0 %3386
          %3388 = vrot.lane.b32.xlu0 %v3363, 18
          %v3389 = vpop.permute.xlu0 %3388
          %3390 = vrot.lane.b32.xlu0 %v3364, 18
          %v3391 = vpop.permute.xlu0 %3390
          %3392 = vrot.lane.b32.xlu0 %v3365, 18
          %v3393 = vpop.permute.xlu0 %3392
          %3394 = vrot.lane.b32.xlu0 %v3366, 18
          %v3395 = vpop.permute.xlu0 %3394
          %3396 = vrot.lane.b32.xlu0 %v3367, 18
          %v3397 = vpop.permute.xlu0 %3396
          %3398 = vrot.lane.b32.xlu0 %v3368, 18
          %v3399 = vpop.permute.xlu0 %3398
          %3400 = vrot.lane.b32.xlu0 %v3369, 18
          %v3401 = vpop.permute.xlu0 %3400
          %vm3418 = vcmask 171152
          %3419 = vst.msk [vmem:[#allocation3] sm:$0xff] %vm3418, %v3371
          %3420 = vst.msk [vmem:[#allocation3 + $0x8] sm:$0xff] %vm3418, %v3373
          %3421 = vst.msk [vmem:[#allocation3 + $0x10] sm:$0xff] %vm3418, %v3375
          %3422 = vst.msk [vmem:[#allocation3 + $0x18] sm:$0xff] %vm3418, %v3377
          %3423 = vst.msk [vmem:[#allocation3 + $0x20] sm:$0xff] %vm3418, %v3379
          %3424 = vst.msk [vmem:[#allocation3 + $0x28] sm:$0xff] %vm3418, %v3381
          %3425 = vst.msk [vmem:[#allocation3 + $0x30] sm:$0xff] %vm3418, %v3383
          %3426 = vst.msk [vmem:[#allocation3 + $0x38] sm:$0xff] %vm3418, %v3385
          %3427 = vst.msk [vmem:[#allocation3 + $0x40] sm:$0xff] %vm3418, %v3387
          %3428 = vst.msk [vmem:[#allocation3 + $0x48] sm:$0xff] %vm3418, %v3389
          %3429 = vst.msk [vmem:[#allocation3 + $0x50] sm:$0xff] %vm3418, %v3391
          %3430 = vst.msk [vmem:[#allocation3 + $0x58] sm:$0xff] %vm3418, %v3393
          %3431 = vst.msk [vmem:[#allocation3 + $0x60] sm:$0xff] %vm3418, %v3395
          %3432 = vst.msk [vmem:[#allocation3 + $0x68] sm:$0xff] %vm3418, %v3397
          %3433 = vst.msk [vmem:[#allocation3 + $0x70] sm:$0xff] %vm3418, %v3399
          %3434 = vst.msk [vmem:[#allocation3 + $0x78] sm:$0xff] %vm3418, %v3401
          %v3435 = vld [vmem:[%s548] sm:$0x8]
          %v3436 = vld [vmem:[%s548 + $0x4] sm:$0xf]
          %v3437 = vld [vmem:[%s548 + $0x8] sm:$0xf]
          %v3438 = vld [vmem:[%s548 + $0xc] sm:$0x8]
          %v3439 = vld [vmem:[%s548 + $0x10] sm:$0xf]
          %v3440 = vld [vmem:[%s548 + $0x14] sm:$0xf]
          %v3441 = vld [vmem:[%s548 + $0x18] sm:$0x8]
          %v3442 = vld [vmem:[%s548 + $0x1c] sm:$0xf]
          %v3443 = vld [vmem:[%s548 + $0x20] sm:$0xf]
          %v3444 = vld [vmem:[%s548 + $0x24] sm:$0x8]
          %v3445 = vld [vmem:[%s548 + $0x28] sm:$0xf]
          %v3446 = vld [vmem:[%s548 + $0x2c] sm:$0xf]
          %v3447 = vld [vmem:[%s548 + $0x30] sm:$0x8]
          %v3448 = vld [vmem:[%s548 + $0x34] sm:$0xf]
          %v3449 = vld [vmem:[%s548 + $0x38] sm:$0xf]
          %v3450 = vld [vmem:[%s548 + $0x3c] sm:$0x8]
          %v3451 = vld [vmem:[%s548 + $0x40] sm:$0xf]
          %v3452 = vld [vmem:[%s548 + $0x44] sm:$0xf]
          %v3453 = vld [vmem:[%s548 + $0x48] sm:$0x8]
          %v3454 = vld [vmem:[%s548 + $0x4c] sm:$0xf]
          %v3455 = vld [vmem:[%s548 + $0x50] sm:$0xf]
          %v3456 = vld [vmem:[%s548 + $0x54] sm:$0x8]
          %v3457 = vld [vmem:[%s548 + $0x58] sm:$0xf]
          %v3458 = vld [vmem:[%s548 + $0x5c] sm:$0xf]
          %v3459 = vld [vmem:[%s548 + $0x60] sm:$0x8]
          %v3460 = vld [vmem:[%s548 + $0x64] sm:$0xf]
          %v3461 = vld [vmem:[%s548 + $0x68] sm:$0xf]
          %v3462 = vld [vmem:[%s548 + $0x6c] sm:$0x8]
          %v3463 = vld [vmem:[%s548 + $0x70] sm:$0xf]
          %v3464 = vld [vmem:[%s548 + $0x74] sm:$0xf]
          %v3465 = vld [vmem:[%s548 + $0x78] sm:$0x8]
          %v3466 = vld [vmem:[%s548 + $0x7c] sm:$0xf]
          %v3467 = vld [vmem:[%s548 + $0x80] sm:$0xf]
          %v3468 = vld [vmem:[%s548 + $0x84] sm:$0x8]
          %v3469 = vld [vmem:[%s548 + $0x88] sm:$0xf]
          %v3470 = vld [vmem:[%s548 + $0x8c] sm:$0xf]
          %v3471 = vld [vmem:[%s548 + $0x90] sm:$0x8]
          %v3472 = vld [vmem:[%s548 + $0x94] sm:$0xf]
          %v3473 = vld [vmem:[%s548 + $0x98] sm:$0xf]
          %v3474 = vld [vmem:[%s548 + $0x9c] sm:$0x8]
          %v3475 = vld [vmem:[%s548 + $0xa0] sm:$0xf]
          %v3476 = vld [vmem:[%s548 + $0xa4] sm:$0xf]
          %v3477 = vld [vmem:[%s548 + $0xa8] sm:$0x8]
          %v3478 = vld [vmem:[%s548 + $0xac] sm:$0xf]
          %v3479 = vld [vmem:[%s548 + $0xb0] sm:$0xf]
          %v3480 = vld [vmem:[%s548 + $0xb4] sm:$0x8]
          %v3481 = vld [vmem:[%s548 + $0xb8] sm:$0xf]
          %v3482 = vld [vmem:[%s548 + $0xbc] sm:$0xf]
          %vm3483 = vsmask.f32 256
          %vm3484 = vsmask.f32 4368
          %vm3485 = vmor %vm3483, %vm3484
          %v3487 = vshrl.u32 %v3435, 16
          %v3489 = vrot.slane %v3487, 7
          %v3490 = vrot.slane %v3489, 4
          %v3492 = vshrl.u32 %v3436, 16
          %v3494 = vrot.slane %v3492, 7
          %v3495 = vshll.u32 %v3436, 16
          %v3497 = vor.u32 %v3494, %v3495
          %v3498 = vsel %vm3485, %v3490, %v3497
          %v3499 = vrot.slane %v3494, 4
          %v3501 = vshrl.u32 %v3437, 16
          %v3503 = vrot.slane %v3501, 7
          %v3504 = vshll.u32 %v3437, 16
          %v3506 = vor.u32 %v3503, %v3504
          %v3507 = vsel %vm3485, %v3499, %v3506
          %v3509 = vshrl.u32 %v3438, 16
          %v3511 = vrot.slane %v3509, 7
          %v3512 = vrot.slane %v3511, 4
          %v3514 = vshrl.u32 %v3439, 16
          %v3516 = vrot.slane %v3514, 7
          %v3517 = vshll.u32 %v3439, 16
          %v3519 = vor.u32 %v3516, %v3517
          %v3520 = vsel %vm3485, %v3512, %v3519
          %v3521 = vrot.slane %v3516, 4
          %v3523 = vshrl.u32 %v3440, 16
          %v3525 = vrot.slane %v3523, 7
          %v3526 = vshll.u32 %v3440, 16
          %v3528 = vor.u32 %v3525, %v3526
          %v3529 = vsel %vm3485, %v3521, %v3528
          %v3531 = vshrl.u32 %v3441, 16
          %v3533 = vrot.slane %v3531, 7
          %v3534 = vrot.slane %v3533, 4
          %v3536 = vshrl.u32 %v3442, 16
          %v3538 = vrot.slane %v3536, 7
          %v3539 = vshll.u32 %v3442, 16
          %v3541 = vor.u32 %v3538, %v3539
          %v3542 = vsel %vm3485, %v3534, %v3541
          %v3543 = vrot.slane %v3538, 4
          %v3545 = vshrl.u32 %v3443, 16
          %v3547 = vrot.slane %v3545, 7
          %v3548 = vshll.u32 %v3443, 16
          %v3550 = vor.u32 %v3547, %v3548
          %v3551 = vsel %vm3485, %v3543, %v3550
          %v3553 = vshrl.u32 %v3444, 16
          %v3555 = vrot.slane %v3553, 7
          %v3556 = vrot.slane %v3555, 4
          %v3558 = vshrl.u32 %v3445, 16
          %v3560 = vrot.slane %v3558, 7
          %v3561 = vshll.u32 %v3445, 16
          %v3563 = vor.u32 %v3560, %v3561
          %v3564 = vsel %vm3485, %v3556, %v3563
          %v3565 = vrot.slane %v3560, 4
          %v3567 = vshrl.u32 %v3446, 16
          %v3569 = vrot.slane %v3567, 7
          %v3570 = vshll.u32 %v3446, 16
          %v3572 = vor.u32 %v3569, %v3570
          %v3573 = vsel %vm3485, %v3565, %v3572
          %v3575 = vshrl.u32 %v3447, 16
          %v3577 = vrot.slane %v3575, 7
          %v3578 = vrot.slane %v3577, 4
          %v3580 = vshrl.u32 %v3448, 16
          %v3582 = vrot.slane %v3580, 7
          %v3583 = vshll.u32 %v3448, 16
          %v3585 = vor.u32 %v3582, %v3583
          %v3586 = vsel %vm3485, %v3578, %v3585
          %v3587 = vrot.slane %v3582, 4
          %v3589 = vshrl.u32 %v3449, 16
          %v3591 = vrot.slane %v3589, 7
          %v3592 = vshll.u32 %v3449, 16
          %v3594 = vor.u32 %v3591, %v3592
          %v3595 = vsel %vm3485, %v3587, %v3594
          %v3597 = vshrl.u32 %v3450, 16
          %v3599 = vrot.slane %v3597, 7
          %v3600 = vrot.slane %v3599, 4
          %v3602 = vshrl.u32 %v3451, 16
          %v3604 = vrot.slane %v3602, 7
          %v3605 = vshll.u32 %v3451, 16
          %v3607 = vor.u32 %v3604, %v3605
          %v3608 = vsel %vm3485, %v3600, %v3607
          %v3609 = vrot.slane %v3604, 4
          %v3611 = vshrl.u32 %v3452, 16
          %v3613 = vrot.slane %v3611, 7
          %v3614 = vshll.u32 %v3452, 16
          %v3616 = vor.u32 %v3613, %v3614
          %v3617 = vsel %vm3485, %v3609, %v3616
          %v3619 = vshrl.u32 %v3453, 16
          %v3621 = vrot.slane %v3619, 7
          %v3622 = vrot.slane %v3621, 4
          %v3624 = vshrl.u32 %v3454, 16
          %v3626 = vrot.slane %v3624, 7
          %v3627 = vshll.u32 %v3454, 16
          %v3629 = vor.u32 %v3626, %v3627
          %v3630 = vsel %vm3485, %v3622, %v3629
          %v3631 = vrot.slane %v3626, 4
          %v3633 = vshrl.u32 %v3455, 16
          %v3635 = vrot.slane %v3633, 7
          %v3636 = vshll.u32 %v3455, 16
          %v3638 = vor.u32 %v3635, %v3636
          %v3639 = vsel %vm3485, %v3631, %v3638
          %v3641 = vshrl.u32 %v3456, 16
          %v3643 = vrot.slane %v3641, 7
          %v3644 = vrot.slane %v3643, 4
          %v3646 = vshrl.u32 %v3457, 16
          %v3648 = vrot.slane %v3646, 7
          %v3649 = vshll.u32 %v3457, 16
          %v3651 = vor.u32 %v3648, %v3649
          %v3652 = vsel %vm3485, %v3644, %v3651
          %v3653 = vrot.slane %v3648, 4
          %v3655 = vshrl.u32 %v3458, 16
          %v3657 = vrot.slane %v3655, 7
          %v3658 = vshll.u32 %v3458, 16
          %v3660 = vor.u32 %v3657, %v3658
          %v3661 = vsel %vm3485, %v3653, %v3660
          %v3663 = vshrl.u32 %v3459, 16
          %v3665 = vrot.slane %v3663, 7
          %v3666 = vrot.slane %v3665, 4
          %v3668 = vshrl.u32 %v3460, 16
          %v3670 = vrot.slane %v3668, 7
          %v3671 = vshll.u32 %v3460, 16
          %v3673 = vor.u32 %v3670, %v3671
          %v3674 = vsel %vm3485, %v3666, %v3673
          %v3675 = vrot.slane %v3670, 4
          %v3677 = vshrl.u32 %v3461, 16
          %v3679 = vrot.slane %v3677, 7
          %v3680 = vshll.u32 %v3461, 16
          %v3682 = vor.u32 %v3679, %v3680
          %v3683 = vsel %vm3485, %v3675, %v3682
          %v3685 = vshrl.u32 %v3462, 16
          %v3687 = vrot.slane %v3685, 7
          %v3688 = vrot.slane %v3687, 4
          %v3690 = vshrl.u32 %v3463, 16
          %v3692 = vrot.slane %v3690, 7
          %v3693 = vshll.u32 %v3463, 16
          %v3695 = vor.u32 %v3692, %v3693
          %v3696 = vsel %vm3485, %v3688, %v3695
          %v3697 = vrot.slane %v3692, 4
          %v3699 = vshrl.u32 %v3464, 16
          %v3701 = vrot.slane %v3699, 7
          %v3702 = vshll.u32 %v3464, 16
          %v3704 = vor.u32 %v3701, %v3702
          %v3705 = vsel %vm3485, %v3697, %v3704
          %v3707 = vshrl.u32 %v3465, 16
          %v3709 = vrot.slane %v3707, 7
          %v3710 = vrot.slane %v3709, 4
          %v3712 = vshrl.u32 %v3466, 16
          %v3714 = vrot.slane %v3712, 7
          %v3715 = vshll.u32 %v3466, 16
          %v3717 = vor.u32 %v3714, %v3715
          %v3718 = vsel %vm3485, %v3710, %v3717
          %v3719 = vrot.slane %v3714, 4
          %v3721 = vshrl.u32 %v3467, 16
          %v3723 = vrot.slane %v3721, 7
          %v3724 = vshll.u32 %v3467, 16
          %v3726 = vor.u32 %v3723, %v3724
          %v3727 = vsel %vm3485, %v3719, %v3726
          %v3729 = vshrl.u32 %v3468, 16
          %v3731 = vrot.slane %v3729, 7
          %v3732 = vrot.slane %v3731, 4
          %v3734 = vshrl.u32 %v3469, 16
          %v3736 = vrot.slane %v3734, 7
          %v3737 = vshll.u32 %v3469, 16
          %v3739 = vor.u32 %v3736, %v3737
          %v3740 = vsel %vm3485, %v3732, %v3739
          %v3741 = vrot.slane %v3736, 4
          %v3743 = vshrl.u32 %v3470, 16
          %v3745 = vrot.slane %v3743, 7
          %v3746 = vshll.u32 %v3470, 16
          %v3748 = vor.u32 %v3745, %v3746
          %v3749 = vsel %vm3485, %v3741, %v3748
          %v3751 = vshrl.u32 %v3471, 16
          %v3753 = vrot.slane %v3751, 7
          %v3754 = vrot.slane %v3753, 4
          %v3756 = vshrl.u32 %v3472, 16
          %v3758 = vrot.slane %v3756, 7
          %v3759 = vshll.u32 %v3472, 16
          %v3761 = vor.u32 %v3758, %v3759
          %v3762 = vsel %vm3485, %v3754, %v3761
          %v3763 = vrot.slane %v3758, 4
          %v3765 = vshrl.u32 %v3473, 16
          %v3767 = vrot.slane %v3765, 7
          %v3768 = vshll.u32 %v3473, 16
          %v3770 = vor.u32 %v3767, %v3768
          %v3771 = vsel %vm3485, %v3763, %v3770
          %v3773 = vshrl.u32 %v3474, 16
          %v3775 = vrot.slane %v3773, 7
          %v3776 = vrot.slane %v3775, 4
          %v3778 = vshrl.u32 %v3475, 16
          %v3780 = vrot.slane %v3778, 7
          %v3781 = vshll.u32 %v3475, 16
          %v3783 = vor.u32 %v3780, %v3781
          %v3784 = vsel %vm3485, %v3776, %v3783
          %v3785 = vrot.slane %v3780, 4
          %v3787 = vshrl.u32 %v3476, 16
          %v3789 = vrot.slane %v3787, 7
          %v3790 = vshll.u32 %v3476, 16
          %v3792 = vor.u32 %v3789, %v3790
          %v3793 = vsel %vm3485, %v3785, %v3792
          %v3795 = vshrl.u32 %v3477, 16
          %v3797 = vrot.slane %v3795, 7
          %v3798 = vrot.slane %v3797, 4
          %v3800 = vshrl.u32 %v3478, 16
          %v3802 = vrot.slane %v3800, 7
          %v3803 = vshll.u32 %v3478, 16
          %v3805 = vor.u32 %v3802, %v3803
          %v3806 = vsel %vm3485, %v3798, %v3805
          %v3807 = vrot.slane %v3802, 4
          %v3809 = vshrl.u32 %v3479, 16
          %v3811 = vrot.slane %v3809, 7
          %v3812 = vshll.u32 %v3479, 16
          %v3814 = vor.u32 %v3811, %v3812
          %v3815 = vsel %vm3485, %v3807, %v3814
          %v3817 = vshrl.u32 %v3480, 16
          %v3819 = vrot.slane %v3817, 7
          %v3820 = vrot.slane %v3819, 4
          %v3822 = vshrl.u32 %v3481, 16
          %v3824 = vrot.slane %v3822, 7
          %v3825 = vshll.u32 %v3481, 16
          %v3827 = vor.u32 %v3824, %v3825
          %v3828 = vsel %vm3485, %v3820, %v3827
          %v3829 = vrot.slane %v3824, 4
          %v3831 = vshrl.u32 %v3482, 16
          %v3833 = vrot.slane %v3831, 7
          %v3834 = vshll.u32 %v3482, 16
          %v3836 = vor.u32 %v3833, %v3834
          %v3837 = vsel %vm3485, %v3829, %v3836
          %v3838 = vunpack.c.l.b16 %v3498
          %v3839 = vunpack.c.l.b16 %v3507
          %v3840 = vunpack.c.l.b16 %v3520
          %v3841 = vunpack.c.l.b16 %v3529
          %v3842 = vunpack.c.l.b16 %v3542
          %v3843 = vunpack.c.l.b16 %v3551
          %v3844 = vunpack.c.l.b16 %v3564
          %v3845 = vunpack.c.l.b16 %v3573
          %v3846 = vunpack.c.l.b16 %v3586
          %v3847 = vunpack.c.l.b16 %v3595
          %v3848 = vunpack.c.l.b16 %v3608
          %v3849 = vunpack.c.l.b16 %v3617
          %v3850 = vunpack.c.l.b16 %v3630
          %v3851 = vunpack.c.l.b16 %v3639
          %v3852 = vunpack.c.l.b16 %v3652
          %v3853 = vunpack.c.l.b16 %v3661
          %v3854 = vunpack.c.l.b16 %v3674
          %v3855 = vunpack.c.l.b16 %v3683
          %v3856 = vunpack.c.l.b16 %v3696
          %v3857 = vunpack.c.l.b16 %v3705
          %v3858 = vunpack.c.l.b16 %v3718
          %v3859 = vunpack.c.l.b16 %v3727
          %v3860 = vunpack.c.l.b16 %v3740
          %v3861 = vunpack.c.l.b16 %v3749
          %v3862 = vunpack.c.l.b16 %v3762
          %v3863 = vunpack.c.l.b16 %v3771
          %v3864 = vunpack.c.l.b16 %v3784
          %v3865 = vunpack.c.l.b16 %v3793
          %v3866 = vunpack.c.l.b16 %v3806
          %v3867 = vunpack.c.l.b16 %v3815
          %v3868 = vunpack.c.l.b16 %v3828
          %v3869 = vunpack.c.l.b16 %v3837
          %v3870 = vpack.c.b16 %v3839, %v3838
          %v3871 = vpack.c.b16 %v3841, %v3840
          %v3872 = vpack.c.b16 %v3843, %v3842
          %v3873 = vpack.c.b16 %v3845, %v3844
          %v3874 = vpack.c.b16 %v3847, %v3846
          %v3875 = vpack.c.b16 %v3849, %v3848
          %v3876 = vpack.c.b16 %v3851, %v3850
          %v3877 = vpack.c.b16 %v3853, %v3852
          %v3878 = vpack.c.b16 %v3855, %v3854
          %v3879 = vpack.c.b16 %v3857, %v3856
          %v3880 = vpack.c.b16 %v3859, %v3858
          %v3881 = vpack.c.b16 %v3861, %v3860
          %v3882 = vpack.c.b16 %v3863, %v3862
          %v3883 = vpack.c.b16 %v3865, %v3864
          %v3884 = vpack.c.b16 %v3867, %v3866
          %v3885 = vpack.c.b16 %v3869, %v3868
          %3886 = vrot.lane.b32.xlu0 %v3870, 21
          %v3887 = vpop.permute.xlu0 %3886
          %3888 = vrot.lane.b32.xlu0 %v3871, 21
          %v3889 = vpop.permute.xlu0 %3888
          %3890 = vrot.lane.b32.xlu0 %v3872, 21
          %v3891 = vpop.permute.xlu0 %3890
          %3892 = vrot.lane.b32.xlu0 %v3873, 21
          %v3893 = vpop.permute.xlu0 %3892
          %3894 = vrot.lane.b32.xlu0 %v3874, 21
          %v3895 = vpop.permute.xlu0 %3894
          %3896 = vrot.lane.b32.xlu0 %v3875, 21
          %v3897 = vpop.permute.xlu0 %3896
          %3898 = vrot.lane.b32.xlu0 %v3876, 21
          %v3899 = vpop.permute.xlu0 %3898
          %3900 = vrot.lane.b32.xlu0 %v3877, 21
          %v3901 = vpop.permute.xlu0 %3900
          %3902 = vrot.lane.b32.xlu0 %v3878, 21
          %v3903 = vpop.permute.xlu0 %3902
          %3904 = vrot.lane.b32.xlu0 %v3879, 21
          %v3905 = vpop.permute.xlu0 %3904
          %3906 = vrot.lane.b32.xlu0 %v3880, 21
          %v3907 = vpop.permute.xlu0 %3906
          %3908 = vrot.lane.b32.xlu0 %v3881, 21
          %v3909 = vpop.permute.xlu0 %3908
          %3910 = vrot.lane.b32.xlu0 %v3882, 21
          %v3911 = vpop.permute.xlu0 %3910
          %3912 = vrot.lane.b32.xlu0 %v3883, 21
          %v3913 = vpop.permute.xlu0 %3912
          %3914 = vrot.lane.b32.xlu0 %v3884, 21
          %v3915 = vpop.permute.xlu0 %3914
          %3916 = vrot.lane.b32.xlu0 %v3885, 21
          %v3917 = vpop.permute.xlu0 %3916
          %vm3934 = vcmask 195752
          %3935 = vst.msk [vmem:[#allocation3] sm:$0xff] %vm3934, %v3887
          %3936 = vst.msk [vmem:[#allocation3 + $0x8] sm:$0xff] %vm3934, %v3889
          %3937 = vst.msk [vmem:[#allocation3 + $0x10] sm:$0xff] %vm3934, %v3891
          %3938 = vst.msk [vmem:[#allocation3 + $0x18] sm:$0xff] %vm3934, %v3893
          %3939 = vst.msk [vmem:[#allocation3 + $0x20] sm:$0xff] %vm3934, %v3895
          %3940 = vst.msk [vmem:[#allocation3 + $0x28] sm:$0xff] %vm3934, %v3897
          %3941 = vst.msk [vmem:[#allocation3 + $0x30] sm:$0xff] %vm3934, %v3899
          %3942 = vst.msk [vmem:[#allocation3 + $0x38] sm:$0xff] %vm3934, %v3901
          %3943 = vst.msk [vmem:[#allocation3 + $0x40] sm:$0xff] %vm3934, %v3903
          %3944 = vst.msk [vmem:[#allocation3 + $0x48] sm:$0xff] %vm3934, %v3905
          %3945 = vst.msk [vmem:[#allocation3 + $0x50] sm:$0xff] %vm3934, %v3907
          %3946 = vst.msk [vmem:[#allocation3 + $0x58] sm:$0xff] %vm3934, %v3909
          %3947 = vst.msk [vmem:[#allocation3 + $0x60] sm:$0xff] %vm3934, %v3911
          %3948 = vst.msk [vmem:[#allocation3 + $0x68] sm:$0xff] %vm3934, %v3913
          %3949 = vst.msk [vmem:[#allocation3 + $0x70] sm:$0xff] %vm3934, %v3915
          %3950 = vst.msk [vmem:[#allocation3 + $0x78] sm:$0xff] %vm3934, %v3917
          %v3951 = vld [vmem:[%s548 + $0x4] sm:$0xf]
          %v3952 = vld [vmem:[%s548 + $0x8] sm:$0xf]
          %v3953 = vld [vmem:[%s548 + $0x10] sm:$0xf]
          %v3954 = vld [vmem:[%s548 + $0x14] sm:$0xf]
          %v3955 = vld [vmem:[%s548 + $0x1c] sm:$0xf]
          %v3956 = vld [vmem:[%s548 + $0x20] sm:$0xf]
          %v3957 = vld [vmem:[%s548 + $0x28] sm:$0xf]
          %v3958 = vld [vmem:[%s548 + $0x2c] sm:$0xf]
          %v3959 = vld [vmem:[%s548 + $0x34] sm:$0xf]
          %v3960 = vld [vmem:[%s548 + $0x38] sm:$0xf]
          %v3961 = vld [vmem:[%s548 + $0x40] sm:$0xf]
          %v3962 = vld [vmem:[%s548 + $0x44] sm:$0xf]
          %v3963 = vld [vmem:[%s548 + $0x4c] sm:$0xf]
          %v3964 = vld [vmem:[%s548 + $0x50] sm:$0xf]
          %v3965 = vld [vmem:[%s548 + $0x58] sm:$0xf]
          %v3966 = vld [vmem:[%s548 + $0x5c] sm:$0xf]
          %v3967 = vld [vmem:[%s548 + $0x64] sm:$0xf]
          %v3968 = vld [vmem:[%s548 + $0x68] sm:$0xf]
          %v3969 = vld [vmem:[%s548 + $0x70] sm:$0xf]
          %v3970 = vld [vmem:[%s548 + $0x74] sm:$0xf]
          %v3971 = vld [vmem:[%s548 + $0x7c] sm:$0xf]
          %v3972 = vld [vmem:[%s548 + $0x80] sm:$0xf]
          %v3973 = vld [vmem:[%s548 + $0x88] sm:$0xf]
          %v3974 = vld [vmem:[%s548 + $0x8c] sm:$0xf]
          %v3975 = vld [vmem:[%s548 + $0x94] sm:$0xf]
          %v3976 = vld [vmem:[%s548 + $0x98] sm:$0xf]
          %v3977 = vld [vmem:[%s548 + $0xa0] sm:$0xf]
          %v3978 = vld [vmem:[%s548 + $0xa4] sm:$0xf]
          %v3979 = vld [vmem:[%s548 + $0xac] sm:$0xf]
          %v3980 = vld [vmem:[%s548 + $0xb0] sm:$0xf]
          %v3981 = vld [vmem:[%s548 + $0xb8] sm:$0xf]
          %v3982 = vld [vmem:[%s548 + $0xbc] sm:$0xf]
          %v4015 = vunpack.c.l.b16 %v3951
          %v4016 = vunpack.c.l.b16 %v3952
          %v4017 = vunpack.c.l.b16 %v3953
          %v4018 = vunpack.c.l.b16 %v3954
          %v4019 = vunpack.c.l.b16 %v3955
          %v4020 = vunpack.c.l.b16 %v3956
          %v4021 = vunpack.c.l.b16 %v3957
          %v4022 = vunpack.c.l.b16 %v3958
          %v4023 = vunpack.c.l.b16 %v3959
          %v4024 = vunpack.c.l.b16 %v3960
          %v4025 = vunpack.c.l.b16 %v3961
          %v4026 = vunpack.c.l.b16 %v3962
          %v4027 = vunpack.c.l.b16 %v3963
          %v4028 = vunpack.c.l.b16 %v3964
          %v4029 = vunpack.c.l.b16 %v3965
          %v4030 = vunpack.c.l.b16 %v3966
          %v4031 = vunpack.c.l.b16 %v3967
          %v4032 = vunpack.c.l.b16 %v3968
          %v4033 = vunpack.c.l.b16 %v3969
          %v4034 = vunpack.c.l.b16 %v3970
          %v4035 = vunpack.c.l.b16 %v3971
          %v4036 = vunpack.c.l.b16 %v3972
          %v4037 = vunpack.c.l.b16 %v3973
          %v4038 = vunpack.c.l.b16 %v3974
          %v4039 = vunpack.c.l.b16 %v3975
          %v4040 = vunpack.c.l.b16 %v3976
          %v4041 = vunpack.c.l.b16 %v3977
          %v4042 = vunpack.c.l.b16 %v3978
          %v4043 = vunpack.c.l.b16 %v3979
          %v4044 = vunpack.c.l.b16 %v3980
          %v4045 = vunpack.c.l.b16 %v3981
          %v4046 = vunpack.c.l.b16 %v3982
          %v4047 = vpack.c.b16 %v4016, %v4015
          %v4048 = vpack.c.b16 %v4018, %v4017
          %v4049 = vpack.c.b16 %v4020, %v4019
          %v4050 = vpack.c.b16 %v4022, %v4021
          %v4051 = vpack.c.b16 %v4024, %v4023
          %v4052 = vpack.c.b16 %v4026, %v4025
          %v4053 = vpack.c.b16 %v4028, %v4027
          %v4054 = vpack.c.b16 %v4030, %v4029
          %v4055 = vpack.c.b16 %v4032, %v4031
          %v4056 = vpack.c.b16 %v4034, %v4033
          %v4057 = vpack.c.b16 %v4036, %v4035
          %v4058 = vpack.c.b16 %v4038, %v4037
          %v4059 = vpack.c.b16 %v4040, %v4039
          %v4060 = vpack.c.b16 %v4042, %v4041
          %v4061 = vpack.c.b16 %v4044, %v4043
          %v4062 = vpack.c.b16 %v4046, %v4045
          %4063 = vrot.lane.b32.xlu0 %v4047, 24
          %v4064 = vpop.permute.xlu0 %4063
          %4065 = vrot.lane.b32.xlu0 %v4048, 24
          %v4066 = vpop.permute.xlu0 %4065
          %4067 = vrot.lane.b32.xlu0 %v4049, 24
          %v4068 = vpop.permute.xlu0 %4067
          %4069 = vrot.lane.b32.xlu0 %v4050, 24
          %v4070 = vpop.permute.xlu0 %4069
          %4071 = vrot.lane.b32.xlu0 %v4051, 24
          %v4072 = vpop.permute.xlu0 %4071
          %4073 = vrot.lane.b32.xlu0 %v4052, 24
          %v4074 = vpop.permute.xlu0 %4073
          %4075 = vrot.lane.b32.xlu0 %v4053, 24
          %v4076 = vpop.permute.xlu0 %4075
          %4077 = vrot.lane.b32.xlu0 %v4054, 24
          %v4078 = vpop.permute.xlu0 %4077
          %4079 = vrot.lane.b32.xlu0 %v4055, 24
          %v4080 = vpop.permute.xlu0 %4079
          %4081 = vrot.lane.b32.xlu0 %v4056, 24
          %v4082 = vpop.permute.xlu0 %4081
          %4083 = vrot.lane.b32.xlu0 %v4057, 24
          %v4084 = vpop.permute.xlu0 %4083
          %4085 = vrot.lane.b32.xlu0 %v4058, 24
          %v4086 = vpop.permute.xlu0 %4085
          %4087 = vrot.lane.b32.xlu0 %v4059, 24
          %v4088 = vpop.permute.xlu0 %4087
          %4089 = vrot.lane.b32.xlu0 %v4060, 24
          %v4090 = vpop.permute.xlu0 %4089
          %4091 = vrot.lane.b32.xlu0 %v4061, 24
          %v4092 = vpop.permute.xlu0 %4091
          %4093 = vrot.lane.b32.xlu0 %v4062, 24
          %v4094 = vpop.permute.xlu0 %4093
          %vm4111 = vcmask 220352
          %4112 = vst.msk [vmem:[#allocation3] sm:$0xff] %vm4111, %v4064
          %4113 = vst.msk [vmem:[#allocation3 + $0x8] sm:$0xff] %vm4111, %v4066
          %4114 = vst.msk [vmem:[#allocation3 + $0x10] sm:$0xff] %vm4111, %v4068
          %4115 = vst.msk [vmem:[#allocation3 + $0x18] sm:$0xff] %vm4111, %v4070
          %4116 = vst.msk [vmem:[#allocation3 + $0x20] sm:$0xff] %vm4111, %v4072
          %4117 = vst.msk [vmem:[#allocation3 + $0x28] sm:$0xff] %vm4111, %v4074
          %4118 = vst.msk [vmem:[#allocation3 + $0x30] sm:$0xff] %vm4111, %v4076
          %4119 = vst.msk [vmem:[#allocation3 + $0x38] sm:$0xff] %vm4111, %v4078
          %4120 = vst.msk [vmem:[#allocation3 + $0x40] sm:$0xff] %vm4111, %v4080
          %4121 = vst.msk [vmem:[#allocation3 + $0x48] sm:$0xff] %vm4111, %v4082
          %4122 = vst.msk [vmem:[#allocation3 + $0x50] sm:$0xff] %vm4111, %v4084
          %4123 = vst.msk [vmem:[#allocation3 + $0x58] sm:$0xff] %vm4111, %v4086
          %4124 = vst.msk [vmem:[#allocation3 + $0x60] sm:$0xff] %vm4111, %v4088
          %4125 = vst.msk [vmem:[#allocation3 + $0x68] sm:$0xff] %vm4111, %v4090
          %4126 = vst.msk [vmem:[#allocation3 + $0x70] sm:$0xff] %vm4111, %v4092
          %4127 = vst.msk [vmem:[#allocation3 + $0x78] sm:$0xff] %vm4111, %v4094
          %v4128 = vld [vmem:[#allocation4] sm:$0xff]
          %v4129 = vld [vmem:[#allocation4 + $0x8] sm:$0xff]
          %v4130 = vld [vmem:[#allocation4 + $0x10] sm:$0xff]
          %v4131 = vld [vmem:[#allocation4 + $0x18] sm:$0xff]
          %v4132 = vld [vmem:[#allocation4 + $0x20] sm:$0xff]
          %v4133 = vld [vmem:[#allocation4 + $0x28] sm:$0xff]
          %v4134 = vld [vmem:[#allocation4 + $0x30] sm:$0xff]
          %v4135 = vld [vmem:[#allocation4 + $0x38] sm:$0xff]
          %v4136 = vld [vmem:[#allocation4 + $0x40] sm:$0xff]
          %v4137 = vld [vmem:[#allocation4 + $0x48] sm:$0xff]
          %v4138 = vld [vmem:[#allocation4 + $0x50] sm:$0xff]
          %v4139 = vld [vmem:[#allocation4 + $0x58] sm:$0xff]
          %v4140 = vld [vmem:[#allocation4 + $0x60] sm:$0xff]
          %v4141 = vld [vmem:[#allocation4 + $0x68] sm:$0xff]
          %v4142 = vld [vmem:[#allocation4 + $0x70] sm:$0xff]
          %v4143 = vld [vmem:[#allocation4 + $0x78] sm:$0xff]
          %v4144 = vld [vmem:[#allocation4 + $0x80] sm:$0xff]
          %v4145 = vld [vmem:[#allocation4 + $0x88] sm:$0xff]
          %v4146 = vld [vmem:[#allocation4 + $0x90] sm:$0xff]
          %v4147 = vld [vmem:[#allocation4 + $0x98] sm:$0xff]
          %v4148 = vld [vmem:[#allocation4 + $0xa0] sm:$0xff]
          %v4149 = vld [vmem:[#allocation4 + $0xa8] sm:$0xff]
          %v4150 = vld [vmem:[#allocation4 + $0xb0] sm:$0xff]
          %v4151 = vld [vmem:[#allocation4 + $0xb8] sm:$0xff]
          %v4152 = vld [vmem:[#allocation4 + $0xc0] sm:$0xff]
          %v4153 = vld [vmem:[#allocation4 + $0xc8] sm:$0xff]
          %v4154 = vld [vmem:[#allocation4 + $0xd0] sm:$0xff]
          %v4155 = vld [vmem:[#allocation4 + $0xd8] sm:$0xff]
          %v4156 = vld [vmem:[#allocation4 + $0xe0] sm:$0xff]
          %v4157 = vld [vmem:[#allocation4 + $0xe8] sm:$0xff]
          %v4158 = vld [vmem:[#allocation4 + $0xf0] sm:$0xff]
          %v4159 = vld [vmem:[#allocation4 + $0xf8] sm:$0xff]
          %v4160 = vld [vmem:[#allocation3] sm:$0xff]
          %v4161 = vld [vmem:[#allocation3 + $0x8] sm:$0xff]
          %v4162 = vld [vmem:[#allocation3 + $0x10] sm:$0xff]
          %v4163 = vld [vmem:[#allocation3 + $0x18] sm:$0xff]
          %v4164 = vld [vmem:[#allocation3 + $0x20] sm:$0xff]
          %v4165 = vld [vmem:[#allocation3 + $0x28] sm:$0xff]
          %v4166 = vld [vmem:[#allocation3 + $0x30] sm:$0xff]
          %v4167 = vld [vmem:[#allocation3 + $0x38] sm:$0xff]
          %v4168 = vld [vmem:[#allocation3 + $0x40] sm:$0xff]
          %v4169 = vld [vmem:[#allocation3 + $0x48] sm:$0xff]
          %v4170 = vld [vmem:[#allocation3 + $0x50] sm:$0xff]
          %v4171 = vld [vmem:[#allocation3 + $0x58] sm:$0xff]
          %v4172 = vld [vmem:[#allocation3 + $0x60] sm:$0xff]
          %v4173 = vld [vmem:[#allocation3 + $0x68] sm:$0xff]
          %v4174 = vld [vmem:[#allocation3 + $0x70] sm:$0xff]
          %v4175 = vld [vmem:[#allocation3 + $0x78] sm:$0xff]
          %s4176 = smul.u32 %s541, 4
          %s4177 = smul.addr %s4176, 4
          %s4178 = scalar_lea.vmem [#allocation5], %s4177
          %v4179 = vld [vmem:[%s4178] sm:$0xf]
          %v4180 = vld [vmem:[%s4178 + $0x4] sm:$0xf]
          %v4181 = vld [vmem:[%s4178 + $0x8] sm:$0xf]
          %v4182 = vld [vmem:[%s4178 + $0xc] sm:$0x3]
          %v4187 = vunpack.c.l.b16 %v4179
          %v4188 = vunpack.c.l.b16 %v4180
          %v4189 = vunpack.c.l.b16 %v4181
          %v4190 = vunpack.c.l.b16 %v4182
          %v4191 = vpack.c.b16 %v4188, %v4187
          %v4192 = vpack.c.b16 %v4190, %v4189
          %vm4194 = vcmask 220160
          %v4196 = vsel %vm4194, %v4160, 0
          %v4199 = vsel %vm4194, %v4161, 0
          %v4202 = vsel %vm4194, %v4162, 0
          %v4205 = vsel %vm4194, %v4163, 0
          %v4208 = vsel %vm4194, %v4164, 0
          %v4211 = vsel %vm4194, %v4165, 0
          %v4214 = vsel %vm4194, %v4166, 0
          %v4217 = vsel %vm4194, %v4167, 0
          %v4220 = vsel %vm4194, %v4168, 0
          %v4223 = vsel %vm4194, %v4169, 0
          %v4226 = vsel %vm4194, %v4170, 0
          %v4229 = vsel %vm4194, %v4171, 0
          %v4232 = vsel %vm4194, %v4172, 0
          %v4235 = vsel %vm4194, %v4173, 0
          %v4238 = vsel %vm4194, %v4174, 0
          %v4241 = vsel %vm4194, %v4175, 0
          %vm4243 = vcmask 1044480
          %vm4244 = vcmask 1045504
          %v4245 = vsel %vm4243, 4294967295, 65535
          %v4246 = vsel %vm4244, %v4245, 0
          %v4248 = vand.u32 %v4192, %v4246
          %4250 = vmatprep.subr.bf16.mxu0 0
          %4251 = vmatpush1.bf16.msra.mxu0 %v4191
          %4252 = vmatprep.subr.bf16.mxu0 0
          %4253 = vmatpush1.bf16.msra.mxu0 %v4248
          %4254 = vmatprep.subr.bf16.mxu0 0
          %4255 = vmatpush1.bf16.msra.mxu0 0
          %4256 = vmatprep.subr.bf16.mxu0 0
          %4257 = vmatpush1.bf16.msra.mxu0 0
          %4258 = vmatprep.subr.bf16.mxu0 0
          %4259 = vmatpush1.bf16.msra.mxu0 0
          %4260 = vmatprep.subr.bf16.mxu0 0
          %4261 = vmatpush1.bf16.msra.mxu0 0
          %4262 = vmatprep.subr.bf16.mxu0 0
          %4263 = vmatpush1.bf16.msra.mxu0 0
          %4264 = vmatprep.subr.bf16.mxu0 0
          %4265 = vmatpush1.bf16.msra.mxu0 0
          %4266 = vmatprep.subr.bf16.mxu0 0
          %4267 = vmatpush1.bf16.msra.mxu0 0
          %4268 = vmatprep.subr.bf16.mxu0 0
          %4269 = vmatpush1.bf16.msra.mxu0 0
          %4270 = vmatprep.subr.bf16.mxu0 0
          %4271 = vmatpush1.bf16.msra.mxu0 0
          %4272 = vmatprep.subr.bf16.mxu0 0
          %4273 = vmatpush1.bf16.msra.mxu0 0
          %4274 = vmatprep.subr.bf16.mxu0 0
          %4275 = vmatpush1.bf16.msra.mxu0 0
          %4276 = vmatprep.subr.bf16.mxu0 0
          %4277 = vmatpush1.bf16.msra.mxu0 0
          %4278 = vmatprep.subr.bf16.mxu0 0
          %4279 = vmatpush1.bf16.msra.mxu0 0
          %4280 = vmatprep.subr.bf16.mxu0 0
          %4281 = vmatpush1.bf16.msra.mxu0 0
          %4282 = vmatprep.mubr.bf16.mxu0 0
          %4283 = vmatmul.mubr.bf16.gmra.mrb[0].mxu0 %v4196
          %v4284 = vpop.f32.mrb[0].mxu0
          %v4285 = vadd.f32 0.0, %v4284
          %v4286 = vpop.f32.mrb[0].mxu0
          %v4287 = vpop.f32.mrb[0].mxu0
          %v4288 = vadd.f32 0.0, %v4287
          %v4289 = vpop.f32.mrb[0].mxu0
          %4290 = vmatprep.mubr.bf16.mxu0 0
          %4291 = vmatmul.mubr.bf16.gmra.mrb[0].mxu0 %v4199
          %v4292 = vpop.f32.mrb[0].mxu0
          %v4293 = vadd.f32 0.0, %v4292
          %v4294 = vpop.f32.mrb[0].mxu0
          %v4295 = vpop.f32.mrb[0].mxu0
          %v4296 = vadd.f32 0.0, %v4295
          %v4297 = vpop.f32.mrb[0].mxu0
          %4298 = vmatprep.mubr.bf16.mxu0 0
          %4299 = vmatmul.mubr.bf16.gmra.mrb[0].mxu0 %v4202
          %v4300 = vpop.f32.mrb[0].mxu0
          %v4301 = vadd.f32 0.0, %v4300
          %v4302 = vpop.f32.mrb[0].mxu0
          %v4303 = vpop.f32.mrb[0].mxu0
          %v4304 = vadd.f32 0.0, %v4303
          %v4305 = vpop.f32.mrb[0].mxu0
          %4306 = vmatprep.mubr.bf16.mxu0 0
          %4307 = vmatmul.mubr.bf16.gmra.mrb[0].mxu0 %v4205
          %v4308 = vpop.f32.mrb[0].mxu0
          %v4309 = vadd.f32 0.0, %v4308
          %v4310 = vpop.f32.mrb[0].mxu0
          %v4311 = vpop.f32.mrb[0].mxu0
          %v4312 = vadd.f32 0.0, %v4311
          %v4313 = vpop.f32.mrb[0].mxu0
          %4314 = vmatprep.mubr.bf16.mxu0 0
          %4315 = vmatmul.mubr.bf16.gmra.mrb[0].mxu0 %v4208
          %v4316 = vpop.f32.mrb[0].mxu0
          %v4317 = vadd.f32 0.0, %v4316
          %v4318 = vpop.f32.mrb[0].mxu0
          %v4319 = vpop.f32.mrb[0].mxu0
          %v4320 = vadd.f32 0.0, %v4319
          %v4321 = vpop.f32.mrb[0].mxu0
          %4322 = vmatprep.mubr.bf16.mxu0 0
          %4323 = vmatmul.mubr.bf16.gmra.mrb[0].mxu0 %v4211
          %v4324 = vpop.f32.mrb[0].mxu0
          %v4325 = vadd.f32 0.0, %v4324
          %v4326 = vpop.f32.mrb[0].mxu0
          %v4327 = vpop.f32.mrb[0].mxu0
          %v4328 = vadd.f32 0.0, %v4327
          %v4329 = vpop.f32.mrb[0].mxu0
          %4330 = vmatprep.mubr.bf16.mxu0 0
          %4331 = vmatmul.mubr.bf16.gmra.mrb[0].mxu0 %v4214
          %v4332 = vpop.f32.mrb[0].mxu0
          %v4333 = vadd.f32 0.0, %v4332
          %v4334 = vpop.f32.mrb[0].mxu0
          %v4335 = vpop.f32.mrb[0].mxu0
          %v4336 = vadd.f32 0.0, %v4335
          %v4337 = vpop.f32.mrb[0].mxu0
          %4338 = vmatprep.mubr.bf16.mxu0 0
          %4339 = vmatmul.mubr.bf16.gmra.mrb[0].mxu0 %v4217
          %v4340 = vpop.f32.mrb[0].mxu0
          %v4341 = vadd.f32 0.0, %v4340
          %v4342 = vpop.f32.mrb[0].mxu0
          %v4343 = vpop.f32.mrb[0].mxu0
          %v4344 = vadd.f32 0.0, %v4343
          %v4345 = vpop.f32.mrb[0].mxu0
          %4346 = vmatprep.mubr.bf16.mxu0 0
          %4347 = vmatmul.mubr.bf16.gmra.mrb[0].mxu0 %v4220
          %v4348 = vpop.f32.mrb[0].mxu0
          %v4349 = vadd.f32 0.0, %v4348
          %v4350 = vpop.f32.mrb[0].mxu0
          %v4351 = vpop.f32.mrb[0].mxu0
          %v4352 = vadd.f32 0.0, %v4351
          %v4353 = vpop.f32.mrb[0].mxu0
          %4354 = vmatprep.mubr.bf16.mxu0 0
          %4355 = vmatmul.mubr.bf16.gmra.mrb[0].mxu0 %v4223
          %v4356 = vpop.f32.mrb[0].mxu0
          %v4357 = vadd.f32 0.0, %v4356
          %v4358 = vpop.f32.mrb[0].mxu0
          %v4359 = vpop.f32.mrb[0].mxu0
          %v4360 = vadd.f32 0.0, %v4359
          %v4361 = vpop.f32.mrb[0].mxu0
          %4362 = vmatprep.mubr.bf16.mxu0 0
          %4363 = vmatmul.mubr.bf16.gmra.mrb[0].mxu0 %v4226
          %v4364 = vpop.f32.mrb[0].mxu0
          %v4365 = vadd.f32 0.0, %v4364
          %v4366 = vpop.f32.mrb[0].mxu0
          %v4367 = vpop.f32.mrb[0].mxu0
          %v4368 = vadd.f32 0.0, %v4367
          %v4369 = vpop.f32.mrb[0].mxu0
          %4370 = vmatprep.mubr.bf16.mxu0 0
          %4371 = vmatmul.mubr.bf16.gmra.mrb[0].mxu0 %v4229
          %v4372 = vpop.f32.mrb[0].mxu0
          %v4373 = vadd.f32 0.0, %v4372
          %v4374 = vpop.f32.mrb[0].mxu0
          %v4375 = vpop.f32.mrb[0].mxu0
          %v4376 = vadd.f32 0.0, %v4375
          %v4377 = vpop.f32.mrb[0].mxu0
          %4378 = vmatprep.mubr.bf16.mxu0 0
          %4379 = vmatmul.mubr.bf16.gmra.mrb[0].mxu0 %v4232
          %v4380 = vpop.f32.mrb[0].mxu0
          %v4381 = vadd.f32 0.0, %v4380
          %v4382 = vpop.f32.mrb[0].mxu0
          %v4383 = vpop.f32.mrb[0].mxu0
          %v4384 = vadd.f32 0.0, %v4383
          %v4385 = vpop.f32.mrb[0].mxu0
          %4386 = vmatprep.mubr.bf16.mxu0 0
          %4387 = vmatmul.mubr.bf16.gmra.mrb[0].mxu0 %v4235
          %v4388 = vpop.f32.mrb[0].mxu0
          %v4389 = vadd.f32 0.0, %v4388
          %v4390 = vpop.f32.mrb[0].mxu0
          %v4391 = vpop.f32.mrb[0].mxu0
          %v4392 = vadd.f32 0.0, %v4391
          %v4393 = vpop.f32.mrb[0].mxu0
          %4394 = vmatprep.mubr.bf16.mxu0 0
          %4395 = vmatmul.mubr.bf16.gmra.mrb[0].mxu0 %v4238
          %v4396 = vpop.f32.mrb[0].mxu0
          %v4397 = vadd.f32 0.0, %v4396
          %v4398 = vpop.f32.mrb[0].mxu0
          %v4399 = vpop.f32.mrb[0].mxu0
          %v4400 = vadd.f32 0.0, %v4399
          %v4401 = vpop.f32.mrb[0].mxu0
          %4402 = vmatprep.mubr.bf16.mxu0 0
          %4403 = vmatmul.mubr.bf16.gmra.mrb[0].mxu0 %v4241
          %v4404 = vpop.f32.mrb[0].mxu0
          %v4405 = vadd.f32 0.0, %v4404
          %v4406 = vpop.f32.mrb[0].mxu0
          %v4407 = vpop.f32.mrb[0].mxu0
          %v4408 = vadd.f32 0.0, %v4407
          %v4409 = vpop.f32.mrb[0].mxu0
          %4410 = vdwg.mxu0
          %v4411 = vadd.f32 %v4128, %v4285
          %v4412 = vadd.f32 %v4129, %v4288
          %v4413 = vadd.f32 %v4130, %v4293
          %v4414 = vadd.f32 %v4131, %v4296
          %v4415 = vadd.f32 %v4132, %v4301
          %v4416 = vadd.f32 %v4133, %v4304
          %v4417 = vadd.f32 %v4134, %v4309
          %v4418 = vadd.f32 %v4135, %v4312
          %v4419 = vadd.f32 %v4136, %v4317
          %v4420 = vadd.f32 %v4137, %v4320
          %v4421 = vadd.f32 %v4138, %v4325
          %v4422 = vadd.f32 %v4139, %v4328
          %v4423 = vadd.f32 %v4140, %v4333
          %v4424 = vadd.f32 %v4141, %v4336
          %v4425 = vadd.f32 %v4142, %v4341
          %v4426 = vadd.f32 %v4143, %v4344
          %v4427 = vadd.f32 %v4144, %v4349
          %v4428 = vadd.f32 %v4145, %v4352
          %v4429 = vadd.f32 %v4146, %v4357
          %v4430 = vadd.f32 %v4147, %v4360
          %v4431 = vadd.f32 %v4148, %v4365
          %v4432 = vadd.f32 %v4149, %v4368
          %v4433 = vadd.f32 %v4150, %v4373
          %v4434 = vadd.f32 %v4151, %v4376
          %v4435 = vadd.f32 %v4152, %v4381
          %v4436 = vadd.f32 %v4153, %v4384
          %v4437 = vadd.f32 %v4154, %v4389
          %v4438 = vadd.f32 %v4155, %v4392
          %v4439 = vadd.f32 %v4156, %v4397
          %v4440 = vadd.f32 %v4157, %v4400
          %v4441 = vadd.f32 %v4158, %v4405
          %v4442 = vadd.f32 %v4159, %v4408
          %4443 = vst.msk [vmem:[#allocation4] sm:$0xff] %vm507, %v4411
          %4444 = vst.msk [vmem:[#allocation4 + $0x8] sm:$0xff] %vm507, %v4412
          %4445 = vst.msk [vmem:[#allocation4 + $0x10] sm:$0xff] %vm507, %v4413
          %4446 = vst.msk [vmem:[#allocation4 + $0x18] sm:$0xff] %vm507, %v4414
          %4447 = vst.msk [vmem:[#allocation4 + $0x20] sm:$0xff] %vm507, %v4415
          %4448 = vst.msk [vmem:[#allocation4 + $0x28] sm:$0xff] %vm507, %v4416
          %4449 = vst.msk [vmem:[#allocation4 + $0x30] sm:$0xff] %vm507, %v4417
          %4450 = vst.msk [vmem:[#allocation4 + $0x38] sm:$0xff] %vm507, %v4418
          %4451 = vst.msk [vmem:[#allocation4 + $0x40] sm:$0xff] %vm507, %v4419
          %4452 = vst.msk [vmem:[#allocation4 + $0x48] sm:$0xff] %vm507, %v4420
          %4453 = vst.msk [vmem:[#allocation4 + $0x50] sm:$0xff] %vm507, %v4421
          %4454 = vst.msk [vmem:[#allocation4 + $0x58] sm:$0xff] %vm507, %v4422
          %4455 = vst.msk [vmem:[#allocation4 + $0x60] sm:$0xff] %vm507, %v4423
          %4456 = vst.msk [vmem:[#allocation4 + $0x68] sm:$0xff] %vm507, %v4424
          %4457 = vst.msk [vmem:[#allocation4 + $0x70] sm:$0xff] %vm507, %v4425
          %4458 = vst.msk [vmem:[#allocation4 + $0x78] sm:$0xff] %vm507, %v4426
          %4459 = vst.msk [vmem:[#allocation4 + $0x80] sm:$0xff] %vm507, %v4427
          %4460 = vst.msk [vmem:[#allocation4 + $0x88] sm:$0xff] %vm507, %v4428
          %4461 = vst.msk [vmem:[#allocation4 + $0x90] sm:$0xff] %vm507, %v4429
          %4462 = vst.msk [vmem:[#allocation4 + $0x98] sm:$0xff] %vm507, %v4430
          %4463 = vst.msk [vmem:[#allocation4 + $0xa0] sm:$0xff] %vm507, %v4431
          %4464 = vst.msk [vmem:[#allocation4 + $0xa8] sm:$0xff] %vm507, %v4432
          %4465 = vst.msk [vmem:[#allocation4 + $0xb0] sm:$0xff] %vm507, %v4433
          %4466 = vst.msk [vmem:[#allocation4 + $0xb8] sm:$0xff] %vm507, %v4434
          %4467 = vst.msk [vmem:[#allocation4 + $0xc0] sm:$0xff] %vm507, %v4435
          %4468 = vst.msk [vmem:[#allocation4 + $0xc8] sm:$0xff] %vm507, %v4436
          %4469 = vst.msk [vmem:[#allocation4 + $0xd0] sm:$0xff] %vm507, %v4437
          %4470 = vst.msk [vmem:[#allocation4 + $0xd8] sm:$0xff] %vm507, %v4438
          %4471 = vst.msk [vmem:[#allocation4 + $0xe0] sm:$0xff] %vm507, %v4439
          %4472 = vst.msk [vmem:[#allocation4 + $0xe8] sm:$0xff] %vm507, %v4440
          %4473 = vst.msk [vmem:[#allocation4 + $0xf0] sm:$0xff] %vm507, %v4441
          %4474 = vst.msk [vmem:[#allocation4 + $0xf8] sm:$0xff] %vm507, %v4442
        $region41: #{_lambda_.3} parent=31 // loop_footer
          %s545 = sadd.s32 1, %s541
        $region42: #{_lambda_.3} parent=31 // loop_footer_branch
          %540 = sbr.rel target = $region38
        $region43: #{_lambda_.3} parent=31 // loop_exit
          _
        %v4475 = vld [vmem:[#allocation4] sm:$0xff]
        %v4476 = vld [vmem:[#allocation4 + $0x8] sm:$0xff]
        %v4477 = vld [vmem:[#allocation4 + $0x10] sm:$0xff]
        %v4478 = vld [vmem:[#allocation4 + $0x18] sm:$0xff]
        %v4479 = vld [vmem:[#allocation4 + $0x20] sm:$0xff]
        %v4480 = vld [vmem:[#allocation4 + $0x28] sm:$0xff]
        %v4481 = vld [vmem:[#allocation4 + $0x30] sm:$0xff]
        %v4482 = vld [vmem:[#allocation4 + $0x38] sm:$0xff]
        %v4483 = vld [vmem:[#allocation4 + $0x40] sm:$0xff]
        %v4484 = vld [vmem:[#allocation4 + $0x48] sm:$0xff]
        %v4485 = vld [vmem:[#allocation4 + $0x50] sm:$0xff]
        %v4486 = vld [vmem:[#allocation4 + $0x58] sm:$0xff]
        %v4487 = vld [vmem:[#allocation4 + $0x60] sm:$0xff]
        %v4488 = vld [vmem:[#allocation4 + $0x68] sm:$0xff]
        %v4489 = vld [vmem:[#allocation4 + $0x70] sm:$0xff]
        %v4490 = vld [vmem:[#allocation4 + $0x78] sm:$0xff]
        %v4491 = vld [vmem:[#allocation4 + $0x80] sm:$0xff]
        %v4492 = vld [vmem:[#allocation4 + $0x88] sm:$0xff]
        %v4493 = vld [vmem:[#allocation4 + $0x90] sm:$0xff]
        %v4494 = vld [vmem:[#allocation4 + $0x98] sm:$0xff]
        %v4495 = vld [vmem:[#allocation4 + $0xa0] sm:$0xff]
        %v4496 = vld [vmem:[#allocation4 + $0xa8] sm:$0xff]
        %v4497 = vld [vmem:[#allocation4 + $0xb0] sm:$0xff]
        %v4498 = vld [vmem:[#allocation4 + $0xb8] sm:$0xff]
        %v4499 = vld [vmem:[#allocation4 + $0xc0] sm:$0xff]
        %v4500 = vld [vmem:[#allocation4 + $0xc8] sm:$0xff]
        %v4501 = vld [vmem:[#allocation4 + $0xd0] sm:$0xff]
        %v4502 = vld [vmem:[#allocation4 + $0xd8] sm:$0xff]
        %v4503 = vld [vmem:[#allocation4 + $0xe0] sm:$0xff]
        %v4504 = vld [vmem:[#allocation4 + $0xe8] sm:$0xff]
        %v4505 = vld [vmem:[#allocation4 + $0xf0] sm:$0xff]
        %v4506 = vld [vmem:[#allocation4 + $0xf8] sm:$0xff]
        %v4507 = vld [vmem:[%s2] sm:$0x1]
        %v4509 = vlaneseq
        %v4510 = vshrl.u32 %v4509, 7
        %v4511 = vsub.s32 0, %v4510
        %v4512 = vrot.slane %v4507, %v4511
        %v4514 = vadd.f32 %v4475, %v4512
        %v4515 = vadd.f32 %v4476, %v4512
        %v4516 = vadd.f32 %v4477, %v4512
        %v4517 = vadd.f32 %v4478, %v4512
        %v4518 = vadd.f32 %v4479, %v4512
        %v4519 = vadd.f32 %v4480, %v4512
        %v4520 = vadd.f32 %v4481, %v4512
        %v4521 = vadd.f32 %v4482, %v4512
        %v4522 = vadd.f32 %v4483, %v4512
        %v4523 = vadd.f32 %v4484, %v4512
        %v4524 = vadd.f32 %v4485, %v4512
        %v4525 = vadd.f32 %v4486, %v4512
        %v4526 = vadd.f32 %v4487, %v4512
        %v4527 = vadd.f32 %v4488, %v4512
        %v4528 = vadd.f32 %v4489, %v4512
        %v4529 = vadd.f32 %v4490, %v4512
        %v4530 = vadd.f32 %v4491, %v4512
        %v4531 = vadd.f32 %v4492, %v4512
        %v4532 = vadd.f32 %v4493, %v4512
        %v4533 = vadd.f32 %v4494, %v4512
        %v4534 = vadd.f32 %v4495, %v4512
        %v4535 = vadd.f32 %v4496, %v4512
        %v4536 = vadd.f32 %v4497, %v4512
        %v4537 = vadd.f32 %v4498, %v4512
        %v4538 = vadd.f32 %v4499, %v4512
        %v4539 = vadd.f32 %v4500, %v4512
        %v4540 = vadd.f32 %v4501, %v4512
        %v4541 = vadd.f32 %v4502, %v4512
        %v4542 = vadd.f32 %v4503, %v4512
        %v4543 = vadd.f32 %v4504, %v4512
        %v4544 = vadd.f32 %v4505, %v4512
        %v4545 = vadd.f32 %v4506, %v4512
        %v4546 = vmax.f32 %v4514, 0.0
        %v4547 = vmax.f32 %v4515, 0.0
        %v4548 = vmax.f32 %v4516, 0.0
        %v4549 = vmax.f32 %v4517, 0.0
        %v4550 = vmax.f32 %v4518, 0.0
        %v4551 = vmax.f32 %v4519, 0.0
        %v4552 = vmax.f32 %v4520, 0.0
        %v4553 = vmax.f32 %v4521, 0.0
        %v4554 = vmax.f32 %v4522, 0.0
        %v4555 = vmax.f32 %v4523, 0.0
        %v4556 = vmax.f32 %v4524, 0.0
        %v4557 = vmax.f32 %v4525, 0.0
        %v4558 = vmax.f32 %v4526, 0.0
        %v4559 = vmax.f32 %v4527, 0.0
        %v4560 = vmax.f32 %v4528, 0.0
        %v4561 = vmax.f32 %v4529, 0.0
        %v4562 = vmax.f32 %v4530, 0.0
        %v4563 = vmax.f32 %v4531, 0.0
        %v4564 = vmax.f32 %v4532, 0.0
        %v4565 = vmax.f32 %v4533, 0.0
        %v4566 = vmax.f32 %v4534, 0.0
        %v4567 = vmax.f32 %v4535, 0.0
        %v4568 = vmax.f32 %v4536, 0.0
        %v4569 = vmax.f32 %v4537, 0.0
        %v4570 = vmax.f32 %v4538, 0.0
        %v4571 = vmax.f32 %v4539, 0.0
        %v4572 = vmax.f32 %v4540, 0.0
        %v4573 = vmax.f32 %v4541, 0.0
        %v4574 = vmax.f32 %v4542, 0.0
        %v4575 = vmax.f32 %v4543, 0.0
        %v4576 = vmax.f32 %v4544, 0.0
        %v4577 = vmax.f32 %v4545, 0.0
        %v4578 = vpack.c.bf16 %v4547, %v4546
        %v4579 = vpack.c.bf16 %v4549, %v4548
        %v4580 = vpack.c.bf16 %v4551, %v4550
        %v4581 = vpack.c.bf16 %v4553, %v4552
        %v4582 = vpack.c.bf16 %v4555, %v4554
        %v4583 = vpack.c.bf16 %v4557, %v4556
        %v4584 = vpack.c.bf16 %v4559, %v4558
        %v4585 = vpack.c.bf16 %v4561, %v4560
        %v4586 = vpack.c.bf16 %v4563, %v4562
        %v4587 = vpack.c.bf16 %v4565, %v4564
        %v4588 = vpack.c.bf16 %v4567, %v4566
        %v4589 = vpack.c.bf16 %v4569, %v4568
        %v4590 = vpack.c.bf16 %v4571, %v4570
        %v4591 = vpack.c.bf16 %v4573, %v4572
        %v4592 = vpack.c.bf16 %v4575, %v4574
        %v4593 = vpack.c.bf16 %v4577, %v4576
        %v4594 = vmax.bf16 %v4578, %v4579
        %v4595 = vmax.bf16 %v4580, %v4581
        %v4596 = vmax.bf16 %v4582, %v4583
        %v4597 = vmax.bf16 %v4584, %v4585
        %v4598 = vmax.bf16 %v4586, %v4587
        %v4599 = vmax.bf16 %v4588, %v4589
        %v4600 = vmax.bf16 %v4590, %v4591
        %v4601 = vmax.bf16 %v4592, %v4593
        %v4610 = vcombine.high %v4594, %v4594
        %v4612 = vunpack.c.l.s4 1966171168
        %v4613 = vunpack.c.0.s8 %v4612
        %v4614 = vlaneseq
        %v4615 = vshrl.u32 %v4614, 7
        %v4616 = vsub.s32 %v4613, %v4615
        %v4617 = vrot.slane %v4594, %v4616
        %v4619 = vunpack.c.l.s4 1966171168
        %v4620 = vunpack.c.0.s8 %v4619
        %v4621 = vlaneseq
        %v4622 = vshrl.u32 %v4621, 7
        %v4623 = vsub.s32 %v4620, %v4622
        %v4624 = vrot.slane %v4610, %v4623
        %v4625 = vcombine.high %v4617, %v4617
        %v4626 = vcombine.high %v4624, %v4624
        %v4628 = vunpack.c.l.s4 1966171168
        %v4629 = vunpack.c.0.s8 %v4628
        %v4630 = vlaneseq
        %v4631 = vshrl.u32 %v4630, 7
        %v4632 = vsub.s32 %v4629, %v4631
        %v4633 = vrot.slane %v4617, %v4632
        %v4635 = vunpack.c.l.s4 1966171168
        %v4636 = vunpack.c.0.s8 %v4635
        %v4637 = vlaneseq
        %v4638 = vshrl.u32 %v4637, 7
        %v4639 = vsub.s32 %v4636, %v4638
        %v4640 = vrot.slane %v4624, %v4639
        %v4642 = vunpack.c.l.s4 1966171168
        %v4643 = vunpack.c.0.s8 %v4642
        %v4644 = vlaneseq
        %v4645 = vshrl.u32 %v4644, 7
        %v4646 = vsub.s32 %v4643, %v4645
        %v4647 = vrot.slane %v4625, %v4646
        %v4649 = vunpack.c.l.s4 1966171168
        %v4650 = vunpack.c.0.s8 %v4649
        %v4651 = vlaneseq
        %v4652 = vshrl.u32 %v4651, 7
        %v4653 = vsub.s32 %v4650, %v4652
        %v4654 = vrot.slane %v4626, %v4653
        %v4655 = vcombine.high %v4633, %v4633
        %v4656 = vcombine.high %v4640, %v4640
        %v4657 = vcombine.high %v4647, %v4647
        %v4658 = vcombine.high %v4654, %v4654
        %v4659 = vcombine.high %v4595, %v4595
        %v4661 = vunpack.c.l.s4 1966171168
        %v4662 = vunpack.c.0.s8 %v4661
        %v4663 = vlaneseq
        %v4664 = vshrl.u32 %v4663, 7
        %v4665 = vsub.s32 %v4662, %v4664
        %v4666 = vrot.slane %v4595, %v4665
        %v4668 = vunpack.c.l.s4 1966171168
        %v4669 = vunpack.c.0.s8 %v4668
        %v4670 = vlaneseq
        %v4671 = vshrl.u32 %v4670, 7
        %v4672 = vsub.s32 %v4669, %v4671
        %v4673 = vrot.slane %v4659, %v4672
        %v4674 = vcombine.high %v4666, %v4666
        %v4675 = vcombine.high %v4673, %v4673
        %v4677 = vunpack.c.l.s4 1966171168
        %v4678 = vunpack.c.0.s8 %v4677
        %v4679 = vlaneseq
        %v4680 = vshrl.u32 %v4679, 7
        %v4681 = vsub.s32 %v4678, %v4680
        %v4682 = vrot.slane %v4666, %v4681
        %v4684 = vunpack.c.l.s4 1966171168
        %v4685 = vunpack.c.0.s8 %v4684
        %v4686 = vlaneseq
        %v4687 = vshrl.u32 %v4686, 7
        %v4688 = vsub.s32 %v4685, %v4687
        %v4689 = vrot.slane %v4673, %v4688
        %v4691 = vunpack.c.l.s4 1966171168
        %v4692 = vunpack.c.0.s8 %v4691
        %v4693 = vlaneseq
        %v4694 = vshrl.u32 %v4693, 7
        %v4695 = vsub.s32 %v4692, %v4694
        %v4696 = vrot.slane %v4674, %v4695
        %v4698 = vunpack.c.l.s4 1966171168
        %v4699 = vunpack.c.0.s8 %v4698
        %v4700 = vlaneseq
        %v4701 = vshrl.u32 %v4700, 7
        %v4702 = vsub.s32 %v4699, %v4701
        %v4703 = vrot.slane %v4675, %v4702
        %v4704 = vcombine.high %v4682, %v4682
        %v4705 = vcombine.high %v4689, %v4689
        %v4706 = vcombine.high %v4696, %v4696
        %v4707 = vcombine.high %v4703, %v4703
        %v4708 = vcombine.high %v4596, %v4596
        %v4710 = vunpack.c.l.s4 1966171168
        %v4711 = vunpack.c.0.s8 %v4710
        %v4712 = vlaneseq
        %v4713 = vshrl.u32 %v4712, 7
        %v4714 = vsub.s32 %v4711, %v4713
        %v4715 = vrot.slane %v4596, %v4714
        %v4717 = vunpack.c.l.s4 1966171168
        %v4718 = vunpack.c.0.s8 %v4717
        %v4719 = vlaneseq
        %v4720 = vshrl.u32 %v4719, 7
        %v4721 = vsub.s32 %v4718, %v4720
        %v4722 = vrot.slane %v4708, %v4721
        %v4723 = vcombine.high %v4715, %v4715
        %v4724 = vcombine.high %v4722, %v4722
        %v4726 = vunpack.c.l.s4 1966171168
        %v4727 = vunpack.c.0.s8 %v4726
        %v4728 = vlaneseq
        %v4729 = vshrl.u32 %v4728, 7
        %v4730 = vsub.s32 %v4727, %v4729
        %v4731 = vrot.slane %v4715, %v4730
        %v4733 = vunpack.c.l.s4 1966171168
        %v4734 = vunpack.c.0.s8 %v4733
        %v4735 = vlaneseq
        %v4736 = vshrl.u32 %v4735, 7
        %v4737 = vsub.s32 %v4734, %v4736
        %v4738 = vrot.slane %v4722, %v4737
        %v4740 = vunpack.c.l.s4 1966171168
        %v4741 = vunpack.c.0.s8 %v4740
        %v4742 = vlaneseq
        %v4743 = vshrl.u32 %v4742, 7
        %v4744 = vsub.s32 %v4741, %v4743
        %v4745 = vrot.slane %v4723, %v4744
        %v4747 = vunpack.c.l.s4 1966171168
        %v4748 = vunpack.c.0.s8 %v4747
        %v4749 = vlaneseq
        %v4750 = vshrl.u32 %v4749, 7
        %v4751 = vsub.s32 %v4748, %v4750
        %v4752 = vrot.slane %v4724, %v4751
        %v4753 = vcombine.high %v4731, %v4731
        %v4754 = vcombine.high %v4738, %v4738
        %v4755 = vcombine.high %v4745, %v4745
        %v4756 = vcombine.high %v4752, %v4752
        %v4757 = vcombine.high %v4597, %v4597
        %v4759 = vunpack.c.l.s4 1966171168
        %v4760 = vunpack.c.0.s8 %v4759
        %v4761 = vlaneseq
        %v4762 = vshrl.u32 %v4761, 7
        %v4763 = vsub.s32 %v4760, %v4762
        %v4764 = vrot.slane %v4597, %v4763
        %v4766 = vunpack.c.l.s4 1966171168
        %v4767 = vunpack.c.0.s8 %v4766
        %v4768 = vlaneseq
        %v4769 = vshrl.u32 %v4768, 7
        %v4770 = vsub.s32 %v4767, %v4769
        %v4771 = vrot.slane %v4757, %v4770
        %v4772 = vcombine.high %v4764, %v4764
        %v4773 = vcombine.high %v4771, %v4771
        %v4775 = vunpack.c.l.s4 1966171168
        %v4776 = vunpack.c.0.s8 %v4775
        %v4777 = vlaneseq
        %v4778 = vshrl.u32 %v4777, 7
        %v4779 = vsub.s32 %v4776, %v4778
        %v4780 = vrot.slane %v4764, %v4779
        %v4782 = vunpack.c.l.s4 1966171168
        %v4783 = vunpack.c.0.s8 %v4782
        %v4784 = vlaneseq
        %v4785 = vshrl.u32 %v4784, 7
        %v4786 = vsub.s32 %v4783, %v4785
        %v4787 = vrot.slane %v4771, %v4786
        %v4789 = vunpack.c.l.s4 1966171168
        %v4790 = vunpack.c.0.s8 %v4789
        %v4791 = vlaneseq
        %v4792 = vshrl.u32 %v4791, 7
        %v4793 = vsub.s32 %v4790, %v4792
        %v4794 = vrot.slane %v4772, %v4793
        %v4796 = vunpack.c.l.s4 1966171168
        %v4797 = vunpack.c.0.s8 %v4796
        %v4798 = vlaneseq
        %v4799 = vshrl.u32 %v4798, 7
        %v4800 = vsub.s32 %v4797, %v4799
        %v4801 = vrot.slane %v4773, %v4800
        %v4802 = vcombine.high %v4780, %v4780
        %v4803 = vcombine.high %v4787, %v4787
        %v4804 = vcombine.high %v4794, %v4794
        %v4805 = vcombine.high %v4801, %v4801
        %v4806 = vcombine.high %v4598, %v4598
        %v4808 = vunpack.c.l.s4 1966171168
        %v4809 = vunpack.c.0.s8 %v4808
        %v4810 = vlaneseq
        %v4811 = vshrl.u32 %v4810, 7
        %v4812 = vsub.s32 %v4809, %v4811
        %v4813 = vrot.slane %v4598, %v4812
        %v4815 = vunpack.c.l.s4 1966171168
        %v4816 = vunpack.c.0.s8 %v4815
        %v4817 = vlaneseq
        %v4818 = vshrl.u32 %v4817, 7
        %v4819 = vsub.s32 %v4816, %v4818
        %v4820 = vrot.slane %v4806, %v4819
        %v4821 = vcombine.high %v4813, %v4813
        %v4822 = vcombine.high %v4820, %v4820
        %v4824 = vunpack.c.l.s4 1966171168
        %v4825 = vunpack.c.0.s8 %v4824
        %v4826 = vlaneseq
        %v4827 = vshrl.u32 %v4826, 7
        %v4828 = vsub.s32 %v4825, %v4827
        %v4829 = vrot.slane %v4813, %v4828
        %v4831 = vunpack.c.l.s4 1966171168
        %v4832 = vunpack.c.0.s8 %v4831
        %v4833 = vlaneseq
        %v4834 = vshrl.u32 %v4833, 7
        %v4835 = vsub.s32 %v4832, %v4834
        %v4836 = vrot.slane %v4820, %v4835
        %v4838 = vunpack.c.l.s4 1966171168
        %v4839 = vunpack.c.0.s8 %v4838
        %v4840 = vlaneseq
        %v4841 = vshrl.u32 %v4840, 7
        %v4842 = vsub.s32 %v4839, %v4841
        %v4843 = vrot.slane %v4821, %v4842
        %v4845 = vunpack.c.l.s4 1966171168
        %v4846 = vunpack.c.0.s8 %v4845
        %v4847 = vlaneseq
        %v4848 = vshrl.u32 %v4847, 7
        %v4849 = vsub.s32 %v4846, %v4848
        %v4850 = vrot.slane %v4822, %v4849
        %v4851 = vcombine.high %v4829, %v4829
        %v4852 = vcombine.high %v4836, %v4836
        %v4853 = vcombine.high %v4843, %v4843
        %v4854 = vcombine.high %v4850, %v4850
        %v4855 = vcombine.high %v4599, %v4599
        %v4857 = vunpack.c.l.s4 1966171168
        %v4858 = vunpack.c.0.s8 %v4857
        %v4859 = vlaneseq
        %v4860 = vshrl.u32 %v4859, 7
        %v4861 = vsub.s32 %v4858, %v4860
        %v4862 = vrot.slane %v4599, %v4861
        %v4864 = vunpack.c.l.s4 1966171168
        %v4865 = vunpack.c.0.s8 %v4864
        %v4866 = vlaneseq
        %v4867 = vshrl.u32 %v4866, 7
        %v4868 = vsub.s32 %v4865, %v4867
        %v4869 = vrot.slane %v4855, %v4868
        %v4870 = vcombine.high %v4862, %v4862
        %v4871 = vcombine.high %v4869, %v4869
        %v4873 = vunpack.c.l.s4 1966171168
        %v4874 = vunpack.c.0.s8 %v4873
        %v4875 = vlaneseq
        %v4876 = vshrl.u32 %v4875, 7
        %v4877 = vsub.s32 %v4874, %v4876
        %v4878 = vrot.slane %v4862, %v4877
        %v4880 = vunpack.c.l.s4 1966171168
        %v4881 = vunpack.c.0.s8 %v4880
        %v4882 = vlaneseq
        %v4883 = vshrl.u32 %v4882, 7
        %v4884 = vsub.s32 %v4881, %v4883
        %v4885 = vrot.slane %v4869, %v4884
        %v4887 = vunpack.c.l.s4 1966171168
        %v4888 = vunpack.c.0.s8 %v4887
        %v4889 = vlaneseq
        %v4890 = vshrl.u32 %v4889, 7
        %v4891 = vsub.s32 %v4888, %v4890
        %v4892 = vrot.slane %v4870, %v4891
        %v4894 = vunpack.c.l.s4 1966171168
        %v4895 = vunpack.c.0.s8 %v4894
        %v4896 = vlaneseq
        %v4897 = vshrl.u32 %v4896, 7
        %v4898 = vsub.s32 %v4895, %v4897
        %v4899 = vrot.slane %v4871, %v4898
        %v4900 = vcombine.high %v4878, %v4878
        %v4901 = vcombine.high %v4885, %v4885
        %v4902 = vcombine.high %v4892, %v4892
        %v4903 = vcombine.high %v4899, %v4899
        %v4904 = vcombine.high %v4600, %v4600
        %v4906 = vunpack.c.l.s4 1966171168
        %v4907 = vunpack.c.0.s8 %v4906
        %v4908 = vlaneseq
        %v4909 = vshrl.u32 %v4908, 7
        %v4910 = vsub.s32 %v4907, %v4909
        %v4911 = vrot.slane %v4600, %v4910
        %v4913 = vunpack.c.l.s4 1966171168
        %v4914 = vunpack.c.0.s8 %v4913
        %v4915 = vlaneseq
        %v4916 = vshrl.u32 %v4915, 7
        %v4917 = vsub.s32 %v4914, %v4916
        %v4918 = vrot.slane %v4904, %v4917
        %v4919 = vcombine.high %v4911, %v4911
        %v4920 = vcombine.high %v4918, %v4918
        %v4922 = vunpack.c.l.s4 1966171168
        %v4923 = vunpack.c.0.s8 %v4922
        %v4924 = vlaneseq
        %v4925 = vshrl.u32 %v4924, 7
        %v4926 = vsub.s32 %v4923, %v4925
        %v4927 = vrot.slane %v4911, %v4926
        %v4929 = vunpack.c.l.s4 1966171168
        %v4930 = vunpack.c.0.s8 %v4929
        %v4931 = vlaneseq
        %v4932 = vshrl.u32 %v4931, 7
        %v4933 = vsub.s32 %v4930, %v4932
        %v4934 = vrot.slane %v4918, %v4933
        %v4936 = vunpack.c.l.s4 1966171168
        %v4937 = vunpack.c.0.s8 %v4936
        %v4938 = vlaneseq
        %v4939 = vshrl.u32 %v4938, 7
        %v4940 = vsub.s32 %v4937, %v4939
        %v4941 = vrot.slane %v4919, %v4940
        %v4943 = vunpack.c.l.s4 1966171168
        %v4944 = vunpack.c.0.s8 %v4943
        %v4945 = vlaneseq
        %v4946 = vshrl.u32 %v4945, 7
        %v4947 = vsub.s32 %v4944, %v4946
        %v4948 = vrot.slane %v4920, %v4947
        %v4949 = vcombine.high %v4927, %v4927
        %v4950 = vcombine.high %v4934, %v4934
        %v4951 = vcombine.high %v4941, %v4941
        %v4952 = vcombine.high %v4948, %v4948
        %v4953 = vcombine.high %v4601, %v4601
        %v4955 = vunpack.c.l.s4 1966171168
        %v4956 = vunpack.c.0.s8 %v4955
        %v4957 = vlaneseq
        %v4958 = vshrl.u32 %v4957, 7
        %v4959 = vsub.s32 %v4956, %v4958
        %v4960 = vrot.slane %v4601, %v4959
        %v4962 = vunpack.c.l.s4 1966171168
        %v4963 = vunpack.c.0.s8 %v4962
        %v4964 = vlaneseq
        %v4965 = vshrl.u32 %v4964, 7
        %v4966 = vsub.s32 %v4963, %v4965
        %v4967 = vrot.slane %v4953, %v4966
        %v4968 = vcombine.high %v4960, %v4960
        %v4969 = vcombine.high %v4967, %v4967
        %v4971 = vunpack.c.l.s4 1966171168
        %v4972 = vunpack.c.0.s8 %v4971
        %v4973 = vlaneseq
        %v4974 = vshrl.u32 %v4973, 7
        %v4975 = vsub.s32 %v4972, %v4974
        %v4976 = vrot.slane %v4960, %v4975
        %v4978 = vunpack.c.l.s4 1966171168
        %v4979 = vunpack.c.0.s8 %v4978
        %v4980 = vlaneseq
        %v4981 = vshrl.u32 %v4980, 7
        %v4982 = vsub.s32 %v4979, %v4981
        %v4983 = vrot.slane %v4967, %v4982
        %v4985 = vunpack.c.l.s4 1966171168
        %v4986 = vunpack.c.0.s8 %v4985
        %v4987 = vlaneseq
        %v4988 = vshrl.u32 %v4987, 7
        %v4989 = vsub.s32 %v4986, %v4988
        %v4990 = vrot.slane %v4968, %v4989
        %v4992 = vunpack.c.l.s4 1966171168
        %v4993 = vunpack.c.0.s8 %v4992
        %v4994 = vlaneseq
        %v4995 = vshrl.u32 %v4994, 7
        %v4996 = vsub.s32 %v4993, %v4995
        %v4997 = vrot.slane %v4969, %v4996
        %v4998 = vcombine.high %v4976, %v4976
        %v4999 = vcombine.high %v4983, %v4983
        %v5000 = vcombine.high %v4990, %v4990
        %v5001 = vcombine.high %v4997, %v4997
        %vm5002 = vcmask 483328
        %v5005 = vsel %vm5002, %v4633, 4286644096
        %v5007 = vunpack.i.l.bf16 %v5005
        %v5008 = vunpack.i.h.bf16 %v5005
        %v5009 = vmax.f32 %v5007, %v5008
        %v5010 = vrot.slane %v5009, 4
        %v5011 = vmax.f32 %v5009, %v5010
        %v5012 = vrot.slane %v5011, 2
        %v5013 = vmax.f32 %v5011, %v5012
        %v5014 = vrot.slane %v5013, 1
        %v5015 = vmax.f32 %v5013, %v5014
        %v5016 = vpack.i.bf16 %v5015, %v5015
        %v5018 = vsel %vm5002, %v4647, 4286644096
        %v5020 = vunpack.i.l.bf16 %v5018
        %v5021 = vunpack.i.h.bf16 %v5018
        %v5022 = vmax.f32 %v5020, %v5021
        %v5023 = vrot.slane %v5022, 4
        %v5024 = vmax.f32 %v5022, %v5023
        %v5025 = vrot.slane %v5024, 2
        %v5026 = vmax.f32 %v5024, %v5025
        %v5027 = vrot.slane %v5026, 1
        %v5028 = vmax.f32 %v5026, %v5027
        %v5029 = vpack.i.bf16 %v5028, %v5028
        %v5031 = vsel %vm5002, %v4655, 4286644096
        %v5033 = vunpack.i.l.bf16 %v5031
        %v5034 = vunpack.i.h.bf16 %v5031
        %v5035 = vmax.f32 %v5033, %v5034
        %v5036 = vrot.slane %v5035, 4
        %v5037 = vmax.f32 %v5035, %v5036
        %v5038 = vrot.slane %v5037, 2
        %v5039 = vmax.f32 %v5037, %v5038
        %v5040 = vrot.slane %v5039, 1
        %v5041 = vmax.f32 %v5039, %v5040
        %v5042 = vpack.i.bf16 %v5041, %v5041
        %v5044 = vsel %vm5002, %v4657, 4286644096
        %v5046 = vunpack.i.l.bf16 %v5044
        %v5047 = vunpack.i.h.bf16 %v5044
        %v5048 = vmax.f32 %v5046, %v5047
        %v5049 = vrot.slane %v5048, 4
        %v5050 = vmax.f32 %v5048, %v5049
        %v5051 = vrot.slane %v5050, 2
        %v5052 = vmax.f32 %v5050, %v5051
        %v5053 = vrot.slane %v5052, 1
        %v5054 = vmax.f32 %v5052, %v5053
        %v5055 = vpack.i.bf16 %v5054, %v5054
        %v5057 = vsel %vm5002, %v4640, 4286644096
        %v5059 = vunpack.i.l.bf16 %v5057
        %v5060 = vunpack.i.h.bf16 %v5057
        %v5061 = vmax.f32 %v5059, %v5060
        %v5062 = vrot.slane %v5061, 4
        %v5063 = vmax.f32 %v5061, %v5062
        %v5064 = vrot.slane %v5063, 2
        %v5065 = vmax.f32 %v5063, %v5064
        %v5066 = vrot.slane %v5065, 1
        %v5067 = vmax.f32 %v5065, %v5066
        %v5068 = vpack.i.bf16 %v5067, %v5067
        %v5070 = vsel %vm5002, %v4654, 4286644096
        %v5072 = vunpack.i.l.bf16 %v5070
        %v5073 = vunpack.i.h.bf16 %v5070
        %v5074 = vmax.f32 %v5072, %v5073
        %v5075 = vrot.slane %v5074, 4
        %v5076 = vmax.f32 %v5074, %v5075
        %v5077 = vrot.slane %v5076, 2
        %v5078 = vmax.f32 %v5076, %v5077
        %v5079 = vrot.slane %v5078, 1
        %v5080 = vmax.f32 %v5078, %v5079
        %v5081 = vpack.i.bf16 %v5080, %v5080
        %v5083 = vsel %vm5002, %v4656, 4286644096
        %v5085 = vunpack.i.l.bf16 %v5083
        %v5086 = vunpack.i.h.bf16 %v5083
        %v5087 = vmax.f32 %v5085, %v5086
        %v5088 = vrot.slane %v5087, 4
        %v5089 = vmax.f32 %v5087, %v5088
        %v5090 = vrot.slane %v5089, 2
        %v5091 = vmax.f32 %v5089, %v5090
        %v5092 = vrot.slane %v5091, 1
        %v5093 = vmax.f32 %v5091, %v5092
        %v5094 = vpack.i.bf16 %v5093, %v5093
        %v5096 = vsel %vm5002, %v4658, 4286644096
        %v5098 = vunpack.i.l.bf16 %v5096
        %v5099 = vunpack.i.h.bf16 %v5096
        %v5100 = vmax.f32 %v5098, %v5099
        %v5101 = vrot.slane %v5100, 4
        %v5102 = vmax.f32 %v5100, %v5101
        %v5103 = vrot.slane %v5102, 2
        %v5104 = vmax.f32 %v5102, %v5103
        %v5105 = vrot.slane %v5104, 1
        %v5106 = vmax.f32 %v5104, %v5105
        %v5107 = vpack.i.bf16 %v5106, %v5106
        %v5109 = vsel %vm5002, %v4682, 4286644096
        %v5111 = vunpack.i.l.bf16 %v5109
        %v5112 = vunpack.i.h.bf16 %v5109
        %v5113 = vmax.f32 %v5111, %v5112
        %v5114 = vrot.slane %v5113, 4
        %v5115 = vmax.f32 %v5113, %v5114
        %v5116 = vrot.slane %v5115, 2
        %v5117 = vmax.f32 %v5115, %v5116
        %v5118 = vrot.slane %v5117, 1
        %v5119 = vmax.f32 %v5117, %v5118
        %v5120 = vpack.i.bf16 %v5119, %v5119
        %v5122 = vsel %vm5002, %v4696, 4286644096
        %v5124 = vunpack.i.l.bf16 %v5122
        %v5125 = vunpack.i.h.bf16 %v5122
        %v5126 = vmax.f32 %v5124, %v5125
        %v5127 = vrot.slane %v5126, 4
        %v5128 = vmax.f32 %v5126, %v5127
        %v5129 = vrot.slane %v5128, 2
        %v5130 = vmax.f32 %v5128, %v5129
        %v5131 = vrot.slane %v5130, 1
        %v5132 = vmax.f32 %v5130, %v5131
        %v5133 = vpack.i.bf16 %v5132, %v5132
        %v5135 = vsel %vm5002, %v4704, 4286644096
        %v5137 = vunpack.i.l.bf16 %v5135
        %v5138 = vunpack.i.h.bf16 %v5135
        %v5139 = vmax.f32 %v5137, %v5138
        %v5140 = vrot.slane %v5139, 4
        %v5141 = vmax.f32 %v5139, %v5140
        %v5142 = vrot.slane %v5141, 2
        %v5143 = vmax.f32 %v5141, %v5142
        %v5144 = vrot.slane %v5143, 1
        %v5145 = vmax.f32 %v5143, %v5144
        %v5146 = vpack.i.bf16 %v5145, %v5145
        %v5148 = vsel %vm5002, %v4706, 4286644096
        %v5150 = vunpack.i.l.bf16 %v5148
        %v5151 = vunpack.i.h.bf16 %v5148
        %v5152 = vmax.f32 %v5150, %v5151
        %v5153 = vrot.slane %v5152, 4
        %v5154 = vmax.f32 %v5152, %v5153
        %v5155 = vrot.slane %v5154, 2
        %v5156 = vmax.f32 %v5154, %v5155
        %v5157 = vrot.slane %v5156, 1
        %v5158 = vmax.f32 %v5156, %v5157
        %v5159 = vpack.i.bf16 %v5158, %v5158
        %v5161 = vsel %vm5002, %v4689, 4286644096
        %v5163 = vunpack.i.l.bf16 %v5161
        %v5164 = vunpack.i.h.bf16 %v5161
        %v5165 = vmax.f32 %v5163, %v5164
        %v5166 = vrot.slane %v5165, 4
        %v5167 = vmax.f32 %v5165, %v5166
        %v5168 = vrot.slane %v5167, 2
        %v5169 = vmax.f32 %v5167, %v5168
        %v5170 = vrot.slane %v5169, 1
        %v5171 = vmax.f32 %v5169, %v5170
        %v5172 = vpack.i.bf16 %v5171, %v5171
        %v5174 = vsel %vm5002, %v4703, 4286644096
        %v5176 = vunpack.i.l.bf16 %v5174
        %v5177 = vunpack.i.h.bf16 %v5174
        %v5178 = vmax.f32 %v5176, %v5177
        %v5179 = vrot.slane %v5178, 4
        %v5180 = vmax.f32 %v5178, %v5179
        %v5181 = vrot.slane %v5180, 2
        %v5182 = vmax.f32 %v5180, %v5181
        %v5183 = vrot.slane %v5182, 1
        %v5184 = vmax.f32 %v5182, %v5183
        %v5185 = vpack.i.bf16 %v5184, %v5184
        %v5187 = vsel %vm5002, %v4705, 4286644096
        %v5189 = vunpack.i.l.bf16 %v5187
        %v5190 = vunpack.i.h.bf16 %v5187
        %v5191 = vmax.f32 %v5189, %v5190
        %v5192 = vrot.slane %v5191, 4
        %v5193 = vmax.f32 %v5191, %v5192
        %v5194 = vrot.slane %v5193, 2
        %v5195 = vmax.f32 %v5193, %v5194
        %v5196 = vrot.slane %v5195, 1
        %v5197 = vmax.f32 %v5195, %v5196
        %v5198 = vpack.i.bf16 %v5197, %v5197
        %v5200 = vsel %vm5002, %v4707, 4286644096
        %v5202 = vunpack.i.l.bf16 %v5200
        %v5203 = vunpack.i.h.bf16 %v5200
        %v5204 = vmax.f32 %v5202, %v5203
        %v5205 = vrot.slane %v5204, 4
        %v5206 = vmax.f32 %v5204, %v5205
        %v5207 = vrot.slane %v5206, 2
        %v5208 = vmax.f32 %v5206, %v5207
        %v5209 = vrot.slane %v5208, 1
        %v5210 = vmax.f32 %v5208, %v5209
        %v5211 = vpack.i.bf16 %v5210, %v5210
        %v5213 = vsel %vm5002, %v4731, 4286644096
        %v5215 = vunpack.i.l.bf16 %v5213
        %v5216 = vunpack.i.h.bf16 %v5213
        %v5217 = vmax.f32 %v5215, %v5216
        %v5218 = vrot.slane %v5217, 4
        %v5219 = vmax.f32 %v5217, %v5218
        %v5220 = vrot.slane %v5219, 2
        %v5221 = vmax.f32 %v5219, %v5220
        %v5222 = vrot.slane %v5221, 1
        %v5223 = vmax.f32 %v5221, %v5222
        %v5224 = vpack.i.bf16 %v5223, %v5223
        %v5226 = vsel %vm5002, %v4745, 4286644096
        %v5228 = vunpack.i.l.bf16 %v5226
        %v5229 = vunpack.i.h.bf16 %v5226
        %v5230 = vmax.f32 %v5228, %v5229
        %v5231 = vrot.slane %v5230, 4
        %v5232 = vmax.f32 %v5230, %v5231
        %v5233 = vrot.slane %v5232, 2
        %v5234 = vmax.f32 %v5232, %v5233
        %v5235 = vrot.slane %v5234, 1
        %v5236 = vmax.f32 %v5234, %v5235
        %v5237 = vpack.i.bf16 %v5236, %v5236
        %v5239 = vsel %vm5002, %v4753, 4286644096
        %v5241 = vunpack.i.l.bf16 %v5239
        %v5242 = vunpack.i.h.bf16 %v5239
        %v5243 = vmax.f32 %v5241, %v5242
        %v5244 = vrot.slane %v5243, 4
        %v5245 = vmax.f32 %v5243, %v5244
        %v5246 = vrot.slane %v5245, 2
        %v5247 = vmax.f32 %v5245, %v5246
        %v5248 = vrot.slane %v5247, 1
        %v5249 = vmax.f32 %v5247, %v5248
        %v5250 = vpack.i.bf16 %v5249, %v5249
        %v5252 = vsel %vm5002, %v4755, 4286644096
        %v5254 = vunpack.i.l.bf16 %v5252
        %v5255 = vunpack.i.h.bf16 %v5252
        %v5256 = vmax.f32 %v5254, %v5255
        %v5257 = vrot.slane %v5256, 4
        %v5258 = vmax.f32 %v5256, %v5257
        %v5259 = vrot.slane %v5258, 2
        %v5260 = vmax.f32 %v5258, %v5259
        %v5261 = vrot.slane %v5260, 1
        %v5262 = vmax.f32 %v5260, %v5261
        %v5263 = vpack.i.bf16 %v5262, %v5262
        %v5265 = vsel %vm5002, %v4738, 4286644096
        %v5267 = vunpack.i.l.bf16 %v5265
        %v5268 = vunpack.i.h.bf16 %v5265
        %v5269 = vmax.f32 %v5267, %v5268
        %v5270 = vrot.slane %v5269, 4
        %v5271 = vmax.f32 %v5269, %v5270
        %v5272 = vrot.slane %v5271, 2
        %v5273 = vmax.f32 %v5271, %v5272
        %v5274 = vrot.slane %v5273, 1
        %v5275 = vmax.f32 %v5273, %v5274
        %v5276 = vpack.i.bf16 %v5275, %v5275
        %v5278 = vsel %vm5002, %v4752, 4286644096
        %v5280 = vunpack.i.l.bf16 %v5278
        %v5281 = vunpack.i.h.bf16 %v5278
        %v5282 = vmax.f32 %v5280, %v5281
        %v5283 = vrot.slane %v5282, 4
        %v5284 = vmax.f32 %v5282, %v5283
        %v5285 = vrot.slane %v5284, 2
        %v5286 = vmax.f32 %v5284, %v5285
        %v5287 = vrot.slane %v5286, 1
        %v5288 = vmax.f32 %v5286, %v5287
        %v5289 = vpack.i.bf16 %v5288, %v5288
        %v5291 = vsel %vm5002, %v4754, 4286644096
        %v5293 = vunpack.i.l.bf16 %v5291
        %v5294 = vunpack.i.h.bf16 %v5291
        %v5295 = vmax.f32 %v5293, %v5294
        %v5296 = vrot.slane %v5295, 4
        %v5297 = vmax.f32 %v5295, %v5296
        %v5298 = vrot.slane %v5297, 2
        %v5299 = vmax.f32 %v5297, %v5298
        %v5300 = vrot.slane %v5299, 1
        %v5301 = vmax.f32 %v5299, %v5300
        %v5302 = vpack.i.bf16 %v5301, %v5301
        %v5304 = vsel %vm5002, %v4756, 4286644096
        %v5306 = vunpack.i.l.bf16 %v5304
        %v5307 = vunpack.i.h.bf16 %v5304
        %v5308 = vmax.f32 %v5306, %v5307
        %v5309 = vrot.slane %v5308, 4
        %v5310 = vmax.f32 %v5308, %v5309
        %v5311 = vrot.slane %v5310, 2
        %v5312 = vmax.f32 %v5310, %v5311
        %v5313 = vrot.slane %v5312, 1
        %v5314 = vmax.f32 %v5312, %v5313
        %v5315 = vpack.i.bf16 %v5314, %v5314
        %v5317 = vsel %vm5002, %v4780, 4286644096
        %v5319 = vunpack.i.l.bf16 %v5317
        %v5320 = vunpack.i.h.bf16 %v5317
        %v5321 = vmax.f32 %v5319, %v5320
        %v5322 = vrot.slane %v5321, 4
        %v5323 = vmax.f32 %v5321, %v5322
        %v5324 = vrot.slane %v5323, 2
        %v5325 = vmax.f32 %v5323, %v5324
        %v5326 = vrot.slane %v5325, 1
        %v5327 = vmax.f32 %v5325, %v5326
        %v5328 = vpack.i.bf16 %v5327, %v5327
        %v5330 = vsel %vm5002, %v4794, 4286644096
        %v5332 = vunpack.i.l.bf16 %v5330
        %v5333 = vunpack.i.h.bf16 %v5330
        %v5334 = vmax.f32 %v5332, %v5333
        %v5335 = vrot.slane %v5334, 4
        %v5336 = vmax.f32 %v5334, %v5335
        %v5337 = vrot.slane %v5336, 2
        %v5338 = vmax.f32 %v5336, %v5337
        %v5339 = vrot.slane %v5338, 1
        %v5340 = vmax.f32 %v5338, %v5339
        %v5341 = vpack.i.bf16 %v5340, %v5340
        %v5343 = vsel %vm5002, %v4802, 4286644096
        %v5345 = vunpack.i.l.bf16 %v5343
        %v5346 = vunpack.i.h.bf16 %v5343
        %v5347 = vmax.f32 %v5345, %v5346
        %v5348 = vrot.slane %v5347, 4
        %v5349 = vmax.f32 %v5347, %v5348
        %v5350 = vrot.slane %v5349, 2
        %v5351 = vmax.f32 %v5349, %v5350
        %v5352 = vrot.slane %v5351, 1
        %v5353 = vmax.f32 %v5351, %v5352
        %v5354 = vpack.i.bf16 %v5353, %v5353
        %v5356 = vsel %vm5002, %v4804, 4286644096
        %v5358 = vunpack.i.l.bf16 %v5356
        %v5359 = vunpack.i.h.bf16 %v5356
        %v5360 = vmax.f32 %v5358, %v5359
        %v5361 = vrot.slane %v5360, 4
        %v5362 = vmax.f32 %v5360, %v5361
        %v5363 = vrot.slane %v5362, 2
        %v5364 = vmax.f32 %v5362, %v5363
        %v5365 = vrot.slane %v5364, 1
        %v5366 = vmax.f32 %v5364, %v5365
        %v5367 = vpack.i.bf16 %v5366, %v5366
        %v5369 = vsel %vm5002, %v4787, 4286644096
        %v5371 = vunpack.i.l.bf16 %v5369
        %v5372 = vunpack.i.h.bf16 %v5369
        %v5373 = vmax.f32 %v5371, %v5372
        %v5374 = vrot.slane %v5373, 4
        %v5375 = vmax.f32 %v5373, %v5374
        %v5376 = vrot.slane %v5375, 2
        %v5377 = vmax.f32 %v5375, %v5376
        %v5378 = vrot.slane %v5377, 1
        %v5379 = vmax.f32 %v5377, %v5378
        %v5380 = vpack.i.bf16 %v5379, %v5379
        %v5382 = vsel %vm5002, %v4801, 4286644096
        %v5384 = vunpack.i.l.bf16 %v5382
        %v5385 = vunpack.i.h.bf16 %v5382
        %v5386 = vmax.f32 %v5384, %v5385
        %v5387 = vrot.slane %v5386, 4
        %v5388 = vmax.f32 %v5386, %v5387
        %v5389 = vrot.slane %v5388, 2
        %v5390 = vmax.f32 %v5388, %v5389
        %v5391 = vrot.slane %v5390, 1
        %v5392 = vmax.f32 %v5390, %v5391
        %v5393 = vpack.i.bf16 %v5392, %v5392
        %v5395 = vsel %vm5002, %v4803, 4286644096
        %v5397 = vunpack.i.l.bf16 %v5395
        %v5398 = vunpack.i.h.bf16 %v5395
        %v5399 = vmax.f32 %v5397, %v5398
        %v5400 = vrot.slane %v5399, 4
        %v5401 = vmax.f32 %v5399, %v5400
        %v5402 = vrot.slane %v5401, 2
        %v5403 = vmax.f32 %v5401, %v5402
        %v5404 = vrot.slane %v5403, 1
        %v5405 = vmax.f32 %v5403, %v5404
        %v5406 = vpack.i.bf16 %v5405, %v5405
        %v5408 = vsel %vm5002, %v4805, 4286644096
        %v5410 = vunpack.i.l.bf16 %v5408
        %v5411 = vunpack.i.h.bf16 %v5408
        %v5412 = vmax.f32 %v5410, %v5411
        %v5413 = vrot.slane %v5412, 4
        %v5414 = vmax.f32 %v5412, %v5413
        %v5415 = vrot.slane %v5414, 2
        %v5416 = vmax.f32 %v5414, %v5415
        %v5417 = vrot.slane %v5416, 1
        %v5418 = vmax.f32 %v5416, %v5417
        %v5419 = vpack.i.bf16 %v5418, %v5418
        %v5421 = vsel %vm5002, %v4829, 4286644096
        %v5423 = vunpack.i.l.bf16 %v5421
        %v5424 = vunpack.i.h.bf16 %v5421
        %v5425 = vmax.f32 %v5423, %v5424
        %v5426 = vrot.slane %v5425, 4
        %v5427 = vmax.f32 %v5425, %v5426
        %v5428 = vrot.slane %v5427, 2
        %v5429 = vmax.f32 %v5427, %v5428
        %v5430 = vrot.slane %v5429, 1
        %v5431 = vmax.f32 %v5429, %v5430
        %v5432 = vpack.i.bf16 %v5431, %v5431
        %v5434 = vsel %vm5002, %v4843, 4286644096
        %v5436 = vunpack.i.l.bf16 %v5434
        %v5437 = vunpack.i.h.bf16 %v5434
        %v5438 = vmax.f32 %v5436, %v5437
        %v5439 = vrot.slane %v5438, 4
        %v5440 = vmax.f32 %v5438, %v5439
        %v5441 = vrot.slane %v5440, 2
        %v5442 = vmax.f32 %v5440, %v5441
        %v5443 = vrot.slane %v5442, 1
        %v5444 = vmax.f32 %v5442, %v5443
        %v5445 = vpack.i.bf16 %v5444, %v5444
        %v5447 = vsel %vm5002, %v4851, 4286644096
        %v5449 = vunpack.i.l.bf16 %v5447
        %v5450 = vunpack.i.h.bf16 %v5447
        %v5451 = vmax.f32 %v5449, %v5450
        %v5452 = vrot.slane %v5451, 4
        %v5453 = vmax.f32 %v5451, %v5452
        %v5454 = vrot.slane %v5453, 2
        %v5455 = vmax.f32 %v5453, %v5454
        %v5456 = vrot.slane %v5455, 1
        %v5457 = vmax.f32 %v5455, %v5456
        %v5458 = vpack.i.bf16 %v5457, %v5457
        %v5460 = vsel %vm5002, %v4853, 4286644096
        %v5462 = vunpack.i.l.bf16 %v5460
        %v5463 = vunpack.i.h.bf16 %v5460
        %v5464 = vmax.f32 %v5462, %v5463
        %v5465 = vrot.slane %v5464, 4
        %v5466 = vmax.f32 %v5464, %v5465
        %v5467 = vrot.slane %v5466, 2
        %v5468 = vmax.f32 %v5466, %v5467
        %v5469 = vrot.slane %v5468, 1
        %v5470 = vmax.f32 %v5468, %v5469
        %v5471 = vpack.i.bf16 %v5470, %v5470
        %v5473 = vsel %vm5002, %v4836, 4286644096
        %v5475 = vunpack.i.l.bf16 %v5473
        %v5476 = vunpack.i.h.bf16 %v5473
        %v5477 = vmax.f32 %v5475, %v5476
        %v5478 = vrot.slane %v5477, 4
        %v5479 = vmax.f32 %v5477, %v5478
        %v5480 = vrot.slane %v5479, 2
        %v5481 = vmax.f32 %v5479, %v5480
        %v5482 = vrot.slane %v5481, 1
        %v5483 = vmax.f32 %v5481, %v5482
        %v5484 = vpack.i.bf16 %v5483, %v5483
        %v5486 = vsel %vm5002, %v4850, 4286644096
        %v5488 = vunpack.i.l.bf16 %v5486
        %v5489 = vunpack.i.h.bf16 %v5486
        %v5490 = vmax.f32 %v5488, %v5489
        %v5491 = vrot.slane %v5490, 4
        %v5492 = vmax.f32 %v5490, %v5491
        %v5493 = vrot.slane %v5492, 2
        %v5494 = vmax.f32 %v5492, %v5493
        %v5495 = vrot.slane %v5494, 1
        %v5496 = vmax.f32 %v5494, %v5495
        %v5497 = vpack.i.bf16 %v5496, %v5496
        %v5499 = vsel %vm5002, %v4852, 4286644096
        %v5501 = vunpack.i.l.bf16 %v5499
        %v5502 = vunpack.i.h.bf16 %v5499
        %v5503 = vmax.f32 %v5501, %v5502
        %v5504 = vrot.slane %v5503, 4
        %v5505 = vmax.f32 %v5503, %v5504
        %v5506 = vrot.slane %v5505, 2
        %v5507 = vmax.f32 %v5505, %v5506
        %v5508 = vrot.slane %v5507, 1
        %v5509 = vmax.f32 %v5507, %v5508
        %v5510 = vpack.i.bf16 %v5509, %v5509
        %v5512 = vsel %vm5002, %v4854, 4286644096
        %v5514 = vunpack.i.l.bf16 %v5512
        %v5515 = vunpack.i.h.bf16 %v5512
        %v5516 = vmax.f32 %v5514, %v5515
        %v5517 = vrot.slane %v5516, 4
        %v5518 = vmax.f32 %v5516, %v5517
        %v5519 = vrot.slane %v5518, 2
        %v5520 = vmax.f32 %v5518, %v5519
        %v5521 = vrot.slane %v5520, 1
        %v5522 = vmax.f32 %v5520, %v5521
        %v5523 = vpack.i.bf16 %v5522, %v5522
        %v5525 = vsel %vm5002, %v4878, 4286644096
        %v5527 = vunpack.i.l.bf16 %v5525
        %v5528 = vunpack.i.h.bf16 %v5525
        %v5529 = vmax.f32 %v5527, %v5528
        %v5530 = vrot.slane %v5529, 4
        %v5531 = vmax.f32 %v5529, %v5530
        %v5532 = vrot.slane %v5531, 2
        %v5533 = vmax.f32 %v5531, %v5532
        %v5534 = vrot.slane %v5533, 1
        %v5535 = vmax.f32 %v5533, %v5534
        %v5536 = vpack.i.bf16 %v5535, %v5535
        %v5538 = vsel %vm5002, %v4892, 4286644096
        %v5540 = vunpack.i.l.bf16 %v5538
        %v5541 = vunpack.i.h.bf16 %v5538
        %v5542 = vmax.f32 %v5540, %v5541
        %v5543 = vrot.slane %v5542, 4
        %v5544 = vmax.f32 %v5542, %v5543
        %v5545 = vrot.slane %v5544, 2
        %v5546 = vmax.f32 %v5544, %v5545
        %v5547 = vrot.slane %v5546, 1
        %v5548 = vmax.f32 %v5546, %v5547
        %v5549 = vpack.i.bf16 %v5548, %v5548
        %v5551 = vsel %vm5002, %v4900, 4286644096
        %v5553 = vunpack.i.l.bf16 %v5551
        %v5554 = vunpack.i.h.bf16 %v5551
        %v5555 = vmax.f32 %v5553, %v5554
        %v5556 = vrot.slane %v5555, 4
        %v5557 = vmax.f32 %v5555, %v5556
        %v5558 = vrot.slane %v5557, 2
        %v5559 = vmax.f32 %v5557, %v5558
        %v5560 = vrot.slane %v5559, 1
        %v5561 = vmax.f32 %v5559, %v5560
        %v5562 = vpack.i.bf16 %v5561, %v5561
        %v5564 = vsel %vm5002, %v4902, 4286644096
        %v5566 = vunpack.i.l.bf16 %v5564
        %v5567 = vunpack.i.h.bf16 %v5564
        %v5568 = vmax.f32 %v5566, %v5567
        %v5569 = vrot.slane %v5568, 4
        %v5570 = vmax.f32 %v5568, %v5569
        %v5571 = vrot.slane %v5570, 2
        %v5572 = vmax.f32 %v5570, %v5571
        %v5573 = vrot.slane %v5572, 1
        %v5574 = vmax.f32 %v5572, %v5573
        %v5575 = vpack.i.bf16 %v5574, %v5574
        %v5577 = vsel %vm5002, %v4885, 4286644096
        %v5579 = vunpack.i.l.bf16 %v5577
        %v5580 = vunpack.i.h.bf16 %v5577
        %v5581 = vmax.f32 %v5579, %v5580
        %v5582 = vrot.slane %v5581, 4
        %v5583 = vmax.f32 %v5581, %v5582
        %v5584 = vrot.slane %v5583, 2
        %v5585 = vmax.f32 %v5583, %v5584
        %v5586 = vrot.slane %v5585, 1
        %v5587 = vmax.f32 %v5585, %v5586
        %v5588 = vpack.i.bf16 %v5587, %v5587
        %v5590 = vsel %vm5002, %v4899, 4286644096
        %v5592 = vunpack.i.l.bf16 %v5590
        %v5593 = vunpack.i.h.bf16 %v5590
        %v5594 = vmax.f32 %v5592, %v5593
        %v5595 = vrot.slane %v5594, 4
        %v5596 = vmax.f32 %v5594, %v5595
        %v5597 = vrot.slane %v5596, 2
        %v5598 = vmax.f32 %v5596, %v5597
        %v5599 = vrot.slane %v5598, 1
        %v5600 = vmax.f32 %v5598, %v5599
        %v5601 = vpack.i.bf16 %v5600, %v5600
        %v5603 = vsel %vm5002, %v4901, 4286644096
        %v5605 = vunpack.i.l.bf16 %v5603
        %v5606 = vunpack.i.h.bf16 %v5603
        %v5607 = vmax.f32 %v5605, %v5606
        %v5608 = vrot.slane %v5607, 4
        %v5609 = vmax.f32 %v5607, %v5608
        %v5610 = vrot.slane %v5609, 2
        %v5611 = vmax.f32 %v5609, %v5610
        %v5612 = vrot.slane %v5611, 1
        %v5613 = vmax.f32 %v5611, %v5612
        %v5614 = vpack.i.bf16 %v5613, %v5613
        %v5616 = vsel %vm5002, %v4903, 4286644096
        %v5618 = vunpack.i.l.bf16 %v5616
        %v5619 = vunpack.i.h.bf16 %v5616
        %v5620 = vmax.f32 %v5618, %v5619
        %v5621 = vrot.slane %v5620, 4
        %v5622 = vmax.f32 %v5620, %v5621
        %v5623 = vrot.slane %v5622, 2
        %v5624 = vmax.f32 %v5622, %v5623
        %v5625 = vrot.slane %v5624, 1
        %v5626 = vmax.f32 %v5624, %v5625
        %v5627 = vpack.i.bf16 %v5626, %v5626
        %v5629 = vsel %vm5002, %v4927, 4286644096
        %v5631 = vunpack.i.l.bf16 %v5629
        %v5632 = vunpack.i.h.bf16 %v5629
        %v5633 = vmax.f32 %v5631, %v5632
        %v5634 = vrot.slane %v5633, 4
        %v5635 = vmax.f32 %v5633, %v5634
        %v5636 = vrot.slane %v5635, 2
        %v5637 = vmax.f32 %v5635, %v5636
        %v5638 = vrot.slane %v5637, 1
        %v5639 = vmax.f32 %v5637, %v5638
        %v5640 = vpack.i.bf16 %v5639, %v5639
        %v5642 = vsel %vm5002, %v4941, 4286644096
        %v5644 = vunpack.i.l.bf16 %v5642
        %v5645 = vunpack.i.h.bf16 %v5642
        %v5646 = vmax.f32 %v5644, %v5645
        %v5647 = vrot.slane %v5646, 4
        %v5648 = vmax.f32 %v5646, %v5647
        %v5649 = vrot.slane %v5648, 2
        %v5650 = vmax.f32 %v5648, %v5649
        %v5651 = vrot.slane %v5650, 1
        %v5652 = vmax.f32 %v5650, %v5651
        %v5653 = vpack.i.bf16 %v5652, %v5652
        %v5655 = vsel %vm5002, %v4949, 4286644096
        %v5657 = vunpack.i.l.bf16 %v5655
        %v5658 = vunpack.i.h.bf16 %v5655
        %v5659 = vmax.f32 %v5657, %v5658
        %v5660 = vrot.slane %v5659, 4
        %v5661 = vmax.f32 %v5659, %v5660
        %v5662 = vrot.slane %v5661, 2
        %v5663 = vmax.f32 %v5661, %v5662
        %v5664 = vrot.slane %v5663, 1
        %v5665 = vmax.f32 %v5663, %v5664
        %v5666 = vpack.i.bf16 %v5665, %v5665
        %v5668 = vsel %vm5002, %v4951, 4286644096
        %v5670 = vunpack.i.l.bf16 %v5668
        %v5671 = vunpack.i.h.bf16 %v5668
        %v5672 = vmax.f32 %v5670, %v5671
        %v5673 = vrot.slane %v5672, 4
        %v5674 = vmax.f32 %v5672, %v5673
        %v5675 = vrot.slane %v5674, 2
        %v5676 = vmax.f32 %v5674, %v5675
        %v5677 = vrot.slane %v5676, 1
        %v5678 = vmax.f32 %v5676, %v5677
        %v5679 = vpack.i.bf16 %v5678, %v5678
        %v5681 = vsel %vm5002, %v4934, 4286644096
        %v5683 = vunpack.i.l.bf16 %v5681
        %v5684 = vunpack.i.h.bf16 %v5681
        %v5685 = vmax.f32 %v5683, %v5684
        %v5686 = vrot.slane %v5685, 4
        %v5687 = vmax.f32 %v5685, %v5686
        %v5688 = vrot.slane %v5687, 2
        %v5689 = vmax.f32 %v5687, %v5688
        %v5690 = vrot.slane %v5689, 1
        %v5691 = vmax.f32 %v5689, %v5690
        %v5692 = vpack.i.bf16 %v5691, %v5691
        %v5694 = vsel %vm5002, %v4948, 4286644096
        %v5696 = vunpack.i.l.bf16 %v5694
        %v5697 = vunpack.i.h.bf16 %v5694
        %v5698 = vmax.f32 %v5696, %v5697
        %v5699 = vrot.slane %v5698, 4
        %v5700 = vmax.f32 %v5698, %v5699
        %v5701 = vrot.slane %v5700, 2
        %v5702 = vmax.f32 %v5700, %v5701
        %v5703 = vrot.slane %v5702, 1
        %v5704 = vmax.f32 %v5702, %v5703
        %v5705 = vpack.i.bf16 %v5704, %v5704
        %v5707 = vsel %vm5002, %v4950, 4286644096
        %v5709 = vunpack.i.l.bf16 %v5707
        %v5710 = vunpack.i.h.bf16 %v5707
        %v5711 = vmax.f32 %v5709, %v5710
        %v5712 = vrot.slane %v5711, 4
        %v5713 = vmax.f32 %v5711, %v5712
        %v5714 = vrot.slane %v5713, 2
        %v5715 = vmax.f32 %v5713, %v5714
        %v5716 = vrot.slane %v5715, 1
        %v5717 = vmax.f32 %v5715, %v5716
        %v5718 = vpack.i.bf16 %v5717, %v5717
        %v5720 = vsel %vm5002, %v4952, 4286644096
        %v5722 = vunpack.i.l.bf16 %v5720
        %v5723 = vunpack.i.h.bf16 %v5720
        %v5724 = vmax.f32 %v5722, %v5723
        %v5725 = vrot.slane %v5724, 4
        %v5726 = vmax.f32 %v5724, %v5725
        %v5727 = vrot.slane %v5726, 2
        %v5728 = vmax.f32 %v5726, %v5727
        %v5729 = vrot.slane %v5728, 1
        %v5730 = vmax.f32 %v5728, %v5729
        %v5731 = vpack.i.bf16 %v5730, %v5730
        %v5733 = vsel %vm5002, %v4976, 4286644096
        %v5735 = vunpack.i.l.bf16 %v5733
        %v5736 = vunpack.i.h.bf16 %v5733
        %v5737 = vmax.f32 %v5735, %v5736
        %v5738 = vrot.slane %v5737, 4
        %v5739 = vmax.f32 %v5737, %v5738
        %v5740 = vrot.slane %v5739, 2
        %v5741 = vmax.f32 %v5739, %v5740
        %v5742 = vrot.slane %v5741, 1
        %v5743 = vmax.f32 %v5741, %v5742
        %v5744 = vpack.i.bf16 %v5743, %v5743
        %v5746 = vsel %vm5002, %v4990, 4286644096
        %v5748 = vunpack.i.l.bf16 %v5746
        %v5749 = vunpack.i.h.bf16 %v5746
        %v5750 = vmax.f32 %v5748, %v5749
        %v5751 = vrot.slane %v5750, 4
        %v5752 = vmax.f32 %v5750, %v5751
        %v5753 = vrot.slane %v5752, 2
        %v5754 = vmax.f32 %v5752, %v5753
        %v5755 = vrot.slane %v5754, 1
        %v5756 = vmax.f32 %v5754, %v5755
        %v5757 = vpack.i.bf16 %v5756, %v5756
        %v5759 = vsel %vm5002, %v4998, 4286644096
        %v5761 = vunpack.i.l.bf16 %v5759
        %v5762 = vunpack.i.h.bf16 %v5759
        %v5763 = vmax.f32 %v5761, %v5762
        %v5764 = vrot.slane %v5763, 4
        %v5765 = vmax.f32 %v5763, %v5764
        %v5766 = vrot.slane %v5765, 2
        %v5767 = vmax.f32 %v5765, %v5766
        %v5768 = vrot.slane %v5767, 1
        %v5769 = vmax.f32 %v5767, %v5768
        %v5770 = vpack.i.bf16 %v5769, %v5769
        %v5772 = vsel %vm5002, %v5000, 4286644096
        %v5774 = vunpack.i.l.bf16 %v5772
        %v5775 = vunpack.i.h.bf16 %v5772
        %v5776 = vmax.f32 %v5774, %v5775
        %v5777 = vrot.slane %v5776, 4
        %v5778 = vmax.f32 %v5776, %v5777
        %v5779 = vrot.slane %v5778, 2
        %v5780 = vmax.f32 %v5778, %v5779
        %v5781 = vrot.slane %v5780, 1
        %v5782 = vmax.f32 %v5780, %v5781
        %v5783 = vpack.i.bf16 %v5782, %v5782
        %v5785 = vsel %vm5002, %v4983, 4286644096
        %v5787 = vunpack.i.l.bf16 %v5785
        %v5788 = vunpack.i.h.bf16 %v5785
        %v5789 = vmax.f32 %v5787, %v5788
        %v5790 = vrot.slane %v5789, 4
        %v5791 = vmax.f32 %v5789, %v5790
        %v5792 = vrot.slane %v5791, 2
        %v5793 = vmax.f32 %v5791, %v5792
        %v5794 = vrot.slane %v5793, 1
        %v5795 = vmax.f32 %v5793, %v5794
        %v5796 = vpack.i.bf16 %v5795, %v5795
        %v5798 = vsel %vm5002, %v4997, 4286644096
        %v5800 = vunpack.i.l.bf16 %v5798
        %v5801 = vunpack.i.h.bf16 %v5798
        %v5802 = vmax.f32 %v5800, %v5801
        %v5803 = vrot.slane %v5802, 4
        %v5804 = vmax.f32 %v5802, %v5803
        %v5805 = vrot.slane %v5804, 2
        %v5806 = vmax.f32 %v5804, %v5805
        %v5807 = vrot.slane %v5806, 1
        %v5808 = vmax.f32 %v5806, %v5807
        %v5809 = vpack.i.bf16 %v5808, %v5808
        %v5811 = vsel %vm5002, %v4999, 4286644096
        %v5813 = vunpack.i.l.bf16 %v5811
        %v5814 = vunpack.i.h.bf16 %v5811
        %v5815 = vmax.f32 %v5813, %v5814
        %v5816 = vrot.slane %v5815, 4
        %v5817 = vmax.f32 %v5815, %v5816
        %v5818 = vrot.slane %v5817, 2
        %v5819 = vmax.f32 %v5817, %v5818
        %v5820 = vrot.slane %v5819, 1
        %v5821 = vmax.f32 %v5819, %v5820
        %v5822 = vpack.i.bf16 %v5821, %v5821
        %v5824 = vsel %vm5002, %v5001, 4286644096
        %v5826 = vunpack.i.l.bf16 %v5824
        %v5827 = vunpack.i.h.bf16 %v5824
        %v5828 = vmax.f32 %v5826, %v5827
        %v5829 = vrot.slane %v5828, 4
        %v5830 = vmax.f32 %v5828, %v5829
        %v5831 = vrot.slane %v5830, 2
        %v5832 = vmax.f32 %v5830, %v5831
        %v5833 = vrot.slane %v5832, 1
        %v5834 = vmax.f32 %v5832, %v5833
        %v5835 = vpack.i.bf16 %v5834, %v5834
        %v5900 = vunpack.c.l.b16 %v5016
        %v5901 = vunpack.c.l.b16 %v5029
        %v5902 = vunpack.c.l.b16 %v5042
        %v5903 = vunpack.c.l.b16 %v5055
        %v5904 = vunpack.c.l.b16 %v5068
        %v5905 = vunpack.c.l.b16 %v5081
        %v5906 = vunpack.c.l.b16 %v5094
        %v5907 = vunpack.c.l.b16 %v5107
        %v5908 = vunpack.c.l.b16 %v5120
        %v5909 = vunpack.c.l.b16 %v5133
        %v5910 = vunpack.c.l.b16 %v5146
        %v5911 = vunpack.c.l.b16 %v5159
        %v5912 = vunpack.c.l.b16 %v5172
        %v5913 = vunpack.c.l.b16 %v5185
        %v5914 = vunpack.c.l.b16 %v5198
        %v5915 = vunpack.c.l.b16 %v5211
        %v5916 = vunpack.c.l.b16 %v5224
        %v5917 = vunpack.c.l.b16 %v5237
        %v5918 = vunpack.c.l.b16 %v5250
        %v5919 = vunpack.c.l.b16 %v5263
        %v5920 = vunpack.c.l.b16 %v5276
        %v5921 = vunpack.c.l.b16 %v5289
        %v5922 = vunpack.c.l.b16 %v5302
        %v5923 = vunpack.c.l.b16 %v5315
        %v5924 = vunpack.c.l.b16 %v5328
        %v5925 = vunpack.c.l.b16 %v5341
        %v5926 = vunpack.c.l.b16 %v5354
        %v5927 = vunpack.c.l.b16 %v5367
        %v5928 = vunpack.c.l.b16 %v5380
        %v5929 = vunpack.c.l.b16 %v5393
        %v5930 = vunpack.c.l.b16 %v5406
        %v5931 = vunpack.c.l.b16 %v5419
        %v5932 = vunpack.c.l.b16 %v5432
        %v5933 = vunpack.c.l.b16 %v5445
        %v5934 = vunpack.c.l.b16 %v5458
        %v5935 = vunpack.c.l.b16 %v5471
        %v5936 = vunpack.c.l.b16 %v5484
        %v5937 = vunpack.c.l.b16 %v5497
        %v5938 = vunpack.c.l.b16 %v5510
        %v5939 = vunpack.c.l.b16 %v5523
        %v5940 = vunpack.c.l.b16 %v5536
        %v5941 = vunpack.c.l.b16 %v5549
        %v5942 = vunpack.c.l.b16 %v5562
        %v5943 = vunpack.c.l.b16 %v5575
        %v5944 = vunpack.c.l.b16 %v5588
        %v5945 = vunpack.c.l.b16 %v5601
        %v5946 = vunpack.c.l.b16 %v5614
        %v5947 = vunpack.c.l.b16 %v5627
        %v5948 = vunpack.c.l.b16 %v5640
        %v5949 = vunpack.c.l.b16 %v5653
        %v5950 = vunpack.c.l.b16 %v5666
        %v5951 = vunpack.c.l.b16 %v5679
        %v5952 = vunpack.c.l.b16 %v5692
        %v5953 = vunpack.c.l.b16 %v5705
        %v5954 = vunpack.c.l.b16 %v5718
        %v5955 = vunpack.c.l.b16 %v5731
        %v5956 = vunpack.c.l.b16 %v5744
        %v5957 = vunpack.c.l.b16 %v5757
        %v5958 = vunpack.c.l.b16 %v5770
        %v5959 = vunpack.c.l.b16 %v5783
        %v5960 = vunpack.c.l.b16 %v5796
        %v5961 = vunpack.c.l.b16 %v5809
        %v5962 = vunpack.c.l.b16 %v5822
        %v5963 = vunpack.c.l.b16 %v5835
        %v5964 = vpack.c.b16 %v5900, %v5900
        %v5965 = vpack.c.b16 %v5901, %v5901
        %v5966 = vpack.c.b16 %v5902, %v5902
        %v5967 = vpack.c.b16 %v5903, %v5903
        %v5968 = vpack.c.b16 %v5904, %v5904
        %v5969 = vpack.c.b16 %v5905, %v5905
        %v5970 = vpack.c.b16 %v5906, %v5906
        %v5971 = vpack.c.b16 %v5907, %v5907
        %v5972 = vpack.c.b16 %v5908, %v5908
        %v5973 = vpack.c.b16 %v5909, %v5909
        %v5974 = vpack.c.b16 %v5910, %v5910
        %v5975 = vpack.c.b16 %v5911, %v5911
        %v5976 = vpack.c.b16 %v5912, %v5912
        %v5977 = vpack.c.b16 %v5913, %v5913
        %v5978 = vpack.c.b16 %v5914, %v5914
        %v5979 = vpack.c.b16 %v5915, %v5915
        %v5980 = vpack.c.b16 %v5916, %v5916
        %v5981 = vpack.c.b16 %v5917, %v5917
        %v5982 = vpack.c.b16 %v5918, %v5918
        %v5983 = vpack.c.b16 %v5919, %v5919
        %v5984 = vpack.c.b16 %v5920, %v5920
        %v5985 = vpack.c.b16 %v5921, %v5921
        %v5986 = vpack.c.b16 %v5922, %v5922
        %v5987 = vpack.c.b16 %v5923, %v5923
        %v5988 = vpack.c.b16 %v5924, %v5924
        %v5989 = vpack.c.b16 %v5925, %v5925
        %v5990 = vpack.c.b16 %v5926, %v5926
        %v5991 = vpack.c.b16 %v5927, %v5927
        %v5992 = vpack.c.b16 %v5928, %v5928
        %v5993 = vpack.c.b16 %v5929, %v5929
        %v5994 = vpack.c.b16 %v5930, %v5930
        %v5995 = vpack.c.b16 %v5931, %v5931
        %v5996 = vpack.c.b16 %v5932, %v5932
        %v5997 = vpack.c.b16 %v5933, %v5933
        %v5998 = vpack.c.b16 %v5934, %v5934
        %v5999 = vpack.c.b16 %v5935, %v5935
        %v6000 = vpack.c.b16 %v5936, %v5936
        %v6001 = vpack.c.b16 %v5937, %v5937
        %v6002 = vpack.c.b16 %v5938, %v5938
        %v6003 = vpack.c.b16 %v5939, %v5939
        %v6004 = vpack.c.b16 %v5940, %v5940
        %v6005 = vpack.c.b16 %v5941, %v5941
        %v6006 = vpack.c.b16 %v5942, %v5942
        %v6007 = vpack.c.b16 %v5943, %v5943
        %v6008 = vpack.c.b16 %v5944, %v5944
        %v6009 = vpack.c.b16 %v5945, %v5945
        %v6010 = vpack.c.b16 %v5946, %v5946
        %v6011 = vpack.c.b16 %v5947, %v5947
        %v6012 = vpack.c.b16 %v5948, %v5948
        %v6013 = vpack.c.b16 %v5949, %v5949
        %v6014 = vpack.c.b16 %v5950, %v5950
        %v6015 = vpack.c.b16 %v5951, %v5951
        %v6016 = vpack.c.b16 %v5952, %v5952
        %v6017 = vpack.c.b16 %v5953, %v5953
        %v6018 = vpack.c.b16 %v5954, %v5954
        %v6019 = vpack.c.b16 %v5955, %v5955
        %v6020 = vpack.c.b16 %v5956, %v5956
        %v6021 = vpack.c.b16 %v5957, %v5957
        %v6022 = vpack.c.b16 %v5958, %v5958
        %v6023 = vpack.c.b16 %v5959, %v5959
        %v6024 = vpack.c.b16 %v5960, %v5960
        %v6025 = vpack.c.b16 %v5961, %v5961
        %v6026 = vpack.c.b16 %v5962, %v5962
        %v6027 = vpack.c.b16 %v5963, %v5963
        %v6028 = vunpack.c.l.b16 %v5964
        %v6029 = vunpack.c.l.b16 %v5965
        %v6030 = vunpack.c.l.b16 %v5966
        %v6031 = vunpack.c.l.b16 %v5967
        %v6032 = vunpack.c.l.b16 %v5968
        %v6033 = vunpack.c.l.b16 %v5969
        %v6034 = vunpack.c.l.b16 %v5970
        %v6035 = vunpack.c.l.b16 %v5971
        %v6036 = vunpack.c.l.b16 %v5972
        %v6037 = vunpack.c.l.b16 %v5973
        %v6038 = vunpack.c.l.b16 %v5974
        %v6039 = vunpack.c.l.b16 %v5975
        %v6040 = vunpack.c.l.b16 %v5976
        %v6041 = vunpack.c.l.b16 %v5977
        %v6042 = vunpack.c.l.b16 %v5978
        %v6043 = vunpack.c.l.b16 %v5979
        %v6044 = vunpack.c.l.b16 %v5980
        %v6045 = vunpack.c.l.b16 %v5981
        %v6046 = vunpack.c.l.b16 %v5982
        %v6047 = vunpack.c.l.b16 %v5983
        %v6048 = vunpack.c.l.b16 %v5984
        %v6049 = vunpack.c.l.b16 %v5985
        %v6050 = vunpack.c.l.b16 %v5986
        %v6051 = vunpack.c.l.b16 %v5987
        %v6052 = vunpack.c.l.b16 %v5988
        %v6053 = vunpack.c.l.b16 %v5989
        %v6054 = vunpack.c.l.b16 %v5990
        %v6055 = vunpack.c.l.b16 %v5991
        %v6056 = vunpack.c.l.b16 %v5992
        %v6057 = vunpack.c.l.b16 %v5993
        %v6058 = vunpack.c.l.b16 %v5994
        %v6059 = vunpack.c.l.b16 %v5995
        %v6060 = vunpack.c.l.b16 %v5996
        %v6061 = vunpack.c.l.b16 %v5997
        %v6062 = vunpack.c.l.b16 %v5998
        %v6063 = vunpack.c.l.b16 %v5999
        %v6064 = vunpack.c.l.b16 %v6000
        %v6065 = vunpack.c.l.b16 %v6001
        %v6066 = vunpack.c.l.b16 %v6002
        %v6067 = vunpack.c.l.b16 %v6003
        %v6068 = vunpack.c.l.b16 %v6004
        %v6069 = vunpack.c.l.b16 %v6005
        %v6070 = vunpack.c.l.b16 %v6006
        %v6071 = vunpack.c.l.b16 %v6007
        %v6072 = vunpack.c.l.b16 %v6008
        %v6073 = vunpack.c.l.b16 %v6009
        %v6074 = vunpack.c.l.b16 %v6010
        %v6075 = vunpack.c.l.b16 %v6011
        %v6076 = vunpack.c.l.b16 %v6012
        %v6077 = vunpack.c.l.b16 %v6013
        %v6078 = vunpack.c.l.b16 %v6014
        %v6079 = vunpack.c.l.b16 %v6015
        %v6080 = vunpack.c.l.b16 %v6016
        %v6081 = vunpack.c.l.b16 %v6017
        %v6082 = vunpack.c.l.b16 %v6018
        %v6083 = vunpack.c.l.b16 %v6019
        %v6084 = vunpack.c.l.b16 %v6020
        %v6085 = vunpack.c.l.b16 %v6021
        %v6086 = vunpack.c.l.b16 %v6022
        %v6087 = vunpack.c.l.b16 %v6023
        %v6088 = vunpack.c.l.b16 %v6024
        %v6089 = vunpack.c.l.b16 %v6025
        %v6090 = vunpack.c.l.b16 %v6026
        %v6091 = vunpack.c.l.b16 %v6027
        %vm6092 = vcmask 1041409
        %v6093 = vsel %vm6092, %v6029, %v6028
        %vm6094 = vcmask 1042434
        %v6095 = vsel %vm6094, %v6030, %v6093
        %vm6096 = vcmask 1043459
        %v6097 = vsel %vm6096, %v6031, %v6095
        %vm6098 = vcmask 1044484
        %v6099 = vsel %vm6098, %v6032, %v6097
        %vm6100 = vcmask 1045509
        %v6101 = vsel %vm6100, %v6033, %v6099
        %vm6102 = vcmask 1046534
        %v6103 = vsel %vm6102, %v6034, %v6101
        %vm6104 = vcmask 1047559
        %v6105 = vsel %vm6104, %v6035, %v6103
        %v6106 = vsel %vm6092, %v6037, %v6036
        %v6107 = vsel %vm6094, %v6038, %v6106
        %v6108 = vsel %vm6096, %v6039, %v6107
        %v6109 = vsel %vm6098, %v6040, %v6108
        %v6110 = vsel %vm6100, %v6041, %v6109
        %v6111 = vsel %vm6102, %v6042, %v6110
        %v6112 = vsel %vm6104, %v6043, %v6111
        %v6113 = vsel %vm6092, %v6045, %v6044
        %v6114 = vsel %vm6094, %v6046, %v6113
        %v6115 = vsel %vm6096, %v6047, %v6114
        %v6116 = vsel %vm6098, %v6048, %v6115
        %v6117 = vsel %vm6100, %v6049, %v6116
        %v6118 = vsel %vm6102, %v6050, %v6117
        %v6119 = vsel %vm6104, %v6051, %v6118
        %v6120 = vsel %vm6092, %v6053, %v6052
        %v6121 = vsel %vm6094, %v6054, %v6120
        %v6122 = vsel %vm6096, %v6055, %v6121
        %v6123 = vsel %vm6098, %v6056, %v6122
        %v6124 = vsel %vm6100, %v6057, %v6123
        %v6125 = vsel %vm6102, %v6058, %v6124
        %v6126 = vsel %vm6104, %v6059, %v6125
        %v6127 = vsel %vm6092, %v6061, %v6060
        %v6128 = vsel %vm6094, %v6062, %v6127
        %v6129 = vsel %vm6096, %v6063, %v6128
        %v6130 = vsel %vm6098, %v6064, %v6129
        %v6131 = vsel %vm6100, %v6065, %v6130
        %v6132 = vsel %vm6102, %v6066, %v6131
        %v6133 = vsel %vm6104, %v6067, %v6132
        %v6134 = vsel %vm6092, %v6069, %v6068
        %v6135 = vsel %vm6094, %v6070, %v6134
        %v6136 = vsel %vm6096, %v6071, %v6135
        %v6137 = vsel %vm6098, %v6072, %v6136
        %v6138 = vsel %vm6100, %v6073, %v6137
        %v6139 = vsel %vm6102, %v6074, %v6138
        %v6140 = vsel %vm6104, %v6075, %v6139
        %v6141 = vsel %vm6092, %v6077, %v6076
        %v6142 = vsel %vm6094, %v6078, %v6141
        %v6143 = vsel %vm6096, %v6079, %v6142
        %v6144 = vsel %vm6098, %v6080, %v6143
        %v6145 = vsel %vm6100, %v6081, %v6144
        %v6146 = vsel %vm6102, %v6082, %v6145
        %v6147 = vsel %vm6104, %v6083, %v6146
        %v6148 = vsel %vm6092, %v6085, %v6084
        %v6149 = vsel %vm6094, %v6086, %v6148
        %v6150 = vsel %vm6096, %v6087, %v6149
        %v6151 = vsel %vm6098, %v6088, %v6150
        %v6152 = vsel %vm6100, %v6089, %v6151
        %v6153 = vsel %vm6102, %v6090, %v6152
        %v6154 = vsel %vm6104, %v6091, %v6153
        %v6155 = vpack.c.b16 %v6105, %v6105
        %v6156 = vpack.c.b16 %v6112, %v6112
        %v6157 = vpack.c.b16 %v6119, %v6119
        %v6158 = vpack.c.b16 %v6126, %v6126
        %v6159 = vpack.c.b16 %v6133, %v6133
        %v6160 = vpack.c.b16 %v6140, %v6140
        %v6161 = vpack.c.b16 %v6147, %v6147
        %v6162 = vpack.c.b16 %v6154, %v6154
        %vm6171 = vcmask 486400
        %6172 = vst.msk [vmem:[%s185] sm:$0xf] %vm6171, %v6155
        %6173 = vst.msk [vmem:[%s185 + $0x4] sm:$0xf] %vm6171, %v6156
        %6174 = vst.msk [vmem:[%s185 + $0x8] sm:$0xf] %vm6171, %v6157
        %6175 = vst.msk [vmem:[%s185 + $0xc] sm:$0xf] %vm6171, %v6158
        %6176 = vst.msk [vmem:[%s185 + $0x10] sm:$0xf] %vm6171, %v6159
        %6177 = vst.msk [vmem:[%s185 + $0x14] sm:$0xf] %vm6171, %v6160
        %6178 = vst.msk [vmem:[%s185 + $0x18] sm:$0xf] %vm6171, %v6161
        %6179 = vst.msk [vmem:[%s185 + $0x1c] sm:$0xf] %vm6171, %v6162
        %p6180 = scmp.lt.s32.totalorder %s15, 1
        %s6181 = scalar_select %p6180, %s15, 1
        %s6182 = smul.addr %s6181, 8
        %s6183 = smul.addr %s6182, 4
        %s6184 = scalar_lea.vmem %s3, %s6183
        // Predicated region
        $region44: #{_lambda_.3} parent=31 // pred_check
          %p6185 = pneg %p101
        $region45: #{_lambda_.3} parent=31 // pred_check_branch
          %6187 = sbr.rel (%p6185) target = $region47
        $region46: #{_lambda_.3} parent=31 // pred_region
          _
        $region47: #{_lambda_.3} parent=31 // pred_fallthru
          _
      $region32: #{_lambda_.3} parent=5 // pred_fallthru
        _
      %p6188 = scmp.le.s32.totalorder 2, %s10
      // Predicated region
      $region48: #{_lambda_.3} parent=5 // pred_check
        %p6189 = pneg %p6188
      $region49: #{_lambda_.3} parent=5 // pred_check_branch
        %6191 = sbr.rel (%p6189) target = $region51
      $region50: #{_lambda_.3} parent=5 // pred_region
        %s6192 = ssub.s32 %s10, 2
        // Predicated region
        $region52: #{_lambda_.3} parent=50 // pred_check
          %p6193 = pneg %p107
        $region53: #{_lambda_.3} parent=50 // pred_check_branch
          %6195 = sbr.rel (%p6193) target = $region55
        $region54: #{_lambda_.3} parent=50 // pred_region
          %p6196 = scmp.lt.s32.totalorder %s16, 1
          %s6197 = scalar_select %p6196, %s16, 1
          %s6198 = smul.addr %s6197, 8
          %s6199 = smul.addr %s6198, 4
          %s6200 = scalar_lea.vmem %s3, %s6199
        $region55: #{_lambda_.3} parent=50 // pred_fallthru
          _
      $region51: #{_lambda_.3} parent=5 // pred_fallthru
        _
    $region6: #{_lambda_.3} parent=1 // loop_footer
      %s14 = sadd.s32 1, %s10
    $region7: #{_lambda_.3} parent=1 // loop_footer_branch
      %9 = sbr.rel target = $region3
    $region8: #{_lambda_.3} parent=1 // loop_exit
      _
    %6201 = vsyncpa [#allocation6], 1
    %s6202 = scalar_lea.sflag [#allocation6], 1
    %6203 = vsyncpa %s6202, 1

</llo_original>
